<compile_context>
chip_gen: v5e
topology: v5e:2x2
jax: 0.10.0
libtpu: 0.0.40
codegen_flags: <defaults>
</compile_context>

<pallas_src>
import functools

import numpy as np
import jax
import jax.numpy as jnp
from jax.experimental import pallas as pl
from jax.experimental.pallas import tpu as pltpu


def _round_up(x, m):
    return (x + m - 1) // m * m


# ------------------------------ fused kernel -------------------------------

def _lenet_fused_kernel(x_ref, c1w_ref, c1b_ref, c2w_ref, c2b_ref,
                        f1w_ref, f1b_ref, f2w_ref, f2b_ref, f3w_ref, f3b_ref,
                        o_ref):
    f32, bf16 = jnp.float32, jnp.bfloat16
    tb = x_ref.shape[0]

    def band_conv_relu(x, w_ref, b_ref):
        # x: (tb, H, K) activation, K = W*Cin merged on the lane axis.
        # w_ref: (kh, K, Nout) bf16 banded weights, Nout = Wo*Cout merged on lanes.
        kh, _, n_out = w_ref.shape
        ho = x.shape[1] - kh + 1
        xb = x.astype(bf16)                       # single cast per layer
        acc = jnp.zeros((tb * ho, n_out), f32)
        for dh in range(kh):                      # static unroll (kh == 5)
            # TODO(synk): the dh=1..4 sublane-offset slices / (tb*ho) reshapes may
            # relayout; a pltpu.roll-based full-H accumulation could remove them.
            slab = xb[:, dh:dh + ho, :].reshape(tb * ho, x.shape[2])
            acc = acc + jnp.dot(slab, w_ref[dh], preferred_element_type=f32)
        return jnp.maximum(acc + b_ref[...], 0.0), ho

    def pool2x2(y, ho, c):
        # y: (tb*ho, n) with rows = (batch, h) and lanes = (w, c) merged.
        n = y.shape[1]
        y = y.reshape(tb * (ho // 2), 2, n)
        y = jnp.maximum(y[:, 0, :], y[:, 1, :])          # max over H pairs
        y = jnp.maximum(y[:, : n - c], y[:, c:])         # pairwise max over W
        # Odd-W lanes now hold junk; the next layer's banded weights have exact
        # (bf16) zero rows there, so the stride-2 W downsample is folded into
        # that matmul (values are finite post-ReLU, so 0*x is safe).
        return y.reshape(tb, ho // 2, n - c)

    # conv1 -> relu -> pool : (tb, 32, 128) -> (tb, 14, 162)
    y, ho = band_conv_relu(x_ref[...], c1w_ref, c1b_ref)
    x = pool2x2(y, ho, 6)
    # conv2 -> relu -> pool : -> (tb, 5, 144)
    y, ho = band_conv_relu(x, c2w_ref, c2b_ref)
    x = pool2x2(y, ho, 16)
    # fc1 (PyTorch NCHW flatten folded into per-pooled-row weight blocks) -> relu
    xb = x.astype(bf16)
    acc = jnp.zeros((tb, f1w_ref.shape[2]), f32)
    for ph in range(f1w_ref.shape[0]):                   # 5 pooled rows
        acc = acc + jnp.dot(xb[:, ph, :], f1w_ref[ph], preferred_element_type=f32)
    h = jnp.maximum(acc + f1b_ref[...], 0.0)             # (tb, 128)
    # fc2 -> relu ; fc3 (both padded to 128 output lanes)
    h = jnp.maximum(jnp.dot(h.astype(bf16), f2w_ref[...],
                            preferred_element_type=f32) + f2b_ref[...], 0.0)
    h = jnp.dot(h.astype(bf16), f3w_ref[...],
                preferred_element_type=f32) + f3b_ref[...]
    o_ref[...] = h                                       # (tb, 128) lane-dense store


@functools.partial(jax.jit, static_argnames=("block_batch",))
def net_forward(packed, x_nchw, block_batch=128):
    """packed = pack_params(...); x_nchw: (N, 3, 32, 32) -> (N, 10) f32 logits."""
    c1w, c1b, c2w, c2b, f1w, f1b, f2w, f2b, f3w, f3b = packed
    n = x_nchw.shape[0]
    # Batch tile: up to block_batch (128 saturates the MXU M dim on every gen),
    # but never more than the 8-padded batch so tiny batches are not blown up.
    tb = min(block_batch, _round_up(max(n, 1), 8))
    n_pad = _round_up(n, tb)

    # One-time input layout conversion: NCHW f32 -> (N_pad, 32, 32*4) bf16 with
    # Cin padded 3->4 so the lane axis is exactly 128 wide.
    x = jnp.transpose(x_nchw.astype(jnp.float32), (0, 2, 3, 1))      # (n,32,32,3)
    x = jnp.pad(x, ((0, n_pad - n), (0, 0), (0, 0), (0, 1)))          # (n_pad,32,32,4)
    x = x.reshape(n_pad, 32, 128).astype(jnp.bfloat16)

    full = lambda arr: pl.BlockSpec(arr.shape, (lambda i: (0,) * arr.ndim))

    flops = 2 * n_pad * (28 * 128 * 168 + 10 * 162 * 160
                         + 5 * 144 * 128 + 2 * 128 * 128)
    bytes_accessed = (x.size * x.dtype.itemsize                 # input (bf16)
                      + n_pad * 128 * 4                         # logits slab
                      + sum(int(np.prod(a.shape)) * a.dtype.itemsize
                            for a in packed))                   # one pass of weights

    out = pl.pallas_call(
        _lenet_fused_kernel,
        out_shape=jax.ShapeDtypeStruct((n_pad, 128), jnp.float32),
        grid=(n_pad // tb,),
        in_specs=[
            pl.BlockSpec((tb, 32, 128), lambda i: (i, 0, 0)),
            full(c1w), full(c1b), full(c2w), full(c2b),
            full(f1w), full(f1b), full(f2w), full(f2b), full(f3w), full(f3b),
        ],
        out_specs=pl.BlockSpec((tb, 128), lambda i: (i, 0)),
        compiler_params=pltpu.CompilerParams(
            dimension_semantics=("parallel",),
            vmem_limit_bytes=64 * 1024 * 1024),
        cost_estimate=pl.CostEstimate(flops=flops, transcendentals=0,
                                      bytes_accessed=bytes_accessed),
    )(x, c1w, c1b, c2w, c2b, f1w, f1b, f2w, f2b, f3w, f3b)
    return out[:n, :10]


# ----------------------- one-time weight preprocessing ----------------------

def pack_params(p):
    """Build banded / folded / padded weight matrices (host side, one time)."""
    w1 = np.asarray(p["conv1_w"], np.float32)   # (6, 3, 5, 5)  (o, ci, dh, dw)
    b1 = np.asarray(p["conv1_b"], np.float32)
    w2 = np.asarray(p["conv2_w"], np.float32)   # (16, 6, 5, 5)
    b2 = np.asarray(p["conv2_b"], np.float32)
    fw1 = np.asarray(p["fc1_w"], np.float32)    # (128, 400)
    fb1 = np.asarray(p["fc1_b"], np.float32)
    fw2 = np.asarray(p["fc2_w"], np.float32)    # (84, 128)
    fb2 = np.asarray(p["fc2_b"], np.float32)
    fw3 = np.asarray(p["fc3_w"], np.float32)    # (10, 84)
    fb3 = np.asarray(p["fc3_b"], np.float32)

    # conv1: input lane = w_in*4 + ci (Cin padded 3->4), output lane = j*6 + o.
    B1 = np.zeros((5, 32 * 4, 28 * 6), np.float32)
    for dh in range(5):
        for j in range(28):
            for dw in range(5):
                B1[dh, (j + dw) * 4:(j + dw) * 4 + 3, j * 6:(j + 1) * 6] = \
                    w1[:, :, dh, dw].T                      # (ci, o)
    b1t = np.tile(b1, 28)[None, :]                          # (1, 168)

    # conv2: input lane = 2*(j2+dw)*6 + ci (only even-W lanes of pooled conv1 are
    # read -> 2x2-pool W downsample folded in), output lane = j2*16 + o.
    B2 = np.zeros((5, 162, 160), np.float32)
    for dh in range(5):
        for j2 in range(10):
            for dw in range(5):
                l0 = 2 * (j2 + dw) * 6
                B2[dh, l0:l0 + 6, j2 * 16:(j2 + 1) * 16] = w2[:, :, dh, dw].T
    b2t = np.tile(b2, 10)[None, :]                          # (1, 160)

    # fc1: PyTorch NCHW flatten (f = c*25 + ph*5 + pw) folded into one (144, 128)
    # block per pooled row ph; input lane = 2*pw*16 + c (pool2 downsample folded).
    W1f = np.zeros((5, 144, 128), np.float32)
    for ph in range(5):
        for pw in range(5):
            for c in range(16):
                W1f[ph, 2 * pw * 16 + c, :] = fw1[:, c * 25 + ph * 5 + pw]
    fb1p = fb1[None, :]                                     # (1, 128)

    # fc2 / fc3 padded to 128 output lanes (lane-dense final store).
    W2p = np.zeros((128, 128), np.float32); W2p[:, :84] = fw2.T
    fb2p = np.zeros((1, 128), np.float32);  fb2p[0, :84] = fb2
    W3p = np.zeros((128, 128), np.float32); W3p[:84, :10] = fw3.T
    fb3p = np.zeros((1, 128), np.float32);  fb3p[0, :10] = fb3

    wt = lambda a: jnp.asarray(a, jnp.bfloat16)   # weights: pre-cast to bf16
    bs = lambda a: jnp.asarray(a, jnp.float32)    # biases:  stay f32
    return (wt(B1), bs(b1t), wt(B2), bs(b2t),
            wt(W1f), bs(fb1p), wt(W2p), bs(fb2p), wt(W3p), bs(fb3p))


# ------------------------------- parameters --------------------------------

def init_params(key):
    ks = jax.random.split(key, 10)

    def u(k, shape, fan_in):
        bound = 1.0 / (fan_in ** 0.5)   # PyTorch default uniform init bounds
        return jax.random.uniform(k, shape, jnp.float32, -bound, bound)

    return {
        "conv1_w": u(ks[0], (6, 3, 5, 5), 3 * 5 * 5),
        "conv1_b": u(ks[1], (6,), 3 * 5 * 5),
        "conv2_w": u(ks[2], (16, 6, 5, 5), 6 * 5 * 5),
        "conv2_b": u(ks[3], (16,), 6 * 5 * 5),
        "fc1_w": u(ks[4], (128, 16 * 5 * 5), 16 * 5 * 5),
        "fc1_b": u(ks[5], (128,), 16 * 5 * 5),
        "fc2_w": u(ks[6], (84, 128), 128),
        "fc2_b": u(ks[7], (84,), 128),
        "fc3_w": u(ks[8], (10, 84), 84),
        "fc3_b": u(ks[9], (10,), 84),
    }


def net_reference(p, x):
    """Pure-JAX f32 reference of the PyTorch Net.forward (for tolerance check)."""
    dn = ("NCHW", "OIHW", "NCHW")
    x = jax.lax.conv_general_dilated(x, p["conv1_w"], (1, 1), "VALID",
                                     dimension_numbers=dn)
    x = jax.nn.relu(x + p["conv1_b"][None, :, None, None])
    x = jax.lax.reduce_window(x, -jnp.inf, jax.lax.max,
                              (1, 1, 2, 2), (1, 1, 2, 2), "VALID")
    x = jax.lax.conv_general_dilated(x, p["conv2_w"], (1, 1), "VALID",
                                     dimension_numbers=dn)
    x = jax.nn.relu(x + p["conv2_b"][None, :, None, None])
    x = jax.lax.reduce_window(x, -jnp.inf, jax.lax.max,
                              (1, 1, 2, 2), (1, 1, 2, 2), "VALID")
    x = x.reshape(x.shape[0], -1)                                    # NCHW flatten
    x = jax.nn.relu(x @ p["fc1_w"].T + p["fc1_b"])
    x = jax.nn.relu(x @ p["fc2_w"].T + p["fc2_b"])
    return x @ p["fc3_w"].T + p["fc3_b"]


if __name__ == "__main__":
    key = jax.random.PRNGKey(0)
    pkey, xkey = jax.random.split(key)
    params = init_params(pkey)
    packed = pack_params(params)
    # CIFAR-10 sized input (32x32 RGB) — required so the 16*5*5 flatten matches.
    x = jax.random.normal(xkey, (2, 3, 32, 32), dtype=jnp.float32)

    out = jax.block_until_ready(net_forward(packed, x))
    assert out.shape == (2, 10), out.shape
    assert out.dtype == jnp.float32

    # bf16 MXU operands -> small drift vs. the f32 reference; loose tolerance.
    ref = jax.block_until_ready(net_reference(params, x))
    np.testing.assert_allclose(np.asarray(out), np.asarray(ref),
                               atol=8e-2, rtol=8e-2)
    print("KERNEL_OK")
</pallas_src>

<mosaic_0001>
module attributes {stable_mosaic.version = 11 : i64} {
  func.func @_lenet_fused_kernel(%arg0: i32, %arg1: memref<8x32x128xbf16, #tpu.memory_space<vmem>>, %arg2: memref<5x128x168xbf16, #tpu.memory_space<vmem>>, %arg3: memref<1x168xf32, #tpu.memory_space<vmem>>, %arg4: memref<5x162x160xbf16, #tpu.memory_space<vmem>>, %arg5: memref<1x160xf32, #tpu.memory_space<vmem>>, %arg6: memref<5x144x128xbf16, #tpu.memory_space<vmem>>, %arg7: memref<1x128xf32, #tpu.memory_space<vmem>>, %arg8: memref<128x128xbf16, #tpu.memory_space<vmem>>, %arg9: memref<1x128xf32, #tpu.memory_space<vmem>>, %arg10: memref<128x128xbf16, #tpu.memory_space<vmem>>, %arg11: memref<1x128xf32, #tpu.memory_space<vmem>>, %arg12: memref<8x128xf32, #tpu.memory_space<vmem>>) attributes {dimension_semantics = [#tpu.dimension_semantics<parallel>], iteration_bounds = array<i64: 1>, scalar_prefetch = 0 : i64, scratch_operands = 0 : i64, tpu.core_type = #tpu.core_type<tc>, window_params = [{transform_indices = @transform_0, window_bounds = array<i64: 8, 32, 128>}, {pipeline_mode = #tpu.pipeline_mode<synchronous>, transform_indices = @transform_1, window_bounds = array<i64: 5, 128, 168>}, {pipeline_mode = #tpu.pipeline_mode<synchronous>, transform_indices = @transform_2, window_bounds = array<i64: 1, 168>}, {pipeline_mode = #tpu.pipeline_mode<synchronous>, transform_indices = @transform_3, window_bounds = array<i64: 5, 162, 160>}, {pipeline_mode = #tpu.pipeline_mode<synchronous>, transform_indices = @transform_4, window_bounds = array<i64: 1, 160>}, {pipeline_mode = #tpu.pipeline_mode<synchronous>, transform_indices = @transform_5, window_bounds = array<i64: 5, 144, 128>}, {pipeline_mode = #tpu.pipeline_mode<synchronous>, transform_indices = @transform_6, window_bounds = array<i64: 1, 128>}, {pipeline_mode = #tpu.pipeline_mode<synchronous>, transform_indices = @transform_7, window_bounds = array<i64: 128, 128>}, {pipeline_mode = #tpu.pipeline_mode<synchronous>, transform_indices = @transform_8, window_bounds = array<i64: 1, 128>}, {pipeline_mode = #tpu.pipeline_mode<synchronous>, transform_indices = @transform_9, window_bounds = array<i64: 128, 128>}, {pipeline_mode = #tpu.pipeline_mode<synchronous>, transform_indices = @transform_10, window_bounds = array<i64: 1, 128>}, {transform_indices = @transform_11, window_bounds = array<i64: 8, 128>}]} {
    %c0 = arith.constant 0 : index
    %c0_0 = arith.constant 0 : index
    %c0_1 = arith.constant 0 : index
    %0 = vector.load %arg1[%c0, %c0_0, %c0_1] : memref<8x32x128xbf16, #tpu.memory_space<vmem>>, vector<8x32x128xbf16>
    %cst = arith.constant 0.000000e+00 : f32
    %1 = vector.broadcast %cst : f32 to vector<224x168xf32>
    %2 = vector.extract_strided_slice %0 {offsets = [0, 0, 0], sizes = [8, 28, 128], strides = [1, 1, 1]} : vector<8x32x128xbf16> to vector<8x28x128xbf16>
    %3 = vector.shape_cast %2 : vector<8x28x128xbf16> to vector<224x128xbf16>
    %c0_2 = arith.constant 0 : index
    %c0_3 = arith.constant 0 : index
    %c0_4 = arith.constant 0 : index
    %4 = vector.load %arg2[%c0_2, %c0_3, %c0_4] : memref<5x128x168xbf16, #tpu.memory_space<vmem>>, vector<1x128x168xbf16>
    %5 = vector.shape_cast %4 : vector<1x128x168xbf16> to vector<128x168xbf16>
    %cst_5 = arith.constant dense<0.000000e+00> : vector<224x168xf32>
    %6 = tpu.matmul %3, %5, %cst_5 {dimension_numbers = #tpu.dot_dimension_numbers<[1], [0], [0], [1], [0, 0, 1, 1], [], []>} : vector<224x128xbf16>, vector<128x168xbf16>, vector<224x168xf32> -> vector<224x168xf32>
    %7 = arith.addf %1, %6 : vector<224x168xf32>
    %8 = vector.extract_strided_slice %0 {offsets = [0, 1, 0], sizes = [8, 28, 128], strides = [1, 1, 1]} : vector<8x32x128xbf16> to vector<8x28x128xbf16>
    %9 = vector.shape_cast %8 : vector<8x28x128xbf16> to vector<224x128xbf16>
    %c1 = arith.constant 1 : index
    %c0_6 = arith.constant 0 : index
    %c0_7 = arith.constant 0 : index
    %10 = vector.load %arg2[%c1, %c0_6, %c0_7] : memref<5x128x168xbf16, #tpu.memory_space<vmem>>, vector<1x128x168xbf16>
    %11 = vector.shape_cast %10 : vector<1x128x168xbf16> to vector<128x168xbf16>
    %cst_8 = arith.constant dense<0.000000e+00> : vector<224x168xf32>
    %12 = tpu.matmul %9, %11, %cst_8 {dimension_numbers = #tpu.dot_dimension_numbers<[1], [0], [0], [1], [0, 0, 1, 1], [], []>} : vector<224x128xbf16>, vector<128x168xbf16>, vector<224x168xf32> -> vector<224x168xf32>
    %13 = arith.addf %7, %12 : vector<224x168xf32>
    %14 = vector.extract_strided_slice %0 {offsets = [0, 2, 0], sizes = [8, 28, 128], strides = [1, 1, 1]} : vector<8x32x128xbf16> to vector<8x28x128xbf16>
    %15 = vector.shape_cast %14 : vector<8x28x128xbf16> to vector<224x128xbf16>
    %c2 = arith.constant 2 : index
    %c0_9 = arith.constant 0 : index
    %c0_10 = arith.constant 0 : index
    %16 = vector.load %arg2[%c2, %c0_9, %c0_10] : memref<5x128x168xbf16, #tpu.memory_space<vmem>>, vector<1x128x168xbf16>
    %17 = vector.shape_cast %16 : vector<1x128x168xbf16> to vector<128x168xbf16>
    %cst_11 = arith.constant dense<0.000000e+00> : vector<224x168xf32>
    %18 = tpu.matmul %15, %17, %cst_11 {dimension_numbers = #tpu.dot_dimension_numbers<[1], [0], [0], [1], [0, 0, 1, 1], [], []>} : vector<224x128xbf16>, vector<128x168xbf16>, vector<224x168xf32> -> vector<224x168xf32>
    %19 = arith.addf %13, %18 : vector<224x168xf32>
    %20 = vector.extract_strided_slice %0 {offsets = [0, 3, 0], sizes = [8, 28, 128], strides = [1, 1, 1]} : vector<8x32x128xbf16> to vector<8x28x128xbf16>
    %21 = vector.shape_cast %20 : vector<8x28x128xbf16> to vector<224x128xbf16>
    %c3 = arith.constant 3 : index
    %c0_12 = arith.constant 0 : index
    %c0_13 = arith.constant 0 : index
    %22 = vector.load %arg2[%c3, %c0_12, %c0_13] : memref<5x128x168xbf16, #tpu.memory_space<vmem>>, vector<1x128x168xbf16>
    %23 = vector.shape_cast %22 : vector<1x128x168xbf16> to vector<128x168xbf16>
    %cst_14 = arith.constant dense<0.000000e+00> : vector<224x168xf32>
    %24 = tpu.matmul %21, %23, %cst_14 {dimension_numbers = #tpu.dot_dimension_numbers<[1], [0], [0], [1], [0, 0, 1, 1], [], []>} : vector<224x128xbf16>, vector<128x168xbf16>, vector<224x168xf32> -> vector<224x168xf32>
    %25 = arith.addf %19, %24 : vector<224x168xf32>
    %26 = vector.extract_strided_slice %0 {offsets = [0, 4, 0], sizes = [8, 28, 128], strides = [1, 1, 1]} : vector<8x32x128xbf16> to vector<8x28x128xbf16>
    %27 = vector.shape_cast %26 : vector<8x28x128xbf16> to vector<224x128xbf16>
    %c4 = arith.constant 4 : index
    %c0_15 = arith.constant 0 : index
    %c0_16 = arith.constant 0 : index
    %28 = vector.load %arg2[%c4, %c0_15, %c0_16] : memref<5x128x168xbf16, #tpu.memory_space<vmem>>, vector<1x128x168xbf16>
    %29 = vector.shape_cast %28 : vector<1x128x168xbf16> to vector<128x168xbf16>
    %cst_17 = arith.constant dense<0.000000e+00> : vector<224x168xf32>
    %30 = tpu.matmul %27, %29, %cst_17 {dimension_numbers = #tpu.dot_dimension_numbers<[1], [0], [0], [1], [0, 0, 1, 1], [], []>} : vector<224x128xbf16>, vector<128x168xbf16>, vector<224x168xf32> -> vector<224x168xf32>
    %31 = arith.addf %25, %30 : vector<224x168xf32>
    %c0_18 = arith.constant 0 : index
    %c0_19 = arith.constant 0 : index
    %32 = vector.load %arg3[%c0_18, %c0_19] : memref<1x168xf32, #tpu.memory_space<vmem>>, vector<1x168xf32>
    %33 = vector.broadcast %32 : vector<1x168xf32> to vector<224x168xf32>
    %34 = arith.addf %31, %33 : vector<224x168xf32>
    %cst_20 = arith.constant 0.000000e+00 : f32
    %35 = vector.broadcast %cst_20 : f32 to vector<224x168xf32>
    %36 = arith.maximumf %34, %35 : vector<224x168xf32>
    %37 = vector.shape_cast %36 : vector<224x168xf32> to vector<112x2x168xf32>
    %38 = vector.extract_strided_slice %37 {offsets = [0, 0, 0], sizes = [112, 1, 168], strides = [1, 1, 1]} : vector<112x2x168xf32> to vector<112x1x168xf32>
    %39 = vector.shape_cast %38 : vector<112x1x168xf32> to vector<112x168xf32>
    %40 = vector.extract_strided_slice %37 {offsets = [0, 1, 0], sizes = [112, 1, 168], strides = [1, 1, 1]} : vector<112x2x168xf32> to vector<112x1x168xf32>
    %41 = vector.shape_cast %40 : vector<112x1x168xf32> to vector<112x168xf32>
    %42 = arith.maximumf %39, %41 : vector<112x168xf32>
    %43 = vector.extract_strided_slice %42 {offsets = [0, 0], sizes = [112, 162], strides = [1, 1]} : vector<112x168xf32> to vector<112x162xf32>
    %44 = vector.extract_strided_slice %42 {offsets = [0, 6], sizes = [112, 162], strides = [1, 1]} : vector<112x168xf32> to vector<112x162xf32>
    %45 = arith.maximumf %43, %44 : vector<112x162xf32>
    %46 = vector.shape_cast %45 : vector<112x162xf32> to vector<8x14x162xf32>
    %47 = arith.truncf %46 : vector<8x14x162xf32> to vector<8x14x162xbf16>
    %cst_21 = arith.constant 0.000000e+00 : f32
    %48 = vector.broadcast %cst_21 : f32 to vector<80x160xf32>
    %49 = vector.extract_strided_slice %47 {offsets = [0, 0, 0], sizes = [8, 10, 162], strides = [1, 1, 1]} : vector<8x14x162xbf16> to vector<8x10x162xbf16>
    %50 = vector.shape_cast %49 : vector<8x10x162xbf16> to vector<80x162xbf16>
    %c0_22 = arith.constant 0 : index
    %c0_23 = arith.constant 0 : index
    %c0_24 = arith.constant 0 : index
    %51 = vector.load %arg4[%c0_22, %c0_23, %c0_24] : memref<5x162x160xbf16, #tpu.memory_space<vmem>>, vector<1x162x160xbf16>
    %52 = vector.shape_cast %51 : vector<1x162x160xbf16> to vector<162x160xbf16>
    %cst_25 = arith.constant dense<0.000000e+00> : vector<80x160xf32>
    %53 = tpu.matmul %50, %52, %cst_25 {dimension_numbers = #tpu.dot_dimension_numbers<[1], [0], [0], [1], [0, 0, 1, 1], [], []>} : vector<80x162xbf16>, vector<162x160xbf16>, vector<80x160xf32> -> vector<80x160xf32>
    %54 = arith.addf %48, %53 : vector<80x160xf32>
    %55 = vector.extract_strided_slice %47 {offsets = [0, 1, 0], sizes = [8, 10, 162], strides = [1, 1, 1]} : vector<8x14x162xbf16> to vector<8x10x162xbf16>
    %56 = vector.shape_cast %55 : vector<8x10x162xbf16> to vector<80x162xbf16>
    %c1_26 = arith.constant 1 : index
    %c0_27 = arith.constant 0 : index
    %c0_28 = arith.constant 0 : index
    %57 = vector.load %arg4[%c1_26, %c0_27, %c0_28] : memref<5x162x160xbf16, #tpu.memory_space<vmem>>, vector<1x162x160xbf16>
    %58 = vector.shape_cast %57 : vector<1x162x160xbf16> to vector<162x160xbf16>
    %cst_29 = arith.constant dense<0.000000e+00> : vector<80x160xf32>
    %59 = tpu.matmul %56, %58, %cst_29 {dimension_numbers = #tpu.dot_dimension_numbers<[1], [0], [0], [1], [0, 0, 1, 1], [], []>} : vector<80x162xbf16>, vector<162x160xbf16>, vector<80x160xf32> -> vector<80x160xf32>
    %60 = arith.addf %54, %59 : vector<80x160xf32>
    %61 = vector.extract_strided_slice %47 {offsets = [0, 2, 0], sizes = [8, 10, 162], strides = [1, 1, 1]} : vector<8x14x162xbf16> to vector<8x10x162xbf16>
    %62 = vector.shape_cast %61 : vector<8x10x162xbf16> to vector<80x162xbf16>
    %c2_30 = arith.constant 2 : index
    %c0_31 = arith.constant 0 : index
    %c0_32 = arith.constant 0 : index
    %63 = vector.load %arg4[%c2_30, %c0_31, %c0_32] : memref<5x162x160xbf16, #tpu.memory_space<vmem>>, vector<1x162x160xbf16>
    %64 = vector.shape_cast %63 : vector<1x162x160xbf16> to vector<162x160xbf16>
    %cst_33 = arith.constant dense<0.000000e+00> : vector<80x160xf32>
    %65 = tpu.matmul %62, %64, %cst_33 {dimension_numbers = #tpu.dot_dimension_numbers<[1], [0], [0], [1], [0, 0, 1, 1], [], []>} : vector<80x162xbf16>, vector<162x160xbf16>, vector<80x160xf32> -> vector<80x160xf32>
    %66 = arith.addf %60, %65 : vector<80x160xf32>
    %67 = vector.extract_strided_slice %47 {offsets = [0, 3, 0], sizes = [8, 10, 162], strides = [1, 1, 1]} : vector<8x14x162xbf16> to vector<8x10x162xbf16>
    %68 = vector.shape_cast %67 : vector<8x10x162xbf16> to vector<80x162xbf16>
    %c3_34 = arith.constant 3 : index
    %c0_35 = arith.constant 0 : index
    %c0_36 = arith.constant 0 : index
    %69 = vector.load %arg4[%c3_34, %c0_35, %c0_36] : memref<5x162x160xbf16, #tpu.memory_space<vmem>>, vector<1x162x160xbf16>
    %70 = vector.shape_cast %69 : vector<1x162x160xbf16> to vector<162x160xbf16>
    %cst_37 = arith.constant dense<0.000000e+00> : vector<80x160xf32>
    %71 = tpu.matmul %68, %70, %cst_37 {dimension_numbers = #tpu.dot_dimension_numbers<[1], [0], [0], [1], [0, 0, 1, 1], [], []>} : vector<80x162xbf16>, vector<162x160xbf16>, vector<80x160xf32> -> vector<80x160xf32>
    %72 = arith.addf %66, %71 : vector<80x160xf32>
    %73 = vector.extract_strided_slice %47 {offsets = [0, 4, 0], sizes = [8, 10, 162], strides = [1, 1, 1]} : vector<8x14x162xbf16> to vector<8x10x162xbf16>
    %74 = vector.shape_cast %73 : vector<8x10x162xbf16> to vector<80x162xbf16>
    %c4_38 = arith.constant 4 : index
    %c0_39 = arith.constant 0 : index
    %c0_40 = arith.constant 0 : index
    %75 = vector.load %arg4[%c4_38, %c0_39, %c0_40] : memref<5x162x160xbf16, #tpu.memory_space<vmem>>, vector<1x162x160xbf16>
    %76 = vector.shape_cast %75 : vector<1x162x160xbf16> to vector<162x160xbf16>
    %cst_41 = arith.constant dense<0.000000e+00> : vector<80x160xf32>
    %77 = tpu.matmul %74, %76, %cst_41 {dimension_numbers = #tpu.dot_dimension_numbers<[1], [0], [0], [1], [0, 0, 1, 1], [], []>} : vector<80x162xbf16>, vector<162x160xbf16>, vector<80x160xf32> -> vector<80x160xf32>
    %78 = arith.addf %72, %77 : vector<80x160xf32>
    %c0_42 = arith.constant 0 : index
    %c0_43 = arith.constant 0 : index
    %79 = vector.load %arg5[%c0_42, %c0_43] : memref<1x160xf32, #tpu.memory_space<vmem>>, vector<1x160xf32>
    %80 = vector.broadcast %79 : vector<1x160xf32> to vector<80x160xf32>
    %81 = arith.addf %78, %80 : vector<80x160xf32>
    %cst_44 = arith.constant 0.000000e+00 : f32
    %82 = vector.broadcast %cst_44 : f32 to vector<80x160xf32>
    %83 = arith.maximumf %81, %82 : vector<80x160xf32>
    %84 = vector.shape_cast %83 : vector<80x160xf32> to vector<40x2x160xf32>
    %85 = vector.extract_strided_slice %84 {offsets = [0, 0, 0], sizes = [40, 1, 160], strides = [1, 1, 1]} : vector<40x2x160xf32> to vector<40x1x160xf32>
    %86 = vector.shape_cast %85 : vector<40x1x160xf32> to vector<40x160xf32>
    %87 = vector.extract_strided_slice %84 {offsets = [0, 1, 0], sizes = [40, 1, 160], strides = [1, 1, 1]} : vector<40x2x160xf32> to vector<40x1x160xf32>
    %88 = vector.shape_cast %87 : vector<40x1x160xf32> to vector<40x160xf32>
    %89 = arith.maximumf %86, %88 : vector<40x160xf32>
    %90 = vector.extract_strided_slice %89 {offsets = [0, 0], sizes = [40, 144], strides = [1, 1]} : vector<40x160xf32> to vector<40x144xf32>
    %91 = vector.extract_strided_slice %89 {offsets = [0, 16], sizes = [40, 144], strides = [1, 1]} : vector<40x160xf32> to vector<40x144xf32>
    %92 = arith.maximumf %90, %91 : vector<40x144xf32>
    %93 = vector.shape_cast %92 : vector<40x144xf32> to vector<8x5x144xf32>
    %94 = arith.truncf %93 : vector<8x5x144xf32> to vector<8x5x144xbf16>
    %cst_45 = arith.constant 0.000000e+00 : f32
    %95 = vector.broadcast %cst_45 : f32 to vector<8x128xf32>
    %96 = vector.extract_strided_slice %94 {offsets = [0, 0, 0], sizes = [8, 1, 144], strides = [1, 1, 1]} : vector<8x5x144xbf16> to vector<8x1x144xbf16>
    %97 = vector.shape_cast %96 : vector<8x1x144xbf16> to vector<8x144xbf16>
    %c0_46 = arith.constant 0 : index
    %c0_47 = arith.constant 0 : index
    %c0_48 = arith.constant 0 : index
    %98 = vector.load %arg6[%c0_46, %c0_47, %c0_48] : memref<5x144x128xbf16, #tpu.memory_space<vmem>>, vector<1x144x128xbf16>
    %99 = vector.shape_cast %98 : vector<1x144x128xbf16> to vector<144x128xbf16>
    %cst_49 = arith.constant dense<0.000000e+00> : vector<8x128xf32>
    %100 = tpu.matmul %97, %99, %cst_49 {dimension_numbers = #tpu.dot_dimension_numbers<[1], [0], [0], [1], [0, 0, 1, 1], [], []>} : vector<8x144xbf16>, vector<144x128xbf16>, vector<8x128xf32> -> vector<8x128xf32>
    %101 = arith.addf %95, %100 : vector<8x128xf32>
    %102 = vector.extract_strided_slice %94 {offsets = [0, 1, 0], sizes = [8, 1, 144], strides = [1, 1, 1]} : vector<8x5x144xbf16> to vector<8x1x144xbf16>
    %103 = vector.shape_cast %102 : vector<8x1x144xbf16> to vector<8x144xbf16>
    %c1_50 = arith.constant 1 : index
    %c0_51 = arith.constant 0 : index
    %c0_52 = arith.constant 0 : index
    %104 = vector.load %arg6[%c1_50, %c0_51, %c0_52] : memref<5x144x128xbf16, #tpu.memory_space<vmem>>, vector<1x144x128xbf16>
    %105 = vector.shape_cast %104 : vector<1x144x128xbf16> to vector<144x128xbf16>
    %cst_53 = arith.constant dense<0.000000e+00> : vector<8x128xf32>
    %106 = tpu.matmul %103, %105, %cst_53 {dimension_numbers = #tpu.dot_dimension_numbers<[1], [0], [0], [1], [0, 0, 1, 1], [], []>} : vector<8x144xbf16>, vector<144x128xbf16>, vector<8x128xf32> -> vector<8x128xf32>
    %107 = arith.addf %101, %106 : vector<8x128xf32>
    %108 = vector.extract_strided_slice %94 {offsets = [0, 2, 0], sizes = [8, 1, 144], strides = [1, 1, 1]} : vector<8x5x144xbf16> to vector<8x1x144xbf16>
    %109 = vector.shape_cast %108 : vector<8x1x144xbf16> to vector<8x144xbf16>
    %c2_54 = arith.constant 2 : index
    %c0_55 = arith.constant 0 : index
    %c0_56 = arith.constant 0 : index
    %110 = vector.load %arg6[%c2_54, %c0_55, %c0_56] : memref<5x144x128xbf16, #tpu.memory_space<vmem>>, vector<1x144x128xbf16>
    %111 = vector.shape_cast %110 : vector<1x144x128xbf16> to vector<144x128xbf16>
    %cst_57 = arith.constant dense<0.000000e+00> : vector<8x128xf32>
    %112 = tpu.matmul %109, %111, %cst_57 {dimension_numbers = #tpu.dot_dimension_numbers<[1], [0], [0], [1], [0, 0, 1, 1], [], []>} : vector<8x144xbf16>, vector<144x128xbf16>, vector<8x128xf32> -> vector<8x128xf32>
    %113 = arith.addf %107, %112 : vector<8x128xf32>
    %114 = vector.extract_strided_slice %94 {offsets = [0, 3, 0], sizes = [8, 1, 144], strides = [1, 1, 1]} : vector<8x5x144xbf16> to vector<8x1x144xbf16>
    %115 = vector.shape_cast %114 : vector<8x1x144xbf16> to vector<8x144xbf16>
    %c3_58 = arith.constant 3 : index
    %c0_59 = arith.constant 0 : index
    %c0_60 = arith.constant 0 : index
    %116 = vector.load %arg6[%c3_58, %c0_59, %c0_60] : memref<5x144x128xbf16, #tpu.memory_space<vmem>>, vector<1x144x128xbf16>
    %117 = vector.shape_cast %116 : vector<1x144x128xbf16> to vector<144x128xbf16>
    %cst_61 = arith.constant dense<0.000000e+00> : vector<8x128xf32>
    %118 = tpu.matmul %115, %117, %cst_61 {dimension_numbers = #tpu.dot_dimension_numbers<[1], [0], [0], [1], [0, 0, 1, 1], [], []>} : vector<8x144xbf16>, vector<144x128xbf16>, vector<8x128xf32> -> vector<8x128xf32>
    %119 = arith.addf %113, %118 : vector<8x128xf32>
    %120 = vector.extract_strided_slice %94 {offsets = [0, 4, 0], sizes = [8, 1, 144], strides = [1, 1, 1]} : vector<8x5x144xbf16> to vector<8x1x144xbf16>
    %121 = vector.shape_cast %120 : vector<8x1x144xbf16> to vector<8x144xbf16>
    %c4_62 = arith.constant 4 : index
    %c0_63 = arith.constant 0 : index
    %c0_64 = arith.constant 0 : index
    %122 = vector.load %arg6[%c4_62, %c0_63, %c0_64] : memref<5x144x128xbf16, #tpu.memory_space<vmem>>, vector<1x144x128xbf16>
    %123 = vector.shape_cast %122 : vector<1x144x128xbf16> to vector<144x128xbf16>
    %cst_65 = arith.constant dense<0.000000e+00> : vector<8x128xf32>
    %124 = tpu.matmul %121, %123, %cst_65 {dimension_numbers = #tpu.dot_dimension_numbers<[1], [0], [0], [1], [0, 0, 1, 1], [], []>} : vector<8x144xbf16>, vector<144x128xbf16>, vector<8x128xf32> -> vector<8x128xf32>
    %125 = arith.addf %119, %124 : vector<8x128xf32>
    %c0_66 = arith.constant 0 : index
    %c0_67 = arith.constant 0 : index
    %126 = vector.load %arg7[%c0_66, %c0_67] : memref<1x128xf32, #tpu.memory_space<vmem>>, vector<1x128xf32>
    %127 = vector.broadcast %126 : vector<1x128xf32> to vector<8x128xf32>
    %128 = arith.addf %125, %127 : vector<8x128xf32>
    %cst_68 = arith.constant 0.000000e+00 : f32
    %129 = vector.broadcast %cst_68 : f32 to vector<8x128xf32>
    %130 = arith.maximumf %128, %129 : vector<8x128xf32>
    %131 = arith.truncf %130 : vector<8x128xf32> to vector<8x128xbf16>
    %c0_69 = arith.constant 0 : index
    %c0_70 = arith.constant 0 : index
    %132 = vector.load %arg8[%c0_69, %c0_70] : memref<128x128xbf16, #tpu.memory_space<vmem>>, vector<128x128xbf16>
    %cst_71 = arith.constant dense<0.000000e+00> : vector<8x128xf32>
    %133 = tpu.matmul %131, %132, %cst_71 {dimension_numbers = #tpu.dot_dimension_numbers<[1], [0], [0], [1], [0, 0, 1, 1], [], []>} : vector<8x128xbf16>, vector<128x128xbf16>, vector<8x128xf32> -> vector<8x128xf32>
    %c0_72 = arith.constant 0 : index
    %c0_73 = arith.constant 0 : index
    %134 = vector.load %arg9[%c0_72, %c0_73] : memref<1x128xf32, #tpu.memory_space<vmem>>, vector<1x128xf32>
    %135 = vector.broadcast %134 : vector<1x128xf32> to vector<8x128xf32>
    %136 = arith.addf %133, %135 : vector<8x128xf32>
    %cst_74 = arith.constant 0.000000e+00 : f32
    %137 = vector.broadcast %cst_74 : f32 to vector<8x128xf32>
    %138 = arith.maximumf %136, %137 : vector<8x128xf32>
    %139 = arith.truncf %138 : vector<8x128xf32> to vector<8x128xbf16>
    %c0_75 = arith.constant 0 : index
    %c0_76 = arith.constant 0 : index
    %140 = vector.load %arg10[%c0_75, %c0_76] : memref<128x128xbf16, #tpu.memory_space<vmem>>, vector<128x128xbf16>
    %cst_77 = arith.constant dense<0.000000e+00> : vector<8x128xf32>
    %141 = tpu.matmul %139, %140, %cst_77 {dimension_numbers = #tpu.dot_dimension_numbers<[1], [0], [0], [1], [0, 0, 1, 1], [], []>} : vector<8x128xbf16>, vector<128x128xbf16>, vector<8x128xf32> -> vector<8x128xf32>
    %c0_78 = arith.constant 0 : index
    %c0_79 = arith.constant 0 : index
    %142 = vector.load %arg11[%c0_78, %c0_79] : memref<1x128xf32, #tpu.memory_space<vmem>>, vector<1x128xf32>
    %143 = vector.broadcast %142 : vector<1x128xf32> to vector<8x128xf32>
    %144 = arith.addf %141, %143 : vector<8x128xf32>
    %c0_80 = arith.constant 0 : index
    %c0_81 = arith.constant 0 : index
    %145 = vector.load %arg12[%c0_80, %c0_81] : memref<8x128xf32, #tpu.memory_space<vmem>>, vector<8x128xf32>
    tpu.vector_store %arg12[%c0_80, %c0_81], %144 {strides = array<i32>} : memref<8x128xf32, #tpu.memory_space<vmem>>, vector<8x128xf32>,
    return
  }
  func.func @transform_0(%arg0: i32) -> (i32, i32, i32) {
    %c0_i32 = arith.constant 0 : i32
    %c0_i32_0 = arith.constant 0 : i32
    %c0_i32_1 = arith.constant 0 : i32
    return %arg0, %c0_i32, %c0_i32_0 : i32, i32, i32
  }
  func.func @transform_1(%arg0: i32) -> (i32, i32, i32) {
    %c0_i32 = arith.constant 0 : i32
    %c0_i32_0 = arith.constant 0 : i32
    %c0_i32_1 = arith.constant 0 : i32
    %c0_i32_2 = arith.constant 0 : i32
    return %c0_i32, %c0_i32_0, %c0_i32_1 : i32, i32, i32
  }
  func.func @transform_2(%arg0: i32) -> (i32, i32) {
    %c0_i32 = arith.constant 0 : i32
    %c0_i32_0 = arith.constant 0 : i32
    %c0_i32_1 = arith.constant 0 : i32
    return %c0_i32, %c0_i32_0 : i32, i32
  }
  func.func @transform_3(%arg0: i32) -> (i32, i32, i32) {
    %c0_i32 = arith.constant 0 : i32
    %c0_i32_0 = arith.constant 0 : i32
    %c0_i32_1 = arith.constant 0 : i32
    %c0_i32_2 = arith.constant 0 : i32
    return %c0_i32, %c0_i32_0, %c0_i32_1 : i32, i32, i32
  }
  func.func @transform_4(%arg0: i32) -> (i32, i32) {
    %c0_i32 = arith.constant 0 : i32
    %c0_i32_0 = arith.constant 0 : i32
    %c0_i32_1 = arith.constant 0 : i32
    return %c0_i32, %c0_i32_0 : i32, i32
  }
  func.func @transform_5(%arg0: i32) -> (i32, i32, i32) {
    %c0_i32 = arith.constant 0 : i32
    %c0_i32_0 = arith.constant 0 : i32
    %c0_i32_1 = arith.constant 0 : i32
    %c0_i32_2 = arith.constant 0 : i32
    return %c0_i32, %c0_i32_0, %c0_i32_1 : i32, i32, i32
  }
  func.func @transform_6(%arg0: i32) -> (i32, i32) {
    %c0_i32 = arith.constant 0 : i32
    %c0_i32_0 = arith.constant 0 : i32
    %c0_i32_1 = arith.constant 0 : i32
    return %c0_i32, %c0_i32_0 : i32, i32
  }
  func.func @transform_7(%arg0: i32) -> (i32, i32) {
    %c0_i32 = arith.constant 0 : i32
    %c0_i32_0 = arith.constant 0 : i32
    %c0_i32_1 = arith.constant 0 : i32
    return %c0_i32, %c0_i32_0 : i32, i32
  }
  func.func @transform_8(%arg0: i32) -> (i32, i32) {
    %c0_i32 = arith.constant 0 : i32
    %c0_i32_0 = arith.constant 0 : i32
    %c0_i32_1 = arith.constant 0 : i32
    return %c0_i32, %c0_i32_0 : i32, i32
  }
  func.func @transform_9(%arg0: i32) -> (i32, i32) {
    %c0_i32 = arith.constant 0 : i32
    %c0_i32_0 = arith.constant 0 : i32
    %c0_i32_1 = arith.constant 0 : i32
    return %c0_i32, %c0_i32_0 : i32, i32
  }
  func.func @transform_10(%arg0: i32) -> (i32, i32) {
    %c0_i32 = arith.constant 0 : i32
    %c0_i32_0 = arith.constant 0 : i32
    %c0_i32_1 = arith.constant 0 : i32
    return %c0_i32, %c0_i32_0 : i32, i32
  }
  func.func @transform_11(%arg0: i32) -> (i32, i32) {
    %c0_i32 = arith.constant 0 : i32
    %c0_i32_0 = arith.constant 0 : i32
    return %arg0, %c0_i32 : i32, i32
  }
}

</mosaic_0001>

<llo_original>
// kernel: net_forward.1
$region0: #{net_forward.1}
  #allocation0 [shape = 'u32[]', space=smem, size = 0x4, offset = 0x4, fixed_abs, tag = 'smem constant byte address 0x4 - core index']
  #allocation1 [shape = 'u32[72,128]{1,0:T(1,128)}', space=vmem, size = 0x9000, scoped, tag = 'internal scratch']
  %s0 = inlined_call_operand.vmem [shape: bf16[8,32,128], index: 0, kind: input, shape index: {}]
  %s1 = inlined_call_operand.vmem [shape: bf16[5,128,168], index: 1, kind: input, shape index: {}]
  %s2 = inlined_call_operand.vmem [shape: f32[1,168], index: 2, kind: input, shape index: {}]
  %s3 = inlined_call_operand.vmem [shape: bf16[5,162,160], index: 3, kind: input, shape index: {}]
  %s4 = inlined_call_operand.vmem [shape: f32[1,160], index: 4, kind: input, shape index: {}]
  %s5 = inlined_call_operand.vmem [shape: bf16[5,144,128], index: 5, kind: input, shape index: {}]
  %s6 = inlined_call_operand.vmem [shape: f32[1,128], index: 6, kind: input, shape index: {}]
  %s7 = inlined_call_operand.vmem [shape: bf16[128,128], index: 7, kind: input, shape index: {}]
  %s8 = inlined_call_operand.vmem [shape: f32[1,128], index: 8, kind: input, shape index: {}]
  %s9 = inlined_call_operand.vmem [shape: bf16[128,128], index: 9, kind: input, shape index: {}]
  %s10 = inlined_call_operand.vmem [shape: f32[1,128], index: 10, kind: input, shape index: {}]
  %s11 = inlined_call_operand.vmem [shape: f32[8,128], index: 11, kind: output, shape index: {}]
  %s12 = sld [smem:[#allocation0]]
  $region54: #{net_forward.1} parent=0
    _
  %s14 = ssub.s32 1, %s12
  %s15 = scalar_select 0, %s14, %s12
  // Predicated region
  $region2: #{net_forward.1} parent=0 // pred_check
    _
  $region3: #{net_forward.1} parent=0 // pred_check_branch
    %17 = sbr.rel (0) target = $region5
  $region4: #{net_forward.1} parent=0 // pred_region
    _
  $region5: #{net_forward.1} parent=0 // pred_fallthru
    _
  // Predicated region
  $region6: #{net_forward.1} parent=0 // pred_check
    _
  $region7: #{net_forward.1} parent=0 // pred_check_branch
    %19 = sbr.rel (0) target = $region9
  $region8: #{net_forward.1} parent=0 // pred_region
    _
  $region9: #{net_forward.1} parent=0 // pred_fallthru
    _
  // Predicated region
  $region10: #{net_forward.1} parent=0 // pred_check
    _
  $region11: #{net_forward.1} parent=0 // pred_check_branch
    %21 = sbr.rel (0) target = $region13
  $region12: #{net_forward.1} parent=0 // pred_region
    _
  $region13: #{net_forward.1} parent=0 // pred_fallthru
    _
  // Predicated region
  $region14: #{net_forward.1} parent=0 // pred_check
    _
  $region15: #{net_forward.1} parent=0 // pred_check_branch
    %23 = sbr.rel (0) target = $region17
  $region16: #{net_forward.1} parent=0 // pred_region
    _
  $region17: #{net_forward.1} parent=0 // pred_fallthru
    _
  // Predicated region
  $region18: #{net_forward.1} parent=0 // pred_check
    _
  $region19: #{net_forward.1} parent=0 // pred_check_branch
    %25 = sbr.rel (0) target = $region21
  $region20: #{net_forward.1} parent=0 // pred_region
    _
  $region21: #{net_forward.1} parent=0 // pred_fallthru
    _
  // Predicated region
  $region22: #{net_forward.1} parent=0 // pred_check
    _
  $region23: #{net_forward.1} parent=0 // pred_check_branch
    %27 = sbr.rel (0) target = $region25
  $region24: #{net_forward.1} parent=0 // pred_region
    _
  $region25: #{net_forward.1} parent=0 // pred_fallthru
    _
  // Predicated region
  $region26: #{net_forward.1} parent=0 // pred_check
    _
  $region27: #{net_forward.1} parent=0 // pred_check_branch
    %29 = sbr.rel (0) target = $region29
  $region28: #{net_forward.1} parent=0 // pred_region
    _
  $region29: #{net_forward.1} parent=0 // pred_fallthru
    _
  // Predicated region
  $region30: #{net_forward.1} parent=0 // pred_check
    _
  $region31: #{net_forward.1} parent=0 // pred_check_branch
    %31 = sbr.rel (0) target = $region33
  $region32: #{net_forward.1} parent=0 // pred_region
    _
  $region33: #{net_forward.1} parent=0 // pred_fallthru
    _
  // Predicated region
  $region34: #{net_forward.1} parent=0 // pred_check
    _
  $region35: #{net_forward.1} parent=0 // pred_check_branch
    %33 = sbr.rel (0) target = $region37
  $region36: #{net_forward.1} parent=0 // pred_region
    _
  $region37: #{net_forward.1} parent=0 // pred_fallthru
    _
  // Predicated region
  $region38: #{net_forward.1} parent=0 // pred_check
    _
  $region39: #{net_forward.1} parent=0 // pred_check_branch
    %35 = sbr.rel (0) target = $region41
  $region40: #{net_forward.1} parent=0 // pred_region
    _
  $region41: #{net_forward.1} parent=0 // pred_fallthru
    _
  // Predicated region
  $region42: #{net_forward.1} parent=0 // pred_check
    _
  $region43: #{net_forward.1} parent=0 // pred_check_branch
    %37 = sbr.rel (0) target = $region45
  $region44: #{net_forward.1} parent=0 // pred_region
    _
  $region45: #{net_forward.1} parent=0 // pred_fallthru
    _
  %v39 = vld [vmem:[%s0] sm:$0xf]
  %v40 = vld [vmem:[%s0 + $0x4] sm:$0xf]
  %v41 = vld [vmem:[%s0 + $0x8] sm:$0xf]
  %v42 = vld [vmem:[%s0 + $0xc] sm:$0xf]
  %v43 = vld [vmem:[%s0 + $0x10] sm:$0xf]
  %v44 = vld [vmem:[%s0 + $0x14] sm:$0xf]
  %v45 = vld [vmem:[%s0 + $0x18] sm:$0xf]
  %v46 = vld [vmem:[%s0 + $0x1c] sm:$0xf]
  %v47 = vld [vmem:[%s0 + $0x20] sm:$0xf]
  %v48 = vld [vmem:[%s0 + $0x24] sm:$0xf]
  %v49 = vld [vmem:[%s0 + $0x28] sm:$0xf]
  %v50 = vld [vmem:[%s0 + $0x2c] sm:$0xf]
  %v51 = vld [vmem:[%s0 + $0x30] sm:$0xf]
  %v52 = vld [vmem:[%s0 + $0x34] sm:$0xf]
  %v53 = vld [vmem:[%s0 + $0x38] sm:$0xf]
  %v54 = vld [vmem:[%s0 + $0x3c] sm:$0xf]
  %v55 = vld [vmem:[%s0 + $0x40] sm:$0xf]
  %v56 = vld [vmem:[%s0 + $0x44] sm:$0xf]
  %v57 = vld [vmem:[%s0 + $0x48] sm:$0xf]
  %v58 = vld [vmem:[%s0 + $0x4c] sm:$0xf]
  %v59 = vld [vmem:[%s0 + $0x50] sm:$0xf]
  %v60 = vld [vmem:[%s0 + $0x54] sm:$0xf]
  %v61 = vld [vmem:[%s0 + $0x58] sm:$0xf]
  %v62 = vld [vmem:[%s0 + $0x5c] sm:$0xf]
  %v63 = vld [vmem:[%s0 + $0x60] sm:$0xf]
  %v64 = vld [vmem:[%s0 + $0x64] sm:$0xf]
  %v65 = vld [vmem:[%s0 + $0x68] sm:$0xf]
  %v66 = vld [vmem:[%s0 + $0x6c] sm:$0xf]
  %v67 = vld [vmem:[%s0 + $0x70] sm:$0xf]
  %v68 = vld [vmem:[%s0 + $0x74] sm:$0xf]
  %v69 = vld [vmem:[%s0 + $0x78] sm:$0xf]
  %v70 = vld [vmem:[%s0 + $0x7c] sm:$0xf]
  %v103 = vrot.slane %v39, 2
  %v104 = vrot.slane %v40, 2
  %v105 = vrot.slane %v41, 2
  %v106 = vrot.slane %v42, 2
  %v107 = vrot.slane %v43, 2
  %v108 = vrot.slane %v44, 2
  %v109 = vrot.slane %v45, 2
  %v110 = vrot.slane %v46, 2
  %v111 = vrot.slane %v47, 2
  %v112 = vrot.slane %v48, 2
  %v113 = vrot.slane %v49, 2
  %v114 = vrot.slane %v50, 2
  %v115 = vrot.slane %v51, 2
  %v116 = vrot.slane %v52, 2
  %v117 = vrot.slane %v53, 2
  %v118 = vrot.slane %v54, 2
  %v119 = vrot.slane %v55, 2
  %v120 = vrot.slane %v56, 2
  %v121 = vrot.slane %v57, 2
  %v122 = vrot.slane %v58, 2
  %v123 = vrot.slane %v59, 2
  %v124 = vrot.slane %v60, 2
  %v125 = vrot.slane %v61, 2
  %v126 = vrot.slane %v62, 2
  %v127 = vrot.slane %v63, 2
  %v128 = vrot.slane %v64, 2
  %v129 = vrot.slane %v65, 2
  %v130 = vrot.slane %v66, 2
  %v131 = vrot.slane %v67, 2
  %v132 = vrot.slane %v68, 2
  %v133 = vrot.slane %v69, 2
  %v134 = vrot.slane %v70, 2
  %vm135 = vcmask 1041408
  %v138 = vsel %vm135, %v39, %v103
  %vm139 = vcmask 1043458
  %v140 = vsel %vm139, %v39, %v103
  %v142 = vrot.slane %v140, 2
  %v145 = vsel %vm135, %v40, %v104
  %v146 = vsel %vm139, %v40, %v104
  %v148 = vrot.slane %v146, 2
  %v151 = vsel %vm135, %v41, %v105
  %v152 = vsel %vm139, %v41, %v105
  %v154 = vrot.slane %v152, 2
  %v157 = vsel %vm135, %v42, %v106
  %v160 = vsel %vm135, %v43, %v107
  %v161 = vsel %vm139, %v43, %v107
  %v163 = vrot.slane %v161, 2
  %v166 = vsel %vm135, %v44, %v108
  %v167 = vsel %vm139, %v44, %v108
  %v169 = vrot.slane %v167, 2
  %v172 = vsel %vm135, %v45, %v109
  %v173 = vsel %vm139, %v45, %v109
  %v175 = vrot.slane %v173, 2
  %v178 = vsel %vm135, %v46, %v110
  %v181 = vsel %vm135, %v47, %v111
  %v182 = vsel %vm139, %v47, %v111
  %v184 = vrot.slane %v182, 2
  %v187 = vsel %vm135, %v48, %v112
  %v188 = vsel %vm139, %v48, %v112
  %v190 = vrot.slane %v188, 2
  %v193 = vsel %vm135, %v49, %v113
  %v194 = vsel %vm139, %v49, %v113
  %v196 = vrot.slane %v194, 2
  %v199 = vsel %vm135, %v50, %v114
  %v202 = vsel %vm135, %v51, %v115
  %v203 = vsel %vm139, %v51, %v115
  %v205 = vrot.slane %v203, 2
  %v208 = vsel %vm135, %v52, %v116
  %v209 = vsel %vm139, %v52, %v116
  %v211 = vrot.slane %v209, 2
  %v214 = vsel %vm135, %v53, %v117
  %v215 = vsel %vm139, %v53, %v117
  %v217 = vrot.slane %v215, 2
  %v220 = vsel %vm135, %v54, %v118
  %v223 = vsel %vm135, %v55, %v119
  %v224 = vsel %vm139, %v55, %v119
  %v226 = vrot.slane %v224, 2
  %v229 = vsel %vm135, %v56, %v120
  %v230 = vsel %vm139, %v56, %v120
  %v232 = vrot.slane %v230, 2
  %v235 = vsel %vm135, %v57, %v121
  %v236 = vsel %vm139, %v57, %v121
  %v238 = vrot.slane %v236, 2
  %v241 = vsel %vm135, %v58, %v122
  %v244 = vsel %vm135, %v59, %v123
  %v245 = vsel %vm139, %v59, %v123
  %v247 = vrot.slane %v245, 2
  %v250 = vsel %vm135, %v60, %v124
  %v251 = vsel %vm139, %v60, %v124
  %v253 = vrot.slane %v251, 2
  %v256 = vsel %vm135, %v61, %v125
  %v257 = vsel %vm139, %v61, %v125
  %v259 = vrot.slane %v257, 2
  %v262 = vsel %vm135, %v62, %v126
  %v265 = vsel %vm135, %v63, %v127
  %v266 = vsel %vm139, %v63, %v127
  %v268 = vrot.slane %v266, 2
  %v271 = vsel %vm135, %v64, %v128
  %v272 = vsel %vm139, %v64, %v128
  %v274 = vrot.slane %v272, 2
  %v277 = vsel %vm135, %v65, %v129
  %v278 = vsel %vm139, %v65, %v129
  %v280 = vrot.slane %v278, 2
  %v283 = vsel %vm135, %v66, %v130
  %v286 = vsel %vm135, %v67, %v131
  %v287 = vsel %vm139, %v67, %v131
  %v289 = vrot.slane %v287, 2
  %v292 = vsel %vm135, %v68, %v132
  %v293 = vsel %vm139, %v68, %v132
  %v295 = vrot.slane %v293, 2
  %v298 = vsel %vm135, %v69, %v133
  %v299 = vsel %vm139, %v69, %v133
  %v301 = vrot.slane %v299, 2
  %v304 = vsel %vm135, %v70, %v134
  %v305 = vld [vmem:[%s1] sm:$0xff]
  %v306 = vld [vmem:[%s1 + $0x8] sm:$0xff]
  %v307 = vld [vmem:[%s1 + $0x10] sm:$0xff]
  %v308 = vld [vmem:[%s1 + $0x18] sm:$0xff]
  %v309 = vld [vmem:[%s1 + $0x20] sm:$0xff]
  %v310 = vld [vmem:[%s1 + $0x28] sm:$0xff]
  %v311 = vld [vmem:[%s1 + $0x30] sm:$0xff]
  %v312 = vld [vmem:[%s1 + $0x38] sm:$0xff]
  %v313 = vld [vmem:[%s1 + $0x40] sm:$0xff]
  %v314 = vld [vmem:[%s1 + $0x48] sm:$0xff]
  %v315 = vld [vmem:[%s1 + $0x50] sm:$0xff]
  %v316 = vld [vmem:[%s1 + $0x58] sm:$0xff]
  %v317 = vld [vmem:[%s1 + $0x60] sm:$0xff]
  %v318 = vld [vmem:[%s1 + $0x68] sm:$0xff]
  %v319 = vld [vmem:[%s1 + $0x70] sm:$0xff]
  %v320 = vld [vmem:[%s1 + $0x78] sm:$0xff]
  %v321 = vsel %vm139, %v42, %v106
  %v323 = vrot.slane %v321, 2
  %v324 = vsel %vm139, %v46, %v110
  %v326 = vrot.slane %v324, 2
  %v327 = vsel %vm139, %v50, %v114
  %v329 = vrot.slane %v327, 2
  %v330 = vsel %vm139, %v54, %v118
  %v332 = vrot.slane %v330, 2
  %v333 = vsel %vm139, %v58, %v122
  %v335 = vrot.slane %v333, 2
  %v336 = vsel %vm139, %v62, %v126
  %v338 = vrot.slane %v336, 2
  %v339 = vsel %vm139, %v66, %v130
  %v341 = vrot.slane %v339, 2
  %v342 = vsel %vm139, %v70, %v134
  %v344 = vrot.slane %v342, 2
  %vm345 = vsmask.f32 1280
  %vm346 = vsmask.f32 3336
  %vm347 = vmor %vm345, %vm346
  %vm348 = vsmask.f32 5392
  %vm349 = vmor %vm347, %vm348
  %vm350 = vsmask.f32 7448
  %vm351 = vmor %vm349, %vm350
  %v352 = vshrl.u32 %v138, 16
  %v354 = vrot.slane %v352, 6
  %v355 = vshll.u32 %v138, 16
  %v357 = vrot.slane %v355, 7
  %v358 = vor.u32 %v354, %v357
  %v359 = vrot.slane %v358, 2
  %v361 = vshll.u32 %v142, 16
  %v363 = vrot.slane %v361, 7
  %v364 = vsel %vm351, %v359, %v363
  %v365 = vshrl.u32 %v142, 16
  %v367 = vrot.slane %v365, 6
  %v368 = vor.u32 %v367, %v363
  %v369 = vrot.slane %v368, 2
  %v370 = vshll.u32 %v145, 16
  %v372 = vrot.slane %v370, 7
  %v373 = vsel %vm351, %v369, %v372
  %v374 = vshrl.u32 %v145, 16
  %v376 = vrot.slane %v374, 6
  %v377 = vor.u32 %v376, %v372
  %v378 = vrot.slane %v377, 2
  %v380 = vshll.u32 %v148, 16
  %v382 = vrot.slane %v380, 7
  %v383 = vsel %vm351, %v378, %v382
  %v384 = vshrl.u32 %v148, 16
  %v386 = vrot.slane %v384, 6
  %v387 = vor.u32 %v386, %v382
  %v388 = vrot.slane %v387, 2
  %v389 = vshll.u32 %v151, 16
  %v391 = vrot.slane %v389, 7
  %v392 = vsel %vm351, %v388, %v391
  %v393 = vshrl.u32 %v151, 16
  %v395 = vrot.slane %v393, 6
  %v396 = vor.u32 %v395, %v391
  %v397 = vrot.slane %v396, 2
  %v399 = vshll.u32 %v154, 16
  %v401 = vrot.slane %v399, 7
  %v402 = vsel %vm351, %v397, %v401
  %v403 = vshrl.u32 %v154, 16
  %v405 = vrot.slane %v403, 6
  %v406 = vor.u32 %v405, %v401
  %v407 = vrot.slane %v406, 2
  %v408 = vshll.u32 %v157, 16
  %v410 = vrot.slane %v408, 7
  %v411 = vsel %vm351, %v407, %v410
  %v412 = vshrl.u32 %v157, 16
  %v414 = vrot.slane %v412, 6
  %v415 = vor.u32 %v414, %v410
  %v416 = vrot.slane %v415, 2
  %v418 = vshll.u32 %v323, 16
  %v420 = vrot.slane %v418, 7
  %v421 = vsel %vm351, %v416, %v420
  %v422 = vshrl.u32 %v160, 16
  %v424 = vrot.slane %v422, 6
  %v425 = vshll.u32 %v160, 16
  %v427 = vrot.slane %v425, 7
  %v428 = vor.u32 %v424, %v427
  %v429 = vrot.slane %v428, 2
  %v431 = vshll.u32 %v163, 16
  %v433 = vrot.slane %v431, 7
  %v434 = vsel %vm351, %v429, %v433
  %v435 = vshrl.u32 %v163, 16
  %v437 = vrot.slane %v435, 6
  %v438 = vor.u32 %v437, %v433
  %v439 = vrot.slane %v438, 2
  %v440 = vshll.u32 %v166, 16
  %v442 = vrot.slane %v440, 7
  %v443 = vsel %vm351, %v439, %v442
  %v444 = vshrl.u32 %v166, 16
  %v446 = vrot.slane %v444, 6
  %v447 = vor.u32 %v446, %v442
  %v448 = vrot.slane %v447, 2
  %v450 = vshll.u32 %v169, 16
  %v452 = vrot.slane %v450, 7
  %v453 = vsel %vm351, %v448, %v452
  %v454 = vshrl.u32 %v169, 16
  %v456 = vrot.slane %v454, 6
  %v457 = vor.u32 %v456, %v452
  %v458 = vrot.slane %v457, 2
  %v459 = vshll.u32 %v172, 16
  %v461 = vrot.slane %v459, 7
  %v462 = vsel %vm351, %v458, %v461
  %v463 = vshrl.u32 %v172, 16
  %v465 = vrot.slane %v463, 6
  %v466 = vor.u32 %v465, %v461
  %v467 = vrot.slane %v466, 2
  %v469 = vshll.u32 %v175, 16
  %v471 = vrot.slane %v469, 7
  %v472 = vsel %vm351, %v467, %v471
  %v473 = vshrl.u32 %v175, 16
  %v475 = vrot.slane %v473, 6
  %v476 = vor.u32 %v475, %v471
  %v477 = vrot.slane %v476, 2
  %v478 = vshll.u32 %v178, 16
  %v480 = vrot.slane %v478, 7
  %v481 = vsel %vm351, %v477, %v480
  %v482 = vshrl.u32 %v178, 16
  %v484 = vrot.slane %v482, 6
  %v485 = vor.u32 %v484, %v480
  %v486 = vrot.slane %v485, 2
  %v488 = vshll.u32 %v326, 16
  %v490 = vrot.slane %v488, 7
  %v491 = vsel %vm351, %v486, %v490
  %v492 = vshrl.u32 %v181, 16
  %v494 = vrot.slane %v492, 6
  %v495 = vshll.u32 %v181, 16
  %v497 = vrot.slane %v495, 7
  %v498 = vor.u32 %v494, %v497
  %v499 = vrot.slane %v498, 2
  %v501 = vshll.u32 %v184, 16
  %v503 = vrot.slane %v501, 7
  %v504 = vsel %vm351, %v499, %v503
  %v505 = vshrl.u32 %v184, 16
  %v507 = vrot.slane %v505, 6
  %v508 = vor.u32 %v507, %v503
  %v509 = vrot.slane %v508, 2
  %v510 = vshll.u32 %v187, 16
  %v512 = vrot.slane %v510, 7
  %v513 = vsel %vm351, %v509, %v512
  %v514 = vshrl.u32 %v187, 16
  %v516 = vrot.slane %v514, 6
  %v517 = vor.u32 %v516, %v512
  %v518 = vrot.slane %v517, 2
  %v520 = vshll.u32 %v190, 16
  %v522 = vrot.slane %v520, 7
  %v523 = vsel %vm351, %v518, %v522
  %v524 = vshrl.u32 %v190, 16
  %v526 = vrot.slane %v524, 6
  %v527 = vor.u32 %v526, %v522
  %v528 = vrot.slane %v527, 2
  %v529 = vshll.u32 %v193, 16
  %v531 = vrot.slane %v529, 7
  %v532 = vsel %vm351, %v528, %v531
  %v533 = vshrl.u32 %v193, 16
  %v535 = vrot.slane %v533, 6
  %v536 = vor.u32 %v535, %v531
  %v537 = vrot.slane %v536, 2
  %v539 = vshll.u32 %v196, 16
  %v541 = vrot.slane %v539, 7
  %v542 = vsel %vm351, %v537, %v541
  %v543 = vshrl.u32 %v196, 16
  %v545 = vrot.slane %v543, 6
  %v546 = vor.u32 %v545, %v541
  %v547 = vrot.slane %v546, 2
  %v548 = vshll.u32 %v199, 16
  %v550 = vrot.slane %v548, 7
  %v551 = vsel %vm351, %v547, %v550
  %v552 = vshrl.u32 %v199, 16
  %v554 = vrot.slane %v552, 6
  %v555 = vor.u32 %v554, %v550
  %v556 = vrot.slane %v555, 2
  %v558 = vshll.u32 %v329, 16
  %v560 = vrot.slane %v558, 7
  %v561 = vsel %vm351, %v556, %v560
  %v562 = vshrl.u32 %v202, 16
  %v564 = vrot.slane %v562, 6
  %v565 = vshll.u32 %v202, 16
  %v567 = vrot.slane %v565, 7
  %v568 = vor.u32 %v564, %v567
  %v569 = vrot.slane %v568, 2
  %v571 = vshll.u32 %v205, 16
  %v573 = vrot.slane %v571, 7
  %v574 = vsel %vm351, %v569, %v573
  %v575 = vshrl.u32 %v205, 16
  %v577 = vrot.slane %v575, 6
  %v578 = vor.u32 %v577, %v573
  %v579 = vrot.slane %v578, 2
  %v580 = vshll.u32 %v208, 16
  %v582 = vrot.slane %v580, 7
  %v583 = vsel %vm351, %v579, %v582
  %v584 = vshrl.u32 %v208, 16
  %v586 = vrot.slane %v584, 6
  %v587 = vor.u32 %v586, %v582
  %v588 = vrot.slane %v587, 2
  %v590 = vshll.u32 %v211, 16
  %v592 = vrot.slane %v590, 7
  %v593 = vsel %vm351, %v588, %v592
  %v594 = vshrl.u32 %v211, 16
  %v596 = vrot.slane %v594, 6
  %v597 = vor.u32 %v596, %v592
  %v598 = vrot.slane %v597, 2
  %v599 = vshll.u32 %v214, 16
  %v601 = vrot.slane %v599, 7
  %v602 = vsel %vm351, %v598, %v601
  %v603 = vshrl.u32 %v214, 16
  %v605 = vrot.slane %v603, 6
  %v606 = vor.u32 %v605, %v601
  %v607 = vrot.slane %v606, 2
  %v609 = vshll.u32 %v217, 16
  %v611 = vrot.slane %v609, 7
  %v612 = vsel %vm351, %v607, %v611
  %v613 = vshrl.u32 %v217, 16
  %v615 = vrot.slane %v613, 6
  %v616 = vor.u32 %v615, %v611
  %v617 = vrot.slane %v616, 2
  %v618 = vshll.u32 %v220, 16
  %v620 = vrot.slane %v618, 7
  %v621 = vsel %vm351, %v617, %v620
  %v622 = vshrl.u32 %v220, 16
  %v624 = vrot.slane %v622, 6
  %v625 = vor.u32 %v624, %v620
  %v626 = vrot.slane %v625, 2
  %v628 = vshll.u32 %v332, 16
  %v630 = vrot.slane %v628, 7
  %v631 = vsel %vm351, %v626, %v630
  %v632 = vshrl.u32 %v223, 16
  %v634 = vrot.slane %v632, 6
  %v635 = vshll.u32 %v223, 16
  %v637 = vrot.slane %v635, 7
  %v638 = vor.u32 %v634, %v637
  %v639 = vrot.slane %v638, 2
  %v641 = vshll.u32 %v226, 16
  %v643 = vrot.slane %v641, 7
  %v644 = vsel %vm351, %v639, %v643
  %v645 = vshrl.u32 %v226, 16
  %v647 = vrot.slane %v645, 6
  %v648 = vor.u32 %v647, %v643
  %v649 = vrot.slane %v648, 2
  %v650 = vshll.u32 %v229, 16
  %v652 = vrot.slane %v650, 7
  %v653 = vsel %vm351, %v649, %v652
  %v654 = vshrl.u32 %v229, 16
  %v656 = vrot.slane %v654, 6
  %v657 = vor.u32 %v656, %v652
  %v658 = vrot.slane %v657, 2
  %v660 = vshll.u32 %v232, 16
  %v662 = vrot.slane %v660, 7
  %v663 = vsel %vm351, %v658, %v662
  %v664 = vshrl.u32 %v232, 16
  %v666 = vrot.slane %v664, 6
  %v667 = vor.u32 %v666, %v662
  %v668 = vrot.slane %v667, 2
  %v669 = vshll.u32 %v235, 16
  %v671 = vrot.slane %v669, 7
  %v672 = vsel %vm351, %v668, %v671
  %v673 = vshrl.u32 %v235, 16
  %v675 = vrot.slane %v673, 6
  %v676 = vor.u32 %v675, %v671
  %v677 = vrot.slane %v676, 2
  %v679 = vshll.u32 %v238, 16
  %v681 = vrot.slane %v679, 7
  %v682 = vsel %vm351, %v677, %v681
  %v683 = vshrl.u32 %v238, 16
  %v685 = vrot.slane %v683, 6
  %v686 = vor.u32 %v685, %v681
  %v687 = vrot.slane %v686, 2
  %v688 = vshll.u32 %v241, 16
  %v690 = vrot.slane %v688, 7
  %v691 = vsel %vm351, %v687, %v690
  %v692 = vshrl.u32 %v241, 16
  %v694 = vrot.slane %v692, 6
  %v695 = vor.u32 %v694, %v690
  %v696 = vrot.slane %v695, 2
  %v698 = vshll.u32 %v335, 16
  %v700 = vrot.slane %v698, 7
  %v701 = vsel %vm351, %v696, %v700
  %v702 = vshrl.u32 %v244, 16
  %v704 = vrot.slane %v702, 6
  %v705 = vshll.u32 %v244, 16
  %v707 = vrot.slane %v705, 7
  %v708 = vor.u32 %v704, %v707
  %v709 = vrot.slane %v708, 2
  %v711 = vshll.u32 %v247, 16
  %v713 = vrot.slane %v711, 7
  %v714 = vsel %vm351, %v709, %v713
  %v715 = vshrl.u32 %v247, 16
  %v717 = vrot.slane %v715, 6
  %v718 = vor.u32 %v717, %v713
  %v719 = vrot.slane %v718, 2
  %v720 = vshll.u32 %v250, 16
  %v722 = vrot.slane %v720, 7
  %v723 = vsel %vm351, %v719, %v722
  %v724 = vshrl.u32 %v250, 16
  %v726 = vrot.slane %v724, 6
  %v727 = vor.u32 %v726, %v722
  %v728 = vrot.slane %v727, 2
  %v730 = vshll.u32 %v253, 16
  %v732 = vrot.slane %v730, 7
  %v733 = vsel %vm351, %v728, %v732
  %v734 = vshrl.u32 %v253, 16
  %v736 = vrot.slane %v734, 6
  %v737 = vor.u32 %v736, %v732
  %v738 = vrot.slane %v737, 2
  %v739 = vshll.u32 %v256, 16
  %v741 = vrot.slane %v739, 7
  %v742 = vsel %vm351, %v738, %v741
  %v743 = vshrl.u32 %v256, 16
  %v745 = vrot.slane %v743, 6
  %v746 = vor.u32 %v745, %v741
  %v747 = vrot.slane %v746, 2
  %v749 = vshll.u32 %v259, 16
  %v751 = vrot.slane %v749, 7
  %v752 = vsel %vm351, %v747, %v751
  %v753 = vshrl.u32 %v259, 16
  %v755 = vrot.slane %v753, 6
  %v756 = vor.u32 %v755, %v751
  %v757 = vrot.slane %v756, 2
  %v758 = vshll.u32 %v262, 16
  %v760 = vrot.slane %v758, 7
  %v761 = vsel %vm351, %v757, %v760
  %v762 = vshrl.u32 %v262, 16
  %v764 = vrot.slane %v762, 6
  %v765 = vor.u32 %v764, %v760
  %v766 = vrot.slane %v765, 2
  %v768 = vshll.u32 %v338, 16
  %v770 = vrot.slane %v768, 7
  %v771 = vsel %vm351, %v766, %v770
  %v772 = vshrl.u32 %v265, 16
  %v774 = vrot.slane %v772, 6
  %v775 = vshll.u32 %v265, 16
  %v777 = vrot.slane %v775, 7
  %v778 = vor.u32 %v774, %v777
  %v779 = vrot.slane %v778, 2
  %v781 = vshll.u32 %v268, 16
  %v783 = vrot.slane %v781, 7
  %v784 = vsel %vm351, %v779, %v783
  %v785 = vshrl.u32 %v268, 16
  %v787 = vrot.slane %v785, 6
  %v788 = vor.u32 %v787, %v783
  %v789 = vrot.slane %v788, 2
  %v790 = vshll.u32 %v271, 16
  %v792 = vrot.slane %v790, 7
  %v793 = vsel %vm351, %v789, %v792
  %v794 = vshrl.u32 %v271, 16
  %v796 = vrot.slane %v794, 6
  %v797 = vor.u32 %v796, %v792
  %v798 = vrot.slane %v797, 2
  %v800 = vshll.u32 %v274, 16
  %v802 = vrot.slane %v800, 7
  %v803 = vsel %vm351, %v798, %v802
  %v804 = vshrl.u32 %v274, 16
  %v806 = vrot.slane %v804, 6
  %v807 = vor.u32 %v806, %v802
  %v808 = vrot.slane %v807, 2
  %v809 = vshll.u32 %v277, 16
  %v811 = vrot.slane %v809, 7
  %v812 = vsel %vm351, %v808, %v811
  %v813 = vshrl.u32 %v277, 16
  %v815 = vrot.slane %v813, 6
  %v816 = vor.u32 %v815, %v811
  %v817 = vrot.slane %v816, 2
  %v819 = vshll.u32 %v280, 16
  %v821 = vrot.slane %v819, 7
  %v822 = vsel %vm351, %v817, %v821
  %v823 = vshrl.u32 %v280, 16
  %v825 = vrot.slane %v823, 6
  %v826 = vor.u32 %v825, %v821
  %v827 = vrot.slane %v826, 2
  %v828 = vshll.u32 %v283, 16
  %v830 = vrot.slane %v828, 7
  %v831 = vsel %vm351, %v827, %v830
  %v832 = vshrl.u32 %v283, 16
  %v834 = vrot.slane %v832, 6
  %v835 = vor.u32 %v834, %v830
  %v836 = vrot.slane %v835, 2
  %v838 = vshll.u32 %v341, 16
  %v840 = vrot.slane %v838, 7
  %v841 = vsel %vm351, %v836, %v840
  %v842 = vshrl.u32 %v286, 16
  %v844 = vrot.slane %v842, 6
  %v845 = vshll.u32 %v286, 16
  %v847 = vrot.slane %v845, 7
  %v848 = vor.u32 %v844, %v847
  %v849 = vrot.slane %v848, 2
  %v851 = vshll.u32 %v289, 16
  %v853 = vrot.slane %v851, 7
  %v854 = vsel %vm351, %v849, %v853
  %v855 = vshrl.u32 %v289, 16
  %v857 = vrot.slane %v855, 6
  %v858 = vor.u32 %v857, %v853
  %v859 = vrot.slane %v858, 2
  %v860 = vshll.u32 %v292, 16
  %v862 = vrot.slane %v860, 7
  %v863 = vsel %vm351, %v859, %v862
  %v864 = vshrl.u32 %v292, 16
  %v866 = vrot.slane %v864, 6
  %v867 = vor.u32 %v866, %v862
  %v868 = vrot.slane %v867, 2
  %v870 = vshll.u32 %v295, 16
  %v872 = vrot.slane %v870, 7
  %v873 = vsel %vm351, %v868, %v872
  %v874 = vshrl.u32 %v295, 16
  %v876 = vrot.slane %v874, 6
  %v877 = vor.u32 %v876, %v872
  %v878 = vrot.slane %v877, 2
  %v879 = vshll.u32 %v298, 16
  %v881 = vrot.slane %v879, 7
  %v882 = vsel %vm351, %v878, %v881
  %v883 = vshrl.u32 %v298, 16
  %v885 = vrot.slane %v883, 6
  %v886 = vor.u32 %v885, %v881
  %v887 = vrot.slane %v886, 2
  %v889 = vshll.u32 %v301, 16
  %v891 = vrot.slane %v889, 7
  %v892 = vsel %vm351, %v887, %v891
  %v893 = vshrl.u32 %v301, 16
  %v895 = vrot.slane %v893, 6
  %v896 = vor.u32 %v895, %v891
  %v897 = vrot.slane %v896, 2
  %v898 = vshll.u32 %v304, 16
  %v900 = vrot.slane %v898, 7
  %v901 = vsel %vm351, %v897, %v900
  %v902 = vshrl.u32 %v304, 16
  %v904 = vrot.slane %v902, 6
  %v905 = vor.u32 %v904, %v900
  %v906 = vrot.slane %v905, 2
  %v908 = vshll.u32 %v344, 16
  %v910 = vrot.slane %v908, 7
  %v911 = vsel %vm351, %v906, %v910
  %s912 = scalar_lea.vmem %s1, 128
  %v913 = vld [vmem:[%s912] sm:$0xff]
  %v914 = vld [vmem:[%s912 + $0x8] sm:$0xff]
  %v915 = vld [vmem:[%s912 + $0x10] sm:$0xff]
  %v916 = vld [vmem:[%s912 + $0x18] sm:$0xff]
  %v917 = vld [vmem:[%s912 + $0x20] sm:$0xff]
  %v918 = vld [vmem:[%s912 + $0x28] sm:$0xff]
  %v919 = vld [vmem:[%s912 + $0x30] sm:$0xff]
  %v920 = vld [vmem:[%s912 + $0x38] sm:$0xff]
  %v921 = vld [vmem:[%s912 + $0x40] sm:$0xff]
  %v922 = vld [vmem:[%s912 + $0x48] sm:$0xff]
  %v923 = vld [vmem:[%s912 + $0x50] sm:$0xff]
  %v924 = vld [vmem:[%s912 + $0x58] sm:$0xff]
  %v925 = vld [vmem:[%s912 + $0x60] sm:$0xff]
  %v926 = vld [vmem:[%s912 + $0x68] sm:$0xff]
  %v927 = vld [vmem:[%s912 + $0x70] sm:$0xff]
  %v928 = vld [vmem:[%s912 + $0x78] sm:$0xff]
  %930 = vst [vmem:[#allocation1] ss:$4 sm:$0xff] %v364
  %s932 = scalar_lea.vmem [#allocation1], 1
  %933 = vst [vmem:[%s932] ss:$4 sm:$0xff] %v373
  %s935 = scalar_lea.vmem [#allocation1], 2
  %936 = vst [vmem:[%s935] ss:$4 sm:$0xff] %v383
  %s938 = scalar_lea.vmem [#allocation1], 3
  %939 = vst [vmem:[%s938] ss:$4 sm:$0xff] %v392
  %s941 = scalar_lea.vmem [#allocation1], 32
  %942 = vst [vmem:[%s941] ss:$4 sm:$0xff] %v402
  %s944 = scalar_lea.vmem [#allocation1], 33
  %945 = vst [vmem:[%s944] ss:$4 sm:$0xff] %v411
  %s947 = scalar_lea.vmem [#allocation1], 34
  %948 = vst [vmem:[%s947] ss:$4 sm:$0xff] %v421
  %s950 = scalar_lea.vmem [#allocation1], 35
  %951 = vst [vmem:[%s950] ss:$4 sm:$0xff] %v434
  %v952 = vld.sshfl [vmem:[#allocation1] sm:$0xff pattern:$0x73625140]
  %v953 = vld.sshfl [vmem:[#allocation1 + $0x20] sm:$0xff pattern:$0x73625140]
  %955 = vst [vmem:[#allocation1] ss:$4 sm:$0xff] %v443
  %957 = vst [vmem:[%s932] ss:$4 sm:$0xff] %v453
  %959 = vst [vmem:[%s935] ss:$4 sm:$0xff] %v462
  %961 = vst [vmem:[%s938] ss:$4 sm:$0xff] %v472
  %963 = vst [vmem:[%s941] ss:$4 sm:$0xff] %v481
  %965 = vst [vmem:[%s944] ss:$4 sm:$0xff] %v491
  %967 = vst [vmem:[%s947] ss:$4 sm:$0xff] %v504
  %969 = vst [vmem:[%s950] ss:$4 sm:$0xff] %v513
  %v970 = vld.sshfl [vmem:[#allocation1] sm:$0xff pattern:$0x73625140]
  %v971 = vld.sshfl [vmem:[#allocation1 + $0x20] sm:$0xff pattern:$0x73625140]
  %973 = vst [vmem:[#allocation1] ss:$4 sm:$0xff] %v523
  %975 = vst [vmem:[%s932] ss:$4 sm:$0xff] %v532
  %977 = vst [vmem:[%s935] ss:$4 sm:$0xff] %v542
  %979 = vst [vmem:[%s938] ss:$4 sm:$0xff] %v551
  %981 = vst [vmem:[%s941] ss:$4 sm:$0xff] %v561
  %983 = vst [vmem:[%s944] ss:$4 sm:$0xff] %v574
  %985 = vst [vmem:[%s947] ss:$4 sm:$0xff] %v583
  %987 = vst [vmem:[%s950] ss:$4 sm:$0xff] %v593
  %v988 = vld.sshfl [vmem:[#allocation1] sm:$0xff pattern:$0x73625140]
  %v989 = vld.sshfl [vmem:[#allocation1 + $0x20] sm:$0xff pattern:$0x73625140]
  %991 = vst [vmem:[#allocation1] ss:$4 sm:$0xff] %v602
  %993 = vst [vmem:[%s932] ss:$4 sm:$0xff] %v612
  %995 = vst [vmem:[%s935] ss:$4 sm:$0xff] %v621
  %997 = vst [vmem:[%s938] ss:$4 sm:$0xff] %v631
  %999 = vst [vmem:[%s941] ss:$4 sm:$0xff] %v644
  %1001 = vst [vmem:[%s944] ss:$4 sm:$0xff] %v653
  %1003 = vst [vmem:[%s947] ss:$4 sm:$0xff] %v663
  %1005 = vst [vmem:[%s950] ss:$4 sm:$0xff] %v672
  %v1006 = vld.sshfl [vmem:[#allocation1] sm:$0xff pattern:$0x73625140]
  %v1007 = vld.sshfl [vmem:[#allocation1 + $0x20] sm:$0xff pattern:$0x73625140]
  %1009 = vst [vmem:[#allocation1] ss:$4 sm:$0xff] %v682
  %1011 = vst [vmem:[%s932] ss:$4 sm:$0xff] %v691
  %1013 = vst [vmem:[%s935] ss:$4 sm:$0xff] %v701
  %1015 = vst [vmem:[%s938] ss:$4 sm:$0xff] %v714
  %1017 = vst [vmem:[%s941] ss:$4 sm:$0xff] %v723
  %1019 = vst [vmem:[%s944] ss:$4 sm:$0xff] %v733
  %1021 = vst [vmem:[%s947] ss:$4 sm:$0xff] %v742
  %1023 = vst [vmem:[%s950] ss:$4 sm:$0xff] %v752
  %v1024 = vld.sshfl [vmem:[#allocation1] sm:$0xff pattern:$0x73625140]
  %v1025 = vld.sshfl [vmem:[#allocation1 + $0x20] sm:$0xff pattern:$0x73625140]
  %1027 = vst [vmem:[#allocation1] ss:$4 sm:$0xff] %v761
  %1029 = vst [vmem:[%s932] ss:$4 sm:$0xff] %v771
  %1031 = vst [vmem:[%s935] ss:$4 sm:$0xff] %v784
  %1033 = vst [vmem:[%s938] ss:$4 sm:$0xff] %v793
  %1035 = vst [vmem:[%s941] ss:$4 sm:$0xff] %v803
  %1037 = vst [vmem:[%s944] ss:$4 sm:$0xff] %v812
  %1039 = vst [vmem:[%s947] ss:$4 sm:$0xff] %v822
  %1041 = vst [vmem:[%s950] ss:$4 sm:$0xff] %v831
  %v1042 = vld.sshfl [vmem:[#allocation1] sm:$0xff pattern:$0x73625140]
  %v1043 = vld.sshfl [vmem:[#allocation1 + $0x20] sm:$0xff pattern:$0x73625140]
  %1045 = vst [vmem:[#allocation1] ss:$4 sm:$0xff] %v841
  %1047 = vst [vmem:[%s932] ss:$4 sm:$0xff] %v854
  %1049 = vst [vmem:[%s935] ss:$4 sm:$0xff] %v863
  %1051 = vst [vmem:[%s938] ss:$4 sm:$0xff] %v873
  %1053 = vst [vmem:[%s941] ss:$4 sm:$0xff] %v882
  %1055 = vst [vmem:[%s944] ss:$4 sm:$0xff] %v892
  %1057 = vst [vmem:[%s947] ss:$4 sm:$0xff] %v901
  %1059 = vst [vmem:[%s950] ss:$4 sm:$0xff] %v911
  %v1060 = vld.sshfl [vmem:[#allocation1] sm:$0xff pattern:$0x73625140]
  %v1061 = vld.sshfl [vmem:[#allocation1 + $0x20] sm:$0xff pattern:$0x73625140]
  %v1092 = vunpack.c.l.b16 %v913
  %v1093 = vunpack.c.h.b16 %v913
  %v1094 = vunpack.c.l.b16 %v914
  %v1095 = vunpack.c.h.b16 %v914
  %v1096 = vunpack.c.l.b16 %v915
  %v1097 = vunpack.c.h.b16 %v915
  %v1098 = vunpack.c.l.b16 %v916
  %v1099 = vunpack.c.h.b16 %v916
  %v1100 = vunpack.c.l.b16 %v917
  %v1101 = vunpack.c.h.b16 %v917
  %v1102 = vunpack.c.l.b16 %v918
  %v1103 = vunpack.c.h.b16 %v918
  %v1104 = vunpack.c.l.b16 %v919
  %v1105 = vunpack.c.h.b16 %v919
  %v1106 = vunpack.c.l.b16 %v920
  %v1107 = vunpack.c.h.b16 %v920
  %v1108 = vunpack.c.l.b16 %v921
  %v1109 = vunpack.c.h.b16 %v921
  %v1110 = vunpack.c.l.b16 %v922
  %v1111 = vunpack.c.h.b16 %v922
  %v1112 = vunpack.c.l.b16 %v923
  %v1113 = vunpack.c.h.b16 %v923
  %v1114 = vunpack.c.l.b16 %v924
  %v1115 = vunpack.c.h.b16 %v924
  %v1116 = vunpack.c.l.b16 %v925
  %v1117 = vunpack.c.h.b16 %v925
  %v1118 = vunpack.c.l.b16 %v926
  %v1119 = vunpack.c.h.b16 %v926
  %v1120 = vunpack.c.l.b16 %v927
  %v1121 = vunpack.c.h.b16 %v927
  %v1122 = vunpack.c.l.b16 %v928
  %v1123 = vunpack.c.h.b16 %v928
  %v1124 = vpack.c.b16 %v1094, %v1092
  %v1125 = vpack.c.b16 %v1095, %v1093
  %v1126 = vpack.c.b16 %v1098, %v1096
  %v1127 = vpack.c.b16 %v1099, %v1097
  %v1128 = vpack.c.b16 %v1102, %v1100
  %v1129 = vpack.c.b16 %v1103, %v1101
  %v1130 = vpack.c.b16 %v1106, %v1104
  %v1131 = vpack.c.b16 %v1107, %v1105
  %v1132 = vpack.c.b16 %v1110, %v1108
  %v1133 = vpack.c.b16 %v1111, %v1109
  %v1134 = vpack.c.b16 %v1114, %v1112
  %v1135 = vpack.c.b16 %v1115, %v1113
  %v1136 = vpack.c.b16 %v1118, %v1116
  %v1137 = vpack.c.b16 %v1119, %v1117
  %v1138 = vpack.c.b16 %v1122, %v1120
  %v1139 = vpack.c.b16 %v1123, %v1121
  %1156 = vmatpush.bf16.msra.mxu0 %v1138
  %1157 = vmatpush.bf16.msra.mxu0 %v1136
  %1158 = vmatpush.bf16.msra.mxu0 %v1134
  %1159 = vmatpush.bf16.msra.mxu0 %v1132
  %1160 = vmatpush.bf16.msra.mxu0 %v1130
  %1161 = vmatpush.bf16.msra.mxu0 %v1128
  %1162 = vmatpush.bf16.msra.mxu0 %v1126
  %1163 = vmatpush.bf16.msra.mxu0 %v1124
  %1164 = vmatmul.bf16.gmra.mxu0 %v952
  %v1165 = vpop.f32.mrf.mxu0
  %v1166 = vadd.f32 0.0, %v1165
  %v1167 = vpop.f32.mrf.mxu0
  %v1168 = vadd.f32 0.0, %v1167
  %1169 = vmatmul.bf16.gmra.mxu0 %v953
  %v1170 = vpop.f32.mrf.mxu0
  %v1171 = vadd.f32 0.0, %v1170
  %v1172 = vpop.f32.mrf.mxu0
  %v1173 = vadd.f32 0.0, %v1172
  %1174 = vmatmul.bf16.gmra.mxu0 %v970
  %v1175 = vpop.f32.mrf.mxu0
  %v1176 = vadd.f32 0.0, %v1175
  %v1177 = vpop.f32.mrf.mxu0
  %v1178 = vadd.f32 0.0, %v1177
  %1179 = vmatmul.bf16.gmra.mxu0 %v971
  %v1180 = vpop.f32.mrf.mxu0
  %v1181 = vadd.f32 0.0, %v1180
  %v1182 = vpop.f32.mrf.mxu0
  %v1183 = vadd.f32 0.0, %v1182
  %1184 = vmatmul.bf16.gmra.mxu0 %v988
  %v1185 = vpop.f32.mrf.mxu0
  %v1186 = vadd.f32 0.0, %v1185
  %v1187 = vpop.f32.mrf.mxu0
  %v1188 = vadd.f32 0.0, %v1187
  %1189 = vmatmul.bf16.gmra.mxu0 %v989
  %v1190 = vpop.f32.mrf.mxu0
  %v1191 = vadd.f32 0.0, %v1190
  %v1192 = vpop.f32.mrf.mxu0
  %v1193 = vadd.f32 0.0, %v1192
  %1194 = vmatmul.bf16.gmra.mxu0 %v1006
  %v1195 = vpop.f32.mrf.mxu0
  %v1196 = vadd.f32 0.0, %v1195
  %v1197 = vpop.f32.mrf.mxu0
  %v1198 = vadd.f32 0.0, %v1197
  %1199 = vmatmul.bf16.gmra.mxu0 %v1007
  %v1200 = vpop.f32.mrf.mxu0
  %v1201 = vadd.f32 0.0, %v1200
  %v1202 = vpop.f32.mrf.mxu0
  %v1203 = vadd.f32 0.0, %v1202
  %1204 = vmatmul.bf16.gmra.mxu0 %v1024
  %v1205 = vpop.f32.mrf.mxu0
  %v1206 = vadd.f32 0.0, %v1205
  %v1207 = vpop.f32.mrf.mxu0
  %v1208 = vadd.f32 0.0, %v1207
  %1209 = vmatmul.bf16.gmra.mxu0 %v1025
  %v1210 = vpop.f32.mrf.mxu0
  %v1211 = vadd.f32 0.0, %v1210
  %v1212 = vpop.f32.mrf.mxu0
  %v1213 = vadd.f32 0.0, %v1212
  %1214 = vmatmul.bf16.gmra.mxu0 %v1042
  %v1215 = vpop.f32.mrf.mxu0
  %v1216 = vadd.f32 0.0, %v1215
  %v1217 = vpop.f32.mrf.mxu0
  %v1218 = vadd.f32 0.0, %v1217
  %1219 = vmatmul.bf16.gmra.mxu0 %v1043
  %v1220 = vpop.f32.mrf.mxu0
  %v1221 = vadd.f32 0.0, %v1220
  %v1222 = vpop.f32.mrf.mxu0
  %v1223 = vadd.f32 0.0, %v1222
  %1224 = vmatmul.bf16.gmra.mxu0 %v1060
  %v1225 = vpop.f32.mrf.mxu0
  %v1226 = vadd.f32 0.0, %v1225
  %v1227 = vpop.f32.mrf.mxu0
  %v1228 = vadd.f32 0.0, %v1227
  %1229 = vmatmul.bf16.gmra.mxu0 %v1061
  %v1230 = vpop.f32.mrf.mxu0
  %v1231 = vadd.f32 0.0, %v1230
  %v1232 = vpop.f32.mrf.mxu0
  %v1233 = vadd.f32 0.0, %v1232
  %1234 = vdwg.mxu0
  %1235 = vmatpush.bf16.msra.mxu0 %v1139
  %1236 = vmatpush.bf16.msra.mxu0 %v1137
  %1237 = vmatpush.bf16.msra.mxu0 %v1135
  %1238 = vmatpush.bf16.msra.mxu0 %v1133
  %1239 = vmatpush.bf16.msra.mxu0 %v1131
  %1240 = vmatpush.bf16.msra.mxu0 %v1129
  %1241 = vmatpush.bf16.msra.mxu0 %v1127
  %1242 = vmatpush.bf16.msra.mxu0 %v1125
  %1243 = vmatmul.bf16.gmra.mxu0 %v952
  %v1244 = vpop.f32.mrf.mxu0
  %v1245 = vadd.f32 0.0, %v1244
  %v1246 = vpop.f32.mrf.mxu0
  %v1247 = vadd.f32 0.0, %v1246
  %1248 = vmatmul.bf16.gmra.mxu0 %v953
  %v1249 = vpop.f32.mrf.mxu0
  %v1250 = vadd.f32 0.0, %v1249
  %v1251 = vpop.f32.mrf.mxu0
  %v1252 = vadd.f32 0.0, %v1251
  %1253 = vmatmul.bf16.gmra.mxu0 %v970
  %v1254 = vpop.f32.mrf.mxu0
  %v1255 = vadd.f32 0.0, %v1254
  %v1256 = vpop.f32.mrf.mxu0
  %v1257 = vadd.f32 0.0, %v1256
  %1258 = vmatmul.bf16.gmra.mxu0 %v971
  %v1259 = vpop.f32.mrf.mxu0
  %v1260 = vadd.f32 0.0, %v1259
  %v1261 = vpop.f32.mrf.mxu0
  %v1262 = vadd.f32 0.0, %v1261
  %1263 = vmatmul.bf16.gmra.mxu0 %v988
  %v1264 = vpop.f32.mrf.mxu0
  %v1265 = vadd.f32 0.0, %v1264
  %v1266 = vpop.f32.mrf.mxu0
  %v1267 = vadd.f32 0.0, %v1266
  %1268 = vmatmul.bf16.gmra.mxu0 %v989
  %v1269 = vpop.f32.mrf.mxu0
  %v1270 = vadd.f32 0.0, %v1269
  %v1271 = vpop.f32.mrf.mxu0
  %v1272 = vadd.f32 0.0, %v1271
  %1273 = vmatmul.bf16.gmra.mxu0 %v1006
  %v1274 = vpop.f32.mrf.mxu0
  %v1275 = vadd.f32 0.0, %v1274
  %v1276 = vpop.f32.mrf.mxu0
  %v1277 = vadd.f32 0.0, %v1276
  %1278 = vmatmul.bf16.gmra.mxu0 %v1007
  %v1279 = vpop.f32.mrf.mxu0
  %v1280 = vadd.f32 0.0, %v1279
  %v1281 = vpop.f32.mrf.mxu0
  %v1282 = vadd.f32 0.0, %v1281
  %1283 = vmatmul.bf16.gmra.mxu0 %v1024
  %v1284 = vpop.f32.mrf.mxu0
  %v1285 = vadd.f32 0.0, %v1284
  %v1286 = vpop.f32.mrf.mxu0
  %v1287 = vadd.f32 0.0, %v1286
  %1288 = vmatmul.bf16.gmra.mxu0 %v1025
  %v1289 = vpop.f32.mrf.mxu0
  %v1290 = vadd.f32 0.0, %v1289
  %v1291 = vpop.f32.mrf.mxu0
  %v1292 = vadd.f32 0.0, %v1291
  %1293 = vmatmul.bf16.gmra.mxu0 %v1042
  %v1294 = vpop.f32.mrf.mxu0
  %v1295 = vadd.f32 0.0, %v1294
  %v1296 = vpop.f32.mrf.mxu0
  %v1297 = vadd.f32 0.0, %v1296
  %1298 = vmatmul.bf16.gmra.mxu0 %v1043
  %v1299 = vpop.f32.mrf.mxu0
  %v1300 = vadd.f32 0.0, %v1299
  %v1301 = vpop.f32.mrf.mxu0
  %v1302 = vadd.f32 0.0, %v1301
  %1303 = vmatmul.bf16.gmra.mxu0 %v1060
  %v1304 = vpop.f32.mrf.mxu0
  %v1305 = vadd.f32 0.0, %v1304
  %v1306 = vpop.f32.mrf.mxu0
  %v1307 = vadd.f32 0.0, %v1306
  %1308 = vmatmul.bf16.gmra.mxu0 %v1061
  %v1309 = vpop.f32.mrf.mxu0
  %v1310 = vadd.f32 0.0, %v1309
  %v1311 = vpop.f32.mrf.mxu0
  %v1312 = vadd.f32 0.0, %v1311
  %1313 = vdwg.mxu0
  %1314 = vst [vmem:[#allocation1] ss:$4 sm:$0xff] %v138
  %s1315 = scalar_lea.vmem [#allocation1], 1
  %1316 = vst [vmem:[%s1315] ss:$4 sm:$0xff] %v142
  %s1317 = scalar_lea.vmem [#allocation1], 2
  %1318 = vst [vmem:[%s1317] ss:$4 sm:$0xff] %v145
  %s1319 = scalar_lea.vmem [#allocation1], 3
  %1320 = vst [vmem:[%s1319] ss:$4 sm:$0xff] %v148
  %s1321 = scalar_lea.vmem [#allocation1], 32
  %1322 = vst [vmem:[%s1321] ss:$4 sm:$0xff] %v151
  %s1323 = scalar_lea.vmem [#allocation1], 33
  %1324 = vst [vmem:[%s1323] ss:$4 sm:$0xff] %v154
  %s1325 = scalar_lea.vmem [#allocation1], 34
  %1326 = vst [vmem:[%s1325] ss:$4 sm:$0xff] %v157
  %s1327 = scalar_lea.vmem [#allocation1], 35
  %1328 = vst [vmem:[%s1327] ss:$4 sm:$0xff] %v160
  %v1329 = vld.sshfl [vmem:[#allocation1] sm:$0xff pattern:$0x73625140]
  %v1330 = vld.sshfl [vmem:[#allocation1 + $0x20] sm:$0xff pattern:$0x73625140]
  %1331 = vst [vmem:[#allocation1] ss:$4 sm:$0xff] %v163
  %1332 = vst [vmem:[%s1315] ss:$4 sm:$0xff] %v166
  %1333 = vst [vmem:[%s1317] ss:$4 sm:$0xff] %v169
  %1334 = vst [vmem:[%s1319] ss:$4 sm:$0xff] %v172
  %1335 = vst [vmem:[%s1321] ss:$4 sm:$0xff] %v175
  %1336 = vst [vmem:[%s1323] ss:$4 sm:$0xff] %v178
  %1337 = vst [vmem:[%s1325] ss:$4 sm:$0xff] %v181
  %1338 = vst [vmem:[%s1327] ss:$4 sm:$0xff] %v184
  %v1339 = vld.sshfl [vmem:[#allocation1] sm:$0xff pattern:$0x73625140]
  %v1340 = vld.sshfl [vmem:[#allocation1 + $0x20] sm:$0xff pattern:$0x73625140]
  %1341 = vst [vmem:[#allocation1] ss:$4 sm:$0xff] %v187
  %1342 = vst [vmem:[%s1315] ss:$4 sm:$0xff] %v190
  %1343 = vst [vmem:[%s1317] ss:$4 sm:$0xff] %v193
  %1344 = vst [vmem:[%s1319] ss:$4 sm:$0xff] %v196
  %1345 = vst [vmem:[%s1321] ss:$4 sm:$0xff] %v199
  %1346 = vst [vmem:[%s1323] ss:$4 sm:$0xff] %v202
  %1347 = vst [vmem:[%s1325] ss:$4 sm:$0xff] %v205
  %1348 = vst [vmem:[%s1327] ss:$4 sm:$0xff] %v208
  %v1349 = vld.sshfl [vmem:[#allocation1] sm:$0xff pattern:$0x73625140]
  %v1350 = vld.sshfl [vmem:[#allocation1 + $0x20] sm:$0xff pattern:$0x73625140]
  %1351 = vst [vmem:[#allocation1] ss:$4 sm:$0xff] %v211
  %1352 = vst [vmem:[%s1315] ss:$4 sm:$0xff] %v214
  %1353 = vst [vmem:[%s1317] ss:$4 sm:$0xff] %v217
  %1354 = vst [vmem:[%s1319] ss:$4 sm:$0xff] %v220
  %1355 = vst [vmem:[%s1321] ss:$4 sm:$0xff] %v223
  %1356 = vst [vmem:[%s1323] ss:$4 sm:$0xff] %v226
  %1357 = vst [vmem:[%s1325] ss:$4 sm:$0xff] %v229
  %1358 = vst [vmem:[%s1327] ss:$4 sm:$0xff] %v232
  %v1359 = vld.sshfl [vmem:[#allocation1] sm:$0xff pattern:$0x73625140]
  %v1360 = vld.sshfl [vmem:[#allocation1 + $0x20] sm:$0xff pattern:$0x73625140]
  %1361 = vst [vmem:[#allocation1] ss:$4 sm:$0xff] %v235
  %1362 = vst [vmem:[%s1315] ss:$4 sm:$0xff] %v238
  %1363 = vst [vmem:[%s1317] ss:$4 sm:$0xff] %v241
  %1364 = vst [vmem:[%s1319] ss:$4 sm:$0xff] %v244
  %1365 = vst [vmem:[%s1321] ss:$4 sm:$0xff] %v247
  %1366 = vst [vmem:[%s1323] ss:$4 sm:$0xff] %v250
  %1367 = vst [vmem:[%s1325] ss:$4 sm:$0xff] %v253
  %1368 = vst [vmem:[%s1327] ss:$4 sm:$0xff] %v256
  %v1369 = vld.sshfl [vmem:[#allocation1] sm:$0xff pattern:$0x73625140]
  %v1370 = vld.sshfl [vmem:[#allocation1 + $0x20] sm:$0xff pattern:$0x73625140]
  %1371 = vst [vmem:[#allocation1] ss:$4 sm:$0xff] %v259
  %1372 = vst [vmem:[%s1315] ss:$4 sm:$0xff] %v262
  %1373 = vst [vmem:[%s1317] ss:$4 sm:$0xff] %v265
  %1374 = vst [vmem:[%s1319] ss:$4 sm:$0xff] %v268
  %1375 = vst [vmem:[%s1321] ss:$4 sm:$0xff] %v271
  %1376 = vst [vmem:[%s1323] ss:$4 sm:$0xff] %v274
  %1377 = vst [vmem:[%s1325] ss:$4 sm:$0xff] %v277
  %1378 = vst [vmem:[%s1327] ss:$4 sm:$0xff] %v280
  %v1379 = vld.sshfl [vmem:[#allocation1] sm:$0xff pattern:$0x73625140]
  %v1380 = vld.sshfl [vmem:[#allocation1 + $0x20] sm:$0xff pattern:$0x73625140]
  %1381 = vst [vmem:[#allocation1] ss:$4 sm:$0xff] %v283
  %1382 = vst [vmem:[%s1315] ss:$4 sm:$0xff] %v286
  %1383 = vst [vmem:[%s1317] ss:$4 sm:$0xff] %v289
  %1384 = vst [vmem:[%s1319] ss:$4 sm:$0xff] %v292
  %1385 = vst [vmem:[%s1321] ss:$4 sm:$0xff] %v295
  %1386 = vst [vmem:[%s1323] ss:$4 sm:$0xff] %v298
  %1387 = vst [vmem:[%s1325] ss:$4 sm:$0xff] %v301
  %1388 = vst [vmem:[%s1327] ss:$4 sm:$0xff] %v304
  %v1389 = vld.sshfl [vmem:[#allocation1] sm:$0xff pattern:$0x73625140]
  %v1390 = vld.sshfl [vmem:[#allocation1 + $0x20] sm:$0xff pattern:$0x73625140]
  %v1421 = vunpack.c.l.b16 %v305
  %v1422 = vunpack.c.h.b16 %v305
  %v1423 = vunpack.c.l.b16 %v306
  %v1424 = vunpack.c.h.b16 %v306
  %v1425 = vunpack.c.l.b16 %v307
  %v1426 = vunpack.c.h.b16 %v307
  %v1427 = vunpack.c.l.b16 %v308
  %v1428 = vunpack.c.h.b16 %v308
  %v1429 = vunpack.c.l.b16 %v309
  %v1430 = vunpack.c.h.b16 %v309
  %v1431 = vunpack.c.l.b16 %v310
  %v1432 = vunpack.c.h.b16 %v310
  %v1433 = vunpack.c.l.b16 %v311
  %v1434 = vunpack.c.h.b16 %v311
  %v1435 = vunpack.c.l.b16 %v312
  %v1436 = vunpack.c.h.b16 %v312
  %v1437 = vunpack.c.l.b16 %v313
  %v1438 = vunpack.c.h.b16 %v313
  %v1439 = vunpack.c.l.b16 %v314
  %v1440 = vunpack.c.h.b16 %v314
  %v1441 = vunpack.c.l.b16 %v315
  %v1442 = vunpack.c.h.b16 %v315
  %v1443 = vunpack.c.l.b16 %v316
  %v1444 = vunpack.c.h.b16 %v316
  %v1445 = vunpack.c.l.b16 %v317
  %v1446 = vunpack.c.h.b16 %v317
  %v1447 = vunpack.c.l.b16 %v318
  %v1448 = vunpack.c.h.b16 %v318
  %v1449 = vunpack.c.l.b16 %v319
  %v1450 = vunpack.c.h.b16 %v319
  %v1451 = vunpack.c.l.b16 %v320
  %v1452 = vunpack.c.h.b16 %v320
  %v1453 = vpack.c.b16 %v1423, %v1421
  %v1454 = vpack.c.b16 %v1424, %v1422
  %v1455 = vpack.c.b16 %v1427, %v1425
  %v1456 = vpack.c.b16 %v1428, %v1426
  %v1457 = vpack.c.b16 %v1431, %v1429
  %v1458 = vpack.c.b16 %v1432, %v1430
  %v1459 = vpack.c.b16 %v1435, %v1433
  %v1460 = vpack.c.b16 %v1436, %v1434
  %v1461 = vpack.c.b16 %v1439, %v1437
  %v1462 = vpack.c.b16 %v1440, %v1438
  %v1463 = vpack.c.b16 %v1443, %v1441
  %v1464 = vpack.c.b16 %v1444, %v1442
  %v1465 = vpack.c.b16 %v1447, %v1445
  %v1466 = vpack.c.b16 %v1448, %v1446
  %v1467 = vpack.c.b16 %v1451, %v1449
  %v1468 = vpack.c.b16 %v1452, %v1450
  %1485 = vmatpush.bf16.msra.mxu0 %v1467
  %1486 = vmatpush.bf16.msra.mxu0 %v1465
  %1487 = vmatpush.bf16.msra.mxu0 %v1463
  %1488 = vmatpush.bf16.msra.mxu0 %v1461
  %1489 = vmatpush.bf16.msra.mxu0 %v1459
  %1490 = vmatpush.bf16.msra.mxu0 %v1457
  %1491 = vmatpush.bf16.msra.mxu0 %v1455
  %1492 = vmatpush.bf16.msra.mxu0 %v1453
  %1493 = vmatmul.bf16.gmra.mxu0 %v1329
  %v1494 = vpop.f32.mrf.mxu0
  %v1495 = vadd.f32 %v1166, %v1494
  %v1496 = vpop.f32.mrf.mxu0
  %v1497 = vadd.f32 %v1168, %v1496
  %1498 = vmatmul.bf16.gmra.mxu0 %v1330
  %v1499 = vpop.f32.mrf.mxu0
  %v1500 = vadd.f32 %v1171, %v1499
  %v1501 = vpop.f32.mrf.mxu0
  %v1502 = vadd.f32 %v1173, %v1501
  %1503 = vmatmul.bf16.gmra.mxu0 %v1339
  %v1504 = vpop.f32.mrf.mxu0
  %v1505 = vadd.f32 %v1176, %v1504
  %v1506 = vpop.f32.mrf.mxu0
  %v1507 = vadd.f32 %v1178, %v1506
  %1508 = vmatmul.bf16.gmra.mxu0 %v1340
  %v1509 = vpop.f32.mrf.mxu0
  %v1510 = vadd.f32 %v1181, %v1509
  %v1511 = vpop.f32.mrf.mxu0
  %v1512 = vadd.f32 %v1183, %v1511
  %1513 = vmatmul.bf16.gmra.mxu0 %v1349
  %v1514 = vpop.f32.mrf.mxu0
  %v1515 = vadd.f32 %v1186, %v1514
  %v1516 = vpop.f32.mrf.mxu0
  %v1517 = vadd.f32 %v1188, %v1516
  %1518 = vmatmul.bf16.gmra.mxu0 %v1350
  %v1519 = vpop.f32.mrf.mxu0
  %v1520 = vadd.f32 %v1191, %v1519
  %v1521 = vpop.f32.mrf.mxu0
  %v1522 = vadd.f32 %v1193, %v1521
  %1523 = vmatmul.bf16.gmra.mxu0 %v1359
  %v1524 = vpop.f32.mrf.mxu0
  %v1525 = vadd.f32 %v1196, %v1524
  %v1526 = vpop.f32.mrf.mxu0
  %v1527 = vadd.f32 %v1198, %v1526
  %1528 = vmatmul.bf16.gmra.mxu0 %v1360
  %v1529 = vpop.f32.mrf.mxu0
  %v1530 = vadd.f32 %v1201, %v1529
  %v1531 = vpop.f32.mrf.mxu0
  %v1532 = vadd.f32 %v1203, %v1531
  %1533 = vmatmul.bf16.gmra.mxu0 %v1369
  %v1534 = vpop.f32.mrf.mxu0
  %v1535 = vadd.f32 %v1206, %v1534
  %v1536 = vpop.f32.mrf.mxu0
  %v1537 = vadd.f32 %v1208, %v1536
  %1538 = vmatmul.bf16.gmra.mxu0 %v1370
  %v1539 = vpop.f32.mrf.mxu0
  %v1540 = vadd.f32 %v1211, %v1539
  %v1541 = vpop.f32.mrf.mxu0
  %v1542 = vadd.f32 %v1213, %v1541
  %1543 = vmatmul.bf16.gmra.mxu0 %v1379
  %v1544 = vpop.f32.mrf.mxu0
  %v1545 = vadd.f32 %v1216, %v1544
  %v1546 = vpop.f32.mrf.mxu0
  %v1547 = vadd.f32 %v1218, %v1546
  %1548 = vmatmul.bf16.gmra.mxu0 %v1380
  %v1549 = vpop.f32.mrf.mxu0
  %v1550 = vadd.f32 %v1221, %v1549
  %v1551 = vpop.f32.mrf.mxu0
  %v1552 = vadd.f32 %v1223, %v1551
  %1553 = vmatmul.bf16.gmra.mxu0 %v1389
  %v1554 = vpop.f32.mrf.mxu0
  %v1555 = vadd.f32 %v1226, %v1554
  %v1556 = vpop.f32.mrf.mxu0
  %v1557 = vadd.f32 %v1228, %v1556
  %1558 = vmatmul.bf16.gmra.mxu0 %v1390
  %v1559 = vpop.f32.mrf.mxu0
  %v1560 = vadd.f32 %v1231, %v1559
  %v1561 = vpop.f32.mrf.mxu0
  %v1562 = vadd.f32 %v1233, %v1561
  %1563 = vdwg.mxu0
  %1564 = vmatpush.bf16.msra.mxu0 %v1468
  %1565 = vmatpush.bf16.msra.mxu0 %v1466
  %1566 = vmatpush.bf16.msra.mxu0 %v1464
  %1567 = vmatpush.bf16.msra.mxu0 %v1462
  %1568 = vmatpush.bf16.msra.mxu0 %v1460
  %1569 = vmatpush.bf16.msra.mxu0 %v1458
  %1570 = vmatpush.bf16.msra.mxu0 %v1456
  %1571 = vmatpush.bf16.msra.mxu0 %v1454
  %1572 = vmatmul.bf16.gmra.mxu0 %v1329
  %v1573 = vpop.f32.mrf.mxu0
  %v1574 = vadd.f32 %v1245, %v1573
  %v1575 = vpop.f32.mrf.mxu0
  %v1576 = vadd.f32 %v1247, %v1575
  %1577 = vmatmul.bf16.gmra.mxu0 %v1330
  %v1578 = vpop.f32.mrf.mxu0
  %v1579 = vadd.f32 %v1250, %v1578
  %v1580 = vpop.f32.mrf.mxu0
  %v1581 = vadd.f32 %v1252, %v1580
  %1582 = vmatmul.bf16.gmra.mxu0 %v1339
  %v1583 = vpop.f32.mrf.mxu0
  %v1584 = vadd.f32 %v1255, %v1583
  %v1585 = vpop.f32.mrf.mxu0
  %v1586 = vadd.f32 %v1257, %v1585
  %1587 = vmatmul.bf16.gmra.mxu0 %v1340
  %v1588 = vpop.f32.mrf.mxu0
  %v1589 = vadd.f32 %v1260, %v1588
  %v1590 = vpop.f32.mrf.mxu0
  %v1591 = vadd.f32 %v1262, %v1590
  %1592 = vmatmul.bf16.gmra.mxu0 %v1349
  %v1593 = vpop.f32.mrf.mxu0
  %v1594 = vadd.f32 %v1265, %v1593
  %v1595 = vpop.f32.mrf.mxu0
  %v1596 = vadd.f32 %v1267, %v1595
  %1597 = vmatmul.bf16.gmra.mxu0 %v1350
  %v1598 = vpop.f32.mrf.mxu0
  %v1599 = vadd.f32 %v1270, %v1598
  %v1600 = vpop.f32.mrf.mxu0
  %v1601 = vadd.f32 %v1272, %v1600
  %1602 = vmatmul.bf16.gmra.mxu0 %v1359
  %v1603 = vpop.f32.mrf.mxu0
  %v1604 = vadd.f32 %v1275, %v1603
  %v1605 = vpop.f32.mrf.mxu0
  %v1606 = vadd.f32 %v1277, %v1605
  %1607 = vmatmul.bf16.gmra.mxu0 %v1360
  %v1608 = vpop.f32.mrf.mxu0
  %v1609 = vadd.f32 %v1280, %v1608
  %v1610 = vpop.f32.mrf.mxu0
  %v1611 = vadd.f32 %v1282, %v1610
  %1612 = vmatmul.bf16.gmra.mxu0 %v1369
  %v1613 = vpop.f32.mrf.mxu0
  %v1614 = vadd.f32 %v1285, %v1613
  %v1615 = vpop.f32.mrf.mxu0
  %v1616 = vadd.f32 %v1287, %v1615
  %1617 = vmatmul.bf16.gmra.mxu0 %v1370
  %v1618 = vpop.f32.mrf.mxu0
  %v1619 = vadd.f32 %v1290, %v1618
  %v1620 = vpop.f32.mrf.mxu0
  %v1621 = vadd.f32 %v1292, %v1620
  %1622 = vmatmul.bf16.gmra.mxu0 %v1379
  %v1623 = vpop.f32.mrf.mxu0
  %v1624 = vadd.f32 %v1295, %v1623
  %v1625 = vpop.f32.mrf.mxu0
  %v1626 = vadd.f32 %v1297, %v1625
  %1627 = vmatmul.bf16.gmra.mxu0 %v1380
  %v1628 = vpop.f32.mrf.mxu0
  %v1629 = vadd.f32 %v1300, %v1628
  %v1630 = vpop.f32.mrf.mxu0
  %v1631 = vadd.f32 %v1302, %v1630
  %1632 = vmatmul.bf16.gmra.mxu0 %v1389
  %v1633 = vpop.f32.mrf.mxu0
  %v1634 = vadd.f32 %v1305, %v1633
  %v1635 = vpop.f32.mrf.mxu0
  %v1636 = vadd.f32 %v1307, %v1635
  %1637 = vmatmul.bf16.gmra.mxu0 %v1390
  %v1638 = vpop.f32.mrf.mxu0
  %v1639 = vadd.f32 %v1310, %v1638
  %v1640 = vpop.f32.mrf.mxu0
  %v1641 = vadd.f32 %v1312, %v1640
  %1642 = vdwg.mxu0
  %vm1675 = vcmask 1040384
  %vm1676 = vcmask 1042434
  %vm1677 = vmor %vm1675, %vm1676
  %vm1678 = vcmask 1044484
  %vm1679 = vmor %vm1677, %vm1678
  %vm1680 = vcmask 1046534
  %vm1681 = vmor %vm1679, %vm1680
  %v1682 = vrot.slane %v138, 7
  %v1683 = vrot.slane %v1682, 2
  %v1684 = vrot.slane %v142, 7
  %v1685 = vsel %vm1681, %v1683, %v1684
  %v1686 = vrot.slane %v1684, 2
  %v1687 = vrot.slane %v145, 7
  %v1688 = vsel %vm1681, %v1686, %v1687
  %v1689 = vrot.slane %v1687, 2
  %v1690 = vrot.slane %v148, 7
  %v1691 = vsel %vm1681, %v1689, %v1690
  %v1692 = vrot.slane %v1690, 2
  %v1693 = vrot.slane %v151, 7
  %v1694 = vsel %vm1681, %v1692, %v1693
  %v1695 = vrot.slane %v1693, 2
  %v1696 = vrot.slane %v154, 7
  %v1697 = vsel %vm1681, %v1695, %v1696
  %v1698 = vrot.slane %v1696, 2
  %v1699 = vrot.slane %v157, 7
  %v1700 = vsel %vm1681, %v1698, %v1699
  %v1701 = vrot.slane %v1699, 2
  %v1702 = vrot.slane %v323, 7
  %v1703 = vsel %vm1681, %v1701, %v1702
  %v1704 = vrot.slane %v160, 7
  %v1705 = vrot.slane %v1704, 2
  %v1706 = vrot.slane %v163, 7
  %v1707 = vsel %vm1681, %v1705, %v1706
  %v1708 = vrot.slane %v1706, 2
  %v1709 = vrot.slane %v166, 7
  %v1710 = vsel %vm1681, %v1708, %v1709
  %v1711 = vrot.slane %v1709, 2
  %v1712 = vrot.slane %v169, 7
  %v1713 = vsel %vm1681, %v1711, %v1712
  %v1714 = vrot.slane %v1712, 2
  %v1715 = vrot.slane %v172, 7
  %v1716 = vsel %vm1681, %v1714, %v1715
  %v1717 = vrot.slane %v1715, 2
  %v1718 = vrot.slane %v175, 7
  %v1719 = vsel %vm1681, %v1717, %v1718
  %v1720 = vrot.slane %v1718, 2
  %v1721 = vrot.slane %v178, 7
  %v1722 = vsel %vm1681, %v1720, %v1721
  %v1723 = vrot.slane %v1721, 2
  %v1724 = vrot.slane %v326, 7
  %v1725 = vsel %vm1681, %v1723, %v1724
  %v1726 = vrot.slane %v181, 7
  %v1727 = vrot.slane %v1726, 2
  %v1728 = vrot.slane %v184, 7
  %v1729 = vsel %vm1681, %v1727, %v1728
  %v1730 = vrot.slane %v1728, 2
  %v1731 = vrot.slane %v187, 7
  %v1732 = vsel %vm1681, %v1730, %v1731
  %v1733 = vrot.slane %v1731, 2
  %v1734 = vrot.slane %v190, 7
  %v1735 = vsel %vm1681, %v1733, %v1734
  %v1736 = vrot.slane %v1734, 2
  %v1737 = vrot.slane %v193, 7
  %v1738 = vsel %vm1681, %v1736, %v1737
  %v1739 = vrot.slane %v1737, 2
  %v1740 = vrot.slane %v196, 7
  %v1741 = vsel %vm1681, %v1739, %v1740
  %v1742 = vrot.slane %v1740, 2
  %v1743 = vrot.slane %v199, 7
  %v1744 = vsel %vm1681, %v1742, %v1743
  %v1745 = vrot.slane %v1743, 2
  %v1746 = vrot.slane %v329, 7
  %v1747 = vsel %vm1681, %v1745, %v1746
  %v1748 = vrot.slane %v202, 7
  %v1749 = vrot.slane %v1748, 2
  %v1750 = vrot.slane %v205, 7
  %v1751 = vsel %vm1681, %v1749, %v1750
  %v1752 = vrot.slane %v1750, 2
  %v1753 = vrot.slane %v208, 7
  %v1754 = vsel %vm1681, %v1752, %v1753
  %v1755 = vrot.slane %v1753, 2
  %v1756 = vrot.slane %v211, 7
  %v1757 = vsel %vm1681, %v1755, %v1756
  %v1758 = vrot.slane %v1756, 2
  %v1759 = vrot.slane %v214, 7
  %v1760 = vsel %vm1681, %v1758, %v1759
  %v1761 = vrot.slane %v1759, 2
  %v1762 = vrot.slane %v217, 7
  %v1763 = vsel %vm1681, %v1761, %v1762
  %v1764 = vrot.slane %v1762, 2
  %v1765 = vrot.slane %v220, 7
  %v1766 = vsel %vm1681, %v1764, %v1765
  %v1767 = vrot.slane %v1765, 2
  %v1768 = vrot.slane %v332, 7
  %v1769 = vsel %vm1681, %v1767, %v1768
  %v1770 = vrot.slane %v223, 7
  %v1771 = vrot.slane %v1770, 2
  %v1772 = vrot.slane %v226, 7
  %v1773 = vsel %vm1681, %v1771, %v1772
  %v1774 = vrot.slane %v1772, 2
  %v1775 = vrot.slane %v229, 7
  %v1776 = vsel %vm1681, %v1774, %v1775
  %v1777 = vrot.slane %v1775, 2
  %v1778 = vrot.slane %v232, 7
  %v1779 = vsel %vm1681, %v1777, %v1778
  %v1780 = vrot.slane %v1778, 2
  %v1781 = vrot.slane %v235, 7
  %v1782 = vsel %vm1681, %v1780, %v1781
  %v1783 = vrot.slane %v1781, 2
  %v1784 = vrot.slane %v238, 7
  %v1785 = vsel %vm1681, %v1783, %v1784
  %v1786 = vrot.slane %v1784, 2
  %v1787 = vrot.slane %v241, 7
  %v1788 = vsel %vm1681, %v1786, %v1787
  %v1789 = vrot.slane %v1787, 2
  %v1790 = vrot.slane %v335, 7
  %v1791 = vsel %vm1681, %v1789, %v1790
  %v1792 = vrot.slane %v244, 7
  %v1793 = vrot.slane %v1792, 2
  %v1794 = vrot.slane %v247, 7
  %v1795 = vsel %vm1681, %v1793, %v1794
  %v1796 = vrot.slane %v1794, 2
  %v1797 = vrot.slane %v250, 7
  %v1798 = vsel %vm1681, %v1796, %v1797
  %v1799 = vrot.slane %v1797, 2
  %v1800 = vrot.slane %v253, 7
  %v1801 = vsel %vm1681, %v1799, %v1800
  %v1802 = vrot.slane %v1800, 2
  %v1803 = vrot.slane %v256, 7
  %v1804 = vsel %vm1681, %v1802, %v1803
  %v1805 = vrot.slane %v1803, 2
  %v1806 = vrot.slane %v259, 7
  %v1807 = vsel %vm1681, %v1805, %v1806
  %v1808 = vrot.slane %v1806, 2
  %v1809 = vrot.slane %v262, 7
  %v1810 = vsel %vm1681, %v1808, %v1809
  %v1811 = vrot.slane %v1809, 2
  %v1812 = vrot.slane %v338, 7
  %v1813 = vsel %vm1681, %v1811, %v1812
  %v1814 = vrot.slane %v265, 7
  %v1815 = vrot.slane %v1814, 2
  %v1816 = vrot.slane %v268, 7
  %v1817 = vsel %vm1681, %v1815, %v1816
  %v1818 = vrot.slane %v1816, 2
  %v1819 = vrot.slane %v271, 7
  %v1820 = vsel %vm1681, %v1818, %v1819
  %v1821 = vrot.slane %v1819, 2
  %v1822 = vrot.slane %v274, 7
  %v1823 = vsel %vm1681, %v1821, %v1822
  %v1824 = vrot.slane %v1822, 2
  %v1825 = vrot.slane %v277, 7
  %v1826 = vsel %vm1681, %v1824, %v1825
  %v1827 = vrot.slane %v1825, 2
  %v1828 = vrot.slane %v280, 7
  %v1829 = vsel %vm1681, %v1827, %v1828
  %v1830 = vrot.slane %v1828, 2
  %v1831 = vrot.slane %v283, 7
  %v1832 = vsel %vm1681, %v1830, %v1831
  %v1833 = vrot.slane %v1831, 2
  %v1834 = vrot.slane %v341, 7
  %v1835 = vsel %vm1681, %v1833, %v1834
  %v1836 = vrot.slane %v286, 7
  %v1837 = vrot.slane %v1836, 2
  %v1838 = vrot.slane %v289, 7
  %v1839 = vsel %vm1681, %v1837, %v1838
  %v1840 = vrot.slane %v1838, 2
  %v1841 = vrot.slane %v292, 7
  %v1842 = vsel %vm1681, %v1840, %v1841
  %v1843 = vrot.slane %v1841, 2
  %v1844 = vrot.slane %v295, 7
  %v1845 = vsel %vm1681, %v1843, %v1844
  %v1846 = vrot.slane %v1844, 2
  %v1847 = vrot.slane %v298, 7
  %v1848 = vsel %vm1681, %v1846, %v1847
  %v1849 = vrot.slane %v1847, 2
  %v1850 = vrot.slane %v301, 7
  %v1851 = vsel %vm1681, %v1849, %v1850
  %v1852 = vrot.slane %v1850, 2
  %v1853 = vrot.slane %v304, 7
  %v1854 = vsel %vm1681, %v1852, %v1853
  %v1855 = vrot.slane %v1853, 2
  %v1856 = vrot.slane %v344, 7
  %v1857 = vsel %vm1681, %v1855, %v1856
  %s1858 = scalar_lea.vmem %s1, 256
  %v1859 = vld [vmem:[%s1858] sm:$0xff]
  %v1860 = vld [vmem:[%s1858 + $0x8] sm:$0xff]
  %v1861 = vld [vmem:[%s1858 + $0x10] sm:$0xff]
  %v1862 = vld [vmem:[%s1858 + $0x18] sm:$0xff]
  %v1863 = vld [vmem:[%s1858 + $0x20] sm:$0xff]
  %v1864 = vld [vmem:[%s1858 + $0x28] sm:$0xff]
  %v1865 = vld [vmem:[%s1858 + $0x30] sm:$0xff]
  %v1866 = vld [vmem:[%s1858 + $0x38] sm:$0xff]
  %v1867 = vld [vmem:[%s1858 + $0x40] sm:$0xff]
  %v1868 = vld [vmem:[%s1858 + $0x48] sm:$0xff]
  %v1869 = vld [vmem:[%s1858 + $0x50] sm:$0xff]
  %v1870 = vld [vmem:[%s1858 + $0x58] sm:$0xff]
  %v1871 = vld [vmem:[%s1858 + $0x60] sm:$0xff]
  %v1872 = vld [vmem:[%s1858 + $0x68] sm:$0xff]
  %v1873 = vld [vmem:[%s1858 + $0x70] sm:$0xff]
  %v1874 = vld [vmem:[%s1858 + $0x78] sm:$0xff]
  %1876 = vst [vmem:[#allocation1] ss:$4 sm:$0xff] %v1685
  %s1878 = scalar_lea.vmem [#allocation1], 1
  %1879 = vst [vmem:[%s1878] ss:$4 sm:$0xff] %v1688
  %s1881 = scalar_lea.vmem [#allocation1], 2
  %1882 = vst [vmem:[%s1881] ss:$4 sm:$0xff] %v1691
  %s1884 = scalar_lea.vmem [#allocation1], 3
  %1885 = vst [vmem:[%s1884] ss:$4 sm:$0xff] %v1694
  %s1887 = scalar_lea.vmem [#allocation1], 32
  %1888 = vst [vmem:[%s1887] ss:$4 sm:$0xff] %v1697
  %s1890 = scalar_lea.vmem [#allocation1], 33
  %1891 = vst [vmem:[%s1890] ss:$4 sm:$0xff] %v1700
  %s1893 = scalar_lea.vmem [#allocation1], 34
  %1894 = vst [vmem:[%s1893] ss:$4 sm:$0xff] %v1703
  %s1896 = scalar_lea.vmem [#allocation1], 35
  %1897 = vst [vmem:[%s1896] ss:$4 sm:$0xff] %v1707
  %v1898 = vld.sshfl [vmem:[#allocation1] sm:$0xff pattern:$0x73625140]
  %v1899 = vld.sshfl [vmem:[#allocation1 + $0x20] sm:$0xff pattern:$0x73625140]
  %1901 = vst [vmem:[#allocation1] ss:$4 sm:$0xff] %v1710
  %1903 = vst [vmem:[%s1878] ss:$4 sm:$0xff] %v1713
  %1905 = vst [vmem:[%s1881] ss:$4 sm:$0xff] %v1716
  %1907 = vst [vmem:[%s1884] ss:$4 sm:$0xff] %v1719
  %1909 = vst [vmem:[%s1887] ss:$4 sm:$0xff] %v1722
  %1911 = vst [vmem:[%s1890] ss:$4 sm:$0xff] %v1725
  %1913 = vst [vmem:[%s1893] ss:$4 sm:$0xff] %v1729
  %1915 = vst [vmem:[%s1896] ss:$4 sm:$0xff] %v1732
  %v1916 = vld.sshfl [vmem:[#allocation1] sm:$0xff pattern:$0x73625140]
  %v1917 = vld.sshfl [vmem:[#allocation1 + $0x20] sm:$0xff pattern:$0x73625140]
  %1919 = vst [vmem:[#allocation1] ss:$4 sm:$0xff] %v1735
  %1921 = vst [vmem:[%s1878] ss:$4 sm:$0xff] %v1738
  %1923 = vst [vmem:[%s1881] ss:$4 sm:$0xff] %v1741
  %1925 = vst [vmem:[%s1884] ss:$4 sm:$0xff] %v1744
  %1927 = vst [vmem:[%s1887] ss:$4 sm:$0xff] %v1747
  %1929 = vst [vmem:[%s1890] ss:$4 sm:$0xff] %v1751
  %1931 = vst [vmem:[%s1893] ss:$4 sm:$0xff] %v1754
  %1933 = vst [vmem:[%s1896] ss:$4 sm:$0xff] %v1757
  %v1934 = vld.sshfl [vmem:[#allocation1] sm:$0xff pattern:$0x73625140]
  %v1935 = vld.sshfl [vmem:[#allocation1 + $0x20] sm:$0xff pattern:$0x73625140]
  %1937 = vst [vmem:[#allocation1] ss:$4 sm:$0xff] %v1760
  %1939 = vst [vmem:[%s1878] ss:$4 sm:$0xff] %v1763
  %1941 = vst [vmem:[%s1881] ss:$4 sm:$0xff] %v1766
  %1943 = vst [vmem:[%s1884] ss:$4 sm:$0xff] %v1769
  %1945 = vst [vmem:[%s1887] ss:$4 sm:$0xff] %v1773
  %1947 = vst [vmem:[%s1890] ss:$4 sm:$0xff] %v1776
  %1949 = vst [vmem:[%s1893] ss:$4 sm:$0xff] %v1779
  %1951 = vst [vmem:[%s1896] ss:$4 sm:$0xff] %v1782
  %v1952 = vld.sshfl [vmem:[#allocation1] sm:$0xff pattern:$0x73625140]
  %v1953 = vld.sshfl [vmem:[#allocation1 + $0x20] sm:$0xff pattern:$0x73625140]
  %1955 = vst [vmem:[#allocation1] ss:$4 sm:$0xff] %v1785
  %1957 = vst [vmem:[%s1878] ss:$4 sm:$0xff] %v1788
  %1959 = vst [vmem:[%s1881] ss:$4 sm:$0xff] %v1791
  %1961 = vst [vmem:[%s1884] ss:$4 sm:$0xff] %v1795
  %1963 = vst [vmem:[%s1887] ss:$4 sm:$0xff] %v1798
  %1965 = vst [vmem:[%s1890] ss:$4 sm:$0xff] %v1801
  %1967 = vst [vmem:[%s1893] ss:$4 sm:$0xff] %v1804
  %1969 = vst [vmem:[%s1896] ss:$4 sm:$0xff] %v1807
  %v1970 = vld.sshfl [vmem:[#allocation1] sm:$0xff pattern:$0x73625140]
  %v1971 = vld.sshfl [vmem:[#allocation1 + $0x20] sm:$0xff pattern:$0x73625140]
  %1973 = vst [vmem:[#allocation1] ss:$4 sm:$0xff] %v1810
  %1975 = vst [vmem:[%s1878] ss:$4 sm:$0xff] %v1813
  %1977 = vst [vmem:[%s1881] ss:$4 sm:$0xff] %v1817
  %1979 = vst [vmem:[%s1884] ss:$4 sm:$0xff] %v1820
  %1981 = vst [vmem:[%s1887] ss:$4 sm:$0xff] %v1823
  %1983 = vst [vmem:[%s1890] ss:$4 sm:$0xff] %v1826
  %1985 = vst [vmem:[%s1893] ss:$4 sm:$0xff] %v1829
  %1987 = vst [vmem:[%s1896] ss:$4 sm:$0xff] %v1832
  %v1988 = vld.sshfl [vmem:[#allocation1] sm:$0xff pattern:$0x73625140]
  %v1989 = vld.sshfl [vmem:[#allocation1 + $0x20] sm:$0xff pattern:$0x73625140]
  %1991 = vst [vmem:[#allocation1] ss:$4 sm:$0xff] %v1835
  %1993 = vst [vmem:[%s1878] ss:$4 sm:$0xff] %v1839
  %1995 = vst [vmem:[%s1881] ss:$4 sm:$0xff] %v1842
  %1997 = vst [vmem:[%s1884] ss:$4 sm:$0xff] %v1845
  %1999 = vst [vmem:[%s1887] ss:$4 sm:$0xff] %v1848
  %2001 = vst [vmem:[%s1890] ss:$4 sm:$0xff] %v1851
  %2003 = vst [vmem:[%s1893] ss:$4 sm:$0xff] %v1854
  %2005 = vst [vmem:[%s1896] ss:$4 sm:$0xff] %v1857
  %v2006 = vld.sshfl [vmem:[#allocation1] sm:$0xff pattern:$0x73625140]
  %v2007 = vld.sshfl [vmem:[#allocation1 + $0x20] sm:$0xff pattern:$0x73625140]
  %v2038 = vunpack.c.l.b16 %v1859
  %v2039 = vunpack.c.h.b16 %v1859
  %v2040 = vunpack.c.l.b16 %v1860
  %v2041 = vunpack.c.h.b16 %v1860
  %v2042 = vunpack.c.l.b16 %v1861
  %v2043 = vunpack.c.h.b16 %v1861
  %v2044 = vunpack.c.l.b16 %v1862
  %v2045 = vunpack.c.h.b16 %v1862
  %v2046 = vunpack.c.l.b16 %v1863
  %v2047 = vunpack.c.h.b16 %v1863
  %v2048 = vunpack.c.l.b16 %v1864
  %v2049 = vunpack.c.h.b16 %v1864
  %v2050 = vunpack.c.l.b16 %v1865
  %v2051 = vunpack.c.h.b16 %v1865
  %v2052 = vunpack.c.l.b16 %v1866
  %v2053 = vunpack.c.h.b16 %v1866
  %v2054 = vunpack.c.l.b16 %v1867
  %v2055 = vunpack.c.h.b16 %v1867
  %v2056 = vunpack.c.l.b16 %v1868
  %v2057 = vunpack.c.h.b16 %v1868
  %v2058 = vunpack.c.l.b16 %v1869
  %v2059 = vunpack.c.h.b16 %v1869
  %v2060 = vunpack.c.l.b16 %v1870
  %v2061 = vunpack.c.h.b16 %v1870
  %v2062 = vunpack.c.l.b16 %v1871
  %v2063 = vunpack.c.h.b16 %v1871
  %v2064 = vunpack.c.l.b16 %v1872
  %v2065 = vunpack.c.h.b16 %v1872
  %v2066 = vunpack.c.l.b16 %v1873
  %v2067 = vunpack.c.h.b16 %v1873
  %v2068 = vunpack.c.l.b16 %v1874
  %v2069 = vunpack.c.h.b16 %v1874
  %v2070 = vpack.c.b16 %v2040, %v2038
  %v2071 = vpack.c.b16 %v2041, %v2039
  %v2072 = vpack.c.b16 %v2044, %v2042
  %v2073 = vpack.c.b16 %v2045, %v2043
  %v2074 = vpack.c.b16 %v2048, %v2046
  %v2075 = vpack.c.b16 %v2049, %v2047
  %v2076 = vpack.c.b16 %v2052, %v2050
  %v2077 = vpack.c.b16 %v2053, %v2051
  %v2078 = vpack.c.b16 %v2056, %v2054
  %v2079 = vpack.c.b16 %v2057, %v2055
  %v2080 = vpack.c.b16 %v2060, %v2058
  %v2081 = vpack.c.b16 %v2061, %v2059
  %v2082 = vpack.c.b16 %v2064, %v2062
  %v2083 = vpack.c.b16 %v2065, %v2063
  %v2084 = vpack.c.b16 %v2068, %v2066
  %v2085 = vpack.c.b16 %v2069, %v2067
  %2102 = vmatpush.bf16.msra.mxu0 %v2084
  %2103 = vmatpush.bf16.msra.mxu0 %v2082
  %2104 = vmatpush.bf16.msra.mxu0 %v2080
  %2105 = vmatpush.bf16.msra.mxu0 %v2078
  %2106 = vmatpush.bf16.msra.mxu0 %v2076
  %2107 = vmatpush.bf16.msra.mxu0 %v2074
  %2108 = vmatpush.bf16.msra.mxu0 %v2072
  %2109 = vmatpush.bf16.msra.mxu0 %v2070
  %2110 = vmatmul.bf16.gmra.mxu0 %v1898
  %v2111 = vpop.f32.mrf.mxu0
  %v2112 = vadd.f32 0.0, %v2111
  %v2113 = vpop.f32.mrf.mxu0
  %v2114 = vadd.f32 0.0, %v2113
  %2115 = vmatmul.bf16.gmra.mxu0 %v1899
  %v2116 = vpop.f32.mrf.mxu0
  %v2117 = vadd.f32 0.0, %v2116
  %v2118 = vpop.f32.mrf.mxu0
  %v2119 = vadd.f32 0.0, %v2118
  %2120 = vmatmul.bf16.gmra.mxu0 %v1916
  %v2121 = vpop.f32.mrf.mxu0
  %v2122 = vadd.f32 0.0, %v2121
  %v2123 = vpop.f32.mrf.mxu0
  %v2124 = vadd.f32 0.0, %v2123
  %2125 = vmatmul.bf16.gmra.mxu0 %v1917
  %v2126 = vpop.f32.mrf.mxu0
  %v2127 = vadd.f32 0.0, %v2126
  %v2128 = vpop.f32.mrf.mxu0
  %v2129 = vadd.f32 0.0, %v2128
  %2130 = vmatmul.bf16.gmra.mxu0 %v1934
  %v2131 = vpop.f32.mrf.mxu0
  %v2132 = vadd.f32 0.0, %v2131
  %v2133 = vpop.f32.mrf.mxu0
  %v2134 = vadd.f32 0.0, %v2133
  %2135 = vmatmul.bf16.gmra.mxu0 %v1935
  %v2136 = vpop.f32.mrf.mxu0
  %v2137 = vadd.f32 0.0, %v2136
  %v2138 = vpop.f32.mrf.mxu0
  %v2139 = vadd.f32 0.0, %v2138
  %2140 = vmatmul.bf16.gmra.mxu0 %v1952
  %v2141 = vpop.f32.mrf.mxu0
  %v2142 = vadd.f32 0.0, %v2141
  %v2143 = vpop.f32.mrf.mxu0
  %v2144 = vadd.f32 0.0, %v2143
  %2145 = vmatmul.bf16.gmra.mxu0 %v1953
  %v2146 = vpop.f32.mrf.mxu0
  %v2147 = vadd.f32 0.0, %v2146
  %v2148 = vpop.f32.mrf.mxu0
  %v2149 = vadd.f32 0.0, %v2148
  %2150 = vmatmul.bf16.gmra.mxu0 %v1970
  %v2151 = vpop.f32.mrf.mxu0
  %v2152 = vadd.f32 0.0, %v2151
  %v2153 = vpop.f32.mrf.mxu0
  %v2154 = vadd.f32 0.0, %v2153
  %2155 = vmatmul.bf16.gmra.mxu0 %v1971
  %v2156 = vpop.f32.mrf.mxu0
  %v2157 = vadd.f32 0.0, %v2156
  %v2158 = vpop.f32.mrf.mxu0
  %v2159 = vadd.f32 0.0, %v2158
  %2160 = vmatmul.bf16.gmra.mxu0 %v1988
  %v2161 = vpop.f32.mrf.mxu0
  %v2162 = vadd.f32 0.0, %v2161
  %v2163 = vpop.f32.mrf.mxu0
  %v2164 = vadd.f32 0.0, %v2163
  %2165 = vmatmul.bf16.gmra.mxu0 %v1989
  %v2166 = vpop.f32.mrf.mxu0
  %v2167 = vadd.f32 0.0, %v2166
  %v2168 = vpop.f32.mrf.mxu0
  %v2169 = vadd.f32 0.0, %v2168
  %2170 = vmatmul.bf16.gmra.mxu0 %v2006
  %v2171 = vpop.f32.mrf.mxu0
  %v2172 = vadd.f32 0.0, %v2171
  %v2173 = vpop.f32.mrf.mxu0
  %v2174 = vadd.f32 0.0, %v2173
  %2175 = vmatmul.bf16.gmra.mxu0 %v2007
  %v2176 = vpop.f32.mrf.mxu0
  %v2177 = vadd.f32 0.0, %v2176
  %v2178 = vpop.f32.mrf.mxu0
  %v2179 = vadd.f32 0.0, %v2178
  %2180 = vdwg.mxu0
  %2181 = vmatpush.bf16.msra.mxu0 %v2085
  %2182 = vmatpush.bf16.msra.mxu0 %v2083
  %2183 = vmatpush.bf16.msra.mxu0 %v2081
  %2184 = vmatpush.bf16.msra.mxu0 %v2079
  %2185 = vmatpush.bf16.msra.mxu0 %v2077
  %2186 = vmatpush.bf16.msra.mxu0 %v2075
  %2187 = vmatpush.bf16.msra.mxu0 %v2073
  %2188 = vmatpush.bf16.msra.mxu0 %v2071
  %2189 = vmatmul.bf16.gmra.mxu0 %v1898
  %v2190 = vpop.f32.mrf.mxu0
  %v2191 = vadd.f32 0.0, %v2190
  %v2192 = vpop.f32.mrf.mxu0
  %v2193 = vadd.f32 0.0, %v2192
  %2194 = vmatmul.bf16.gmra.mxu0 %v1899
  %v2195 = vpop.f32.mrf.mxu0
  %v2196 = vadd.f32 0.0, %v2195
  %v2197 = vpop.f32.mrf.mxu0
  %v2198 = vadd.f32 0.0, %v2197
  %2199 = vmatmul.bf16.gmra.mxu0 %v1916
  %v2200 = vpop.f32.mrf.mxu0
  %v2201 = vadd.f32 0.0, %v2200
  %v2202 = vpop.f32.mrf.mxu0
  %v2203 = vadd.f32 0.0, %v2202
  %2204 = vmatmul.bf16.gmra.mxu0 %v1917
  %v2205 = vpop.f32.mrf.mxu0
  %v2206 = vadd.f32 0.0, %v2205
  %v2207 = vpop.f32.mrf.mxu0
  %v2208 = vadd.f32 0.0, %v2207
  %2209 = vmatmul.bf16.gmra.mxu0 %v1934
  %v2210 = vpop.f32.mrf.mxu0
  %v2211 = vadd.f32 0.0, %v2210
  %v2212 = vpop.f32.mrf.mxu0
  %v2213 = vadd.f32 0.0, %v2212
  %2214 = vmatmul.bf16.gmra.mxu0 %v1935
  %v2215 = vpop.f32.mrf.mxu0
  %v2216 = vadd.f32 0.0, %v2215
  %v2217 = vpop.f32.mrf.mxu0
  %v2218 = vadd.f32 0.0, %v2217
  %2219 = vmatmul.bf16.gmra.mxu0 %v1952
  %v2220 = vpop.f32.mrf.mxu0
  %v2221 = vadd.f32 0.0, %v2220
  %v2222 = vpop.f32.mrf.mxu0
  %v2223 = vadd.f32 0.0, %v2222
  %2224 = vmatmul.bf16.gmra.mxu0 %v1953
  %v2225 = vpop.f32.mrf.mxu0
  %v2226 = vadd.f32 0.0, %v2225
  %v2227 = vpop.f32.mrf.mxu0
  %v2228 = vadd.f32 0.0, %v2227
  %2229 = vmatmul.bf16.gmra.mxu0 %v1970
  %v2230 = vpop.f32.mrf.mxu0
  %v2231 = vadd.f32 0.0, %v2230
  %v2232 = vpop.f32.mrf.mxu0
  %v2233 = vadd.f32 0.0, %v2232
  %2234 = vmatmul.bf16.gmra.mxu0 %v1971
  %v2235 = vpop.f32.mrf.mxu0
  %v2236 = vadd.f32 0.0, %v2235
  %v2237 = vpop.f32.mrf.mxu0
  %v2238 = vadd.f32 0.0, %v2237
  %2239 = vmatmul.bf16.gmra.mxu0 %v1988
  %v2240 = vpop.f32.mrf.mxu0
  %v2241 = vadd.f32 0.0, %v2240
  %v2242 = vpop.f32.mrf.mxu0
  %v2243 = vadd.f32 0.0, %v2242
  %2244 = vmatmul.bf16.gmra.mxu0 %v1989
  %v2245 = vpop.f32.mrf.mxu0
  %v2246 = vadd.f32 0.0, %v2245
  %v2247 = vpop.f32.mrf.mxu0
  %v2248 = vadd.f32 0.0, %v2247
  %2249 = vmatmul.bf16.gmra.mxu0 %v2006
  %v2250 = vpop.f32.mrf.mxu0
  %v2251 = vadd.f32 0.0, %v2250
  %v2252 = vpop.f32.mrf.mxu0
  %v2253 = vadd.f32 0.0, %v2252
  %2254 = vmatmul.bf16.gmra.mxu0 %v2007
  %v2255 = vpop.f32.mrf.mxu0
  %v2256 = vadd.f32 0.0, %v2255
  %v2257 = vpop.f32.mrf.mxu0
  %v2258 = vadd.f32 0.0, %v2257
  %2259 = vdwg.mxu0
  %v2260 = vadd.f32 %v1495, %v2112
  %v2261 = vadd.f32 %v1574, %v2191
  %v2262 = vadd.f32 %v1497, %v2114
  %v2263 = vadd.f32 %v1576, %v2193
  %v2264 = vadd.f32 %v1500, %v2117
  %v2265 = vadd.f32 %v1579, %v2196
  %v2266 = vadd.f32 %v1502, %v2119
  %v2267 = vadd.f32 %v1581, %v2198
  %v2268 = vadd.f32 %v1505, %v2122
  %v2269 = vadd.f32 %v1584, %v2201
  %v2270 = vadd.f32 %v1507, %v2124
  %v2271 = vadd.f32 %v1586, %v2203
  %v2272 = vadd.f32 %v1510, %v2127
  %v2273 = vadd.f32 %v1589, %v2206
  %v2274 = vadd.f32 %v1512, %v2129
  %v2275 = vadd.f32 %v1591, %v2208
  %v2276 = vadd.f32 %v1515, %v2132
  %v2277 = vadd.f32 %v1594, %v2211
  %v2278 = vadd.f32 %v1517, %v2134
  %v2279 = vadd.f32 %v1596, %v2213
  %v2280 = vadd.f32 %v1520, %v2137
  %v2281 = vadd.f32 %v1599, %v2216
  %v2282 = vadd.f32 %v1522, %v2139
  %v2283 = vadd.f32 %v1601, %v2218
  %v2284 = vadd.f32 %v1525, %v2142
  %v2285 = vadd.f32 %v1604, %v2221
  %v2286 = vadd.f32 %v1527, %v2144
  %v2287 = vadd.f32 %v1606, %v2223
  %v2288 = vadd.f32 %v1530, %v2147
  %v2289 = vadd.f32 %v1609, %v2226
  %v2290 = vadd.f32 %v1532, %v2149
  %v2291 = vadd.f32 %v1611, %v2228
  %v2292 = vadd.f32 %v1535, %v2152
  %v2293 = vadd.f32 %v1614, %v2231
  %v2294 = vadd.f32 %v1537, %v2154
  %v2295 = vadd.f32 %v1616, %v2233
  %v2296 = vadd.f32 %v1540, %v2157
  %v2297 = vadd.f32 %v1619, %v2236
  %v2298 = vadd.f32 %v1542, %v2159
  %v2299 = vadd.f32 %v1621, %v2238
  %v2300 = vadd.f32 %v1545, %v2162
  %v2301 = vadd.f32 %v1624, %v2241
  %v2302 = vadd.f32 %v1547, %v2164
  %v2303 = vadd.f32 %v1626, %v2243
  %v2304 = vadd.f32 %v1550, %v2167
  %v2305 = vadd.f32 %v1629, %v2246
  %v2306 = vadd.f32 %v1552, %v2169
  %v2307 = vadd.f32 %v1631, %v2248
  %v2308 = vadd.f32 %v1555, %v2172
  %v2309 = vadd.f32 %v1634, %v2251
  %v2310 = vadd.f32 %v1557, %v2174
  %v2311 = vadd.f32 %v1636, %v2253
  %v2312 = vadd.f32 %v1560, %v2177
  %v2313 = vadd.f32 %v1639, %v2256
  %v2314 = vadd.f32 %v1562, %v2179
  %v2315 = vadd.f32 %v1641, %v2258
  %vm2316 = vsmask.f32 256
  %vm2317 = vsmask.f32 2312
  %vm2318 = vmor %vm2316, %vm2317
  %vm2319 = vsmask.f32 4368
  %vm2320 = vmor %vm2318, %vm2319
  %vm2321 = vsmask.f32 6424
  %vm2322 = vmor %vm2320, %vm2321
  %v2323 = vrot.slane %v352, 7
  %v2324 = vrot.slane %v2323, 2
  %v2325 = vrot.slane %v365, 7
  %v2326 = vor.u32 %v2325, %v361
  %v2327 = vsel %vm2322, %v2324, %v2326
  %v2328 = vrot.slane %v2325, 2
  %v2329 = vrot.slane %v374, 7
  %v2330 = vor.u32 %v2329, %v370
  %v2331 = vsel %vm2322, %v2328, %v2330
  %v2332 = vrot.slane %v2329, 2
  %v2333 = vrot.slane %v384, 7
  %v2334 = vor.u32 %v2333, %v380
  %v2335 = vsel %vm2322, %v2332, %v2334
  %v2336 = vrot.slane %v2333, 2
  %v2337 = vrot.slane %v393, 7
  %v2338 = vor.u32 %v2337, %v389
  %v2339 = vsel %vm2322, %v2336, %v2338
  %v2340 = vrot.slane %v2337, 2
  %v2341 = vrot.slane %v403, 7
  %v2342 = vor.u32 %v2341, %v399
  %v2343 = vsel %vm2322, %v2340, %v2342
  %v2344 = vrot.slane %v2341, 2
  %v2345 = vrot.slane %v412, 7
  %v2346 = vor.u32 %v2345, %v408
  %v2347 = vsel %vm2322, %v2344, %v2346
  %v2348 = vrot.slane %v2345, 2
  %v2349 = vshrl.u32 %v323, 16
  %v2351 = vrot.slane %v2349, 7
  %v2352 = vor.u32 %v2351, %v418
  %v2353 = vsel %vm2322, %v2348, %v2352
  %v2354 = vrot.slane %v422, 7
  %v2355 = vrot.slane %v2354, 2
  %v2356 = vrot.slane %v435, 7
  %v2357 = vor.u32 %v2356, %v431
  %v2358 = vsel %vm2322, %v2355, %v2357
  %v2359 = vrot.slane %v2356, 2
  %v2360 = vrot.slane %v444, 7
  %v2361 = vor.u32 %v2360, %v440
  %v2362 = vsel %vm2322, %v2359, %v2361
  %v2363 = vrot.slane %v2360, 2
  %v2364 = vrot.slane %v454, 7
  %v2365 = vor.u32 %v2364, %v450
  %v2366 = vsel %vm2322, %v2363, %v2365
  %v2367 = vrot.slane %v2364, 2
  %v2368 = vrot.slane %v463, 7
  %v2369 = vor.u32 %v2368, %v459
  %v2370 = vsel %vm2322, %v2367, %v2369
  %v2371 = vrot.slane %v2368, 2
  %v2372 = vrot.slane %v473, 7
  %v2373 = vor.u32 %v2372, %v469
  %v2374 = vsel %vm2322, %v2371, %v2373
  %v2375 = vrot.slane %v2372, 2
  %v2376 = vrot.slane %v482, 7
  %v2377 = vor.u32 %v2376, %v478
  %v2378 = vsel %vm2322, %v2375, %v2377
  %v2379 = vrot.slane %v2376, 2
  %v2380 = vshrl.u32 %v326, 16
  %v2382 = vrot.slane %v2380, 7
  %v2383 = vor.u32 %v2382, %v488
  %v2384 = vsel %vm2322, %v2379, %v2383
  %v2385 = vrot.slane %v492, 7
  %v2386 = vrot.slane %v2385, 2
  %v2387 = vrot.slane %v505, 7
  %v2388 = vor.u32 %v2387, %v501
  %v2389 = vsel %vm2322, %v2386, %v2388
  %v2390 = vrot.slane %v2387, 2
  %v2391 = vrot.slane %v514, 7
  %v2392 = vor.u32 %v2391, %v510
  %v2393 = vsel %vm2322, %v2390, %v2392
  %v2394 = vrot.slane %v2391, 2
  %v2395 = vrot.slane %v524, 7
  %v2396 = vor.u32 %v2395, %v520
  %v2397 = vsel %vm2322, %v2394, %v2396
  %v2398 = vrot.slane %v2395, 2
  %v2399 = vrot.slane %v533, 7
  %v2400 = vor.u32 %v2399, %v529
  %v2401 = vsel %vm2322, %v2398, %v2400
  %v2402 = vrot.slane %v2399, 2
  %v2403 = vrot.slane %v543, 7
  %v2404 = vor.u32 %v2403, %v539
  %v2405 = vsel %vm2322, %v2402, %v2404
  %v2406 = vrot.slane %v2403, 2
  %v2407 = vrot.slane %v552, 7
  %v2408 = vor.u32 %v2407, %v548
  %v2409 = vsel %vm2322, %v2406, %v2408
  %v2410 = vrot.slane %v2407, 2
  %v2411 = vshrl.u32 %v329, 16
  %v2413 = vrot.slane %v2411, 7
  %v2414 = vor.u32 %v2413, %v558
  %v2415 = vsel %vm2322, %v2410, %v2414
  %v2416 = vrot.slane %v562, 7
  %v2417 = vrot.slane %v2416, 2
  %v2418 = vrot.slane %v575, 7
  %v2419 = vor.u32 %v2418, %v571
  %v2420 = vsel %vm2322, %v2417, %v2419
  %v2421 = vrot.slane %v2418, 2
  %v2422 = vrot.slane %v584, 7
  %v2423 = vor.u32 %v2422, %v580
  %v2424 = vsel %vm2322, %v2421, %v2423
  %v2425 = vrot.slane %v2422, 2
  %v2426 = vrot.slane %v594, 7
  %v2427 = vor.u32 %v2426, %v590
  %v2428 = vsel %vm2322, %v2425, %v2427
  %v2429 = vrot.slane %v2426, 2
  %v2430 = vrot.slane %v603, 7
  %v2431 = vor.u32 %v2430, %v599
  %v2432 = vsel %vm2322, %v2429, %v2431
  %v2433 = vrot.slane %v2430, 2
  %v2434 = vrot.slane %v613, 7
  %v2435 = vor.u32 %v2434, %v609
  %v2436 = vsel %vm2322, %v2433, %v2435
  %v2437 = vrot.slane %v2434, 2
  %v2438 = vrot.slane %v622, 7
  %v2439 = vor.u32 %v2438, %v618
  %v2440 = vsel %vm2322, %v2437, %v2439
  %v2441 = vrot.slane %v2438, 2
  %v2442 = vshrl.u32 %v332, 16
  %v2444 = vrot.slane %v2442, 7
  %v2445 = vor.u32 %v2444, %v628
  %v2446 = vsel %vm2322, %v2441, %v2445
  %v2447 = vrot.slane %v632, 7
  %v2448 = vrot.slane %v2447, 2
  %v2449 = vrot.slane %v645, 7
  %v2450 = vor.u32 %v2449, %v641
  %v2451 = vsel %vm2322, %v2448, %v2450
  %v2452 = vrot.slane %v2449, 2
  %v2453 = vrot.slane %v654, 7
  %v2454 = vor.u32 %v2453, %v650
  %v2455 = vsel %vm2322, %v2452, %v2454
  %v2456 = vrot.slane %v2453, 2
  %v2457 = vrot.slane %v664, 7
  %v2458 = vor.u32 %v2457, %v660
  %v2459 = vsel %vm2322, %v2456, %v2458
  %v2460 = vrot.slane %v2457, 2
  %v2461 = vrot.slane %v673, 7
  %v2462 = vor.u32 %v2461, %v669
  %v2463 = vsel %vm2322, %v2460, %v2462
  %v2464 = vrot.slane %v2461, 2
  %v2465 = vrot.slane %v683, 7
  %v2466 = vor.u32 %v2465, %v679
  %v2467 = vsel %vm2322, %v2464, %v2466
  %v2468 = vrot.slane %v2465, 2
  %v2469 = vrot.slane %v692, 7
  %v2470 = vor.u32 %v2469, %v688
  %v2471 = vsel %vm2322, %v2468, %v2470
  %v2472 = vrot.slane %v2469, 2
  %v2473 = vshrl.u32 %v335, 16
  %v2475 = vrot.slane %v2473, 7
  %v2476 = vor.u32 %v2475, %v698
  %v2477 = vsel %vm2322, %v2472, %v2476
  %v2478 = vrot.slane %v702, 7
  %v2479 = vrot.slane %v2478, 2
  %v2480 = vrot.slane %v715, 7
  %v2481 = vor.u32 %v2480, %v711
  %v2482 = vsel %vm2322, %v2479, %v2481
  %v2483 = vrot.slane %v2480, 2
  %v2484 = vrot.slane %v724, 7
  %v2485 = vor.u32 %v2484, %v720
  %v2486 = vsel %vm2322, %v2483, %v2485
  %v2487 = vrot.slane %v2484, 2
  %v2488 = vrot.slane %v734, 7
  %v2489 = vor.u32 %v2488, %v730
  %v2490 = vsel %vm2322, %v2487, %v2489
  %v2491 = vrot.slane %v2488, 2
  %v2492 = vrot.slane %v743, 7
  %v2493 = vor.u32 %v2492, %v739
  %v2494 = vsel %vm2322, %v2491, %v2493
  %v2495 = vrot.slane %v2492, 2
  %v2496 = vrot.slane %v753, 7
  %v2497 = vor.u32 %v2496, %v749
  %v2498 = vsel %vm2322, %v2495, %v2497
  %v2499 = vrot.slane %v2496, 2
  %v2500 = vrot.slane %v762, 7
  %v2501 = vor.u32 %v2500, %v758
  %v2502 = vsel %vm2322, %v2499, %v2501
  %v2503 = vrot.slane %v2500, 2
  %v2504 = vshrl.u32 %v338, 16
  %v2506 = vrot.slane %v2504, 7
  %v2507 = vor.u32 %v2506, %v768
  %v2508 = vsel %vm2322, %v2503, %v2507
  %v2509 = vrot.slane %v772, 7
  %v2510 = vrot.slane %v2509, 2
  %v2511 = vrot.slane %v785, 7
  %v2512 = vor.u32 %v2511, %v781
  %v2513 = vsel %vm2322, %v2510, %v2512
  %v2514 = vrot.slane %v2511, 2
  %v2515 = vrot.slane %v794, 7
  %v2516 = vor.u32 %v2515, %v790
  %v2517 = vsel %vm2322, %v2514, %v2516
  %v2518 = vrot.slane %v2515, 2
  %v2519 = vrot.slane %v804, 7
  %v2520 = vor.u32 %v2519, %v800
  %v2521 = vsel %vm2322, %v2518, %v2520
  %v2522 = vrot.slane %v2519, 2
  %v2523 = vrot.slane %v813, 7
  %v2524 = vor.u32 %v2523, %v809
  %v2525 = vsel %vm2322, %v2522, %v2524
  %v2526 = vrot.slane %v2523, 2
  %v2527 = vrot.slane %v823, 7
  %v2528 = vor.u32 %v2527, %v819
  %v2529 = vsel %vm2322, %v2526, %v2528
  %v2530 = vrot.slane %v2527, 2
  %v2531 = vrot.slane %v832, 7
  %v2532 = vor.u32 %v2531, %v828
  %v2533 = vsel %vm2322, %v2530, %v2532
  %v2534 = vrot.slane %v2531, 2
  %v2535 = vshrl.u32 %v341, 16
  %v2537 = vrot.slane %v2535, 7
  %v2538 = vor.u32 %v2537, %v838
  %v2539 = vsel %vm2322, %v2534, %v2538
  %v2540 = vrot.slane %v842, 7
  %v2541 = vrot.slane %v2540, 2
  %v2542 = vrot.slane %v855, 7
  %v2543 = vor.u32 %v2542, %v851
  %v2544 = vsel %vm2322, %v2541, %v2543
  %v2545 = vrot.slane %v2542, 2
  %v2546 = vrot.slane %v864, 7
  %v2547 = vor.u32 %v2546, %v860
  %v2548 = vsel %vm2322, %v2545, %v2547
  %v2549 = vrot.slane %v2546, 2
  %v2550 = vrot.slane %v874, 7
  %v2551 = vor.u32 %v2550, %v870
  %v2552 = vsel %vm2322, %v2549, %v2551
  %v2553 = vrot.slane %v2550, 2
  %v2554 = vrot.slane %v883, 7
  %v2555 = vor.u32 %v2554, %v879
  %v2556 = vsel %vm2322, %v2553, %v2555
  %v2557 = vrot.slane %v2554, 2
  %v2558 = vrot.slane %v893, 7
  %v2559 = vor.u32 %v2558, %v889
  %v2560 = vsel %vm2322, %v2557, %v2559
  %v2561 = vrot.slane %v2558, 2
  %v2562 = vrot.slane %v902, 7
  %v2563 = vor.u32 %v2562, %v898
  %v2564 = vsel %vm2322, %v2561, %v2563
  %v2565 = vrot.slane %v2562, 2
  %v2566 = vshrl.u32 %v344, 16
  %v2568 = vrot.slane %v2566, 7
  %v2569 = vor.u32 %v2568, %v908
  %v2570 = vsel %vm2322, %v2565, %v2569
  %s2571 = scalar_lea.vmem %s1, 384
  %v2572 = vld [vmem:[%s2571] sm:$0xff]
  %v2573 = vld [vmem:[%s2571 + $0x8] sm:$0xff]
  %v2574 = vld [vmem:[%s2571 + $0x10] sm:$0xff]
  %v2575 = vld [vmem:[%s2571 + $0x18] sm:$0xff]
  %v2576 = vld [vmem:[%s2571 + $0x20] sm:$0xff]
  %v2577 = vld [vmem:[%s2571 + $0x28] sm:$0xff]
  %v2578 = vld [vmem:[%s2571 + $0x30] sm:$0xff]
  %v2579 = vld [vmem:[%s2571 + $0x38] sm:$0xff]
  %v2580 = vld [vmem:[%s2571 + $0x40] sm:$0xff]
  %v2581 = vld [vmem:[%s2571 + $0x48] sm:$0xff]
  %v2582 = vld [vmem:[%s2571 + $0x50] sm:$0xff]
  %v2583 = vld [vmem:[%s2571 + $0x58] sm:$0xff]
  %v2584 = vld [vmem:[%s2571 + $0x60] sm:$0xff]
  %v2585 = vld [vmem:[%s2571 + $0x68] sm:$0xff]
  %v2586 = vld [vmem:[%s2571 + $0x70] sm:$0xff]
  %v2587 = vld [vmem:[%s2571 + $0x78] sm:$0xff]
  %2589 = vst [vmem:[#allocation1] ss:$4 sm:$0xff] %v2327
  %s2591 = scalar_lea.vmem [#allocation1], 1
  %2592 = vst [vmem:[%s2591] ss:$4 sm:$0xff] %v2331
  %s2594 = scalar_lea.vmem [#allocation1], 2
  %2595 = vst [vmem:[%s2594] ss:$4 sm:$0xff] %v2335
  %s2597 = scalar_lea.vmem [#allocation1], 3
  %2598 = vst [vmem:[%s2597] ss:$4 sm:$0xff] %v2339
  %s2600 = scalar_lea.vmem [#allocation1], 32
  %2601 = vst [vmem:[%s2600] ss:$4 sm:$0xff] %v2343
  %s2603 = scalar_lea.vmem [#allocation1], 33
  %2604 = vst [vmem:[%s2603] ss:$4 sm:$0xff] %v2347
  %s2606 = scalar_lea.vmem [#allocation1], 34
  %2607 = vst [vmem:[%s2606] ss:$4 sm:$0xff] %v2353
  %s2609 = scalar_lea.vmem [#allocation1], 35
  %2610 = vst [vmem:[%s2609] ss:$4 sm:$0xff] %v2358
  %v2611 = vld.sshfl [vmem:[#allocation1] sm:$0xff pattern:$0x73625140]
  %v2612 = vld.sshfl [vmem:[#allocation1 + $0x20] sm:$0xff pattern:$0x73625140]
  %2614 = vst [vmem:[#allocation1] ss:$4 sm:$0xff] %v2362
  %2616 = vst [vmem:[%s2591] ss:$4 sm:$0xff] %v2366
  %2618 = vst [vmem:[%s2594] ss:$4 sm:$0xff] %v2370
  %2620 = vst [vmem:[%s2597] ss:$4 sm:$0xff] %v2374
  %2622 = vst [vmem:[%s2600] ss:$4 sm:$0xff] %v2378
  %2624 = vst [vmem:[%s2603] ss:$4 sm:$0xff] %v2384
  %2626 = vst [vmem:[%s2606] ss:$4 sm:$0xff] %v2389
  %2628 = vst [vmem:[%s2609] ss:$4 sm:$0xff] %v2393
  %v2629 = vld.sshfl [vmem:[#allocation1] sm:$0xff pattern:$0x73625140]
  %v2630 = vld.sshfl [vmem:[#allocation1 + $0x20] sm:$0xff pattern:$0x73625140]
  %2632 = vst [vmem:[#allocation1] ss:$4 sm:$0xff] %v2397
  %2634 = vst [vmem:[%s2591] ss:$4 sm:$0xff] %v2401
  %2636 = vst [vmem:[%s2594] ss:$4 sm:$0xff] %v2405
  %2638 = vst [vmem:[%s2597] ss:$4 sm:$0xff] %v2409
  %2640 = vst [vmem:[%s2600] ss:$4 sm:$0xff] %v2415
  %2642 = vst [vmem:[%s2603] ss:$4 sm:$0xff] %v2420
  %2644 = vst [vmem:[%s2606] ss:$4 sm:$0xff] %v2424
  %2646 = vst [vmem:[%s2609] ss:$4 sm:$0xff] %v2428
  %v2647 = vld.sshfl [vmem:[#allocation1] sm:$0xff pattern:$0x73625140]
  %v2648 = vld.sshfl [vmem:[#allocation1 + $0x20] sm:$0xff pattern:$0x73625140]
  %2650 = vst [vmem:[#allocation1] ss:$4 sm:$0xff] %v2432
  %2652 = vst [vmem:[%s2591] ss:$4 sm:$0xff] %v2436
  %2654 = vst [vmem:[%s2594] ss:$4 sm:$0xff] %v2440
  %2656 = vst [vmem:[%s2597] ss:$4 sm:$0xff] %v2446
  %2658 = vst [vmem:[%s2600] ss:$4 sm:$0xff] %v2451
  %2660 = vst [vmem:[%s2603] ss:$4 sm:$0xff] %v2455
  %2662 = vst [vmem:[%s2606] ss:$4 sm:$0xff] %v2459
  %2664 = vst [vmem:[%s2609] ss:$4 sm:$0xff] %v2463
  %v2665 = vld.sshfl [vmem:[#allocation1] sm:$0xff pattern:$0x73625140]
  %v2666 = vld.sshfl [vmem:[#allocation1 + $0x20] sm:$0xff pattern:$0x73625140]
  %2668 = vst [vmem:[#allocation1] ss:$4 sm:$0xff] %v2467
  %2670 = vst [vmem:[%s2591] ss:$4 sm:$0xff] %v2471
  %2672 = vst [vmem:[%s2594] ss:$4 sm:$0xff] %v2477
  %2674 = vst [vmem:[%s2597] ss:$4 sm:$0xff] %v2482
  %2676 = vst [vmem:[%s2600] ss:$4 sm:$0xff] %v2486
  %2678 = vst [vmem:[%s2603] ss:$4 sm:$0xff] %v2490
  %2680 = vst [vmem:[%s2606] ss:$4 sm:$0xff] %v2494
  %2682 = vst [vmem:[%s2609] ss:$4 sm:$0xff] %v2498
  %v2683 = vld.sshfl [vmem:[#allocation1] sm:$0xff pattern:$0x73625140]
  %v2684 = vld.sshfl [vmem:[#allocation1 + $0x20] sm:$0xff pattern:$0x73625140]
  %2686 = vst [vmem:[#allocation1] ss:$4 sm:$0xff] %v2502
  %2688 = vst [vmem:[%s2591] ss:$4 sm:$0xff] %v2508
  %2690 = vst [vmem:[%s2594] ss:$4 sm:$0xff] %v2513
  %2692 = vst [vmem:[%s2597] ss:$4 sm:$0xff] %v2517
  %2694 = vst [vmem:[%s2600] ss:$4 sm:$0xff] %v2521
  %2696 = vst [vmem:[%s2603] ss:$4 sm:$0xff] %v2525
  %2698 = vst [vmem:[%s2606] ss:$4 sm:$0xff] %v2529
  %2700 = vst [vmem:[%s2609] ss:$4 sm:$0xff] %v2533
  %v2701 = vld.sshfl [vmem:[#allocation1] sm:$0xff pattern:$0x73625140]
  %v2702 = vld.sshfl [vmem:[#allocation1 + $0x20] sm:$0xff pattern:$0x73625140]
  %2704 = vst [vmem:[#allocation1] ss:$4 sm:$0xff] %v2539
  %2706 = vst [vmem:[%s2591] ss:$4 sm:$0xff] %v2544
  %2708 = vst [vmem:[%s2594] ss:$4 sm:$0xff] %v2548
  %2710 = vst [vmem:[%s2597] ss:$4 sm:$0xff] %v2552
  %2712 = vst [vmem:[%s2600] ss:$4 sm:$0xff] %v2556
  %2714 = vst [vmem:[%s2603] ss:$4 sm:$0xff] %v2560
  %2716 = vst [vmem:[%s2606] ss:$4 sm:$0xff] %v2564
  %2718 = vst [vmem:[%s2609] ss:$4 sm:$0xff] %v2570
  %v2719 = vld.sshfl [vmem:[#allocation1] sm:$0xff pattern:$0x73625140]
  %v2720 = vld.sshfl [vmem:[#allocation1 + $0x20] sm:$0xff pattern:$0x73625140]
  %v2751 = vunpack.c.l.b16 %v2572
  %v2752 = vunpack.c.h.b16 %v2572
  %v2753 = vunpack.c.l.b16 %v2573
  %v2754 = vunpack.c.h.b16 %v2573
  %v2755 = vunpack.c.l.b16 %v2574
  %v2756 = vunpack.c.h.b16 %v2574
  %v2757 = vunpack.c.l.b16 %v2575
  %v2758 = vunpack.c.h.b16 %v2575
  %v2759 = vunpack.c.l.b16 %v2576
  %v2760 = vunpack.c.h.b16 %v2576
  %v2761 = vunpack.c.l.b16 %v2577
  %v2762 = vunpack.c.h.b16 %v2577
  %v2763 = vunpack.c.l.b16 %v2578
  %v2764 = vunpack.c.h.b16 %v2578
  %v2765 = vunpack.c.l.b16 %v2579
  %v2766 = vunpack.c.h.b16 %v2579
  %v2767 = vunpack.c.l.b16 %v2580
  %v2768 = vunpack.c.h.b16 %v2580
  %v2769 = vunpack.c.l.b16 %v2581
  %v2770 = vunpack.c.h.b16 %v2581
  %v2771 = vunpack.c.l.b16 %v2582
  %v2772 = vunpack.c.h.b16 %v2582
  %v2773 = vunpack.c.l.b16 %v2583
  %v2774 = vunpack.c.h.b16 %v2583
  %v2775 = vunpack.c.l.b16 %v2584
  %v2776 = vunpack.c.h.b16 %v2584
  %v2777 = vunpack.c.l.b16 %v2585
  %v2778 = vunpack.c.h.b16 %v2585
  %v2779 = vunpack.c.l.b16 %v2586
  %v2780 = vunpack.c.h.b16 %v2586
  %v2781 = vunpack.c.l.b16 %v2587
  %v2782 = vunpack.c.h.b16 %v2587
  %v2783 = vpack.c.b16 %v2753, %v2751
  %v2784 = vpack.c.b16 %v2754, %v2752
  %v2785 = vpack.c.b16 %v2757, %v2755
  %v2786 = vpack.c.b16 %v2758, %v2756
  %v2787 = vpack.c.b16 %v2761, %v2759
  %v2788 = vpack.c.b16 %v2762, %v2760
  %v2789 = vpack.c.b16 %v2765, %v2763
  %v2790 = vpack.c.b16 %v2766, %v2764
  %v2791 = vpack.c.b16 %v2769, %v2767
  %v2792 = vpack.c.b16 %v2770, %v2768
  %v2793 = vpack.c.b16 %v2773, %v2771
  %v2794 = vpack.c.b16 %v2774, %v2772
  %v2795 = vpack.c.b16 %v2777, %v2775
  %v2796 = vpack.c.b16 %v2778, %v2776
  %v2797 = vpack.c.b16 %v2781, %v2779
  %v2798 = vpack.c.b16 %v2782, %v2780
  %2815 = vmatpush.bf16.msra.mxu0 %v2797
  %2816 = vmatpush.bf16.msra.mxu0 %v2795
  %2817 = vmatpush.bf16.msra.mxu0 %v2793
  %2818 = vmatpush.bf16.msra.mxu0 %v2791
  %2819 = vmatpush.bf16.msra.mxu0 %v2789
  %2820 = vmatpush.bf16.msra.mxu0 %v2787
  %2821 = vmatpush.bf16.msra.mxu0 %v2785
  %2822 = vmatpush.bf16.msra.mxu0 %v2783
  %2823 = vmatmul.bf16.gmra.mxu0 %v2611
  %v2824 = vpop.f32.mrf.mxu0
  %v2825 = vadd.f32 0.0, %v2824
  %v2826 = vpop.f32.mrf.mxu0
  %v2827 = vadd.f32 0.0, %v2826
  %2828 = vmatmul.bf16.gmra.mxu0 %v2612
  %v2829 = vpop.f32.mrf.mxu0
  %v2830 = vadd.f32 0.0, %v2829
  %v2831 = vpop.f32.mrf.mxu0
  %v2832 = vadd.f32 0.0, %v2831
  %2833 = vmatmul.bf16.gmra.mxu0 %v2629
  %v2834 = vpop.f32.mrf.mxu0
  %v2835 = vadd.f32 0.0, %v2834
  %v2836 = vpop.f32.mrf.mxu0
  %v2837 = vadd.f32 0.0, %v2836
  %2838 = vmatmul.bf16.gmra.mxu0 %v2630
  %v2839 = vpop.f32.mrf.mxu0
  %v2840 = vadd.f32 0.0, %v2839
  %v2841 = vpop.f32.mrf.mxu0
  %v2842 = vadd.f32 0.0, %v2841
  %2843 = vmatmul.bf16.gmra.mxu0 %v2647
  %v2844 = vpop.f32.mrf.mxu0
  %v2845 = vadd.f32 0.0, %v2844
  %v2846 = vpop.f32.mrf.mxu0
  %v2847 = vadd.f32 0.0, %v2846
  %2848 = vmatmul.bf16.gmra.mxu0 %v2648
  %v2849 = vpop.f32.mrf.mxu0
  %v2850 = vadd.f32 0.0, %v2849
  %v2851 = vpop.f32.mrf.mxu0
  %v2852 = vadd.f32 0.0, %v2851
  %2853 = vmatmul.bf16.gmra.mxu0 %v2665
  %v2854 = vpop.f32.mrf.mxu0
  %v2855 = vadd.f32 0.0, %v2854
  %v2856 = vpop.f32.mrf.mxu0
  %v2857 = vadd.f32 0.0, %v2856
  %2858 = vmatmul.bf16.gmra.mxu0 %v2666
  %v2859 = vpop.f32.mrf.mxu0
  %v2860 = vadd.f32 0.0, %v2859
  %v2861 = vpop.f32.mrf.mxu0
  %v2862 = vadd.f32 0.0, %v2861
  %2863 = vmatmul.bf16.gmra.mxu0 %v2683
  %v2864 = vpop.f32.mrf.mxu0
  %v2865 = vadd.f32 0.0, %v2864
  %v2866 = vpop.f32.mrf.mxu0
  %v2867 = vadd.f32 0.0, %v2866
  %2868 = vmatmul.bf16.gmra.mxu0 %v2684
  %v2869 = vpop.f32.mrf.mxu0
  %v2870 = vadd.f32 0.0, %v2869
  %v2871 = vpop.f32.mrf.mxu0
  %v2872 = vadd.f32 0.0, %v2871
  %2873 = vmatmul.bf16.gmra.mxu0 %v2701
  %v2874 = vpop.f32.mrf.mxu0
  %v2875 = vadd.f32 0.0, %v2874
  %v2876 = vpop.f32.mrf.mxu0
  %v2877 = vadd.f32 0.0, %v2876
  %2878 = vmatmul.bf16.gmra.mxu0 %v2702
  %v2879 = vpop.f32.mrf.mxu0
  %v2880 = vadd.f32 0.0, %v2879
  %v2881 = vpop.f32.mrf.mxu0
  %v2882 = vadd.f32 0.0, %v2881
  %2883 = vmatmul.bf16.gmra.mxu0 %v2719
  %v2884 = vpop.f32.mrf.mxu0
  %v2885 = vadd.f32 0.0, %v2884
  %v2886 = vpop.f32.mrf.mxu0
  %v2887 = vadd.f32 0.0, %v2886
  %2888 = vmatmul.bf16.gmra.mxu0 %v2720
  %v2889 = vpop.f32.mrf.mxu0
  %v2890 = vadd.f32 0.0, %v2889
  %v2891 = vpop.f32.mrf.mxu0
  %v2892 = vadd.f32 0.0, %v2891
  %2893 = vdwg.mxu0
  %2894 = vmatpush.bf16.msra.mxu0 %v2798
  %2895 = vmatpush.bf16.msra.mxu0 %v2796
  %2896 = vmatpush.bf16.msra.mxu0 %v2794
  %2897 = vmatpush.bf16.msra.mxu0 %v2792
  %2898 = vmatpush.bf16.msra.mxu0 %v2790
  %2899 = vmatpush.bf16.msra.mxu0 %v2788
  %2900 = vmatpush.bf16.msra.mxu0 %v2786
  %2901 = vmatpush.bf16.msra.mxu0 %v2784
  %2902 = vmatmul.bf16.gmra.mxu0 %v2611
  %v2903 = vpop.f32.mrf.mxu0
  %v2904 = vadd.f32 0.0, %v2903
  %v2905 = vpop.f32.mrf.mxu0
  %v2906 = vadd.f32 0.0, %v2905
  %2907 = vmatmul.bf16.gmra.mxu0 %v2612
  %v2908 = vpop.f32.mrf.mxu0
  %v2909 = vadd.f32 0.0, %v2908
  %v2910 = vpop.f32.mrf.mxu0
  %v2911 = vadd.f32 0.0, %v2910
  %2912 = vmatmul.bf16.gmra.mxu0 %v2629
  %v2913 = vpop.f32.mrf.mxu0
  %v2914 = vadd.f32 0.0, %v2913
  %v2915 = vpop.f32.mrf.mxu0
  %v2916 = vadd.f32 0.0, %v2915
  %2917 = vmatmul.bf16.gmra.mxu0 %v2630
  %v2918 = vpop.f32.mrf.mxu0
  %v2919 = vadd.f32 0.0, %v2918
  %v2920 = vpop.f32.mrf.mxu0
  %v2921 = vadd.f32 0.0, %v2920
  %2922 = vmatmul.bf16.gmra.mxu0 %v2647
  %v2923 = vpop.f32.mrf.mxu0
  %v2924 = vadd.f32 0.0, %v2923
  %v2925 = vpop.f32.mrf.mxu0
  %v2926 = vadd.f32 0.0, %v2925
  %2927 = vmatmul.bf16.gmra.mxu0 %v2648
  %v2928 = vpop.f32.mrf.mxu0
  %v2929 = vadd.f32 0.0, %v2928
  %v2930 = vpop.f32.mrf.mxu0
  %v2931 = vadd.f32 0.0, %v2930
  %2932 = vmatmul.bf16.gmra.mxu0 %v2665
  %v2933 = vpop.f32.mrf.mxu0
  %v2934 = vadd.f32 0.0, %v2933
  %v2935 = vpop.f32.mrf.mxu0
  %v2936 = vadd.f32 0.0, %v2935
  %2937 = vmatmul.bf16.gmra.mxu0 %v2666
  %v2938 = vpop.f32.mrf.mxu0
  %v2939 = vadd.f32 0.0, %v2938
  %v2940 = vpop.f32.mrf.mxu0
  %v2941 = vadd.f32 0.0, %v2940
  %2942 = vmatmul.bf16.gmra.mxu0 %v2683
  %v2943 = vpop.f32.mrf.mxu0
  %v2944 = vadd.f32 0.0, %v2943
  %v2945 = vpop.f32.mrf.mxu0
  %v2946 = vadd.f32 0.0, %v2945
  %2947 = vmatmul.bf16.gmra.mxu0 %v2684
  %v2948 = vpop.f32.mrf.mxu0
  %v2949 = vadd.f32 0.0, %v2948
  %v2950 = vpop.f32.mrf.mxu0
  %v2951 = vadd.f32 0.0, %v2950
  %2952 = vmatmul.bf16.gmra.mxu0 %v2701
  %v2953 = vpop.f32.mrf.mxu0
  %v2954 = vadd.f32 0.0, %v2953
  %v2955 = vpop.f32.mrf.mxu0
  %v2956 = vadd.f32 0.0, %v2955
  %2957 = vmatmul.bf16.gmra.mxu0 %v2702
  %v2958 = vpop.f32.mrf.mxu0
  %v2959 = vadd.f32 0.0, %v2958
  %v2960 = vpop.f32.mrf.mxu0
  %v2961 = vadd.f32 0.0, %v2960
  %2962 = vmatmul.bf16.gmra.mxu0 %v2719
  %v2963 = vpop.f32.mrf.mxu0
  %v2964 = vadd.f32 0.0, %v2963
  %v2965 = vpop.f32.mrf.mxu0
  %v2966 = vadd.f32 0.0, %v2965
  %2967 = vmatmul.bf16.gmra.mxu0 %v2720
  %v2968 = vpop.f32.mrf.mxu0
  %v2969 = vadd.f32 0.0, %v2968
  %v2970 = vpop.f32.mrf.mxu0
  %v2971 = vadd.f32 0.0, %v2970
  %2972 = vdwg.mxu0
  %v2973 = vadd.f32 %v2260, %v2825
  %v2974 = vadd.f32 %v2261, %v2904
  %v2975 = vadd.f32 %v2262, %v2827
  %v2976 = vadd.f32 %v2263, %v2906
  %v2977 = vadd.f32 %v2264, %v2830
  %v2978 = vadd.f32 %v2265, %v2909
  %v2979 = vadd.f32 %v2266, %v2832
  %v2980 = vadd.f32 %v2267, %v2911
  %v2981 = vadd.f32 %v2268, %v2835
  %v2982 = vadd.f32 %v2269, %v2914
  %v2983 = vadd.f32 %v2270, %v2837
  %v2984 = vadd.f32 %v2271, %v2916
  %v2985 = vadd.f32 %v2272, %v2840
  %v2986 = vadd.f32 %v2273, %v2919
  %v2987 = vadd.f32 %v2274, %v2842
  %v2988 = vadd.f32 %v2275, %v2921
  %v2989 = vadd.f32 %v2276, %v2845
  %v2990 = vadd.f32 %v2277, %v2924
  %v2991 = vadd.f32 %v2278, %v2847
  %v2992 = vadd.f32 %v2279, %v2926
  %v2993 = vadd.f32 %v2280, %v2850
  %v2994 = vadd.f32 %v2281, %v2929
  %v2995 = vadd.f32 %v2282, %v2852
  %v2996 = vadd.f32 %v2283, %v2931
  %v2997 = vadd.f32 %v2284, %v2855
  %v2998 = vadd.f32 %v2285, %v2934
  %v2999 = vadd.f32 %v2286, %v2857
  %v3000 = vadd.f32 %v2287, %v2936
  %v3001 = vadd.f32 %v2288, %v2860
  %v3002 = vadd.f32 %v2289, %v2939
  %v3003 = vadd.f32 %v2290, %v2862
  %v3004 = vadd.f32 %v2291, %v2941
  %v3005 = vadd.f32 %v2292, %v2865
  %v3006 = vadd.f32 %v2293, %v2944
  %v3007 = vadd.f32 %v2294, %v2867
  %v3008 = vadd.f32 %v2295, %v2946
  %v3009 = vadd.f32 %v2296, %v2870
  %v3010 = vadd.f32 %v2297, %v2949
  %v3011 = vadd.f32 %v2298, %v2872
  %v3012 = vadd.f32 %v2299, %v2951
  %v3013 = vadd.f32 %v2300, %v2875
  %v3014 = vadd.f32 %v2301, %v2954
  %v3015 = vadd.f32 %v2302, %v2877
  %v3016 = vadd.f32 %v2303, %v2956
  %v3017 = vadd.f32 %v2304, %v2880
  %v3018 = vadd.f32 %v2305, %v2959
  %v3019 = vadd.f32 %v2306, %v2882
  %v3020 = vadd.f32 %v2307, %v2961
  %v3021 = vadd.f32 %v2308, %v2885
  %v3022 = vadd.f32 %v2309, %v2964
  %v3023 = vadd.f32 %v2310, %v2887
  %v3024 = vadd.f32 %v2311, %v2966
  %v3025 = vadd.f32 %v2312, %v2890
  %v3026 = vadd.f32 %v2313, %v2969
  %v3027 = vadd.f32 %v2314, %v2892
  %v3028 = vadd.f32 %v2315, %v2971
  %3029 = vst.sshfl [vmem:[#allocation1] sm:$0xff pattern:$0x75643120] %v39
  %3030 = vst.sshfl [vmem:[#allocation1 + $0x10] sm:$0xff pattern:$0x75643120] %v40
  %3031 = vst.sshfl [vmem:[#allocation1 + $0x20] sm:$0xff pattern:$0x75643120] %v41
  %3032 = vst.sshfl [vmem:[#allocation1 + $0x30] sm:$0xff pattern:$0x75643120] %v42
  %s3033 = scalar_lea.vmem [#allocation1], 1
  %v3034 = vld [vmem:[%s3033] ss:$2 sm:$0xff]
  %s3035 = scalar_lea.vmem [#allocation1], 16
  %v3036 = vld [vmem:[%s3035] ss:$2 sm:$0xff]
  %s3037 = scalar_lea.vmem [#allocation1], 17
  %v3038 = vld [vmem:[%s3037] ss:$2 sm:$0xff]
  %s3039 = scalar_lea.vmem [#allocation1], 32
  %v3040 = vld [vmem:[%s3039] ss:$2 sm:$0xff]
  %s3041 = scalar_lea.vmem [#allocation1], 33
  %v3042 = vld [vmem:[%s3041] ss:$2 sm:$0xff]
  %s3043 = scalar_lea.vmem [#allocation1], 48
  %v3044 = vld [vmem:[%s3043] ss:$2 sm:$0xff]
  %s3045 = scalar_lea.vmem [#allocation1], 49
  %v3046 = vld [vmem:[%s3045] ss:$2 sm:$0xff]
  %3047 = vst.sshfl [vmem:[#allocation1] sm:$0xff pattern:$0x75643120] %v43
  %3048 = vst.sshfl [vmem:[#allocation1 + $0x10] sm:$0xff pattern:$0x75643120] %v44
  %3049 = vst.sshfl [vmem:[#allocation1 + $0x20] sm:$0xff pattern:$0x75643120] %v45
  %3050 = vst.sshfl [vmem:[#allocation1 + $0x30] sm:$0xff pattern:$0x75643120] %v46
  %v3051 = vld [vmem:[%s3033] ss:$2 sm:$0xff]
  %v3052 = vld [vmem:[%s3035] ss:$2 sm:$0xff]
  %v3053 = vld [vmem:[%s3037] ss:$2 sm:$0xff]
  %v3054 = vld [vmem:[%s3039] ss:$2 sm:$0xff]
  %v3055 = vld [vmem:[%s3041] ss:$2 sm:$0xff]
  %v3056 = vld [vmem:[%s3043] ss:$2 sm:$0xff]
  %v3057 = vld [vmem:[%s3045] ss:$2 sm:$0xff]
  %3058 = vst.sshfl [vmem:[#allocation1] sm:$0xff pattern:$0x75643120] %v47
  %3059 = vst.sshfl [vmem:[#allocation1 + $0x10] sm:$0xff pattern:$0x75643120] %v48
  %3060 = vst.sshfl [vmem:[#allocation1 + $0x20] sm:$0xff pattern:$0x75643120] %v49
  %3061 = vst.sshfl [vmem:[#allocation1 + $0x30] sm:$0xff pattern:$0x75643120] %v50
  %v3062 = vld [vmem:[%s3033] ss:$2 sm:$0xff]
  %v3063 = vld [vmem:[%s3035] ss:$2 sm:$0xff]
  %v3064 = vld [vmem:[%s3037] ss:$2 sm:$0xff]
  %v3065 = vld [vmem:[%s3039] ss:$2 sm:$0xff]
  %v3066 = vld [vmem:[%s3041] ss:$2 sm:$0xff]
  %v3067 = vld [vmem:[%s3043] ss:$2 sm:$0xff]
  %v3068 = vld [vmem:[%s3045] ss:$2 sm:$0xff]
  %3069 = vst.sshfl [vmem:[#allocation1] sm:$0xff pattern:$0x75643120] %v51
  %3070 = vst.sshfl [vmem:[#allocation1 + $0x10] sm:$0xff pattern:$0x75643120] %v52
  %3071 = vst.sshfl [vmem:[#allocation1 + $0x20] sm:$0xff pattern:$0x75643120] %v53
  %3072 = vst.sshfl [vmem:[#allocation1 + $0x30] sm:$0xff pattern:$0x75643120] %v54
  %v3073 = vld [vmem:[%s3033] ss:$2 sm:$0xff]
  %v3074 = vld [vmem:[%s3035] ss:$2 sm:$0xff]
  %v3075 = vld [vmem:[%s3037] ss:$2 sm:$0xff]
  %v3076 = vld [vmem:[%s3039] ss:$2 sm:$0xff]
  %v3077 = vld [vmem:[%s3041] ss:$2 sm:$0xff]
  %v3078 = vld [vmem:[%s3043] ss:$2 sm:$0xff]
  %v3079 = vld [vmem:[%s3045] ss:$2 sm:$0xff]
  %3080 = vst.sshfl [vmem:[#allocation1] sm:$0xff pattern:$0x75643120] %v55
  %3081 = vst.sshfl [vmem:[#allocation1 + $0x10] sm:$0xff pattern:$0x75643120] %v56
  %3082 = vst.sshfl [vmem:[#allocation1 + $0x20] sm:$0xff pattern:$0x75643120] %v57
  %3083 = vst.sshfl [vmem:[#allocation1 + $0x30] sm:$0xff pattern:$0x75643120] %v58
  %v3084 = vld [vmem:[%s3033] ss:$2 sm:$0xff]
  %v3085 = vld [vmem:[%s3035] ss:$2 sm:$0xff]
  %v3086 = vld [vmem:[%s3037] ss:$2 sm:$0xff]
  %v3087 = vld [vmem:[%s3039] ss:$2 sm:$0xff]
  %v3088 = vld [vmem:[%s3041] ss:$2 sm:$0xff]
  %v3089 = vld [vmem:[%s3043] ss:$2 sm:$0xff]
  %v3090 = vld [vmem:[%s3045] ss:$2 sm:$0xff]
  %3091 = vst.sshfl [vmem:[#allocation1] sm:$0xff pattern:$0x75643120] %v59
  %3092 = vst.sshfl [vmem:[#allocation1 + $0x10] sm:$0xff pattern:$0x75643120] %v60
  %3093 = vst.sshfl [vmem:[#allocation1 + $0x20] sm:$0xff pattern:$0x75643120] %v61
  %3094 = vst.sshfl [vmem:[#allocation1 + $0x30] sm:$0xff pattern:$0x75643120] %v62
  %v3095 = vld [vmem:[%s3033] ss:$2 sm:$0xff]
  %v3096 = vld [vmem:[%s3035] ss:$2 sm:$0xff]
  %v3097 = vld [vmem:[%s3037] ss:$2 sm:$0xff]
  %v3098 = vld [vmem:[%s3039] ss:$2 sm:$0xff]
  %v3099 = vld [vmem:[%s3041] ss:$2 sm:$0xff]
  %v3100 = vld [vmem:[%s3043] ss:$2 sm:$0xff]
  %v3101 = vld [vmem:[%s3045] ss:$2 sm:$0xff]
  %3102 = vst.sshfl [vmem:[#allocation1] sm:$0xff pattern:$0x75643120] %v63
  %3103 = vst.sshfl [vmem:[#allocation1 + $0x10] sm:$0xff pattern:$0x75643120] %v64
  %3104 = vst.sshfl [vmem:[#allocation1 + $0x20] sm:$0xff pattern:$0x75643120] %v65
  %3105 = vst.sshfl [vmem:[#allocation1 + $0x30] sm:$0xff pattern:$0x75643120] %v66
  %v3106 = vld [vmem:[%s3033] ss:$2 sm:$0xff]
  %v3107 = vld [vmem:[%s3035] ss:$2 sm:$0xff]
  %v3108 = vld [vmem:[%s3037] ss:$2 sm:$0xff]
  %v3109 = vld [vmem:[%s3039] ss:$2 sm:$0xff]
  %v3110 = vld [vmem:[%s3041] ss:$2 sm:$0xff]
  %v3111 = vld [vmem:[%s3043] ss:$2 sm:$0xff]
  %v3112 = vld [vmem:[%s3045] ss:$2 sm:$0xff]
  %3113 = vst.sshfl [vmem:[#allocation1] sm:$0xff pattern:$0x75643120] %v67
  %3114 = vst.sshfl [vmem:[#allocation1 + $0x10] sm:$0xff pattern:$0x75643120] %v68
  %3115 = vst.sshfl [vmem:[#allocation1 + $0x20] sm:$0xff pattern:$0x75643120] %v69
  %3116 = vst.sshfl [vmem:[#allocation1 + $0x30] sm:$0xff pattern:$0x75643120] %v70
  %v3117 = vld [vmem:[%s3033] ss:$2 sm:$0xff]
  %v3118 = vld [vmem:[%s3035] ss:$2 sm:$0xff]
  %v3119 = vld [vmem:[%s3037] ss:$2 sm:$0xff]
  %v3120 = vld [vmem:[%s3039] ss:$2 sm:$0xff]
  %v3121 = vld [vmem:[%s3041] ss:$2 sm:$0xff]
  %v3122 = vld [vmem:[%s3043] ss:$2 sm:$0xff]
  %v3123 = vld [vmem:[%s3045] ss:$2 sm:$0xff]
  %s3124 = scalar_lea.vmem %s1, 512
  %v3125 = vld [vmem:[%s3124] sm:$0xff]
  %v3126 = vld [vmem:[%s3124 + $0x8] sm:$0xff]
  %v3127 = vld [vmem:[%s3124 + $0x10] sm:$0xff]
  %v3128 = vld [vmem:[%s3124 + $0x18] sm:$0xff]
  %v3129 = vld [vmem:[%s3124 + $0x20] sm:$0xff]
  %v3130 = vld [vmem:[%s3124 + $0x28] sm:$0xff]
  %v3131 = vld [vmem:[%s3124 + $0x30] sm:$0xff]
  %v3132 = vld [vmem:[%s3124 + $0x38] sm:$0xff]
  %v3133 = vld [vmem:[%s3124 + $0x40] sm:$0xff]
  %v3134 = vld [vmem:[%s3124 + $0x48] sm:$0xff]
  %v3135 = vld [vmem:[%s3124 + $0x50] sm:$0xff]
  %v3136 = vld [vmem:[%s3124 + $0x58] sm:$0xff]
  %v3137 = vld [vmem:[%s3124 + $0x60] sm:$0xff]
  %v3138 = vld [vmem:[%s3124 + $0x68] sm:$0xff]
  %v3139 = vld [vmem:[%s3124 + $0x70] sm:$0xff]
  %v3140 = vld [vmem:[%s3124 + $0x78] sm:$0xff]
  %3141 = vst [vmem:[#allocation1] ss:$4 sm:$0xff] %v3034
  %s3142 = scalar_lea.vmem [#allocation1], 1
  %3143 = vst [vmem:[%s3142] ss:$4 sm:$0xff] %v3036
  %s3144 = scalar_lea.vmem [#allocation1], 2
  %3145 = vst [vmem:[%s3144] ss:$4 sm:$0xff] %v3038
  %s3146 = scalar_lea.vmem [#allocation1], 3
  %3147 = vst [vmem:[%s3146] ss:$4 sm:$0xff] %v3040
  %s3148 = scalar_lea.vmem [#allocation1], 32
  %3149 = vst [vmem:[%s3148] ss:$4 sm:$0xff] %v3042
  %s3150 = scalar_lea.vmem [#allocation1], 33
  %3151 = vst [vmem:[%s3150] ss:$4 sm:$0xff] %v3044
  %s3152 = scalar_lea.vmem [#allocation1], 34
  %3153 = vst [vmem:[%s3152] ss:$4 sm:$0xff] %v3046
  %s3154 = scalar_lea.vmem [#allocation1], 35
  %3155 = vst [vmem:[%s3154] ss:$4 sm:$0xff] %v3051
  %v3156 = vld.sshfl [vmem:[#allocation1] sm:$0xff pattern:$0x73625140]
  %v3157 = vld.sshfl [vmem:[#allocation1 + $0x20] sm:$0xff pattern:$0x73625140]
  %3158 = vst [vmem:[#allocation1] ss:$4 sm:$0xff] %v3052
  %3159 = vst [vmem:[%s3142] ss:$4 sm:$0xff] %v3053
  %3160 = vst [vmem:[%s3144] ss:$4 sm:$0xff] %v3054
  %3161 = vst [vmem:[%s3146] ss:$4 sm:$0xff] %v3055
  %3162 = vst [vmem:[%s3148] ss:$4 sm:$0xff] %v3056
  %3163 = vst [vmem:[%s3150] ss:$4 sm:$0xff] %v3057
  %3164 = vst [vmem:[%s3152] ss:$4 sm:$0xff] %v3062
  %3165 = vst [vmem:[%s3154] ss:$4 sm:$0xff] %v3063
  %v3166 = vld.sshfl [vmem:[#allocation1] sm:$0xff pattern:$0x73625140]
  %v3167 = vld.sshfl [vmem:[#allocation1 + $0x20] sm:$0xff pattern:$0x73625140]
  %3168 = vst [vmem:[#allocation1] ss:$4 sm:$0xff] %v3064
  %3169 = vst [vmem:[%s3142] ss:$4 sm:$0xff] %v3065
  %3170 = vst [vmem:[%s3144] ss:$4 sm:$0xff] %v3066
  %3171 = vst [vmem:[%s3146] ss:$4 sm:$0xff] %v3067
  %3172 = vst [vmem:[%s3148] ss:$4 sm:$0xff] %v3068
  %3173 = vst [vmem:[%s3150] ss:$4 sm:$0xff] %v3073
  %3174 = vst [vmem:[%s3152] ss:$4 sm:$0xff] %v3074
  %3175 = vst [vmem:[%s3154] ss:$4 sm:$0xff] %v3075
  %v3176 = vld.sshfl [vmem:[#allocation1] sm:$0xff pattern:$0x73625140]
  %v3177 = vld.sshfl [vmem:[#allocation1 + $0x20] sm:$0xff pattern:$0x73625140]
  %3178 = vst [vmem:[#allocation1] ss:$4 sm:$0xff] %v3076
  %3179 = vst [vmem:[%s3142] ss:$4 sm:$0xff] %v3077
  %3180 = vst [vmem:[%s3144] ss:$4 sm:$0xff] %v3078
  %3181 = vst [vmem:[%s3146] ss:$4 sm:$0xff] %v3079
  %3182 = vst [vmem:[%s3148] ss:$4 sm:$0xff] %v3084
  %3183 = vst [vmem:[%s3150] ss:$4 sm:$0xff] %v3085
  %3184 = vst [vmem:[%s3152] ss:$4 sm:$0xff] %v3086
  %3185 = vst [vmem:[%s3154] ss:$4 sm:$0xff] %v3087
  %v3186 = vld.sshfl [vmem:[#allocation1] sm:$0xff pattern:$0x73625140]
  %v3187 = vld.sshfl [vmem:[#allocation1 + $0x20] sm:$0xff pattern:$0x73625140]
  %3188 = vst [vmem:[#allocation1] ss:$4 sm:$0xff] %v3088
  %3189 = vst [vmem:[%s3142] ss:$4 sm:$0xff] %v3089
  %3190 = vst [vmem:[%s3144] ss:$4 sm:$0xff] %v3090
  %3191 = vst [vmem:[%s3146] ss:$4 sm:$0xff] %v3095
  %3192 = vst [vmem:[%s3148] ss:$4 sm:$0xff] %v3096
  %3193 = vst [vmem:[%s3150] ss:$4 sm:$0xff] %v3097
  %3194 = vst [vmem:[%s3152] ss:$4 sm:$0xff] %v3098
  %3195 = vst [vmem:[%s3154] ss:$4 sm:$0xff] %v3099
  %v3196 = vld.sshfl [vmem:[#allocation1] sm:$0xff pattern:$0x73625140]
  %v3197 = vld.sshfl [vmem:[#allocation1 + $0x20] sm:$0xff pattern:$0x73625140]
  %3198 = vst [vmem:[#allocation1] ss:$4 sm:$0xff] %v3100
  %3199 = vst [vmem:[%s3142] ss:$4 sm:$0xff] %v3101
  %3200 = vst [vmem:[%s3144] ss:$4 sm:$0xff] %v3106
  %3201 = vst [vmem:[%s3146] ss:$4 sm:$0xff] %v3107
  %3202 = vst [vmem:[%s3148] ss:$4 sm:$0xff] %v3108
  %3203 = vst [vmem:[%s3150] ss:$4 sm:$0xff] %v3109
  %3204 = vst [vmem:[%s3152] ss:$4 sm:$0xff] %v3110
  %3205 = vst [vmem:[%s3154] ss:$4 sm:$0xff] %v3111
  %v3206 = vld.sshfl [vmem:[#allocation1] sm:$0xff pattern:$0x73625140]
  %v3207 = vld.sshfl [vmem:[#allocation1 + $0x20] sm:$0xff pattern:$0x73625140]
  %3208 = vst [vmem:[#allocation1] ss:$4 sm:$0xff] %v3112
  %3209 = vst [vmem:[%s3142] ss:$4 sm:$0xff] %v3117
  %3210 = vst [vmem:[%s3144] ss:$4 sm:$0xff] %v3118
  %3211 = vst [vmem:[%s3146] ss:$4 sm:$0xff] %v3119
  %3212 = vst [vmem:[%s3148] ss:$4 sm:$0xff] %v3120
  %3213 = vst [vmem:[%s3150] ss:$4 sm:$0xff] %v3121
  %3214 = vst [vmem:[%s3152] ss:$4 sm:$0xff] %v3122
  %3215 = vst [vmem:[%s3154] ss:$4 sm:$0xff] %v3123
  %v3216 = vld.sshfl [vmem:[#allocation1] sm:$0xff pattern:$0x73625140]
  %v3217 = vld.sshfl [vmem:[#allocation1 + $0x20] sm:$0xff pattern:$0x73625140]
  %v3248 = vunpack.c.l.b16 %v3125
  %v3249 = vunpack.c.h.b16 %v3125
  %v3250 = vunpack.c.l.b16 %v3126
  %v3251 = vunpack.c.h.b16 %v3126
  %v3252 = vunpack.c.l.b16 %v3127
  %v3253 = vunpack.c.h.b16 %v3127
  %v3254 = vunpack.c.l.b16 %v3128
  %v3255 = vunpack.c.h.b16 %v3128
  %v3256 = vunpack.c.l.b16 %v3129
  %v3257 = vunpack.c.h.b16 %v3129
  %v3258 = vunpack.c.l.b16 %v3130
  %v3259 = vunpack.c.h.b16 %v3130
  %v3260 = vunpack.c.l.b16 %v3131
  %v3261 = vunpack.c.h.b16 %v3131
  %v3262 = vunpack.c.l.b16 %v3132
  %v3263 = vunpack.c.h.b16 %v3132
  %v3264 = vunpack.c.l.b16 %v3133
  %v3265 = vunpack.c.h.b16 %v3133
  %v3266 = vunpack.c.l.b16 %v3134
  %v3267 = vunpack.c.h.b16 %v3134
  %v3268 = vunpack.c.l.b16 %v3135
  %v3269 = vunpack.c.h.b16 %v3135
  %v3270 = vunpack.c.l.b16 %v3136
  %v3271 = vunpack.c.h.b16 %v3136
  %v3272 = vunpack.c.l.b16 %v3137
  %v3273 = vunpack.c.h.b16 %v3137
  %v3274 = vunpack.c.l.b16 %v3138
  %v3275 = vunpack.c.h.b16 %v3138
  %v3276 = vunpack.c.l.b16 %v3139
  %v3277 = vunpack.c.h.b16 %v3139
  %v3278 = vunpack.c.l.b16 %v3140
  %v3279 = vunpack.c.h.b16 %v3140
  %v3280 = vpack.c.b16 %v3250, %v3248
  %v3281 = vpack.c.b16 %v3251, %v3249
  %v3282 = vpack.c.b16 %v3254, %v3252
  %v3283 = vpack.c.b16 %v3255, %v3253
  %v3284 = vpack.c.b16 %v3258, %v3256
  %v3285 = vpack.c.b16 %v3259, %v3257
  %v3286 = vpack.c.b16 %v3262, %v3260
  %v3287 = vpack.c.b16 %v3263, %v3261
  %v3288 = vpack.c.b16 %v3266, %v3264
  %v3289 = vpack.c.b16 %v3267, %v3265
  %v3290 = vpack.c.b16 %v3270, %v3268
  %v3291 = vpack.c.b16 %v3271, %v3269
  %v3292 = vpack.c.b16 %v3274, %v3272
  %v3293 = vpack.c.b16 %v3275, %v3273
  %v3294 = vpack.c.b16 %v3278, %v3276
  %v3295 = vpack.c.b16 %v3279, %v3277
  %3312 = vmatpush.bf16.msra.mxu0 %v3294
  %3313 = vmatpush.bf16.msra.mxu0 %v3292
  %3314 = vmatpush.bf16.msra.mxu0 %v3290
  %3315 = vmatpush.bf16.msra.mxu0 %v3288
  %3316 = vmatpush.bf16.msra.mxu0 %v3286
  %3317 = vmatpush.bf16.msra.mxu0 %v3284
  %3318 = vmatpush.bf16.msra.mxu0 %v3282
  %3319 = vmatpush.bf16.msra.mxu0 %v3280
  %3320 = vmatmul.bf16.gmra.mxu0 %v3156
  %v3321 = vpop.f32.mrf.mxu0
  %v3322 = vadd.f32 0.0, %v3321
  %v3323 = vpop.f32.mrf.mxu0
  %v3324 = vadd.f32 0.0, %v3323
  %3325 = vmatmul.bf16.gmra.mxu0 %v3157
  %v3326 = vpop.f32.mrf.mxu0
  %v3327 = vadd.f32 0.0, %v3326
  %v3328 = vpop.f32.mrf.mxu0
  %v3329 = vadd.f32 0.0, %v3328
  %3330 = vmatmul.bf16.gmra.mxu0 %v3166
  %v3331 = vpop.f32.mrf.mxu0
  %v3332 = vadd.f32 0.0, %v3331
  %v3333 = vpop.f32.mrf.mxu0
  %v3334 = vadd.f32 0.0, %v3333
  %3335 = vmatmul.bf16.gmra.mxu0 %v3167
  %v3336 = vpop.f32.mrf.mxu0
  %v3337 = vadd.f32 0.0, %v3336
  %v3338 = vpop.f32.mrf.mxu0
  %v3339 = vadd.f32 0.0, %v3338
  %3340 = vmatmul.bf16.gmra.mxu0 %v3176
  %v3341 = vpop.f32.mrf.mxu0
  %v3342 = vadd.f32 0.0, %v3341
  %v3343 = vpop.f32.mrf.mxu0
  %v3344 = vadd.f32 0.0, %v3343
  %3345 = vmatmul.bf16.gmra.mxu0 %v3177
  %v3346 = vpop.f32.mrf.mxu0
  %v3347 = vadd.f32 0.0, %v3346
  %v3348 = vpop.f32.mrf.mxu0
  %v3349 = vadd.f32 0.0, %v3348
  %3350 = vmatmul.bf16.gmra.mxu0 %v3186
  %v3351 = vpop.f32.mrf.mxu0
  %v3352 = vadd.f32 0.0, %v3351
  %v3353 = vpop.f32.mrf.mxu0
  %v3354 = vadd.f32 0.0, %v3353
  %3355 = vmatmul.bf16.gmra.mxu0 %v3187
  %v3356 = vpop.f32.mrf.mxu0
  %v3357 = vadd.f32 0.0, %v3356
  %v3358 = vpop.f32.mrf.mxu0
  %v3359 = vadd.f32 0.0, %v3358
  %3360 = vmatmul.bf16.gmra.mxu0 %v3196
  %v3361 = vpop.f32.mrf.mxu0
  %v3362 = vadd.f32 0.0, %v3361
  %v3363 = vpop.f32.mrf.mxu0
  %v3364 = vadd.f32 0.0, %v3363
  %3365 = vmatmul.bf16.gmra.mxu0 %v3197
  %v3366 = vpop.f32.mrf.mxu0
  %v3367 = vadd.f32 0.0, %v3366
  %v3368 = vpop.f32.mrf.mxu0
  %v3369 = vadd.f32 0.0, %v3368
  %3370 = vmatmul.bf16.gmra.mxu0 %v3206
  %v3371 = vpop.f32.mrf.mxu0
  %v3372 = vadd.f32 0.0, %v3371
  %v3373 = vpop.f32.mrf.mxu0
  %v3374 = vadd.f32 0.0, %v3373
  %3375 = vmatmul.bf16.gmra.mxu0 %v3207
  %v3376 = vpop.f32.mrf.mxu0
  %v3377 = vadd.f32 0.0, %v3376
  %v3378 = vpop.f32.mrf.mxu0
  %v3379 = vadd.f32 0.0, %v3378
  %3380 = vmatmul.bf16.gmra.mxu0 %v3216
  %v3381 = vpop.f32.mrf.mxu0
  %v3382 = vadd.f32 0.0, %v3381
  %v3383 = vpop.f32.mrf.mxu0
  %v3384 = vadd.f32 0.0, %v3383
  %3385 = vmatmul.bf16.gmra.mxu0 %v3217
  %v3386 = vpop.f32.mrf.mxu0
  %v3387 = vadd.f32 0.0, %v3386
  %v3388 = vpop.f32.mrf.mxu0
  %v3389 = vadd.f32 0.0, %v3388
  %3390 = vdwg.mxu0
  %3391 = vmatpush.bf16.msra.mxu0 %v3295
  %3392 = vmatpush.bf16.msra.mxu0 %v3293
  %3393 = vmatpush.bf16.msra.mxu0 %v3291
  %3394 = vmatpush.bf16.msra.mxu0 %v3289
  %3395 = vmatpush.bf16.msra.mxu0 %v3287
  %3396 = vmatpush.bf16.msra.mxu0 %v3285
  %3397 = vmatpush.bf16.msra.mxu0 %v3283
  %3398 = vmatpush.bf16.msra.mxu0 %v3281
  %3399 = vmatmul.bf16.gmra.mxu0 %v3156
  %v3400 = vpop.f32.mrf.mxu0
  %v3401 = vadd.f32 0.0, %v3400
  %v3402 = vpop.f32.mrf.mxu0
  %v3403 = vadd.f32 0.0, %v3402
  %3404 = vmatmul.bf16.gmra.mxu0 %v3157
  %v3405 = vpop.f32.mrf.mxu0
  %v3406 = vadd.f32 0.0, %v3405
  %v3407 = vpop.f32.mrf.mxu0
  %v3408 = vadd.f32 0.0, %v3407
  %3409 = vmatmul.bf16.gmra.mxu0 %v3166
  %v3410 = vpop.f32.mrf.mxu0
  %v3411 = vadd.f32 0.0, %v3410
  %v3412 = vpop.f32.mrf.mxu0
  %v3413 = vadd.f32 0.0, %v3412
  %3414 = vmatmul.bf16.gmra.mxu0 %v3167
  %v3415 = vpop.f32.mrf.mxu0
  %v3416 = vadd.f32 0.0, %v3415
  %v3417 = vpop.f32.mrf.mxu0
  %v3418 = vadd.f32 0.0, %v3417
  %3419 = vmatmul.bf16.gmra.mxu0 %v3176
  %v3420 = vpop.f32.mrf.mxu0
  %v3421 = vadd.f32 0.0, %v3420
  %v3422 = vpop.f32.mrf.mxu0
  %v3423 = vadd.f32 0.0, %v3422
  %3424 = vmatmul.bf16.gmra.mxu0 %v3177
  %v3425 = vpop.f32.mrf.mxu0
  %v3426 = vadd.f32 0.0, %v3425
  %v3427 = vpop.f32.mrf.mxu0
  %v3428 = vadd.f32 0.0, %v3427
  %3429 = vmatmul.bf16.gmra.mxu0 %v3186
  %v3430 = vpop.f32.mrf.mxu0
  %v3431 = vadd.f32 0.0, %v3430
  %v3432 = vpop.f32.mrf.mxu0
  %v3433 = vadd.f32 0.0, %v3432
  %3434 = vmatmul.bf16.gmra.mxu0 %v3187
  %v3435 = vpop.f32.mrf.mxu0
  %v3436 = vadd.f32 0.0, %v3435
  %v3437 = vpop.f32.mrf.mxu0
  %v3438 = vadd.f32 0.0, %v3437
  %3439 = vmatmul.bf16.gmra.mxu0 %v3196
  %v3440 = vpop.f32.mrf.mxu0
  %v3441 = vadd.f32 0.0, %v3440
  %v3442 = vpop.f32.mrf.mxu0
  %v3443 = vadd.f32 0.0, %v3442
  %3444 = vmatmul.bf16.gmra.mxu0 %v3197
  %v3445 = vpop.f32.mrf.mxu0
  %v3446 = vadd.f32 0.0, %v3445
  %v3447 = vpop.f32.mrf.mxu0
  %v3448 = vadd.f32 0.0, %v3447
  %3449 = vmatmul.bf16.gmra.mxu0 %v3206
  %v3450 = vpop.f32.mrf.mxu0
  %v3451 = vadd.f32 0.0, %v3450
  %v3452 = vpop.f32.mrf.mxu0
  %v3453 = vadd.f32 0.0, %v3452
  %3454 = vmatmul.bf16.gmra.mxu0 %v3207
  %v3455 = vpop.f32.mrf.mxu0
  %v3456 = vadd.f32 0.0, %v3455
  %v3457 = vpop.f32.mrf.mxu0
  %v3458 = vadd.f32 0.0, %v3457
  %3459 = vmatmul.bf16.gmra.mxu0 %v3216
  %v3460 = vpop.f32.mrf.mxu0
  %v3461 = vadd.f32 0.0, %v3460
  %v3462 = vpop.f32.mrf.mxu0
  %v3463 = vadd.f32 0.0, %v3462
  %3464 = vmatmul.bf16.gmra.mxu0 %v3217
  %v3465 = vpop.f32.mrf.mxu0
  %v3466 = vadd.f32 0.0, %v3465
  %v3467 = vpop.f32.mrf.mxu0
  %v3468 = vadd.f32 0.0, %v3467
  %3469 = vdwg.mxu0
  %v3470 = vadd.f32 %v2973, %v3322
  %v3471 = vadd.f32 %v2974, %v3401
  %v3472 = vadd.f32 %v2975, %v3324
  %v3473 = vadd.f32 %v2976, %v3403
  %v3474 = vadd.f32 %v2977, %v3327
  %v3475 = vadd.f32 %v2978, %v3406
  %v3476 = vadd.f32 %v2979, %v3329
  %v3477 = vadd.f32 %v2980, %v3408
  %v3478 = vadd.f32 %v2981, %v3332
  %v3479 = vadd.f32 %v2982, %v3411
  %v3480 = vadd.f32 %v2983, %v3334
  %v3481 = vadd.f32 %v2984, %v3413
  %v3482 = vadd.f32 %v2985, %v3337
  %v3483 = vadd.f32 %v2986, %v3416
  %v3484 = vadd.f32 %v2987, %v3339
  %v3485 = vadd.f32 %v2988, %v3418
  %v3486 = vadd.f32 %v2989, %v3342
  %v3487 = vadd.f32 %v2990, %v3421
  %v3488 = vadd.f32 %v2991, %v3344
  %v3489 = vadd.f32 %v2992, %v3423
  %v3490 = vadd.f32 %v2993, %v3347
  %v3491 = vadd.f32 %v2994, %v3426
  %v3492 = vadd.f32 %v2995, %v3349
  %v3493 = vadd.f32 %v2996, %v3428
  %v3494 = vadd.f32 %v2997, %v3352
  %v3495 = vadd.f32 %v2998, %v3431
  %v3496 = vadd.f32 %v2999, %v3354
  %v3497 = vadd.f32 %v3000, %v3433
  %v3498 = vadd.f32 %v3001, %v3357
  %v3499 = vadd.f32 %v3002, %v3436
  %v3500 = vadd.f32 %v3003, %v3359
  %v3501 = vadd.f32 %v3004, %v3438
  %v3502 = vadd.f32 %v3005, %v3362
  %v3503 = vadd.f32 %v3006, %v3441
  %v3504 = vadd.f32 %v3007, %v3364
  %v3505 = vadd.f32 %v3008, %v3443
  %v3506 = vadd.f32 %v3009, %v3367
  %v3507 = vadd.f32 %v3010, %v3446
  %v3508 = vadd.f32 %v3011, %v3369
  %v3509 = vadd.f32 %v3012, %v3448
  %v3510 = vadd.f32 %v3013, %v3372
  %v3511 = vadd.f32 %v3014, %v3451
  %v3512 = vadd.f32 %v3015, %v3374
  %v3513 = vadd.f32 %v3016, %v3453
  %v3514 = vadd.f32 %v3017, %v3377
  %v3515 = vadd.f32 %v3018, %v3456
  %v3516 = vadd.f32 %v3019, %v3379
  %v3517 = vadd.f32 %v3020, %v3458
  %v3518 = vadd.f32 %v3021, %v3382
  %v3519 = vadd.f32 %v3022, %v3461
  %v3520 = vadd.f32 %v3023, %v3384
  %v3521 = vadd.f32 %v3024, %v3463
  %v3522 = vadd.f32 %v3025, %v3387
  %v3523 = vadd.f32 %v3026, %v3466
  %v3524 = vadd.f32 %v3027, %v3389
  %v3525 = vadd.f32 %v3028, %v3468
  %v3526 = vld [vmem:[%s2] sm:$0x3]
  %v3528 = vperm.slane %v3526, 0
  %v3529 = vperm.slane %v3526, 1
  %v3532 = vadd.f32 %v3470, %v3528
  %v3533 = vadd.f32 %v3471, %v3529
  %v3534 = vadd.f32 %v3472, %v3528
  %v3535 = vadd.f32 %v3473, %v3529
  %v3536 = vadd.f32 %v3474, %v3528
  %v3537 = vadd.f32 %v3475, %v3529
  %v3538 = vadd.f32 %v3476, %v3528
  %v3539 = vadd.f32 %v3477, %v3529
  %v3540 = vadd.f32 %v3478, %v3528
  %v3541 = vadd.f32 %v3479, %v3529
  %v3542 = vadd.f32 %v3480, %v3528
  %v3543 = vadd.f32 %v3481, %v3529
  %v3544 = vadd.f32 %v3482, %v3528
  %v3545 = vadd.f32 %v3483, %v3529
  %v3546 = vadd.f32 %v3484, %v3528
  %v3547 = vadd.f32 %v3485, %v3529
  %v3548 = vadd.f32 %v3486, %v3528
  %v3549 = vadd.f32 %v3487, %v3529
  %v3550 = vadd.f32 %v3488, %v3528
  %v3551 = vadd.f32 %v3489, %v3529
  %v3552 = vadd.f32 %v3490, %v3528
  %v3553 = vadd.f32 %v3491, %v3529
  %v3554 = vadd.f32 %v3492, %v3528
  %v3555 = vadd.f32 %v3493, %v3529
  %v3556 = vadd.f32 %v3494, %v3528
  %v3557 = vadd.f32 %v3495, %v3529
  %v3558 = vadd.f32 %v3496, %v3528
  %v3559 = vadd.f32 %v3497, %v3529
  %v3560 = vadd.f32 %v3498, %v3528
  %v3561 = vadd.f32 %v3499, %v3529
  %v3562 = vadd.f32 %v3500, %v3528
  %v3563 = vadd.f32 %v3501, %v3529
  %v3564 = vadd.f32 %v3502, %v3528
  %v3565 = vadd.f32 %v3503, %v3529
  %v3566 = vadd.f32 %v3504, %v3528
  %v3567 = vadd.f32 %v3505, %v3529
  %v3568 = vadd.f32 %v3506, %v3528
  %v3569 = vadd.f32 %v3507, %v3529
  %v3570 = vadd.f32 %v3508, %v3528
  %v3571 = vadd.f32 %v3509, %v3529
  %v3572 = vadd.f32 %v3510, %v3528
  %v3573 = vadd.f32 %v3511, %v3529
  %v3574 = vadd.f32 %v3512, %v3528
  %v3575 = vadd.f32 %v3513, %v3529
  %v3576 = vadd.f32 %v3514, %v3528
  %v3577 = vadd.f32 %v3515, %v3529
  %v3578 = vadd.f32 %v3516, %v3528
  %v3579 = vadd.f32 %v3517, %v3529
  %v3580 = vadd.f32 %v3518, %v3528
  %v3581 = vadd.f32 %v3519, %v3529
  %v3582 = vadd.f32 %v3520, %v3528
  %v3583 = vadd.f32 %v3521, %v3529
  %v3584 = vadd.f32 %v3522, %v3528
  %v3585 = vadd.f32 %v3523, %v3529
  %v3586 = vadd.f32 %v3524, %v3528
  %v3587 = vadd.f32 %v3525, %v3529
  %v3588 = vmax.f32 %v3532, 0.0
  %v3589 = vmax.f32 %v3533, 0.0
  %v3590 = vmax.f32 %v3534, 0.0
  %v3591 = vmax.f32 %v3535, 0.0
  %v3592 = vmax.f32 %v3536, 0.0
  %v3593 = vmax.f32 %v3537, 0.0
  %v3594 = vmax.f32 %v3538, 0.0
  %v3595 = vmax.f32 %v3539, 0.0
  %v3596 = vmax.f32 %v3540, 0.0
  %v3597 = vmax.f32 %v3541, 0.0
  %v3598 = vmax.f32 %v3542, 0.0
  %v3599 = vmax.f32 %v3543, 0.0
  %v3600 = vmax.f32 %v3544, 0.0
  %v3601 = vmax.f32 %v3545, 0.0
  %v3602 = vmax.f32 %v3546, 0.0
  %v3603 = vmax.f32 %v3547, 0.0
  %v3604 = vmax.f32 %v3548, 0.0
  %v3605 = vmax.f32 %v3549, 0.0
  %v3606 = vmax.f32 %v3550, 0.0
  %v3607 = vmax.f32 %v3551, 0.0
  %v3608 = vmax.f32 %v3552, 0.0
  %v3609 = vmax.f32 %v3553, 0.0
  %v3610 = vmax.f32 %v3554, 0.0
  %v3611 = vmax.f32 %v3555, 0.0
  %v3612 = vmax.f32 %v3556, 0.0
  %v3613 = vmax.f32 %v3557, 0.0
  %v3614 = vmax.f32 %v3558, 0.0
  %v3615 = vmax.f32 %v3559, 0.0
  %v3616 = vmax.f32 %v3560, 0.0
  %v3617 = vmax.f32 %v3561, 0.0
  %v3618 = vmax.f32 %v3562, 0.0
  %v3619 = vmax.f32 %v3563, 0.0
  %v3620 = vmax.f32 %v3564, 0.0
  %v3621 = vmax.f32 %v3565, 0.0
  %v3622 = vmax.f32 %v3566, 0.0
  %v3623 = vmax.f32 %v3567, 0.0
  %v3624 = vmax.f32 %v3568, 0.0
  %v3625 = vmax.f32 %v3569, 0.0
  %v3626 = vmax.f32 %v3570, 0.0
  %v3627 = vmax.f32 %v3571, 0.0
  %v3628 = vmax.f32 %v3572, 0.0
  %v3629 = vmax.f32 %v3573, 0.0
  %v3630 = vmax.f32 %v3574, 0.0
  %v3631 = vmax.f32 %v3575, 0.0
  %v3632 = vmax.f32 %v3576, 0.0
  %v3633 = vmax.f32 %v3577, 0.0
  %v3634 = vmax.f32 %v3578, 0.0
  %v3635 = vmax.f32 %v3579, 0.0
  %v3636 = vmax.f32 %v3580, 0.0
  %v3637 = vmax.f32 %v3581, 0.0
  %v3638 = vmax.f32 %v3582, 0.0
  %v3639 = vmax.f32 %v3583, 0.0
  %v3640 = vmax.f32 %v3584, 0.0
  %v3641 = vmax.f32 %v3585, 0.0
  %v3642 = vmax.f32 %v3586, 0.0
  %v3643 = vmax.f32 %v3587, 0.0
  %v3700 = vrot.slane %v3589, 6
  %v3701 = vrot.slane %v3591, 6
  %v3702 = vrot.slane %v3593, 6
  %v3703 = vrot.slane %v3595, 6
  %v3704 = vrot.slane %v3597, 6
  %v3705 = vrot.slane %v3599, 6
  %v3706 = vrot.slane %v3601, 6
  %v3707 = vrot.slane %v3603, 6
  %v3708 = vrot.slane %v3605, 6
  %v3709 = vrot.slane %v3607, 6
  %v3710 = vrot.slane %v3609, 6
  %v3711 = vrot.slane %v3611, 6
  %v3712 = vrot.slane %v3613, 6
  %v3713 = vrot.slane %v3615, 6
  %v3714 = vrot.slane %v3617, 6
  %v3715 = vrot.slane %v3619, 6
  %v3716 = vrot.slane %v3621, 6
  %v3717 = vrot.slane %v3623, 6
  %v3718 = vrot.slane %v3625, 6
  %v3719 = vrot.slane %v3627, 6
  %v3720 = vrot.slane %v3629, 6
  %v3721 = vrot.slane %v3631, 6
  %v3722 = vrot.slane %v3633, 6
  %v3723 = vrot.slane %v3635, 6
  %v3724 = vrot.slane %v3637, 6
  %v3725 = vrot.slane %v3639, 6
  %v3726 = vrot.slane %v3641, 6
  %v3727 = vrot.slane %v3643, 6
  %v3728 = vsel %vm135, %v3588, %v3700
  %v3729 = vsel %vm139, %v3588, %v3700
  %v3730 = vrot.slane %v3729, 2
  %vm3731 = vcmask 1045508
  %v3732 = vsel %vm3731, %v3588, %v3700
  %v3733 = vrot.slane %v3732, 4
  %vm3734 = vcmask 1045504
  %v3735 = vsel %vm3734, %v3700, %v3588
  %v3736 = vrot.slane %v3735, 6
  %v3737 = vsel %vm135, %v3590, %v3701
  %v3738 = vsel %vm139, %v3590, %v3701
  %v3739 = vrot.slane %v3738, 2
  %v3740 = vsel %vm3731, %v3590, %v3701
  %v3741 = vrot.slane %v3740, 4
  %v3742 = vsel %vm3734, %v3701, %v3590
  %v3743 = vrot.slane %v3742, 6
  %v3744 = vsel %vm135, %v3592, %v3702
  %v3745 = vsel %vm139, %v3592, %v3702
  %v3746 = vrot.slane %v3745, 2
  %v3747 = vsel %vm3731, %v3592, %v3702
  %v3748 = vrot.slane %v3747, 4
  %v3749 = vsel %vm3734, %v3702, %v3592
  %v3750 = vrot.slane %v3749, 6
  %v3751 = vsel %vm135, %v3594, %v3703
  %v3752 = vsel %vm139, %v3594, %v3703
  %v3753 = vrot.slane %v3752, 2
  %v3754 = vsel %vm3731, %v3594, %v3703
  %v3755 = vrot.slane %v3754, 4
  %v3756 = vsel %vm3734, %v3703, %v3594
  %v3757 = vrot.slane %v3756, 6
  %v3758 = vsel %vm135, %v3596, %v3704
  %v3759 = vsel %vm139, %v3596, %v3704
  %v3760 = vrot.slane %v3759, 2
  %v3761 = vsel %vm3731, %v3596, %v3704
  %v3762 = vrot.slane %v3761, 4
  %v3763 = vsel %vm3734, %v3704, %v3596
  %v3764 = vrot.slane %v3763, 6
  %v3765 = vsel %vm135, %v3598, %v3705
  %v3766 = vsel %vm139, %v3598, %v3705
  %v3767 = vrot.slane %v3766, 2
  %v3768 = vsel %vm3731, %v3598, %v3705
  %v3769 = vrot.slane %v3768, 4
  %v3770 = vsel %vm3734, %v3705, %v3598
  %v3771 = vrot.slane %v3770, 6
  %v3772 = vsel %vm135, %v3600, %v3706
  %v3773 = vsel %vm139, %v3600, %v3706
  %v3774 = vrot.slane %v3773, 2
  %v3775 = vsel %vm3731, %v3600, %v3706
  %v3776 = vrot.slane %v3775, 4
  %v3777 = vsel %vm3734, %v3706, %v3600
  %v3778 = vrot.slane %v3777, 6
  %v3779 = vsel %vm135, %v3602, %v3707
  %v3780 = vsel %vm139, %v3602, %v3707
  %v3781 = vrot.slane %v3780, 2
  %v3782 = vsel %vm3731, %v3602, %v3707
  %v3783 = vrot.slane %v3782, 4
  %v3784 = vsel %vm3734, %v3707, %v3602
  %v3785 = vrot.slane %v3784, 6
  %v3786 = vsel %vm135, %v3604, %v3708
  %v3787 = vsel %vm139, %v3604, %v3708
  %v3788 = vrot.slane %v3787, 2
  %v3789 = vsel %vm3731, %v3604, %v3708
  %v3790 = vrot.slane %v3789, 4
  %v3791 = vsel %vm3734, %v3708, %v3604
  %v3792 = vrot.slane %v3791, 6
  %v3793 = vsel %vm135, %v3606, %v3709
  %v3794 = vsel %vm139, %v3606, %v3709
  %v3795 = vrot.slane %v3794, 2
  %v3796 = vsel %vm3731, %v3606, %v3709
  %v3797 = vrot.slane %v3796, 4
  %v3798 = vsel %vm3734, %v3709, %v3606
  %v3799 = vrot.slane %v3798, 6
  %v3800 = vsel %vm135, %v3608, %v3710
  %v3801 = vsel %vm139, %v3608, %v3710
  %v3802 = vrot.slane %v3801, 2
  %v3803 = vsel %vm3731, %v3608, %v3710
  %v3804 = vrot.slane %v3803, 4
  %v3805 = vsel %vm3734, %v3710, %v3608
  %v3806 = vrot.slane %v3805, 6
  %v3807 = vsel %vm135, %v3610, %v3711
  %v3808 = vsel %vm139, %v3610, %v3711
  %v3809 = vrot.slane %v3808, 2
  %v3810 = vsel %vm3731, %v3610, %v3711
  %v3811 = vrot.slane %v3810, 4
  %v3812 = vsel %vm3734, %v3711, %v3610
  %v3813 = vrot.slane %v3812, 6
  %v3814 = vsel %vm135, %v3612, %v3712
  %v3815 = vsel %vm139, %v3612, %v3712
  %v3816 = vrot.slane %v3815, 2
  %v3817 = vsel %vm3731, %v3612, %v3712
  %v3818 = vrot.slane %v3817, 4
  %v3819 = vsel %vm3734, %v3712, %v3612
  %v3820 = vrot.slane %v3819, 6
  %v3821 = vsel %vm135, %v3614, %v3713
  %v3822 = vsel %vm139, %v3614, %v3713
  %v3823 = vrot.slane %v3822, 2
  %v3824 = vsel %vm3731, %v3614, %v3713
  %v3825 = vrot.slane %v3824, 4
  %v3826 = vsel %vm3734, %v3713, %v3614
  %v3827 = vrot.slane %v3826, 6
  %v3828 = vsel %vm135, %v3616, %v3714
  %v3829 = vsel %vm139, %v3616, %v3714
  %v3830 = vrot.slane %v3829, 2
  %v3831 = vsel %vm3731, %v3616, %v3714
  %v3832 = vrot.slane %v3831, 4
  %v3833 = vsel %vm3734, %v3714, %v3616
  %v3834 = vrot.slane %v3833, 6
  %v3835 = vsel %vm135, %v3618, %v3715
  %v3836 = vsel %vm139, %v3618, %v3715
  %v3837 = vrot.slane %v3836, 2
  %v3838 = vsel %vm3731, %v3618, %v3715
  %v3839 = vrot.slane %v3838, 4
  %v3840 = vsel %vm3734, %v3715, %v3618
  %v3841 = vrot.slane %v3840, 6
  %v3842 = vsel %vm135, %v3620, %v3716
  %v3843 = vsel %vm139, %v3620, %v3716
  %v3844 = vrot.slane %v3843, 2
  %v3845 = vsel %vm3731, %v3620, %v3716
  %v3846 = vrot.slane %v3845, 4
  %v3847 = vsel %vm3734, %v3716, %v3620
  %v3848 = vrot.slane %v3847, 6
  %v3849 = vsel %vm135, %v3622, %v3717
  %v3850 = vsel %vm139, %v3622, %v3717
  %v3851 = vrot.slane %v3850, 2
  %v3852 = vsel %vm3731, %v3622, %v3717
  %v3853 = vrot.slane %v3852, 4
  %v3854 = vsel %vm3734, %v3717, %v3622
  %v3855 = vrot.slane %v3854, 6
  %v3856 = vsel %vm135, %v3624, %v3718
  %v3857 = vsel %vm139, %v3624, %v3718
  %v3858 = vrot.slane %v3857, 2
  %v3859 = vsel %vm3731, %v3624, %v3718
  %v3860 = vrot.slane %v3859, 4
  %v3861 = vsel %vm3734, %v3718, %v3624
  %v3862 = vrot.slane %v3861, 6
  %v3863 = vsel %vm135, %v3626, %v3719
  %v3864 = vsel %vm139, %v3626, %v3719
  %v3865 = vrot.slane %v3864, 2
  %v3866 = vsel %vm3731, %v3626, %v3719
  %v3867 = vrot.slane %v3866, 4
  %v3868 = vsel %vm3734, %v3719, %v3626
  %v3869 = vrot.slane %v3868, 6
  %v3870 = vsel %vm135, %v3628, %v3720
  %v3871 = vsel %vm139, %v3628, %v3720
  %v3872 = vrot.slane %v3871, 2
  %v3873 = vsel %vm3731, %v3628, %v3720
  %v3874 = vrot.slane %v3873, 4
  %v3875 = vsel %vm3734, %v3720, %v3628
  %v3876 = vrot.slane %v3875, 6
  %v3877 = vsel %vm135, %v3630, %v3721
  %v3878 = vsel %vm139, %v3630, %v3721
  %v3879 = vrot.slane %v3878, 2
  %v3880 = vsel %vm3731, %v3630, %v3721
  %v3881 = vrot.slane %v3880, 4
  %v3882 = vsel %vm3734, %v3721, %v3630
  %v3883 = vrot.slane %v3882, 6
  %v3884 = vsel %vm135, %v3632, %v3722
  %v3885 = vsel %vm139, %v3632, %v3722
  %v3886 = vrot.slane %v3885, 2
  %v3887 = vsel %vm3731, %v3632, %v3722
  %v3888 = vrot.slane %v3887, 4
  %v3889 = vsel %vm3734, %v3722, %v3632
  %v3890 = vrot.slane %v3889, 6
  %v3891 = vsel %vm135, %v3634, %v3723
  %v3892 = vsel %vm139, %v3634, %v3723
  %v3893 = vrot.slane %v3892, 2
  %v3894 = vsel %vm3731, %v3634, %v3723
  %v3895 = vrot.slane %v3894, 4
  %v3896 = vsel %vm3734, %v3723, %v3634
  %v3897 = vrot.slane %v3896, 6
  %v3898 = vsel %vm135, %v3636, %v3724
  %v3899 = vsel %vm139, %v3636, %v3724
  %v3900 = vrot.slane %v3899, 2
  %v3901 = vsel %vm3731, %v3636, %v3724
  %v3902 = vrot.slane %v3901, 4
  %v3903 = vsel %vm3734, %v3724, %v3636
  %v3904 = vrot.slane %v3903, 6
  %v3905 = vsel %vm135, %v3638, %v3725
  %v3906 = vsel %vm139, %v3638, %v3725
  %v3907 = vrot.slane %v3906, 2
  %v3908 = vsel %vm3731, %v3638, %v3725
  %v3909 = vrot.slane %v3908, 4
  %v3910 = vsel %vm3734, %v3725, %v3638
  %v3911 = vrot.slane %v3910, 6
  %v3912 = vsel %vm135, %v3640, %v3726
  %v3913 = vsel %vm139, %v3640, %v3726
  %v3914 = vrot.slane %v3913, 2
  %v3915 = vsel %vm3731, %v3640, %v3726
  %v3916 = vrot.slane %v3915, 4
  %v3917 = vsel %vm3734, %v3726, %v3640
  %v3918 = vrot.slane %v3917, 6
  %v3919 = vsel %vm135, %v3642, %v3727
  %v3920 = vsel %vm139, %v3642, %v3727
  %v3921 = vrot.slane %v3920, 2
  %v3922 = vsel %vm3731, %v3642, %v3727
  %v3923 = vrot.slane %v3922, 4
  %v3924 = vsel %vm3734, %v3727, %v3642
  %v3925 = vrot.slane %v3924, 6
  %v4038 = vrot.slane %v3728, 7
  %v4039 = vrot.slane %v4038, 2
  %v4040 = vrot.slane %v3730, 7
  %v4041 = vrot.slane %v4040, 2
  %v4042 = vrot.slane %v3733, 7
  %v4043 = vrot.slane %v4042, 2
  %v4044 = vrot.slane %v3736, 7
  %v4045 = vrot.slane %v4044, 2
  %v4046 = vrot.slane %v3737, 7
  %v4047 = vrot.slane %v4046, 2
  %v4048 = vrot.slane %v3739, 7
  %v4049 = vrot.slane %v4048, 2
  %v4050 = vrot.slane %v3741, 7
  %v4051 = vrot.slane %v4050, 2
  %v4052 = vrot.slane %v3743, 7
  %v4053 = vrot.slane %v4052, 2
  %v4054 = vrot.slane %v3744, 7
  %v4055 = vrot.slane %v4054, 2
  %v4056 = vrot.slane %v3746, 7
  %v4057 = vrot.slane %v4056, 2
  %v4058 = vrot.slane %v3748, 7
  %v4059 = vrot.slane %v4058, 2
  %v4060 = vrot.slane %v3750, 7
  %v4061 = vrot.slane %v4060, 2
  %v4062 = vrot.slane %v3751, 7
  %v4063 = vrot.slane %v4062, 2
  %v4064 = vrot.slane %v3753, 7
  %v4065 = vrot.slane %v4064, 2
  %v4066 = vrot.slane %v3755, 7
  %v4067 = vrot.slane %v4066, 2
  %v4068 = vrot.slane %v3757, 7
  %v4069 = vrot.slane %v4068, 2
  %v4070 = vrot.slane %v3758, 7
  %v4071 = vrot.slane %v4070, 2
  %v4072 = vrot.slane %v3760, 7
  %v4073 = vrot.slane %v4072, 2
  %v4074 = vrot.slane %v3762, 7
  %v4075 = vrot.slane %v4074, 2
  %v4076 = vrot.slane %v3764, 7
  %v4077 = vrot.slane %v4076, 2
  %v4078 = vrot.slane %v3765, 7
  %v4079 = vrot.slane %v4078, 2
  %v4080 = vrot.slane %v3767, 7
  %v4081 = vrot.slane %v4080, 2
  %v4082 = vrot.slane %v3769, 7
  %v4083 = vrot.slane %v4082, 2
  %v4084 = vrot.slane %v3771, 7
  %v4085 = vrot.slane %v4084, 2
  %v4086 = vrot.slane %v3772, 7
  %v4087 = vrot.slane %v4086, 2
  %v4088 = vrot.slane %v3774, 7
  %v4089 = vrot.slane %v4088, 2
  %v4090 = vrot.slane %v3776, 7
  %v4091 = vrot.slane %v4090, 2
  %v4092 = vrot.slane %v3778, 7
  %v4093 = vrot.slane %v4092, 2
  %v4094 = vrot.slane %v3779, 7
  %v4095 = vrot.slane %v4094, 2
  %v4096 = vrot.slane %v3781, 7
  %v4097 = vrot.slane %v4096, 2
  %v4098 = vrot.slane %v3783, 7
  %v4099 = vrot.slane %v4098, 2
  %v4100 = vrot.slane %v3785, 7
  %v4101 = vrot.slane %v4100, 2
  %v4102 = vrot.slane %v3786, 7
  %v4103 = vrot.slane %v4102, 2
  %v4104 = vrot.slane %v3788, 7
  %v4105 = vrot.slane %v4104, 2
  %v4106 = vrot.slane %v3790, 7
  %v4107 = vrot.slane %v4106, 2
  %v4108 = vrot.slane %v3792, 7
  %v4109 = vrot.slane %v4108, 2
  %v4110 = vrot.slane %v3793, 7
  %v4111 = vrot.slane %v4110, 2
  %v4112 = vrot.slane %v3795, 7
  %v4113 = vrot.slane %v4112, 2
  %v4114 = vrot.slane %v3797, 7
  %v4115 = vrot.slane %v4114, 2
  %v4116 = vrot.slane %v3799, 7
  %v4117 = vrot.slane %v4116, 2
  %v4118 = vrot.slane %v3800, 7
  %v4119 = vrot.slane %v4118, 2
  %v4120 = vrot.slane %v3802, 7
  %v4121 = vrot.slane %v4120, 2
  %v4122 = vrot.slane %v3804, 7
  %v4123 = vrot.slane %v4122, 2
  %v4124 = vrot.slane %v3806, 7
  %v4125 = vrot.slane %v4124, 2
  %v4126 = vrot.slane %v3807, 7
  %v4127 = vrot.slane %v4126, 2
  %v4128 = vrot.slane %v3809, 7
  %v4129 = vrot.slane %v4128, 2
  %v4130 = vrot.slane %v3811, 7
  %v4131 = vrot.slane %v4130, 2
  %v4132 = vrot.slane %v3813, 7
  %v4133 = vrot.slane %v4132, 2
  %v4134 = vrot.slane %v3814, 7
  %v4135 = vrot.slane %v4134, 2
  %v4136 = vrot.slane %v3816, 7
  %v4137 = vrot.slane %v4136, 2
  %v4138 = vrot.slane %v3818, 7
  %v4139 = vrot.slane %v4138, 2
  %v4140 = vrot.slane %v3820, 7
  %v4141 = vrot.slane %v4140, 2
  %v4142 = vrot.slane %v3821, 7
  %v4143 = vrot.slane %v4142, 2
  %v4144 = vrot.slane %v3823, 7
  %v4145 = vrot.slane %v4144, 2
  %v4146 = vrot.slane %v3825, 7
  %v4147 = vrot.slane %v4146, 2
  %v4148 = vrot.slane %v3827, 7
  %v4149 = vrot.slane %v4148, 2
  %v4150 = vrot.slane %v3828, 7
  %v4151 = vrot.slane %v4150, 2
  %v4152 = vrot.slane %v3830, 7
  %v4153 = vrot.slane %v4152, 2
  %v4154 = vrot.slane %v3832, 7
  %v4155 = vrot.slane %v4154, 2
  %v4156 = vrot.slane %v3834, 7
  %v4157 = vrot.slane %v4156, 2
  %v4158 = vrot.slane %v3835, 7
  %v4159 = vrot.slane %v4158, 2
  %v4160 = vrot.slane %v3837, 7
  %v4161 = vrot.slane %v4160, 2
  %v4162 = vrot.slane %v3839, 7
  %v4163 = vrot.slane %v4162, 2
  %v4164 = vrot.slane %v3841, 7
  %v4165 = vrot.slane %v4164, 2
  %v4166 = vrot.slane %v3842, 7
  %v4167 = vrot.slane %v4166, 2
  %v4168 = vrot.slane %v3844, 7
  %v4169 = vrot.slane %v4168, 2
  %v4170 = vrot.slane %v3846, 7
  %v4171 = vrot.slane %v4170, 2
  %v4172 = vrot.slane %v3848, 7
  %v4173 = vrot.slane %v4172, 2
  %v4174 = vrot.slane %v3849, 7
  %v4175 = vrot.slane %v4174, 2
  %v4176 = vrot.slane %v3851, 7
  %v4177 = vrot.slane %v4176, 2
  %v4178 = vrot.slane %v3853, 7
  %v4179 = vrot.slane %v4178, 2
  %v4180 = vrot.slane %v3855, 7
  %v4181 = vrot.slane %v4180, 2
  %v4182 = vrot.slane %v3856, 7
  %v4183 = vrot.slane %v4182, 2
  %v4184 = vrot.slane %v3858, 7
  %v4185 = vrot.slane %v4184, 2
  %v4186 = vrot.slane %v3860, 7
  %v4187 = vrot.slane %v4186, 2
  %v4188 = vrot.slane %v3862, 7
  %v4189 = vrot.slane %v4188, 2
  %v4190 = vrot.slane %v3863, 7
  %v4191 = vrot.slane %v4190, 2
  %v4192 = vrot.slane %v3865, 7
  %v4193 = vrot.slane %v4192, 2
  %v4194 = vrot.slane %v3867, 7
  %v4195 = vrot.slane %v4194, 2
  %v4196 = vrot.slane %v3869, 7
  %v4197 = vrot.slane %v4196, 2
  %v4198 = vrot.slane %v3870, 7
  %v4199 = vrot.slane %v4198, 2
  %v4200 = vrot.slane %v3872, 7
  %v4201 = vrot.slane %v4200, 2
  %v4202 = vrot.slane %v3874, 7
  %v4203 = vrot.slane %v4202, 2
  %v4204 = vrot.slane %v3876, 7
  %v4205 = vrot.slane %v4204, 2
  %v4206 = vrot.slane %v3877, 7
  %v4207 = vrot.slane %v4206, 2
  %v4208 = vrot.slane %v3879, 7
  %v4209 = vrot.slane %v4208, 2
  %v4210 = vrot.slane %v3881, 7
  %v4211 = vrot.slane %v4210, 2
  %v4212 = vrot.slane %v3883, 7
  %v4213 = vrot.slane %v4212, 2
  %v4214 = vrot.slane %v3884, 7
  %v4215 = vrot.slane %v4214, 2
  %v4216 = vrot.slane %v3886, 7
  %v4217 = vrot.slane %v4216, 2
  %v4218 = vrot.slane %v3888, 7
  %v4219 = vrot.slane %v4218, 2
  %v4220 = vrot.slane %v3890, 7
  %v4221 = vrot.slane %v4220, 2
  %v4222 = vrot.slane %v3891, 7
  %v4223 = vrot.slane %v4222, 2
  %v4224 = vrot.slane %v3893, 7
  %v4225 = vrot.slane %v4224, 2
  %v4226 = vrot.slane %v3895, 7
  %v4227 = vrot.slane %v4226, 2
  %v4228 = vrot.slane %v3897, 7
  %v4229 = vrot.slane %v4228, 2
  %v4230 = vrot.slane %v3898, 7
  %v4231 = vrot.slane %v4230, 2
  %v4232 = vrot.slane %v3900, 7
  %v4233 = vrot.slane %v4232, 2
  %v4234 = vrot.slane %v3902, 7
  %v4235 = vrot.slane %v4234, 2
  %v4236 = vrot.slane %v3904, 7
  %v4237 = vrot.slane %v4236, 2
  %v4238 = vrot.slane %v3905, 7
  %v4239 = vrot.slane %v4238, 2
  %v4240 = vrot.slane %v3907, 7
  %v4241 = vrot.slane %v4240, 2
  %v4242 = vrot.slane %v3909, 7
  %v4243 = vrot.slane %v4242, 2
  %v4244 = vrot.slane %v3911, 7
  %v4245 = vrot.slane %v4244, 2
  %v4246 = vrot.slane %v3912, 7
  %v4247 = vrot.slane %v4246, 2
  %v4248 = vrot.slane %v3914, 7
  %v4249 = vrot.slane %v4248, 2
  %v4250 = vrot.slane %v3916, 7
  %v4251 = vrot.slane %v4250, 2
  %v4252 = vrot.slane %v3918, 7
  %v4253 = vrot.slane %v4252, 2
  %v4254 = vrot.slane %v3919, 7
  %v4255 = vrot.slane %v4254, 2
  %v4256 = vrot.slane %v3921, 7
  %v4257 = vrot.slane %v4256, 2
  %v4258 = vrot.slane %v3923, 7
  %v4259 = vrot.slane %v4258, 2
  %v4260 = vrot.slane %v3925, 7
  %v4261 = vrot.slane %v4260, 2
  %v4374 = vmax.f32 %v3728, %v4039
  %v4375 = vmax.f32 %v3730, %v4041
  %v4376 = vmax.f32 %v3733, %v4043
  %v4377 = vmax.f32 %v3736, %v4045
  %v4378 = vmax.f32 %v3737, %v4047
  %v4379 = vmax.f32 %v3739, %v4049
  %v4380 = vmax.f32 %v3741, %v4051
  %v4381 = vmax.f32 %v3743, %v4053
  %v4382 = vmax.f32 %v3744, %v4055
  %v4383 = vmax.f32 %v3746, %v4057
  %v4384 = vmax.f32 %v3748, %v4059
  %v4385 = vmax.f32 %v3750, %v4061
  %v4386 = vmax.f32 %v3751, %v4063
  %v4387 = vmax.f32 %v3753, %v4065
  %v4388 = vmax.f32 %v3755, %v4067
  %v4389 = vmax.f32 %v3757, %v4069
  %v4390 = vmax.f32 %v3758, %v4071
  %v4391 = vmax.f32 %v3760, %v4073
  %v4392 = vmax.f32 %v3762, %v4075
  %v4393 = vmax.f32 %v3764, %v4077
  %v4394 = vmax.f32 %v3765, %v4079
  %v4395 = vmax.f32 %v3767, %v4081
  %v4396 = vmax.f32 %v3769, %v4083
  %v4397 = vmax.f32 %v3771, %v4085
  %v4398 = vmax.f32 %v3772, %v4087
  %v4399 = vmax.f32 %v3774, %v4089
  %v4400 = vmax.f32 %v3776, %v4091
  %v4401 = vmax.f32 %v3778, %v4093
  %v4402 = vmax.f32 %v3779, %v4095
  %v4403 = vmax.f32 %v3781, %v4097
  %v4404 = vmax.f32 %v3783, %v4099
  %v4405 = vmax.f32 %v3785, %v4101
  %v4406 = vmax.f32 %v3786, %v4103
  %v4407 = vmax.f32 %v3788, %v4105
  %v4408 = vmax.f32 %v3790, %v4107
  %v4409 = vmax.f32 %v3792, %v4109
  %v4410 = vmax.f32 %v3793, %v4111
  %v4411 = vmax.f32 %v3795, %v4113
  %v4412 = vmax.f32 %v3797, %v4115
  %v4413 = vmax.f32 %v3799, %v4117
  %v4414 = vmax.f32 %v3800, %v4119
  %v4415 = vmax.f32 %v3802, %v4121
  %v4416 = vmax.f32 %v3804, %v4123
  %v4417 = vmax.f32 %v3806, %v4125
  %v4418 = vmax.f32 %v3807, %v4127
  %v4419 = vmax.f32 %v3809, %v4129
  %v4420 = vmax.f32 %v3811, %v4131
  %v4421 = vmax.f32 %v3813, %v4133
  %v4422 = vmax.f32 %v3814, %v4135
  %v4423 = vmax.f32 %v3816, %v4137
  %v4424 = vmax.f32 %v3818, %v4139
  %v4425 = vmax.f32 %v3820, %v4141
  %v4426 = vmax.f32 %v3821, %v4143
  %v4427 = vmax.f32 %v3823, %v4145
  %v4428 = vmax.f32 %v3825, %v4147
  %v4429 = vmax.f32 %v3827, %v4149
  %v4430 = vmax.f32 %v3828, %v4151
  %v4431 = vmax.f32 %v3830, %v4153
  %v4432 = vmax.f32 %v3832, %v4155
  %v4433 = vmax.f32 %v3834, %v4157
  %v4434 = vmax.f32 %v3835, %v4159
  %v4435 = vmax.f32 %v3837, %v4161
  %v4436 = vmax.f32 %v3839, %v4163
  %v4437 = vmax.f32 %v3841, %v4165
  %v4438 = vmax.f32 %v3842, %v4167
  %v4439 = vmax.f32 %v3844, %v4169
  %v4440 = vmax.f32 %v3846, %v4171
  %v4441 = vmax.f32 %v3848, %v4173
  %v4442 = vmax.f32 %v3849, %v4175
  %v4443 = vmax.f32 %v3851, %v4177
  %v4444 = vmax.f32 %v3853, %v4179
  %v4445 = vmax.f32 %v3855, %v4181
  %v4446 = vmax.f32 %v3856, %v4183
  %v4447 = vmax.f32 %v3858, %v4185
  %v4448 = vmax.f32 %v3860, %v4187
  %v4449 = vmax.f32 %v3862, %v4189
  %v4450 = vmax.f32 %v3863, %v4191
  %v4451 = vmax.f32 %v3865, %v4193
  %v4452 = vmax.f32 %v3867, %v4195
  %v4453 = vmax.f32 %v3869, %v4197
  %v4454 = vmax.f32 %v3870, %v4199
  %v4455 = vmax.f32 %v3872, %v4201
  %v4456 = vmax.f32 %v3874, %v4203
  %v4457 = vmax.f32 %v3876, %v4205
  %v4458 = vmax.f32 %v3877, %v4207
  %v4459 = vmax.f32 %v3879, %v4209
  %v4460 = vmax.f32 %v3881, %v4211
  %v4461 = vmax.f32 %v3883, %v4213
  %v4462 = vmax.f32 %v3884, %v4215
  %v4463 = vmax.f32 %v3886, %v4217
  %v4464 = vmax.f32 %v3888, %v4219
  %v4465 = vmax.f32 %v3890, %v4221
  %v4466 = vmax.f32 %v3891, %v4223
  %v4467 = vmax.f32 %v3893, %v4225
  %v4468 = vmax.f32 %v3895, %v4227
  %v4469 = vmax.f32 %v3897, %v4229
  %v4470 = vmax.f32 %v3898, %v4231
  %v4471 = vmax.f32 %v3900, %v4233
  %v4472 = vmax.f32 %v3902, %v4235
  %v4473 = vmax.f32 %v3904, %v4237
  %v4474 = vmax.f32 %v3905, %v4239
  %v4475 = vmax.f32 %v3907, %v4241
  %v4476 = vmax.f32 %v3909, %v4243
  %v4477 = vmax.f32 %v3911, %v4245
  %v4478 = vmax.f32 %v3912, %v4247
  %v4479 = vmax.f32 %v3914, %v4249
  %v4480 = vmax.f32 %v3916, %v4251
  %v4481 = vmax.f32 %v3918, %v4253
  %v4482 = vmax.f32 %v3919, %v4255
  %v4483 = vmax.f32 %v3921, %v4257
  %v4484 = vmax.f32 %v3923, %v4259
  %v4485 = vmax.f32 %v3925, %v4261
  %4598 = vrot.lane.b32.xlu0 %v4374, 122
  %v4599 = vpop.permute.xlu0 %4598
  %4600 = vrot.lane.b32.xlu0 %v4375, 122
  %v4601 = vpop.permute.xlu0 %4600
  %4602 = vrot.lane.b32.xlu0 %v4376, 122
  %v4603 = vpop.permute.xlu0 %4602
  %4604 = vrot.lane.b32.xlu0 %v4377, 122
  %v4605 = vpop.permute.xlu0 %4604
  %4606 = vrot.lane.b32.xlu0 %v4378, 122
  %v4607 = vpop.permute.xlu0 %4606
  %4608 = vrot.lane.b32.xlu0 %v4379, 122
  %v4609 = vpop.permute.xlu0 %4608
  %4610 = vrot.lane.b32.xlu0 %v4380, 122
  %v4611 = vpop.permute.xlu0 %4610
  %4612 = vrot.lane.b32.xlu0 %v4381, 122
  %v4613 = vpop.permute.xlu0 %4612
  %4614 = vrot.lane.b32.xlu0 %v4382, 122
  %v4615 = vpop.permute.xlu0 %4614
  %4616 = vrot.lane.b32.xlu0 %v4383, 122
  %v4617 = vpop.permute.xlu0 %4616
  %4618 = vrot.lane.b32.xlu0 %v4384, 122
  %v4619 = vpop.permute.xlu0 %4618
  %4620 = vrot.lane.b32.xlu0 %v4385, 122
  %v4621 = vpop.permute.xlu0 %4620
  %4622 = vrot.lane.b32.xlu0 %v4386, 122
  %v4623 = vpop.permute.xlu0 %4622
  %4624 = vrot.lane.b32.xlu0 %v4387, 122
  %v4625 = vpop.permute.xlu0 %4624
  %4626 = vrot.lane.b32.xlu0 %v4388, 122
  %v4627 = vpop.permute.xlu0 %4626
  %4628 = vrot.lane.b32.xlu0 %v4389, 122
  %v4629 = vpop.permute.xlu0 %4628
  %4630 = vrot.lane.b32.xlu0 %v4390, 122
  %v4631 = vpop.permute.xlu0 %4630
  %4632 = vrot.lane.b32.xlu0 %v4391, 122
  %v4633 = vpop.permute.xlu0 %4632
  %4634 = vrot.lane.b32.xlu0 %v4392, 122
  %v4635 = vpop.permute.xlu0 %4634
  %4636 = vrot.lane.b32.xlu0 %v4393, 122
  %v4637 = vpop.permute.xlu0 %4636
  %4638 = vrot.lane.b32.xlu0 %v4394, 122
  %v4639 = vpop.permute.xlu0 %4638
  %4640 = vrot.lane.b32.xlu0 %v4395, 122
  %v4641 = vpop.permute.xlu0 %4640
  %4642 = vrot.lane.b32.xlu0 %v4396, 122
  %v4643 = vpop.permute.xlu0 %4642
  %4644 = vrot.lane.b32.xlu0 %v4397, 122
  %v4645 = vpop.permute.xlu0 %4644
  %4646 = vrot.lane.b32.xlu0 %v4398, 122
  %v4647 = vpop.permute.xlu0 %4646
  %4648 = vrot.lane.b32.xlu0 %v4399, 122
  %v4649 = vpop.permute.xlu0 %4648
  %4650 = vrot.lane.b32.xlu0 %v4400, 122
  %v4651 = vpop.permute.xlu0 %4650
  %4652 = vrot.lane.b32.xlu0 %v4401, 122
  %v4653 = vpop.permute.xlu0 %4652
  %4654 = vrot.lane.b32.xlu0 %v4402, 122
  %v4655 = vpop.permute.xlu0 %4654
  %4656 = vrot.lane.b32.xlu0 %v4403, 122
  %v4657 = vpop.permute.xlu0 %4656
  %4658 = vrot.lane.b32.xlu0 %v4404, 122
  %v4659 = vpop.permute.xlu0 %4658
  %4660 = vrot.lane.b32.xlu0 %v4405, 122
  %v4661 = vpop.permute.xlu0 %4660
  %4662 = vrot.lane.b32.xlu0 %v4406, 122
  %v4663 = vpop.permute.xlu0 %4662
  %4664 = vrot.lane.b32.xlu0 %v4407, 122
  %v4665 = vpop.permute.xlu0 %4664
  %4666 = vrot.lane.b32.xlu0 %v4408, 122
  %v4667 = vpop.permute.xlu0 %4666
  %4668 = vrot.lane.b32.xlu0 %v4409, 122
  %v4669 = vpop.permute.xlu0 %4668
  %4670 = vrot.lane.b32.xlu0 %v4410, 122
  %v4671 = vpop.permute.xlu0 %4670
  %4672 = vrot.lane.b32.xlu0 %v4411, 122
  %v4673 = vpop.permute.xlu0 %4672
  %4674 = vrot.lane.b32.xlu0 %v4412, 122
  %v4675 = vpop.permute.xlu0 %4674
  %4676 = vrot.lane.b32.xlu0 %v4413, 122
  %v4677 = vpop.permute.xlu0 %4676
  %4678 = vrot.lane.b32.xlu0 %v4414, 122
  %v4679 = vpop.permute.xlu0 %4678
  %4680 = vrot.lane.b32.xlu0 %v4415, 122
  %v4681 = vpop.permute.xlu0 %4680
  %4682 = vrot.lane.b32.xlu0 %v4416, 122
  %v4683 = vpop.permute.xlu0 %4682
  %4684 = vrot.lane.b32.xlu0 %v4417, 122
  %v4685 = vpop.permute.xlu0 %4684
  %4686 = vrot.lane.b32.xlu0 %v4418, 122
  %v4687 = vpop.permute.xlu0 %4686
  %4688 = vrot.lane.b32.xlu0 %v4419, 122
  %v4689 = vpop.permute.xlu0 %4688
  %4690 = vrot.lane.b32.xlu0 %v4420, 122
  %v4691 = vpop.permute.xlu0 %4690
  %4692 = vrot.lane.b32.xlu0 %v4421, 122
  %v4693 = vpop.permute.xlu0 %4692
  %4694 = vrot.lane.b32.xlu0 %v4422, 122
  %v4695 = vpop.permute.xlu0 %4694
  %4696 = vrot.lane.b32.xlu0 %v4423, 122
  %v4697 = vpop.permute.xlu0 %4696
  %4698 = vrot.lane.b32.xlu0 %v4424, 122
  %v4699 = vpop.permute.xlu0 %4698
  %4700 = vrot.lane.b32.xlu0 %v4425, 122
  %v4701 = vpop.permute.xlu0 %4700
  %4702 = vrot.lane.b32.xlu0 %v4426, 122
  %v4703 = vpop.permute.xlu0 %4702
  %4704 = vrot.lane.b32.xlu0 %v4427, 122
  %v4705 = vpop.permute.xlu0 %4704
  %4706 = vrot.lane.b32.xlu0 %v4428, 122
  %v4707 = vpop.permute.xlu0 %4706
  %4708 = vrot.lane.b32.xlu0 %v4429, 122
  %v4709 = vpop.permute.xlu0 %4708
  %4710 = vrot.lane.b32.xlu0 %v4430, 122
  %v4711 = vpop.permute.xlu0 %4710
  %4712 = vrot.lane.b32.xlu0 %v4431, 122
  %v4713 = vpop.permute.xlu0 %4712
  %4714 = vrot.lane.b32.xlu0 %v4432, 122
  %v4715 = vpop.permute.xlu0 %4714
  %4716 = vrot.lane.b32.xlu0 %v4433, 122
  %v4717 = vpop.permute.xlu0 %4716
  %4718 = vrot.lane.b32.xlu0 %v4434, 122
  %v4719 = vpop.permute.xlu0 %4718
  %4720 = vrot.lane.b32.xlu0 %v4435, 122
  %v4721 = vpop.permute.xlu0 %4720
  %4722 = vrot.lane.b32.xlu0 %v4436, 122
  %v4723 = vpop.permute.xlu0 %4722
  %4724 = vrot.lane.b32.xlu0 %v4437, 122
  %v4725 = vpop.permute.xlu0 %4724
  %4726 = vrot.lane.b32.xlu0 %v4438, 122
  %v4727 = vpop.permute.xlu0 %4726
  %4728 = vrot.lane.b32.xlu0 %v4439, 122
  %v4729 = vpop.permute.xlu0 %4728
  %4730 = vrot.lane.b32.xlu0 %v4440, 122
  %v4731 = vpop.permute.xlu0 %4730
  %4732 = vrot.lane.b32.xlu0 %v4441, 122
  %v4733 = vpop.permute.xlu0 %4732
  %4734 = vrot.lane.b32.xlu0 %v4442, 122
  %v4735 = vpop.permute.xlu0 %4734
  %4736 = vrot.lane.b32.xlu0 %v4443, 122
  %v4737 = vpop.permute.xlu0 %4736
  %4738 = vrot.lane.b32.xlu0 %v4444, 122
  %v4739 = vpop.permute.xlu0 %4738
  %4740 = vrot.lane.b32.xlu0 %v4445, 122
  %v4741 = vpop.permute.xlu0 %4740
  %4742 = vrot.lane.b32.xlu0 %v4446, 122
  %v4743 = vpop.permute.xlu0 %4742
  %4744 = vrot.lane.b32.xlu0 %v4447, 122
  %v4745 = vpop.permute.xlu0 %4744
  %4746 = vrot.lane.b32.xlu0 %v4448, 122
  %v4747 = vpop.permute.xlu0 %4746
  %4748 = vrot.lane.b32.xlu0 %v4449, 122
  %v4749 = vpop.permute.xlu0 %4748
  %4750 = vrot.lane.b32.xlu0 %v4450, 122
  %v4751 = vpop.permute.xlu0 %4750
  %4752 = vrot.lane.b32.xlu0 %v4451, 122
  %v4753 = vpop.permute.xlu0 %4752
  %4754 = vrot.lane.b32.xlu0 %v4452, 122
  %v4755 = vpop.permute.xlu0 %4754
  %4756 = vrot.lane.b32.xlu0 %v4453, 122
  %v4757 = vpop.permute.xlu0 %4756
  %4758 = vrot.lane.b32.xlu0 %v4454, 122
  %v4759 = vpop.permute.xlu0 %4758
  %4760 = vrot.lane.b32.xlu0 %v4455, 122
  %v4761 = vpop.permute.xlu0 %4760
  %4762 = vrot.lane.b32.xlu0 %v4456, 122
  %v4763 = vpop.permute.xlu0 %4762
  %4764 = vrot.lane.b32.xlu0 %v4457, 122
  %v4765 = vpop.permute.xlu0 %4764
  %4766 = vrot.lane.b32.xlu0 %v4458, 122
  %v4767 = vpop.permute.xlu0 %4766
  %4768 = vrot.lane.b32.xlu0 %v4459, 122
  %v4769 = vpop.permute.xlu0 %4768
  %4770 = vrot.lane.b32.xlu0 %v4460, 122
  %v4771 = vpop.permute.xlu0 %4770
  %4772 = vrot.lane.b32.xlu0 %v4461, 122
  %v4773 = vpop.permute.xlu0 %4772
  %4774 = vrot.lane.b32.xlu0 %v4462, 122
  %v4775 = vpop.permute.xlu0 %4774
  %4776 = vrot.lane.b32.xlu0 %v4463, 122
  %v4777 = vpop.permute.xlu0 %4776
  %4778 = vrot.lane.b32.xlu0 %v4464, 122
  %v4779 = vpop.permute.xlu0 %4778
  %4780 = vrot.lane.b32.xlu0 %v4465, 122
  %v4781 = vpop.permute.xlu0 %4780
  %4782 = vrot.lane.b32.xlu0 %v4466, 122
  %v4783 = vpop.permute.xlu0 %4782
  %4784 = vrot.lane.b32.xlu0 %v4467, 122
  %v4785 = vpop.permute.xlu0 %4784
  %4786 = vrot.lane.b32.xlu0 %v4468, 122
  %v4787 = vpop.permute.xlu0 %4786
  %4788 = vrot.lane.b32.xlu0 %v4469, 122
  %v4789 = vpop.permute.xlu0 %4788
  %4790 = vrot.lane.b32.xlu0 %v4470, 122
  %v4791 = vpop.permute.xlu0 %4790
  %4792 = vrot.lane.b32.xlu0 %v4471, 122
  %v4793 = vpop.permute.xlu0 %4792
  %4794 = vrot.lane.b32.xlu0 %v4472, 122
  %v4795 = vpop.permute.xlu0 %4794
  %4796 = vrot.lane.b32.xlu0 %v4473, 122
  %v4797 = vpop.permute.xlu0 %4796
  %4798 = vrot.lane.b32.xlu0 %v4474, 122
  %v4799 = vpop.permute.xlu0 %4798
  %4800 = vrot.lane.b32.xlu0 %v4475, 122
  %v4801 = vpop.permute.xlu0 %4800
  %4802 = vrot.lane.b32.xlu0 %v4476, 122
  %v4803 = vpop.permute.xlu0 %4802
  %4804 = vrot.lane.b32.xlu0 %v4477, 122
  %v4805 = vpop.permute.xlu0 %4804
  %4806 = vrot.lane.b32.xlu0 %v4478, 122
  %v4807 = vpop.permute.xlu0 %4806
  %4808 = vrot.lane.b32.xlu0 %v4479, 122
  %v4809 = vpop.permute.xlu0 %4808
  %4810 = vrot.lane.b32.xlu0 %v4480, 122
  %v4811 = vpop.permute.xlu0 %4810
  %4812 = vrot.lane.b32.xlu0 %v4481, 122
  %v4813 = vpop.permute.xlu0 %4812
  %4814 = vrot.lane.b32.xlu0 %v4482, 122
  %v4815 = vpop.permute.xlu0 %4814
  %4816 = vrot.lane.b32.xlu0 %v4483, 122
  %v4817 = vpop.permute.xlu0 %4816
  %4818 = vrot.lane.b32.xlu0 %v4484, 122
  %v4819 = vpop.permute.xlu0 %4818
  %4820 = vrot.lane.b32.xlu0 %v4485, 122
  %v4821 = vpop.permute.xlu0 %4820
  %v4822 = vrot.slane %v4599, 2
  %v4823 = vrot.slane %v4601, 2
  %v4824 = vrot.slane %v4603, 2
  %v4825 = vrot.slane %v4605, 2
  %v4826 = vrot.slane %v4607, 2
  %v4827 = vrot.slane %v4609, 2
  %v4828 = vrot.slane %v4611, 2
  %v4829 = vrot.slane %v4613, 2
  %v4830 = vrot.slane %v4615, 2
  %v4831 = vrot.slane %v4617, 2
  %v4832 = vrot.slane %v4619, 2
  %v4833 = vrot.slane %v4621, 2
  %v4834 = vrot.slane %v4623, 2
  %v4835 = vrot.slane %v4625, 2
  %v4836 = vrot.slane %v4627, 2
  %v4837 = vrot.slane %v4629, 2
  %v4838 = vrot.slane %v4631, 2
  %v4839 = vrot.slane %v4633, 2
  %v4840 = vrot.slane %v4635, 2
  %v4841 = vrot.slane %v4637, 2
  %v4842 = vrot.slane %v4639, 2
  %v4843 = vrot.slane %v4641, 2
  %v4844 = vrot.slane %v4643, 2
  %v4845 = vrot.slane %v4645, 2
  %v4846 = vrot.slane %v4647, 2
  %v4847 = vrot.slane %v4649, 2
  %v4848 = vrot.slane %v4651, 2
  %v4849 = vrot.slane %v4653, 2
  %v4850 = vrot.slane %v4655, 2
  %v4851 = vrot.slane %v4657, 2
  %v4852 = vrot.slane %v4659, 2
  %v4853 = vrot.slane %v4661, 2
  %v4854 = vrot.slane %v4663, 2
  %v4855 = vrot.slane %v4665, 2
  %v4856 = vrot.slane %v4667, 2
  %v4857 = vrot.slane %v4669, 2
  %v4858 = vrot.slane %v4671, 2
  %v4859 = vrot.slane %v4673, 2
  %v4860 = vrot.slane %v4675, 2
  %v4861 = vrot.slane %v4677, 2
  %v4862 = vrot.slane %v4679, 2
  %v4863 = vrot.slane %v4681, 2
  %v4864 = vrot.slane %v4683, 2
  %v4865 = vrot.slane %v4685, 2
  %v4866 = vrot.slane %v4687, 2
  %v4867 = vrot.slane %v4689, 2
  %v4868 = vrot.slane %v4691, 2
  %v4869 = vrot.slane %v4693, 2
  %v4870 = vrot.slane %v4695, 2
  %v4871 = vrot.slane %v4697, 2
  %v4872 = vrot.slane %v4699, 2
  %v4873 = vrot.slane %v4701, 2
  %v4874 = vrot.slane %v4703, 2
  %v4875 = vrot.slane %v4705, 2
  %v4876 = vrot.slane %v4707, 2
  %v4877 = vrot.slane %v4709, 2
  %v4878 = vrot.slane %v4711, 2
  %v4879 = vrot.slane %v4713, 2
  %v4880 = vrot.slane %v4715, 2
  %v4881 = vrot.slane %v4717, 2
  %v4882 = vrot.slane %v4719, 2
  %v4883 = vrot.slane %v4721, 2
  %v4884 = vrot.slane %v4723, 2
  %v4885 = vrot.slane %v4725, 2
  %v4886 = vrot.slane %v4727, 2
  %v4887 = vrot.slane %v4729, 2
  %v4888 = vrot.slane %v4731, 2
  %v4889 = vrot.slane %v4733, 2
  %v4890 = vrot.slane %v4735, 2
  %v4891 = vrot.slane %v4737, 2
  %v4892 = vrot.slane %v4739, 2
  %v4893 = vrot.slane %v4741, 2
  %v4894 = vrot.slane %v4743, 2
  %v4895 = vrot.slane %v4745, 2
  %v4896 = vrot.slane %v4747, 2
  %v4897 = vrot.slane %v4749, 2
  %v4898 = vrot.slane %v4751, 2
  %v4899 = vrot.slane %v4753, 2
  %v4900 = vrot.slane %v4755, 2
  %v4901 = vrot.slane %v4757, 2
  %v4902 = vrot.slane %v4759, 2
  %v4903 = vrot.slane %v4761, 2
  %v4904 = vrot.slane %v4763, 2
  %v4905 = vrot.slane %v4765, 2
  %v4906 = vrot.slane %v4767, 2
  %v4907 = vrot.slane %v4769, 2
  %v4908 = vrot.slane %v4771, 2
  %v4909 = vrot.slane %v4773, 2
  %v4910 = vrot.slane %v4775, 2
  %v4911 = vrot.slane %v4777, 2
  %v4912 = vrot.slane %v4779, 2
  %v4913 = vrot.slane %v4781, 2
  %v4914 = vrot.slane %v4783, 2
  %v4915 = vrot.slane %v4785, 2
  %v4916 = vrot.slane %v4787, 2
  %v4917 = vrot.slane %v4789, 2
  %v4918 = vrot.slane %v4791, 2
  %v4919 = vrot.slane %v4793, 2
  %v4920 = vrot.slane %v4795, 2
  %v4921 = vrot.slane %v4797, 2
  %v4922 = vrot.slane %v4799, 2
  %v4923 = vrot.slane %v4801, 2
  %v4924 = vrot.slane %v4803, 2
  %v4925 = vrot.slane %v4805, 2
  %v4926 = vrot.slane %v4807, 2
  %v4927 = vrot.slane %v4809, 2
  %v4928 = vrot.slane %v4811, 2
  %v4929 = vrot.slane %v4813, 2
  %v4930 = vrot.slane %v4815, 2
  %v4931 = vrot.slane %v4817, 2
  %v4932 = vrot.slane %v4819, 2
  %v4933 = vrot.slane %v4821, 2
  %vm4934 = vcmask 998400
  %v4935 = vsel %vm4934, %v4599, %v4822
  %v4936 = vsel %vm4934, %v4601, %v4823
  %v4937 = vsel %vm4934, %v4603, %v4824
  %v4938 = vsel %vm4934, %v4605, %v4825
  %v4939 = vsel %vm4934, %v4607, %v4826
  %v4940 = vsel %vm4934, %v4609, %v4827
  %v4941 = vsel %vm4934, %v4611, %v4828
  %v4942 = vsel %vm4934, %v4613, %v4829
  %v4943 = vsel %vm4934, %v4615, %v4830
  %v4944 = vsel %vm4934, %v4617, %v4831
  %v4945 = vsel %vm4934, %v4619, %v4832
  %v4946 = vsel %vm4934, %v4621, %v4833
  %v4947 = vsel %vm4934, %v4623, %v4834
  %v4948 = vsel %vm4934, %v4625, %v4835
  %v4949 = vsel %vm4934, %v4627, %v4836
  %v4950 = vsel %vm4934, %v4629, %v4837
  %v4951 = vsel %vm4934, %v4631, %v4838
  %v4952 = vsel %vm4934, %v4633, %v4839
  %v4953 = vsel %vm4934, %v4635, %v4840
  %v4954 = vsel %vm4934, %v4637, %v4841
  %v4955 = vsel %vm4934, %v4639, %v4842
  %v4956 = vsel %vm4934, %v4641, %v4843
  %v4957 = vsel %vm4934, %v4643, %v4844
  %v4958 = vsel %vm4934, %v4645, %v4845
  %v4959 = vsel %vm4934, %v4647, %v4846
  %v4960 = vsel %vm4934, %v4649, %v4847
  %v4961 = vsel %vm4934, %v4651, %v4848
  %v4962 = vsel %vm4934, %v4653, %v4849
  %v4963 = vsel %vm4934, %v4655, %v4850
  %v4964 = vsel %vm4934, %v4657, %v4851
  %v4965 = vsel %vm4934, %v4659, %v4852
  %v4966 = vsel %vm4934, %v4661, %v4853
  %v4967 = vsel %vm4934, %v4663, %v4854
  %v4968 = vsel %vm4934, %v4665, %v4855
  %v4969 = vsel %vm4934, %v4667, %v4856
  %v4970 = vsel %vm4934, %v4669, %v4857
  %v4971 = vsel %vm4934, %v4671, %v4858
  %v4972 = vsel %vm4934, %v4673, %v4859
  %v4973 = vsel %vm4934, %v4675, %v4860
  %v4974 = vsel %vm4934, %v4677, %v4861
  %v4975 = vsel %vm4934, %v4679, %v4862
  %v4976 = vsel %vm4934, %v4681, %v4863
  %v4977 = vsel %vm4934, %v4683, %v4864
  %v4978 = vsel %vm4934, %v4685, %v4865
  %v4979 = vsel %vm4934, %v4687, %v4866
  %v4980 = vsel %vm4934, %v4689, %v4867
  %v4981 = vsel %vm4934, %v4691, %v4868
  %v4982 = vsel %vm4934, %v4693, %v4869
  %v4983 = vsel %vm4934, %v4695, %v4870
  %v4984 = vsel %vm4934, %v4697, %v4871
  %v4985 = vsel %vm4934, %v4699, %v4872
  %v4986 = vsel %vm4934, %v4701, %v4873
  %v4987 = vsel %vm4934, %v4703, %v4874
  %v4988 = vsel %vm4934, %v4705, %v4875
  %v4989 = vsel %vm4934, %v4707, %v4876
  %v4990 = vsel %vm4934, %v4709, %v4877
  %v4991 = vsel %vm4934, %v4711, %v4878
  %v4992 = vsel %vm4934, %v4713, %v4879
  %v4993 = vsel %vm4934, %v4715, %v4880
  %v4994 = vsel %vm4934, %v4717, %v4881
  %v4995 = vsel %vm4934, %v4719, %v4882
  %v4996 = vsel %vm4934, %v4721, %v4883
  %v4997 = vsel %vm4934, %v4723, %v4884
  %v4998 = vsel %vm4934, %v4725, %v4885
  %v4999 = vsel %vm4934, %v4727, %v4886
  %v5000 = vsel %vm4934, %v4729, %v4887
  %v5001 = vsel %vm4934, %v4731, %v4888
  %v5002 = vsel %vm4934, %v4733, %v4889
  %v5003 = vsel %vm4934, %v4735, %v4890
  %v5004 = vsel %vm4934, %v4737, %v4891
  %v5005 = vsel %vm4934, %v4739, %v4892
  %v5006 = vsel %vm4934, %v4741, %v4893
  %v5007 = vsel %vm4934, %v4743, %v4894
  %v5008 = vsel %vm4934, %v4745, %v4895
  %v5009 = vsel %vm4934, %v4747, %v4896
  %v5010 = vsel %vm4934, %v4749, %v4897
  %v5011 = vsel %vm4934, %v4751, %v4898
  %v5012 = vsel %vm4934, %v4753, %v4899
  %v5013 = vsel %vm4934, %v4755, %v4900
  %v5014 = vsel %vm4934, %v4757, %v4901
  %v5015 = vsel %vm4934, %v4759, %v4902
  %v5016 = vsel %vm4934, %v4761, %v4903
  %v5017 = vsel %vm4934, %v4763, %v4904
  %v5018 = vsel %vm4934, %v4765, %v4905
  %v5019 = vsel %vm4934, %v4767, %v4906
  %v5020 = vsel %vm4934, %v4769, %v4907
  %v5021 = vsel %vm4934, %v4771, %v4908
  %v5022 = vsel %vm4934, %v4773, %v4909
  %v5023 = vsel %vm4934, %v4775, %v4910
  %v5024 = vsel %vm4934, %v4777, %v4911
  %v5025 = vsel %vm4934, %v4779, %v4912
  %v5026 = vsel %vm4934, %v4781, %v4913
  %v5027 = vsel %vm4934, %v4783, %v4914
  %v5028 = vsel %vm4934, %v4785, %v4915
  %v5029 = vsel %vm4934, %v4787, %v4916
  %v5030 = vsel %vm4934, %v4789, %v4917
  %v5031 = vsel %vm4934, %v4791, %v4918
  %v5032 = vsel %vm4934, %v4793, %v4919
  %v5033 = vsel %vm4934, %v4795, %v4920
  %v5034 = vsel %vm4934, %v4797, %v4921
  %v5035 = vsel %vm4934, %v4799, %v4922
  %v5036 = vsel %vm4934, %v4801, %v4923
  %v5037 = vsel %vm4934, %v4803, %v4924
  %v5038 = vsel %vm4934, %v4805, %v4925
  %v5039 = vsel %vm4934, %v4807, %v4926
  %v5040 = vsel %vm4934, %v4809, %v4927
  %v5041 = vsel %vm4934, %v4811, %v4928
  %v5042 = vsel %vm4934, %v4813, %v4929
  %v5043 = vsel %vm4934, %v4815, %v4930
  %v5044 = vsel %vm4934, %v4817, %v4931
  %v5045 = vsel %vm4934, %v4819, %v4932
  %v5046 = vsel %vm4934, %v4821, %v4933
  %v5159 = vmax.f32 %v4374, %v4935
  %v5160 = vmax.f32 %v4375, %v4936
  %v5161 = vmax.f32 %v4376, %v4937
  %v5162 = vmax.f32 %v4377, %v4938
  %v5163 = vmax.f32 %v4378, %v4939
  %v5164 = vmax.f32 %v4379, %v4940
  %v5165 = vmax.f32 %v4380, %v4941
  %v5166 = vmax.f32 %v4381, %v4942
  %v5167 = vmax.f32 %v4382, %v4943
  %v5168 = vmax.f32 %v4383, %v4944
  %v5169 = vmax.f32 %v4384, %v4945
  %v5170 = vmax.f32 %v4385, %v4946
  %v5171 = vmax.f32 %v4386, %v4947
  %v5172 = vmax.f32 %v4387, %v4948
  %v5173 = vmax.f32 %v4388, %v4949
  %v5174 = vmax.f32 %v4389, %v4950
  %v5175 = vmax.f32 %v4390, %v4951
  %v5176 = vmax.f32 %v4391, %v4952
  %v5177 = vmax.f32 %v4392, %v4953
  %v5178 = vmax.f32 %v4393, %v4954
  %v5179 = vmax.f32 %v4394, %v4955
  %v5180 = vmax.f32 %v4395, %v4956
  %v5181 = vmax.f32 %v4396, %v4957
  %v5182 = vmax.f32 %v4397, %v4958
  %v5183 = vmax.f32 %v4398, %v4959
  %v5184 = vmax.f32 %v4399, %v4960
  %v5185 = vmax.f32 %v4400, %v4961
  %v5186 = vmax.f32 %v4401, %v4962
  %v5187 = vmax.f32 %v4402, %v4963
  %v5188 = vmax.f32 %v4403, %v4964
  %v5189 = vmax.f32 %v4404, %v4965
  %v5190 = vmax.f32 %v4405, %v4966
  %v5191 = vmax.f32 %v4406, %v4967
  %v5192 = vmax.f32 %v4407, %v4968
  %v5193 = vmax.f32 %v4408, %v4969
  %v5194 = vmax.f32 %v4409, %v4970
  %v5195 = vmax.f32 %v4410, %v4971
  %v5196 = vmax.f32 %v4411, %v4972
  %v5197 = vmax.f32 %v4412, %v4973
  %v5198 = vmax.f32 %v4413, %v4974
  %v5199 = vmax.f32 %v4414, %v4975
  %v5200 = vmax.f32 %v4415, %v4976
  %v5201 = vmax.f32 %v4416, %v4977
  %v5202 = vmax.f32 %v4417, %v4978
  %v5203 = vmax.f32 %v4418, %v4979
  %v5204 = vmax.f32 %v4419, %v4980
  %v5205 = vmax.f32 %v4420, %v4981
  %v5206 = vmax.f32 %v4421, %v4982
  %v5207 = vmax.f32 %v4422, %v4983
  %v5208 = vmax.f32 %v4423, %v4984
  %v5209 = vmax.f32 %v4424, %v4985
  %v5210 = vmax.f32 %v4425, %v4986
  %v5211 = vmax.f32 %v4426, %v4987
  %v5212 = vmax.f32 %v4427, %v4988
  %v5213 = vmax.f32 %v4428, %v4989
  %v5214 = vmax.f32 %v4429, %v4990
  %v5215 = vmax.f32 %v4430, %v4991
  %v5216 = vmax.f32 %v4431, %v4992
  %v5217 = vmax.f32 %v4432, %v4993
  %v5218 = vmax.f32 %v4433, %v4994
  %v5219 = vmax.f32 %v4434, %v4995
  %v5220 = vmax.f32 %v4435, %v4996
  %v5221 = vmax.f32 %v4436, %v4997
  %v5222 = vmax.f32 %v4437, %v4998
  %v5223 = vmax.f32 %v4438, %v4999
  %v5224 = vmax.f32 %v4439, %v5000
  %v5225 = vmax.f32 %v4440, %v5001
  %v5226 = vmax.f32 %v4441, %v5002
  %v5227 = vmax.f32 %v4442, %v5003
  %v5228 = vmax.f32 %v4443, %v5004
  %v5229 = vmax.f32 %v4444, %v5005
  %v5230 = vmax.f32 %v4445, %v5006
  %v5231 = vmax.f32 %v4446, %v5007
  %v5232 = vmax.f32 %v4447, %v5008
  %v5233 = vmax.f32 %v4448, %v5009
  %v5234 = vmax.f32 %v4449, %v5010
  %v5235 = vmax.f32 %v4450, %v5011
  %v5236 = vmax.f32 %v4451, %v5012
  %v5237 = vmax.f32 %v4452, %v5013
  %v5238 = vmax.f32 %v4453, %v5014
  %v5239 = vmax.f32 %v4454, %v5015
  %v5240 = vmax.f32 %v4455, %v5016
  %v5241 = vmax.f32 %v4456, %v5017
  %v5242 = vmax.f32 %v4457, %v5018
  %v5243 = vmax.f32 %v4458, %v5019
  %v5244 = vmax.f32 %v4459, %v5020
  %v5245 = vmax.f32 %v4460, %v5021
  %v5246 = vmax.f32 %v4461, %v5022
  %v5247 = vmax.f32 %v4462, %v5023
  %v5248 = vmax.f32 %v4463, %v5024
  %v5249 = vmax.f32 %v4464, %v5025
  %v5250 = vmax.f32 %v4465, %v5026
  %v5251 = vmax.f32 %v4466, %v5027
  %v5252 = vmax.f32 %v4467, %v5028
  %v5253 = vmax.f32 %v4468, %v5029
  %v5254 = vmax.f32 %v4469, %v5030
  %v5255 = vmax.f32 %v4470, %v5031
  %v5256 = vmax.f32 %v4471, %v5032
  %v5257 = vmax.f32 %v4472, %v5033
  %v5258 = vmax.f32 %v4473, %v5034
  %v5259 = vmax.f32 %v4474, %v5035
  %v5260 = vmax.f32 %v4475, %v5036
  %v5261 = vmax.f32 %v4476, %v5037
  %v5262 = vmax.f32 %v4477, %v5038
  %v5263 = vmax.f32 %v4478, %v5039
  %v5264 = vmax.f32 %v4479, %v5040
  %v5265 = vmax.f32 %v4480, %v5041
  %v5266 = vmax.f32 %v4481, %v5042
  %v5267 = vmax.f32 %v4482, %v5043
  %v5268 = vmax.f32 %v4483, %v5044
  %v5269 = vmax.f32 %v4484, %v5045
  %v5270 = vmax.f32 %v4485, %v5046
  %v5383 = vperm.slane %v5159, 0
  %v5384 = vperm.slane %v5159, 2
  %v5385 = vperm.slane %v5160, 0
  %v5386 = vperm.slane %v5160, 2
  %v5387 = vperm.slane %v5161, 0
  %v5388 = vperm.slane %v5161, 2
  %v5389 = vperm.slane %v5162, 0
  %v5390 = vperm.slane %v5162, 2
  %v5391 = vperm.slane %v5163, 0
  %v5392 = vperm.slane %v5163, 2
  %v5393 = vperm.slane %v5164, 0
  %v5394 = vperm.slane %v5164, 2
  %v5395 = vperm.slane %v5165, 0
  %v5396 = vperm.slane %v5165, 2
  %v5397 = vperm.slane %v5166, 0
  %v5398 = vperm.slane %v5166, 2
  %v5399 = vperm.slane %v5167, 0
  %v5400 = vperm.slane %v5167, 2
  %v5401 = vperm.slane %v5168, 0
  %v5402 = vperm.slane %v5168, 2
  %v5403 = vperm.slane %v5169, 0
  %v5404 = vperm.slane %v5169, 2
  %v5405 = vperm.slane %v5170, 0
  %v5406 = vperm.slane %v5170, 2
  %v5407 = vperm.slane %v5171, 0
  %v5408 = vperm.slane %v5171, 2
  %v5409 = vperm.slane %v5172, 0
  %v5410 = vperm.slane %v5172, 2
  %v5411 = vperm.slane %v5173, 0
  %v5412 = vperm.slane %v5173, 2
  %v5413 = vperm.slane %v5174, 0
  %v5414 = vperm.slane %v5174, 2
  %v5415 = vperm.slane %v5175, 0
  %v5416 = vperm.slane %v5175, 2
  %v5417 = vperm.slane %v5176, 0
  %v5418 = vperm.slane %v5176, 2
  %v5419 = vperm.slane %v5177, 0
  %v5420 = vperm.slane %v5177, 2
  %v5421 = vperm.slane %v5178, 0
  %v5422 = vperm.slane %v5178, 2
  %v5423 = vperm.slane %v5179, 0
  %v5424 = vperm.slane %v5179, 2
  %v5425 = vperm.slane %v5180, 0
  %v5426 = vperm.slane %v5180, 2
  %v5427 = vperm.slane %v5181, 0
  %v5428 = vperm.slane %v5181, 2
  %v5429 = vperm.slane %v5182, 0
  %v5430 = vperm.slane %v5182, 2
  %v5431 = vperm.slane %v5183, 0
  %v5432 = vperm.slane %v5183, 2
  %v5433 = vperm.slane %v5184, 0
  %v5434 = vperm.slane %v5184, 2
  %v5435 = vperm.slane %v5185, 0
  %v5436 = vperm.slane %v5185, 2
  %v5437 = vperm.slane %v5186, 0
  %v5438 = vperm.slane %v5186, 2
  %v5439 = vperm.slane %v5187, 0
  %v5440 = vperm.slane %v5187, 2
  %v5441 = vperm.slane %v5188, 0
  %v5442 = vperm.slane %v5188, 2
  %v5443 = vperm.slane %v5189, 0
  %v5444 = vperm.slane %v5189, 2
  %v5445 = vperm.slane %v5190, 0
  %v5446 = vperm.slane %v5190, 2
  %v5447 = vperm.slane %v5191, 0
  %v5448 = vperm.slane %v5191, 2
  %v5449 = vperm.slane %v5192, 0
  %v5450 = vperm.slane %v5192, 2
  %v5451 = vperm.slane %v5193, 0
  %v5452 = vperm.slane %v5193, 2
  %v5453 = vperm.slane %v5194, 0
  %v5454 = vperm.slane %v5194, 2
  %v5455 = vperm.slane %v5195, 0
  %v5456 = vperm.slane %v5195, 2
  %v5457 = vperm.slane %v5196, 0
  %v5458 = vperm.slane %v5196, 2
  %v5459 = vperm.slane %v5197, 0
  %v5460 = vperm.slane %v5197, 2
  %v5461 = vperm.slane %v5198, 0
  %v5462 = vperm.slane %v5198, 2
  %v5463 = vperm.slane %v5199, 0
  %v5464 = vperm.slane %v5199, 2
  %v5465 = vperm.slane %v5200, 0
  %v5466 = vperm.slane %v5200, 2
  %v5467 = vperm.slane %v5201, 0
  %v5468 = vperm.slane %v5201, 2
  %v5469 = vperm.slane %v5202, 0
  %v5470 = vperm.slane %v5202, 2
  %v5471 = vperm.slane %v5203, 0
  %v5472 = vperm.slane %v5203, 2
  %v5473 = vperm.slane %v5204, 0
  %v5474 = vperm.slane %v5204, 2
  %v5475 = vperm.slane %v5205, 0
  %v5476 = vperm.slane %v5205, 2
  %v5477 = vperm.slane %v5206, 0
  %v5478 = vperm.slane %v5206, 2
  %v5479 = vperm.slane %v5207, 0
  %v5480 = vperm.slane %v5207, 2
  %v5481 = vperm.slane %v5208, 0
  %v5482 = vperm.slane %v5208, 2
  %v5483 = vperm.slane %v5209, 0
  %v5484 = vperm.slane %v5209, 2
  %v5485 = vperm.slane %v5210, 0
  %v5486 = vperm.slane %v5210, 2
  %v5487 = vperm.slane %v5211, 0
  %v5488 = vperm.slane %v5211, 2
  %v5489 = vperm.slane %v5212, 0
  %v5490 = vperm.slane %v5212, 2
  %v5491 = vperm.slane %v5213, 0
  %v5492 = vperm.slane %v5213, 2
  %v5493 = vperm.slane %v5214, 0
  %v5494 = vperm.slane %v5214, 2
  %v5495 = vperm.slane %v5215, 0
  %v5496 = vperm.slane %v5215, 2
  %v5497 = vperm.slane %v5216, 0
  %v5498 = vperm.slane %v5216, 2
  %v5499 = vperm.slane %v5217, 0
  %v5500 = vperm.slane %v5217, 2
  %v5501 = vperm.slane %v5218, 0
  %v5502 = vperm.slane %v5218, 2
  %v5503 = vperm.slane %v5219, 0
  %v5504 = vperm.slane %v5219, 2
  %v5505 = vperm.slane %v5220, 0
  %v5506 = vperm.slane %v5220, 2
  %v5507 = vperm.slane %v5221, 0
  %v5508 = vperm.slane %v5221, 2
  %v5509 = vperm.slane %v5222, 0
  %v5510 = vperm.slane %v5222, 2
  %v5511 = vperm.slane %v5223, 0
  %v5512 = vperm.slane %v5223, 2
  %v5513 = vperm.slane %v5224, 0
  %v5514 = vperm.slane %v5224, 2
  %v5515 = vperm.slane %v5225, 0
  %v5516 = vperm.slane %v5225, 2
  %v5517 = vperm.slane %v5226, 0
  %v5518 = vperm.slane %v5226, 2
  %v5519 = vperm.slane %v5227, 0
  %v5520 = vperm.slane %v5227, 2
  %v5521 = vperm.slane %v5228, 0
  %v5522 = vperm.slane %v5228, 2
  %v5523 = vperm.slane %v5229, 0
  %v5524 = vperm.slane %v5229, 2
  %v5525 = vperm.slane %v5230, 0
  %v5526 = vperm.slane %v5230, 2
  %v5527 = vperm.slane %v5231, 0
  %v5528 = vperm.slane %v5231, 2
  %v5529 = vperm.slane %v5232, 0
  %v5530 = vperm.slane %v5232, 2
  %v5531 = vperm.slane %v5233, 0
  %v5532 = vperm.slane %v5233, 2
  %v5533 = vperm.slane %v5234, 0
  %v5534 = vperm.slane %v5234, 2
  %v5535 = vperm.slane %v5235, 0
  %v5536 = vperm.slane %v5235, 2
  %v5537 = vperm.slane %v5236, 0
  %v5538 = vperm.slane %v5236, 2
  %v5539 = vperm.slane %v5237, 0
  %v5540 = vperm.slane %v5237, 2
  %v5541 = vperm.slane %v5238, 0
  %v5542 = vperm.slane %v5238, 2
  %v5543 = vperm.slane %v5239, 0
  %v5544 = vperm.slane %v5239, 2
  %v5545 = vperm.slane %v5240, 0
  %v5546 = vperm.slane %v5240, 2
  %v5547 = vperm.slane %v5241, 0
  %v5548 = vperm.slane %v5241, 2
  %v5549 = vperm.slane %v5242, 0
  %v5550 = vperm.slane %v5242, 2
  %v5551 = vperm.slane %v5243, 0
  %v5552 = vperm.slane %v5243, 2
  %v5553 = vperm.slane %v5244, 0
  %v5554 = vperm.slane %v5244, 2
  %v5555 = vperm.slane %v5245, 0
  %v5556 = vperm.slane %v5245, 2
  %v5557 = vperm.slane %v5246, 0
  %v5558 = vperm.slane %v5246, 2
  %v5559 = vperm.slane %v5247, 0
  %v5560 = vperm.slane %v5247, 2
  %v5561 = vperm.slane %v5248, 0
  %v5562 = vperm.slane %v5248, 2
  %v5563 = vperm.slane %v5249, 0
  %v5564 = vperm.slane %v5249, 2
  %v5565 = vperm.slane %v5250, 0
  %v5566 = vperm.slane %v5250, 2
  %v5567 = vperm.slane %v5251, 0
  %v5568 = vperm.slane %v5251, 2
  %v5569 = vperm.slane %v5252, 0
  %v5570 = vperm.slane %v5252, 2
  %v5571 = vperm.slane %v5253, 0
  %v5572 = vperm.slane %v5253, 2
  %v5573 = vperm.slane %v5254, 0
  %v5574 = vperm.slane %v5254, 2
  %v5575 = vperm.slane %v5255, 0
  %v5576 = vperm.slane %v5255, 2
  %v5577 = vperm.slane %v5256, 0
  %v5578 = vperm.slane %v5256, 2
  %v5579 = vperm.slane %v5257, 0
  %v5580 = vperm.slane %v5257, 2
  %v5581 = vperm.slane %v5258, 0
  %v5582 = vperm.slane %v5258, 2
  %v5583 = vperm.slane %v5259, 0
  %v5584 = vperm.slane %v5259, 2
  %v5585 = vperm.slane %v5260, 0
  %v5586 = vperm.slane %v5260, 2
  %v5587 = vperm.slane %v5261, 0
  %v5588 = vperm.slane %v5261, 2
  %v5589 = vperm.slane %v5262, 0
  %v5590 = vperm.slane %v5262, 2
  %v5591 = vperm.slane %v5263, 0
  %v5592 = vperm.slane %v5263, 2
  %v5593 = vperm.slane %v5264, 0
  %v5594 = vperm.slane %v5264, 2
  %v5595 = vperm.slane %v5265, 0
  %v5596 = vperm.slane %v5265, 2
  %v5597 = vperm.slane %v5266, 0
  %v5598 = vperm.slane %v5266, 2
  %v5599 = vperm.slane %v5267, 0
  %v5600 = vperm.slane %v5267, 2
  %v5601 = vperm.slane %v5268, 0
  %v5602 = vperm.slane %v5268, 2
  %v5603 = vperm.slane %v5269, 0
  %v5604 = vperm.slane %v5269, 2
  %v5605 = vperm.slane %v5270, 0
  %v5606 = vperm.slane %v5270, 2
  %v5831 = vpack.c.bf16 %v5384, %v5383
  %v5832 = vpack.c.bf16 %v5386, %v5385
  %v5833 = vpack.c.bf16 %v5388, %v5387
  %v5834 = vpack.c.bf16 %v5390, %v5389
  %v5835 = vpack.c.bf16 %v5392, %v5391
  %v5836 = vpack.c.bf16 %v5394, %v5393
  %v5837 = vpack.c.bf16 %v5396, %v5395
  %v5838 = vpack.c.bf16 %v5398, %v5397
  %v5839 = vpack.c.bf16 %v5400, %v5399
  %v5840 = vpack.c.bf16 %v5402, %v5401
  %v5841 = vpack.c.bf16 %v5404, %v5403
  %v5842 = vpack.c.bf16 %v5406, %v5405
  %v5843 = vpack.c.bf16 %v5408, %v5407
  %v5844 = vpack.c.bf16 %v5410, %v5409
  %v5845 = vpack.c.bf16 %v5412, %v5411
  %v5846 = vpack.c.bf16 %v5414, %v5413
  %v5847 = vpack.c.bf16 %v5416, %v5415
  %v5848 = vpack.c.bf16 %v5418, %v5417
  %v5849 = vpack.c.bf16 %v5420, %v5419
  %v5850 = vpack.c.bf16 %v5422, %v5421
  %v5851 = vpack.c.bf16 %v5424, %v5423
  %v5852 = vpack.c.bf16 %v5426, %v5425
  %v5853 = vpack.c.bf16 %v5428, %v5427
  %v5854 = vpack.c.bf16 %v5430, %v5429
  %v5855 = vpack.c.bf16 %v5432, %v5431
  %v5856 = vpack.c.bf16 %v5434, %v5433
  %v5857 = vpack.c.bf16 %v5436, %v5435
  %v5858 = vpack.c.bf16 %v5438, %v5437
  %v5859 = vpack.c.bf16 %v5440, %v5439
  %v5860 = vpack.c.bf16 %v5442, %v5441
  %v5861 = vpack.c.bf16 %v5444, %v5443
  %v5862 = vpack.c.bf16 %v5446, %v5445
  %v5863 = vpack.c.bf16 %v5448, %v5447
  %v5864 = vpack.c.bf16 %v5450, %v5449
  %v5865 = vpack.c.bf16 %v5452, %v5451
  %v5866 = vpack.c.bf16 %v5454, %v5453
  %v5867 = vpack.c.bf16 %v5456, %v5455
  %v5868 = vpack.c.bf16 %v5458, %v5457
  %v5869 = vpack.c.bf16 %v5460, %v5459
  %v5870 = vpack.c.bf16 %v5462, %v5461
  %v5871 = vpack.c.bf16 %v5464, %v5463
  %v5872 = vpack.c.bf16 %v5466, %v5465
  %v5873 = vpack.c.bf16 %v5468, %v5467
  %v5874 = vpack.c.bf16 %v5470, %v5469
  %v5875 = vpack.c.bf16 %v5472, %v5471
  %v5876 = vpack.c.bf16 %v5474, %v5473
  %v5877 = vpack.c.bf16 %v5476, %v5475
  %v5878 = vpack.c.bf16 %v5478, %v5477
  %v5879 = vpack.c.bf16 %v5480, %v5479
  %v5880 = vpack.c.bf16 %v5482, %v5481
  %v5881 = vpack.c.bf16 %v5484, %v5483
  %v5882 = vpack.c.bf16 %v5486, %v5485
  %v5883 = vpack.c.bf16 %v5488, %v5487
  %v5884 = vpack.c.bf16 %v5490, %v5489
  %v5885 = vpack.c.bf16 %v5492, %v5491
  %v5886 = vpack.c.bf16 %v5494, %v5493
  %v5887 = vpack.c.bf16 %v5496, %v5495
  %v5888 = vpack.c.bf16 %v5498, %v5497
  %v5889 = vpack.c.bf16 %v5500, %v5499
  %v5890 = vpack.c.bf16 %v5502, %v5501
  %v5891 = vpack.c.bf16 %v5504, %v5503
  %v5892 = vpack.c.bf16 %v5506, %v5505
  %v5893 = vpack.c.bf16 %v5508, %v5507
  %v5894 = vpack.c.bf16 %v5510, %v5509
  %v5895 = vpack.c.bf16 %v5512, %v5511
  %v5896 = vpack.c.bf16 %v5514, %v5513
  %v5897 = vpack.c.bf16 %v5516, %v5515
  %v5898 = vpack.c.bf16 %v5518, %v5517
  %v5899 = vpack.c.bf16 %v5520, %v5519
  %v5900 = vpack.c.bf16 %v5522, %v5521
  %v5901 = vpack.c.bf16 %v5524, %v5523
  %v5902 = vpack.c.bf16 %v5526, %v5525
  %v5903 = vpack.c.bf16 %v5528, %v5527
  %v5904 = vpack.c.bf16 %v5530, %v5529
  %v5905 = vpack.c.bf16 %v5532, %v5531
  %v5906 = vpack.c.bf16 %v5534, %v5533
  %v5907 = vpack.c.bf16 %v5536, %v5535
  %v5908 = vpack.c.bf16 %v5538, %v5537
  %v5909 = vpack.c.bf16 %v5540, %v5539
  %v5910 = vpack.c.bf16 %v5542, %v5541
  %v5911 = vpack.c.bf16 %v5544, %v5543
  %v5912 = vpack.c.bf16 %v5546, %v5545
  %v5913 = vpack.c.bf16 %v5548, %v5547
  %v5914 = vpack.c.bf16 %v5550, %v5549
  %v5915 = vpack.c.bf16 %v5552, %v5551
  %v5916 = vpack.c.bf16 %v5554, %v5553
  %v5917 = vpack.c.bf16 %v5556, %v5555
  %v5918 = vpack.c.bf16 %v5558, %v5557
  %v5919 = vpack.c.bf16 %v5560, %v5559
  %v5920 = vpack.c.bf16 %v5562, %v5561
  %v5921 = vpack.c.bf16 %v5564, %v5563
  %v5922 = vpack.c.bf16 %v5566, %v5565
  %v5923 = vpack.c.bf16 %v5568, %v5567
  %v5924 = vpack.c.bf16 %v5570, %v5569
  %v5925 = vpack.c.bf16 %v5572, %v5571
  %v5926 = vpack.c.bf16 %v5574, %v5573
  %v5927 = vpack.c.bf16 %v5576, %v5575
  %v5928 = vpack.c.bf16 %v5578, %v5577
  %v5929 = vpack.c.bf16 %v5580, %v5579
  %v5930 = vpack.c.bf16 %v5582, %v5581
  %v5931 = vpack.c.bf16 %v5584, %v5583
  %v5932 = vpack.c.bf16 %v5586, %v5585
  %v5933 = vpack.c.bf16 %v5588, %v5587
  %v5934 = vpack.c.bf16 %v5590, %v5589
  %v5935 = vpack.c.bf16 %v5592, %v5591
  %v5936 = vpack.c.bf16 %v5594, %v5593
  %v5937 = vpack.c.bf16 %v5596, %v5595
  %v5938 = vpack.c.bf16 %v5598, %v5597
  %v5939 = vpack.c.bf16 %v5600, %v5599
  %v5940 = vpack.c.bf16 %v5602, %v5601
  %v5941 = vpack.c.bf16 %v5604, %v5603
  %v5942 = vpack.c.bf16 %v5606, %v5605
  %v5943 = vld [vmem:[%s3] sm:$0xff]
  %v5944 = vld [vmem:[%s3 + $0x8] sm:$0xff]
  %v5945 = vld [vmem:[%s3 + $0x10] sm:$0xff]
  %v5946 = vld [vmem:[%s3 + $0x18] sm:$0xff]
  %v5947 = vld [vmem:[%s3 + $0x20] sm:$0xff]
  %v5948 = vld [vmem:[%s3 + $0x28] sm:$0xff]
  %v5949 = vld [vmem:[%s3 + $0x30] sm:$0xff]
  %v5950 = vld [vmem:[%s3 + $0x38] sm:$0xff]
  %v5951 = vld [vmem:[%s3 + $0x40] sm:$0xff]
  %v5952 = vld [vmem:[%s3 + $0x48] sm:$0xff]
  %v5953 = vld [vmem:[%s3 + $0x50] sm:$0xff]
  %v5954 = vld [vmem:[%s3 + $0x58] sm:$0xff]
  %v5955 = vld [vmem:[%s3 + $0x60] sm:$0xff]
  %v5956 = vld [vmem:[%s3 + $0x68] sm:$0xff]
  %v5957 = vld [vmem:[%s3 + $0x70] sm:$0xff]
  %v5958 = vld [vmem:[%s3 + $0x78] sm:$0xff]
  %v5959 = vld [vmem:[%s3 + $0x80] sm:$0xff]
  %v5960 = vld [vmem:[%s3 + $0x88] sm:$0xff]
  %v5961 = vld [vmem:[%s3 + $0x90] sm:$0xff]
  %v5962 = vld [vmem:[%s3 + $0x98] sm:$0xff]
  %v5963 = vld [vmem:[%s3 + $0xa0] sm:$0x11]
  %s5964 = scalar_lea.vmem %s3, 168
  %v5965 = vld [vmem:[%s5964] sm:$0xff]
  %v5966 = vld [vmem:[%s5964 + $0x8] sm:$0xff]
  %v5967 = vld [vmem:[%s5964 + $0x10] sm:$0xff]
  %v5968 = vld [vmem:[%s5964 + $0x18] sm:$0xff]
  %v5969 = vld [vmem:[%s5964 + $0x20] sm:$0xff]
  %v5970 = vld [vmem:[%s5964 + $0x28] sm:$0xff]
  %v5971 = vld [vmem:[%s5964 + $0x30] sm:$0xff]
  %v5972 = vld [vmem:[%s5964 + $0x38] sm:$0xff]
  %v5973 = vld [vmem:[%s5964 + $0x40] sm:$0xff]
  %v5974 = vld [vmem:[%s5964 + $0x48] sm:$0xff]
  %v5975 = vld [vmem:[%s5964 + $0x50] sm:$0xff]
  %v5976 = vld [vmem:[%s5964 + $0x58] sm:$0xff]
  %v5977 = vld [vmem:[%s5964 + $0x60] sm:$0xff]
  %v5978 = vld [vmem:[%s5964 + $0x68] sm:$0xff]
  %v5979 = vld [vmem:[%s5964 + $0x70] sm:$0xff]
  %v5980 = vld [vmem:[%s5964 + $0x78] sm:$0xff]
  %v5981 = vld [vmem:[%s5964 + $0x80] sm:$0xff]
  %v5982 = vld [vmem:[%s5964 + $0x88] sm:$0xff]
  %v5983 = vld [vmem:[%s5964 + $0x90] sm:$0xff]
  %v5984 = vld [vmem:[%s5964 + $0x98] sm:$0xff]
  %v5985 = vld [vmem:[%s5964 + $0xa0] sm:$0x11]
  %v6066 = vunpack.c.l.b16 %v5832
  %v6067 = vunpack.c.h.b16 %v5832
  %v6068 = vunpack.c.l.b16 %v5833
  %v6069 = vunpack.c.h.b16 %v5833
  %v6070 = vunpack.c.l.b16 %v5834
  %v6071 = vunpack.c.h.b16 %v5834
  %v6072 = vunpack.c.l.b16 %v5835
  %v6073 = vunpack.c.h.b16 %v5835
  %v6074 = vunpack.c.l.b16 %v5836
  %v6075 = vunpack.c.h.b16 %v5836
  %v6076 = vunpack.c.l.b16 %v5837
  %v6077 = vunpack.c.h.b16 %v5837
  %v6078 = vunpack.c.l.b16 %v5838
  %v6079 = vunpack.c.h.b16 %v5838
  %v6080 = vunpack.c.l.b16 %v5839
  %v6081 = vunpack.c.h.b16 %v5839
  %v6082 = vunpack.c.l.b16 %v5840
  %v6083 = vunpack.c.h.b16 %v5840
  %v6084 = vunpack.c.l.b16 %v5841
  %v6085 = vunpack.c.h.b16 %v5841
  %v6086 = vunpack.c.l.b16 %v5846
  %v6087 = vunpack.c.h.b16 %v5846
  %v6088 = vunpack.c.l.b16 %v5847
  %v6089 = vunpack.c.h.b16 %v5847
  %v6090 = vunpack.c.l.b16 %v5848
  %v6091 = vunpack.c.h.b16 %v5848
  %v6092 = vunpack.c.l.b16 %v5849
  %v6093 = vunpack.c.h.b16 %v5849
  %v6094 = vunpack.c.l.b16 %v5850
  %v6095 = vunpack.c.h.b16 %v5850
  %v6096 = vunpack.c.l.b16 %v5851
  %v6097 = vunpack.c.h.b16 %v5851
  %v6098 = vunpack.c.l.b16 %v5852
  %v6099 = vunpack.c.h.b16 %v5852
  %v6100 = vunpack.c.l.b16 %v5853
  %v6101 = vunpack.c.h.b16 %v5853
  %v6102 = vunpack.c.l.b16 %v5854
  %v6103 = vunpack.c.h.b16 %v5854
  %v6104 = vunpack.c.l.b16 %v5855
  %v6105 = vunpack.c.h.b16 %v5855
  %v6106 = vunpack.c.l.b16 %v5860
  %v6107 = vunpack.c.h.b16 %v5860
  %v6108 = vunpack.c.l.b16 %v5861
  %v6109 = vunpack.c.h.b16 %v5861
  %v6110 = vunpack.c.l.b16 %v5862
  %v6111 = vunpack.c.h.b16 %v5862
  %v6112 = vunpack.c.l.b16 %v5863
  %v6113 = vunpack.c.h.b16 %v5863
  %v6114 = vunpack.c.l.b16 %v5864
  %v6115 = vunpack.c.h.b16 %v5864
  %v6116 = vunpack.c.l.b16 %v5865
  %v6117 = vunpack.c.h.b16 %v5865
  %v6118 = vunpack.c.l.b16 %v5866
  %v6119 = vunpack.c.h.b16 %v5866
  %v6120 = vunpack.c.l.b16 %v5867
  %v6121 = vunpack.c.h.b16 %v5867
  %v6122 = vunpack.c.l.b16 %v5868
  %v6123 = vunpack.c.h.b16 %v5868
  %v6124 = vunpack.c.l.b16 %v5869
  %v6125 = vunpack.c.h.b16 %v5869
  %v6126 = vunpack.c.l.b16 %v5874
  %v6127 = vunpack.c.h.b16 %v5874
  %v6128 = vunpack.c.l.b16 %v5875
  %v6129 = vunpack.c.h.b16 %v5875
  %v6130 = vunpack.c.l.b16 %v5876
  %v6131 = vunpack.c.h.b16 %v5876
  %v6132 = vunpack.c.l.b16 %v5877
  %v6133 = vunpack.c.h.b16 %v5877
  %v6134 = vunpack.c.l.b16 %v5878
  %v6135 = vunpack.c.h.b16 %v5878
  %v6136 = vunpack.c.l.b16 %v5879
  %v6137 = vunpack.c.h.b16 %v5879
  %v6138 = vunpack.c.l.b16 %v5880
  %v6139 = vunpack.c.h.b16 %v5880
  %v6140 = vunpack.c.l.b16 %v5881
  %v6141 = vunpack.c.h.b16 %v5881
  %v6142 = vunpack.c.l.b16 %v5882
  %v6143 = vunpack.c.h.b16 %v5882
  %v6144 = vunpack.c.l.b16 %v5883
  %v6145 = vunpack.c.h.b16 %v5883
  %v6146 = vunpack.c.l.b16 %v5888
  %v6147 = vunpack.c.h.b16 %v5888
  %v6148 = vunpack.c.l.b16 %v5889
  %v6149 = vunpack.c.h.b16 %v5889
  %v6150 = vunpack.c.l.b16 %v5890
  %v6151 = vunpack.c.h.b16 %v5890
  %v6152 = vunpack.c.l.b16 %v5891
  %v6153 = vunpack.c.h.b16 %v5891
  %v6154 = vunpack.c.l.b16 %v5892
  %v6155 = vunpack.c.h.b16 %v5892
  %v6156 = vunpack.c.l.b16 %v5893
  %v6157 = vunpack.c.h.b16 %v5893
  %v6158 = vunpack.c.l.b16 %v5894
  %v6159 = vunpack.c.h.b16 %v5894
  %v6160 = vunpack.c.l.b16 %v5895
  %v6161 = vunpack.c.h.b16 %v5895
  %v6162 = vunpack.c.l.b16 %v5896
  %v6163 = vunpack.c.h.b16 %v5896
  %v6164 = vunpack.c.l.b16 %v5897
  %v6165 = vunpack.c.h.b16 %v5897
  %v6166 = vunpack.c.l.b16 %v5902
  %v6167 = vunpack.c.h.b16 %v5902
  %v6168 = vunpack.c.l.b16 %v5903
  %v6169 = vunpack.c.h.b16 %v5903
  %v6170 = vunpack.c.l.b16 %v5904
  %v6171 = vunpack.c.h.b16 %v5904
  %v6172 = vunpack.c.l.b16 %v5905
  %v6173 = vunpack.c.h.b16 %v5905
  %v6174 = vunpack.c.l.b16 %v5906
  %v6175 = vunpack.c.h.b16 %v5906
  %v6176 = vunpack.c.l.b16 %v5907
  %v6177 = vunpack.c.h.b16 %v5907
  %v6178 = vunpack.c.l.b16 %v5908
  %v6179 = vunpack.c.h.b16 %v5908
  %v6180 = vunpack.c.l.b16 %v5909
  %v6181 = vunpack.c.h.b16 %v5909
  %v6182 = vunpack.c.l.b16 %v5910
  %v6183 = vunpack.c.h.b16 %v5910
  %v6184 = vunpack.c.l.b16 %v5911
  %v6185 = vunpack.c.h.b16 %v5911
  %v6186 = vunpack.c.l.b16 %v5916
  %v6187 = vunpack.c.h.b16 %v5916
  %v6188 = vunpack.c.l.b16 %v5917
  %v6189 = vunpack.c.h.b16 %v5917
  %v6190 = vunpack.c.l.b16 %v5918
  %v6191 = vunpack.c.h.b16 %v5918
  %v6192 = vunpack.c.l.b16 %v5919
  %v6193 = vunpack.c.h.b16 %v5919
  %v6194 = vunpack.c.l.b16 %v5920
  %v6195 = vunpack.c.h.b16 %v5920
  %v6196 = vunpack.c.l.b16 %v5921
  %v6197 = vunpack.c.h.b16 %v5921
  %v6198 = vunpack.c.l.b16 %v5922
  %v6199 = vunpack.c.h.b16 %v5922
  %v6200 = vunpack.c.l.b16 %v5923
  %v6201 = vunpack.c.h.b16 %v5923
  %v6202 = vunpack.c.l.b16 %v5924
  %v6203 = vunpack.c.h.b16 %v5924
  %v6204 = vunpack.c.l.b16 %v5925
  %v6205 = vunpack.c.h.b16 %v5925
  %v6206 = vunpack.c.l.b16 %v5930
  %v6207 = vunpack.c.h.b16 %v5930
  %v6208 = vunpack.c.l.b16 %v5931
  %v6209 = vunpack.c.h.b16 %v5931
  %v6210 = vunpack.c.l.b16 %v5932
  %v6211 = vunpack.c.h.b16 %v5932
  %v6212 = vunpack.c.l.b16 %v5933
  %v6213 = vunpack.c.h.b16 %v5933
  %v6214 = vunpack.c.l.b16 %v5934
  %v6215 = vunpack.c.h.b16 %v5934
  %v6216 = vunpack.c.l.b16 %v5935
  %v6217 = vunpack.c.h.b16 %v5935
  %v6218 = vunpack.c.l.b16 %v5936
  %v6219 = vunpack.c.h.b16 %v5936
  %v6220 = vunpack.c.l.b16 %v5937
  %v6221 = vunpack.c.h.b16 %v5937
  %v6222 = vunpack.c.l.b16 %v5938
  %v6223 = vunpack.c.h.b16 %v5938
  %v6224 = vunpack.c.l.b16 %v5939
  %v6225 = vunpack.c.h.b16 %v5939
  %v6226 = vpack.c.b16 %v6066, %v6066
  %v6227 = vpack.c.b16 %v6067, %v6067
  %v6228 = vpack.c.b16 %v6068, %v6068
  %v6229 = vpack.c.b16 %v6069, %v6069
  %v6230 = vpack.c.b16 %v6070, %v6070
  %v6231 = vpack.c.b16 %v6071, %v6071
  %v6232 = vpack.c.b16 %v6072, %v6072
  %v6233 = vpack.c.b16 %v6073, %v6073
  %v6234 = vpack.c.b16 %v6074, %v6074
  %v6235 = vpack.c.b16 %v6075, %v6075
  %v6236 = vpack.c.b16 %v6076, %v6076
  %v6237 = vpack.c.b16 %v6077, %v6077
  %v6238 = vpack.c.b16 %v6078, %v6078
  %v6239 = vpack.c.b16 %v6079, %v6079
  %v6240 = vpack.c.b16 %v6080, %v6080
  %v6241 = vpack.c.b16 %v6081, %v6081
  %v6242 = vpack.c.b16 %v6082, %v6082
  %v6243 = vpack.c.b16 %v6083, %v6083
  %v6244 = vpack.c.b16 %v6084, %v6084
  %v6245 = vpack.c.b16 %v6085, %v6085
  %v6246 = vpack.c.b16 %v6086, %v6086
  %v6247 = vpack.c.b16 %v6087, %v6087
  %v6248 = vpack.c.b16 %v6088, %v6088
  %v6249 = vpack.c.b16 %v6089, %v6089
  %v6250 = vpack.c.b16 %v6090, %v6090
  %v6251 = vpack.c.b16 %v6091, %v6091
  %v6252 = vpack.c.b16 %v6092, %v6092
  %v6253 = vpack.c.b16 %v6093, %v6093
  %v6254 = vpack.c.b16 %v6094, %v6094
  %v6255 = vpack.c.b16 %v6095, %v6095
  %v6256 = vpack.c.b16 %v6096, %v6096
  %v6257 = vpack.c.b16 %v6097, %v6097
  %v6258 = vpack.c.b16 %v6098, %v6098
  %v6259 = vpack.c.b16 %v6099, %v6099
  %v6260 = vpack.c.b16 %v6100, %v6100
  %v6261 = vpack.c.b16 %v6101, %v6101
  %v6262 = vpack.c.b16 %v6102, %v6102
  %v6263 = vpack.c.b16 %v6103, %v6103
  %v6264 = vpack.c.b16 %v6104, %v6104
  %v6265 = vpack.c.b16 %v6105, %v6105
  %v6266 = vpack.c.b16 %v6106, %v6106
  %v6267 = vpack.c.b16 %v6107, %v6107
  %v6268 = vpack.c.b16 %v6108, %v6108
  %v6269 = vpack.c.b16 %v6109, %v6109
  %v6270 = vpack.c.b16 %v6110, %v6110
  %v6271 = vpack.c.b16 %v6111, %v6111
  %v6272 = vpack.c.b16 %v6112, %v6112
  %v6273 = vpack.c.b16 %v6113, %v6113
  %v6274 = vpack.c.b16 %v6114, %v6114
  %v6275 = vpack.c.b16 %v6115, %v6115
  %v6276 = vpack.c.b16 %v6116, %v6116
  %v6277 = vpack.c.b16 %v6117, %v6117
  %v6278 = vpack.c.b16 %v6118, %v6118
  %v6279 = vpack.c.b16 %v6119, %v6119
  %v6280 = vpack.c.b16 %v6120, %v6120
  %v6281 = vpack.c.b16 %v6121, %v6121
  %v6282 = vpack.c.b16 %v6122, %v6122
  %v6283 = vpack.c.b16 %v6123, %v6123
  %v6284 = vpack.c.b16 %v6124, %v6124
  %v6285 = vpack.c.b16 %v6125, %v6125
  %v6286 = vpack.c.b16 %v6126, %v6126
  %v6287 = vpack.c.b16 %v6127, %v6127
  %v6288 = vpack.c.b16 %v6128, %v6128
  %v6289 = vpack.c.b16 %v6129, %v6129
  %v6290 = vpack.c.b16 %v6130, %v6130
  %v6291 = vpack.c.b16 %v6131, %v6131
  %v6292 = vpack.c.b16 %v6132, %v6132
  %v6293 = vpack.c.b16 %v6133, %v6133
  %v6294 = vpack.c.b16 %v6134, %v6134
  %v6295 = vpack.c.b16 %v6135, %v6135
  %v6296 = vpack.c.b16 %v6136, %v6136
  %v6297 = vpack.c.b16 %v6137, %v6137
  %v6298 = vpack.c.b16 %v6138, %v6138
  %v6299 = vpack.c.b16 %v6139, %v6139
  %v6300 = vpack.c.b16 %v6140, %v6140
  %v6301 = vpack.c.b16 %v6141, %v6141
  %v6302 = vpack.c.b16 %v6142, %v6142
  %v6303 = vpack.c.b16 %v6143, %v6143
  %v6304 = vpack.c.b16 %v6144, %v6144
  %v6305 = vpack.c.b16 %v6145, %v6145
  %v6306 = vpack.c.b16 %v6146, %v6146
  %v6307 = vpack.c.b16 %v6147, %v6147
  %v6308 = vpack.c.b16 %v6148, %v6148
  %v6309 = vpack.c.b16 %v6149, %v6149
  %v6310 = vpack.c.b16 %v6150, %v6150
  %v6311 = vpack.c.b16 %v6151, %v6151
  %v6312 = vpack.c.b16 %v6152, %v6152
  %v6313 = vpack.c.b16 %v6153, %v6153
  %v6314 = vpack.c.b16 %v6154, %v6154
  %v6315 = vpack.c.b16 %v6155, %v6155
  %v6316 = vpack.c.b16 %v6156, %v6156
  %v6317 = vpack.c.b16 %v6157, %v6157
  %v6318 = vpack.c.b16 %v6158, %v6158
  %v6319 = vpack.c.b16 %v6159, %v6159
  %v6320 = vpack.c.b16 %v6160, %v6160
  %v6321 = vpack.c.b16 %v6161, %v6161
  %v6322 = vpack.c.b16 %v6162, %v6162
  %v6323 = vpack.c.b16 %v6163, %v6163
  %v6324 = vpack.c.b16 %v6164, %v6164
  %v6325 = vpack.c.b16 %v6165, %v6165
  %v6326 = vpack.c.b16 %v6166, %v6166
  %v6327 = vpack.c.b16 %v6167, %v6167
  %v6328 = vpack.c.b16 %v6168, %v6168
  %v6329 = vpack.c.b16 %v6169, %v6169
  %v6330 = vpack.c.b16 %v6170, %v6170
  %v6331 = vpack.c.b16 %v6171, %v6171
  %v6332 = vpack.c.b16 %v6172, %v6172
  %v6333 = vpack.c.b16 %v6173, %v6173
  %v6334 = vpack.c.b16 %v6174, %v6174
  %v6335 = vpack.c.b16 %v6175, %v6175
  %v6336 = vpack.c.b16 %v6176, %v6176
  %v6337 = vpack.c.b16 %v6177, %v6177
  %v6338 = vpack.c.b16 %v6178, %v6178
  %v6339 = vpack.c.b16 %v6179, %v6179
  %v6340 = vpack.c.b16 %v6180, %v6180
  %v6341 = vpack.c.b16 %v6181, %v6181
  %v6342 = vpack.c.b16 %v6182, %v6182
  %v6343 = vpack.c.b16 %v6183, %v6183
  %v6344 = vpack.c.b16 %v6184, %v6184
  %v6345 = vpack.c.b16 %v6185, %v6185
  %v6346 = vpack.c.b16 %v6186, %v6186
  %v6347 = vpack.c.b16 %v6187, %v6187
  %v6348 = vpack.c.b16 %v6188, %v6188
  %v6349 = vpack.c.b16 %v6189, %v6189
  %v6350 = vpack.c.b16 %v6190, %v6190
  %v6351 = vpack.c.b16 %v6191, %v6191
  %v6352 = vpack.c.b16 %v6192, %v6192
  %v6353 = vpack.c.b16 %v6193, %v6193
  %v6354 = vpack.c.b16 %v6194, %v6194
  %v6355 = vpack.c.b16 %v6195, %v6195
  %v6356 = vpack.c.b16 %v6196, %v6196
  %v6357 = vpack.c.b16 %v6197, %v6197
  %v6358 = vpack.c.b16 %v6198, %v6198
  %v6359 = vpack.c.b16 %v6199, %v6199
  %v6360 = vpack.c.b16 %v6200, %v6200
  %v6361 = vpack.c.b16 %v6201, %v6201
  %v6362 = vpack.c.b16 %v6202, %v6202
  %v6363 = vpack.c.b16 %v6203, %v6203
  %v6364 = vpack.c.b16 %v6204, %v6204
  %v6365 = vpack.c.b16 %v6205, %v6205
  %v6366 = vpack.c.b16 %v6206, %v6206
  %v6367 = vpack.c.b16 %v6207, %v6207
  %v6368 = vpack.c.b16 %v6208, %v6208
  %v6369 = vpack.c.b16 %v6209, %v6209
  %v6370 = vpack.c.b16 %v6210, %v6210
  %v6371 = vpack.c.b16 %v6211, %v6211
  %v6372 = vpack.c.b16 %v6212, %v6212
  %v6373 = vpack.c.b16 %v6213, %v6213
  %v6374 = vpack.c.b16 %v6214, %v6214
  %v6375 = vpack.c.b16 %v6215, %v6215
  %v6376 = vpack.c.b16 %v6216, %v6216
  %v6377 = vpack.c.b16 %v6217, %v6217
  %v6378 = vpack.c.b16 %v6218, %v6218
  %v6379 = vpack.c.b16 %v6219, %v6219
  %v6380 = vpack.c.b16 %v6220, %v6220
  %v6381 = vpack.c.b16 %v6221, %v6221
  %v6382 = vpack.c.b16 %v6222, %v6222
  %v6383 = vpack.c.b16 %v6223, %v6223
  %v6384 = vpack.c.b16 %v6224, %v6224
  %v6385 = vpack.c.b16 %v6225, %v6225
  %v6386 = vunpack.c.l.b16 %v6226
  %v6387 = vunpack.c.l.b16 %v6227
  %v6388 = vunpack.c.l.b16 %v6228
  %v6389 = vunpack.c.l.b16 %v6229
  %v6390 = vunpack.c.l.b16 %v6230
  %v6391 = vunpack.c.l.b16 %v6231
  %v6392 = vunpack.c.l.b16 %v6232
  %v6393 = vunpack.c.l.b16 %v6233
  %v6394 = vunpack.c.l.b16 %v6234
  %v6395 = vunpack.c.l.b16 %v6235
  %v6396 = vunpack.c.l.b16 %v6236
  %v6397 = vunpack.c.l.b16 %v6237
  %v6398 = vunpack.c.l.b16 %v6238
  %v6399 = vunpack.c.l.b16 %v6239
  %v6400 = vunpack.c.l.b16 %v6240
  %v6401 = vunpack.c.l.b16 %v6241
  %v6402 = vunpack.c.l.b16 %v6242
  %v6403 = vunpack.c.l.b16 %v6243
  %v6404 = vunpack.c.l.b16 %v6244
  %v6405 = vunpack.c.l.b16 %v6245
  %v6406 = vunpack.c.l.b16 %v6246
  %v6407 = vunpack.c.l.b16 %v6247
  %v6408 = vunpack.c.l.b16 %v6248
  %v6409 = vunpack.c.l.b16 %v6249
  %v6410 = vunpack.c.l.b16 %v6250
  %v6411 = vunpack.c.l.b16 %v6251
  %v6412 = vunpack.c.l.b16 %v6252
  %v6413 = vunpack.c.l.b16 %v6253
  %v6414 = vunpack.c.l.b16 %v6254
  %v6415 = vunpack.c.l.b16 %v6255
  %v6416 = vunpack.c.l.b16 %v6256
  %v6417 = vunpack.c.l.b16 %v6257
  %v6418 = vunpack.c.l.b16 %v6258
  %v6419 = vunpack.c.l.b16 %v6259
  %v6420 = vunpack.c.l.b16 %v6260
  %v6421 = vunpack.c.l.b16 %v6261
  %v6422 = vunpack.c.l.b16 %v6262
  %v6423 = vunpack.c.l.b16 %v6263
  %v6424 = vunpack.c.l.b16 %v6264
  %v6425 = vunpack.c.l.b16 %v6265
  %v6426 = vunpack.c.l.b16 %v6266
  %v6427 = vunpack.c.l.b16 %v6267
  %v6428 = vunpack.c.l.b16 %v6268
  %v6429 = vunpack.c.l.b16 %v6269
  %v6430 = vunpack.c.l.b16 %v6270
  %v6431 = vunpack.c.l.b16 %v6271
  %v6432 = vunpack.c.l.b16 %v6272
  %v6433 = vunpack.c.l.b16 %v6273
  %v6434 = vunpack.c.l.b16 %v6274
  %v6435 = vunpack.c.l.b16 %v6275
  %v6436 = vunpack.c.l.b16 %v6276
  %v6437 = vunpack.c.l.b16 %v6277
  %v6438 = vunpack.c.l.b16 %v6278
  %v6439 = vunpack.c.l.b16 %v6279
  %v6440 = vunpack.c.l.b16 %v6280
  %v6441 = vunpack.c.l.b16 %v6281
  %v6442 = vunpack.c.l.b16 %v6282
  %v6443 = vunpack.c.l.b16 %v6283
  %v6444 = vunpack.c.l.b16 %v6284
  %v6445 = vunpack.c.l.b16 %v6285
  %v6446 = vunpack.c.l.b16 %v6286
  %v6447 = vunpack.c.l.b16 %v6287
  %v6448 = vunpack.c.l.b16 %v6288
  %v6449 = vunpack.c.l.b16 %v6289
  %v6450 = vunpack.c.l.b16 %v6290
  %v6451 = vunpack.c.l.b16 %v6291
  %v6452 = vunpack.c.l.b16 %v6292
  %v6453 = vunpack.c.l.b16 %v6293
  %v6454 = vunpack.c.l.b16 %v6294
  %v6455 = vunpack.c.l.b16 %v6295
  %v6456 = vunpack.c.l.b16 %v6296
  %v6457 = vunpack.c.l.b16 %v6297
  %v6458 = vunpack.c.l.b16 %v6298
  %v6459 = vunpack.c.l.b16 %v6299
  %v6460 = vunpack.c.l.b16 %v6300
  %v6461 = vunpack.c.l.b16 %v6301
  %v6462 = vunpack.c.l.b16 %v6302
  %v6463 = vunpack.c.l.b16 %v6303
  %v6464 = vunpack.c.l.b16 %v6304
  %v6465 = vunpack.c.l.b16 %v6305
  %v6466 = vunpack.c.l.b16 %v6306
  %v6467 = vunpack.c.l.b16 %v6307
  %v6468 = vunpack.c.l.b16 %v6308
  %v6469 = vunpack.c.l.b16 %v6309
  %v6470 = vunpack.c.l.b16 %v6310
  %v6471 = vunpack.c.l.b16 %v6311
  %v6472 = vunpack.c.l.b16 %v6312
  %v6473 = vunpack.c.l.b16 %v6313
  %v6474 = vunpack.c.l.b16 %v6314
  %v6475 = vunpack.c.l.b16 %v6315
  %v6476 = vunpack.c.l.b16 %v6316
  %v6477 = vunpack.c.l.b16 %v6317
  %v6478 = vunpack.c.l.b16 %v6318
  %v6479 = vunpack.c.l.b16 %v6319
  %v6480 = vunpack.c.l.b16 %v6320
  %v6481 = vunpack.c.l.b16 %v6321
  %v6482 = vunpack.c.l.b16 %v6322
  %v6483 = vunpack.c.l.b16 %v6323
  %v6484 = vunpack.c.l.b16 %v6324
  %v6485 = vunpack.c.l.b16 %v6325
  %v6486 = vunpack.c.l.b16 %v6326
  %v6487 = vunpack.c.l.b16 %v6327
  %v6488 = vunpack.c.l.b16 %v6328
  %v6489 = vunpack.c.l.b16 %v6329
  %v6490 = vunpack.c.l.b16 %v6330
  %v6491 = vunpack.c.l.b16 %v6331
  %v6492 = vunpack.c.l.b16 %v6332
  %v6493 = vunpack.c.l.b16 %v6333
  %v6494 = vunpack.c.l.b16 %v6334
  %v6495 = vunpack.c.l.b16 %v6335
  %v6496 = vunpack.c.l.b16 %v6336
  %v6497 = vunpack.c.l.b16 %v6337
  %v6498 = vunpack.c.l.b16 %v6338
  %v6499 = vunpack.c.l.b16 %v6339
  %v6500 = vunpack.c.l.b16 %v6340
  %v6501 = vunpack.c.l.b16 %v6341
  %v6502 = vunpack.c.l.b16 %v6342
  %v6503 = vunpack.c.l.b16 %v6343
  %v6504 = vunpack.c.l.b16 %v6344
  %v6505 = vunpack.c.l.b16 %v6345
  %v6506 = vunpack.c.l.b16 %v6346
  %v6507 = vunpack.c.l.b16 %v6347
  %v6508 = vunpack.c.l.b16 %v6348
  %v6509 = vunpack.c.l.b16 %v6349
  %v6510 = vunpack.c.l.b16 %v6350
  %v6511 = vunpack.c.l.b16 %v6351
  %v6512 = vunpack.c.l.b16 %v6352
  %v6513 = vunpack.c.l.b16 %v6353
  %v6514 = vunpack.c.l.b16 %v6354
  %v6515 = vunpack.c.l.b16 %v6355
  %v6516 = vunpack.c.l.b16 %v6356
  %v6517 = vunpack.c.l.b16 %v6357
  %v6518 = vunpack.c.l.b16 %v6358
  %v6519 = vunpack.c.l.b16 %v6359
  %v6520 = vunpack.c.l.b16 %v6360
  %v6521 = vunpack.c.l.b16 %v6361
  %v6522 = vunpack.c.l.b16 %v6362
  %v6523 = vunpack.c.l.b16 %v6363
  %v6524 = vunpack.c.l.b16 %v6364
  %v6525 = vunpack.c.l.b16 %v6365
  %v6526 = vunpack.c.l.b16 %v6366
  %v6527 = vunpack.c.l.b16 %v6367
  %v6528 = vunpack.c.l.b16 %v6368
  %v6529 = vunpack.c.l.b16 %v6369
  %v6530 = vunpack.c.l.b16 %v6370
  %v6531 = vunpack.c.l.b16 %v6371
  %v6532 = vunpack.c.l.b16 %v6372
  %v6533 = vunpack.c.l.b16 %v6373
  %v6534 = vunpack.c.l.b16 %v6374
  %v6535 = vunpack.c.l.b16 %v6375
  %v6536 = vunpack.c.l.b16 %v6376
  %v6537 = vunpack.c.l.b16 %v6377
  %v6538 = vunpack.c.l.b16 %v6378
  %v6539 = vunpack.c.l.b16 %v6379
  %v6540 = vunpack.c.l.b16 %v6380
  %v6541 = vunpack.c.l.b16 %v6381
  %v6542 = vunpack.c.l.b16 %v6382
  %v6543 = vunpack.c.l.b16 %v6383
  %v6544 = vunpack.c.l.b16 %v6384
  %v6545 = vunpack.c.l.b16 %v6385
  %v6546 = vrot.slane %v6388, 7
  %vm6547 = vcmask 1041409
  %v6548 = vsel %vm6547, %v6546, %v6386
  %v6549 = vrot.slane %v6390, 6
  %vm6550 = vcmask 1042434
  %v6551 = vsel %vm6550, %v6549, %v6548
  %v6552 = vrot.slane %v6392, 5
  %vm6553 = vcmask 1043459
  %v6554 = vsel %vm6553, %v6552, %v6551
  %v6555 = vrot.slane %v6394, 4
  %vm6556 = vcmask 1044484
  %v6557 = vsel %vm6556, %v6555, %v6554
  %v6558 = vrot.slane %v6396, 3
  %vm6559 = vcmask 1045509
  %v6560 = vsel %vm6559, %v6558, %v6557
  %v6561 = vrot.slane %v6398, 2
  %vm6562 = vcmask 1046534
  %v6563 = vsel %vm6562, %v6561, %v6560
  %v6564 = vrot.slane %v6400, 1
  %vm6565 = vcmask 1047559
  %v6566 = vsel %vm6565, %v6564, %v6563
  %v6567 = vrot.slane %v6389, 7
  %v6568 = vsel %vm6547, %v6567, %v6387
  %v6569 = vrot.slane %v6391, 6
  %v6570 = vsel %vm6550, %v6569, %v6568
  %v6571 = vrot.slane %v6393, 5
  %v6572 = vsel %vm6553, %v6571, %v6570
  %v6573 = vrot.slane %v6395, 4
  %v6574 = vsel %vm6556, %v6573, %v6572
  %v6575 = vrot.slane %v6397, 3
  %v6576 = vsel %vm6559, %v6575, %v6574
  %v6577 = vrot.slane %v6399, 2
  %v6578 = vsel %vm6562, %v6577, %v6576
  %v6579 = vrot.slane %v6401, 1
  %v6580 = vsel %vm6565, %v6579, %v6578
  %v6581 = vrot.slane %v6404, 7
  %v6582 = vsel %vm6547, %v6581, %v6402
  %v6583 = vrot.slane %v6406, 6
  %v6584 = vsel %vm6550, %v6583, %v6582
  %v6585 = vrot.slane %v6408, 5
  %v6586 = vsel %vm6553, %v6585, %v6584
  %v6587 = vrot.slane %v6410, 4
  %v6588 = vsel %vm6556, %v6587, %v6586
  %v6589 = vrot.slane %v6412, 3
  %v6590 = vsel %vm6559, %v6589, %v6588
  %v6591 = vrot.slane %v6414, 2
  %v6592 = vsel %vm6562, %v6591, %v6590
  %v6593 = vrot.slane %v6416, 1
  %v6594 = vsel %vm6565, %v6593, %v6592
  %v6595 = vrot.slane %v6405, 7
  %v6596 = vsel %vm6547, %v6595, %v6403
  %v6597 = vrot.slane %v6407, 6
  %v6598 = vsel %vm6550, %v6597, %v6596
  %v6599 = vrot.slane %v6409, 5
  %v6600 = vsel %vm6553, %v6599, %v6598
  %v6601 = vrot.slane %v6411, 4
  %v6602 = vsel %vm6556, %v6601, %v6600
  %v6603 = vrot.slane %v6413, 3
  %v6604 = vsel %vm6559, %v6603, %v6602
  %v6605 = vrot.slane %v6415, 2
  %v6606 = vsel %vm6562, %v6605, %v6604
  %v6607 = vrot.slane %v6417, 1
  %v6608 = vsel %vm6565, %v6607, %v6606
  %v6609 = vrot.slane %v6420, 7
  %v6610 = vsel %vm6547, %v6609, %v6418
  %v6611 = vrot.slane %v6422, 6
  %v6612 = vsel %vm6550, %v6611, %v6610
  %v6613 = vrot.slane %v6424, 5
  %v6614 = vsel %vm6553, %v6613, %v6612
  %v6615 = vrot.slane %v6426, 4
  %v6616 = vsel %vm6556, %v6615, %v6614
  %v6617 = vrot.slane %v6428, 3
  %v6618 = vsel %vm6559, %v6617, %v6616
  %v6619 = vrot.slane %v6430, 2
  %v6620 = vsel %vm6562, %v6619, %v6618
  %v6621 = vrot.slane %v6432, 1
  %v6622 = vsel %vm6565, %v6621, %v6620
  %v6623 = vrot.slane %v6421, 7
  %v6624 = vsel %vm6547, %v6623, %v6419
  %v6625 = vrot.slane %v6423, 6
  %v6626 = vsel %vm6550, %v6625, %v6624
  %v6627 = vrot.slane %v6425, 5
  %v6628 = vsel %vm6553, %v6627, %v6626
  %v6629 = vrot.slane %v6427, 4
  %v6630 = vsel %vm6556, %v6629, %v6628
  %v6631 = vrot.slane %v6429, 3
  %v6632 = vsel %vm6559, %v6631, %v6630
  %v6633 = vrot.slane %v6431, 2
  %v6634 = vsel %vm6562, %v6633, %v6632
  %v6635 = vrot.slane %v6433, 1
  %v6636 = vsel %vm6565, %v6635, %v6634
  %v6637 = vrot.slane %v6436, 7
  %v6638 = vsel %vm6547, %v6637, %v6434
  %v6639 = vrot.slane %v6438, 6
  %v6640 = vsel %vm6550, %v6639, %v6638
  %v6641 = vrot.slane %v6440, 5
  %v6642 = vsel %vm6553, %v6641, %v6640
  %v6643 = vrot.slane %v6442, 4
  %v6644 = vsel %vm6556, %v6643, %v6642
  %v6645 = vrot.slane %v6444, 3
  %v6646 = vsel %vm6559, %v6645, %v6644
  %v6647 = vrot.slane %v6446, 2
  %v6648 = vsel %vm6562, %v6647, %v6646
  %v6649 = vrot.slane %v6448, 1
  %v6650 = vsel %vm6565, %v6649, %v6648
  %v6651 = vrot.slane %v6437, 7
  %v6652 = vsel %vm6547, %v6651, %v6435
  %v6653 = vrot.slane %v6439, 6
  %v6654 = vsel %vm6550, %v6653, %v6652
  %v6655 = vrot.slane %v6441, 5
  %v6656 = vsel %vm6553, %v6655, %v6654
  %v6657 = vrot.slane %v6443, 4
  %v6658 = vsel %vm6556, %v6657, %v6656
  %v6659 = vrot.slane %v6445, 3
  %v6660 = vsel %vm6559, %v6659, %v6658
  %v6661 = vrot.slane %v6447, 2
  %v6662 = vsel %vm6562, %v6661, %v6660
  %v6663 = vrot.slane %v6449, 1
  %v6664 = vsel %vm6565, %v6663, %v6662
  %v6665 = vrot.slane %v6452, 7
  %v6666 = vsel %vm6547, %v6665, %v6450
  %v6667 = vrot.slane %v6454, 6
  %v6668 = vsel %vm6550, %v6667, %v6666
  %v6669 = vrot.slane %v6456, 5
  %v6670 = vsel %vm6553, %v6669, %v6668
  %v6671 = vrot.slane %v6458, 4
  %v6672 = vsel %vm6556, %v6671, %v6670
  %v6673 = vrot.slane %v6460, 3
  %v6674 = vsel %vm6559, %v6673, %v6672
  %v6675 = vrot.slane %v6462, 2
  %v6676 = vsel %vm6562, %v6675, %v6674
  %v6677 = vrot.slane %v6464, 1
  %v6678 = vsel %vm6565, %v6677, %v6676
  %v6679 = vrot.slane %v6453, 7
  %v6680 = vsel %vm6547, %v6679, %v6451
  %v6681 = vrot.slane %v6455, 6
  %v6682 = vsel %vm6550, %v6681, %v6680
  %v6683 = vrot.slane %v6457, 5
  %v6684 = vsel %vm6553, %v6683, %v6682
  %v6685 = vrot.slane %v6459, 4
  %v6686 = vsel %vm6556, %v6685, %v6684
  %v6687 = vrot.slane %v6461, 3
  %v6688 = vsel %vm6559, %v6687, %v6686
  %v6689 = vrot.slane %v6463, 2
  %v6690 = vsel %vm6562, %v6689, %v6688
  %v6691 = vrot.slane %v6465, 1
  %v6692 = vsel %vm6565, %v6691, %v6690
  %v6693 = vrot.slane %v6468, 7
  %v6694 = vsel %vm6547, %v6693, %v6466
  %v6695 = vrot.slane %v6470, 6
  %v6696 = vsel %vm6550, %v6695, %v6694
  %v6697 = vrot.slane %v6472, 5
  %v6698 = vsel %vm6553, %v6697, %v6696
  %v6699 = vrot.slane %v6474, 4
  %v6700 = vsel %vm6556, %v6699, %v6698
  %v6701 = vrot.slane %v6476, 3
  %v6702 = vsel %vm6559, %v6701, %v6700
  %v6703 = vrot.slane %v6478, 2
  %v6704 = vsel %vm6562, %v6703, %v6702
  %v6705 = vrot.slane %v6480, 1
  %v6706 = vsel %vm6565, %v6705, %v6704
  %v6707 = vrot.slane %v6469, 7
  %v6708 = vsel %vm6547, %v6707, %v6467
  %v6709 = vrot.slane %v6471, 6
  %v6710 = vsel %vm6550, %v6709, %v6708
  %v6711 = vrot.slane %v6473, 5
  %v6712 = vsel %vm6553, %v6711, %v6710
  %v6713 = vrot.slane %v6475, 4
  %v6714 = vsel %vm6556, %v6713, %v6712
  %v6715 = vrot.slane %v6477, 3
  %v6716 = vsel %vm6559, %v6715, %v6714
  %v6717 = vrot.slane %v6479, 2
  %v6718 = vsel %vm6562, %v6717, %v6716
  %v6719 = vrot.slane %v6481, 1
  %v6720 = vsel %vm6565, %v6719, %v6718
  %v6721 = vrot.slane %v6484, 7
  %v6722 = vsel %vm6547, %v6721, %v6482
  %v6723 = vrot.slane %v6486, 6
  %v6724 = vsel %vm6550, %v6723, %v6722
  %v6725 = vrot.slane %v6488, 5
  %v6726 = vsel %vm6553, %v6725, %v6724
  %v6727 = vrot.slane %v6490, 4
  %v6728 = vsel %vm6556, %v6727, %v6726
  %v6729 = vrot.slane %v6492, 3
  %v6730 = vsel %vm6559, %v6729, %v6728
  %v6731 = vrot.slane %v6494, 2
  %v6732 = vsel %vm6562, %v6731, %v6730
  %v6733 = vrot.slane %v6496, 1
  %v6734 = vsel %vm6565, %v6733, %v6732
  %v6735 = vrot.slane %v6485, 7
  %v6736 = vsel %vm6547, %v6735, %v6483
  %v6737 = vrot.slane %v6487, 6
  %v6738 = vsel %vm6550, %v6737, %v6736
  %v6739 = vrot.slane %v6489, 5
  %v6740 = vsel %vm6553, %v6739, %v6738
  %v6741 = vrot.slane %v6491, 4
  %v6742 = vsel %vm6556, %v6741, %v6740
  %v6743 = vrot.slane %v6493, 3
  %v6744 = vsel %vm6559, %v6743, %v6742
  %v6745 = vrot.slane %v6495, 2
  %v6746 = vsel %vm6562, %v6745, %v6744
  %v6747 = vrot.slane %v6497, 1
  %v6748 = vsel %vm6565, %v6747, %v6746
  %v6749 = vrot.slane %v6500, 7
  %v6750 = vsel %vm6547, %v6749, %v6498
  %v6751 = vrot.slane %v6502, 6
  %v6752 = vsel %vm6550, %v6751, %v6750
  %v6753 = vrot.slane %v6504, 5
  %v6754 = vsel %vm6553, %v6753, %v6752
  %v6755 = vrot.slane %v6506, 4
  %v6756 = vsel %vm6556, %v6755, %v6754
  %v6757 = vrot.slane %v6508, 3
  %v6758 = vsel %vm6559, %v6757, %v6756
  %v6759 = vrot.slane %v6510, 2
  %v6760 = vsel %vm6562, %v6759, %v6758
  %v6761 = vrot.slane %v6512, 1
  %v6762 = vsel %vm6565, %v6761, %v6760
  %v6763 = vrot.slane %v6501, 7
  %v6764 = vsel %vm6547, %v6763, %v6499
  %v6765 = vrot.slane %v6503, 6
  %v6766 = vsel %vm6550, %v6765, %v6764
  %v6767 = vrot.slane %v6505, 5
  %v6768 = vsel %vm6553, %v6767, %v6766
  %v6769 = vrot.slane %v6507, 4
  %v6770 = vsel %vm6556, %v6769, %v6768
  %v6771 = vrot.slane %v6509, 3
  %v6772 = vsel %vm6559, %v6771, %v6770
  %v6773 = vrot.slane %v6511, 2
  %v6774 = vsel %vm6562, %v6773, %v6772
  %v6775 = vrot.slane %v6513, 1
  %v6776 = vsel %vm6565, %v6775, %v6774
  %v6777 = vrot.slane %v6516, 7
  %v6778 = vsel %vm6547, %v6777, %v6514
  %v6779 = vrot.slane %v6518, 6
  %v6780 = vsel %vm6550, %v6779, %v6778
  %v6781 = vrot.slane %v6520, 5
  %v6782 = vsel %vm6553, %v6781, %v6780
  %v6783 = vrot.slane %v6522, 4
  %v6784 = vsel %vm6556, %v6783, %v6782
  %v6785 = vrot.slane %v6524, 3
  %v6786 = vsel %vm6559, %v6785, %v6784
  %v6787 = vrot.slane %v6526, 2
  %v6788 = vsel %vm6562, %v6787, %v6786
  %v6789 = vrot.slane %v6528, 1
  %v6790 = vsel %vm6565, %v6789, %v6788
  %v6791 = vrot.slane %v6517, 7
  %v6792 = vsel %vm6547, %v6791, %v6515
  %v6793 = vrot.slane %v6519, 6
  %v6794 = vsel %vm6550, %v6793, %v6792
  %v6795 = vrot.slane %v6521, 5
  %v6796 = vsel %vm6553, %v6795, %v6794
  %v6797 = vrot.slane %v6523, 4
  %v6798 = vsel %vm6556, %v6797, %v6796
  %v6799 = vrot.slane %v6525, 3
  %v6800 = vsel %vm6559, %v6799, %v6798
  %v6801 = vrot.slane %v6527, 2
  %v6802 = vsel %vm6562, %v6801, %v6800
  %v6803 = vrot.slane %v6529, 1
  %v6804 = vsel %vm6565, %v6803, %v6802
  %v6805 = vrot.slane %v6532, 7
  %v6806 = vsel %vm6547, %v6805, %v6530
  %v6807 = vrot.slane %v6534, 6
  %v6808 = vsel %vm6550, %v6807, %v6806
  %v6809 = vrot.slane %v6536, 5
  %v6810 = vsel %vm6553, %v6809, %v6808
  %v6811 = vrot.slane %v6538, 4
  %v6812 = vsel %vm6556, %v6811, %v6810
  %v6813 = vrot.slane %v6540, 3
  %v6814 = vsel %vm6559, %v6813, %v6812
  %v6815 = vrot.slane %v6542, 2
  %v6816 = vsel %vm6562, %v6815, %v6814
  %v6817 = vrot.slane %v6544, 1
  %v6818 = vsel %vm6565, %v6817, %v6816
  %v6819 = vrot.slane %v6533, 7
  %v6820 = vsel %vm6547, %v6819, %v6531
  %v6821 = vrot.slane %v6535, 6
  %v6822 = vsel %vm6550, %v6821, %v6820
  %v6823 = vrot.slane %v6537, 5
  %v6824 = vsel %vm6553, %v6823, %v6822
  %v6825 = vrot.slane %v6539, 4
  %v6826 = vsel %vm6556, %v6825, %v6824
  %v6827 = vrot.slane %v6541, 3
  %v6828 = vsel %vm6559, %v6827, %v6826
  %v6829 = vrot.slane %v6543, 2
  %v6830 = vsel %vm6562, %v6829, %v6828
  %v6831 = vrot.slane %v6545, 1
  %v6832 = vsel %vm6565, %v6831, %v6830
  %v6833 = vpack.c.b16 %v6594, %v6566
  %v6834 = vpack.c.b16 %v6608, %v6580
  %v6835 = vpack.c.b16 %v6650, %v6622
  %v6836 = vpack.c.b16 %v6664, %v6636
  %v6837 = vpack.c.b16 %v6706, %v6678
  %v6838 = vpack.c.b16 %v6720, %v6692
  %v6839 = vpack.c.b16 %v6762, %v6734
  %v6840 = vpack.c.b16 %v6776, %v6748
  %v6841 = vpack.c.b16 %v6818, %v6790
  %v6842 = vpack.c.b16 %v6832, %v6804
  %v6869 = vunpack.c.l.b16 %v5965
  %v6870 = vunpack.c.h.b16 %v5965
  %v6871 = vunpack.c.l.b16 %v5966
  %v6872 = vunpack.c.h.b16 %v5966
  %v6873 = vunpack.c.l.b16 %v5967
  %v6874 = vunpack.c.h.b16 %v5967
  %v6875 = vunpack.c.l.b16 %v5968
  %v6876 = vunpack.c.h.b16 %v5968
  %v6877 = vunpack.c.l.b16 %v5969
  %v6878 = vunpack.c.h.b16 %v5969
  %v6879 = vunpack.c.l.b16 %v5970
  %v6880 = vunpack.c.h.b16 %v5970
  %v6881 = vunpack.c.l.b16 %v5971
  %v6882 = vunpack.c.h.b16 %v5971
  %v6883 = vunpack.c.l.b16 %v5972
  %v6884 = vunpack.c.h.b16 %v5972
  %v6885 = vunpack.c.l.b16 %v5973
  %v6886 = vunpack.c.h.b16 %v5973
  %v6887 = vunpack.c.l.b16 %v5974
  %v6888 = vunpack.c.h.b16 %v5974
  %v6889 = vunpack.c.l.b16 %v5975
  %v6890 = vunpack.c.h.b16 %v5975
  %v6891 = vunpack.c.l.b16 %v5976
  %v6892 = vunpack.c.h.b16 %v5976
  %v6893 = vunpack.c.l.b16 %v5977
  %v6894 = vunpack.c.h.b16 %v5977
  %v6895 = vunpack.c.l.b16 %v5978
  %v6896 = vunpack.c.h.b16 %v5978
  %v6897 = vunpack.c.l.b16 %v5979
  %v6898 = vunpack.c.h.b16 %v5979
  %v6899 = vunpack.c.l.b16 %v5980
  %v6900 = vunpack.c.h.b16 %v5980
  %v6901 = vunpack.c.l.b16 %v5981
  %v6902 = vunpack.c.h.b16 %v5981
  %v6903 = vunpack.c.l.b16 %v5982
  %v6904 = vunpack.c.h.b16 %v5982
  %v6905 = vunpack.c.l.b16 %v5983
  %v6906 = vunpack.c.h.b16 %v5983
  %v6907 = vunpack.c.l.b16 %v5984
  %v6908 = vunpack.c.h.b16 %v5984
  %v6909 = vunpack.c.l.b16 %v5985
  %v6910 = vunpack.c.h.b16 %v5985
  %v6911 = vpack.c.b16 %v6871, %v6869
  %v6912 = vpack.c.b16 %v6872, %v6870
  %v6913 = vpack.c.b16 %v6875, %v6873
  %v6914 = vpack.c.b16 %v6876, %v6874
  %v6915 = vpack.c.b16 %v6879, %v6877
  %v6916 = vpack.c.b16 %v6880, %v6878
  %v6917 = vpack.c.b16 %v6883, %v6881
  %v6918 = vpack.c.b16 %v6884, %v6882
  %v6919 = vpack.c.b16 %v6887, %v6885
  %v6920 = vpack.c.b16 %v6888, %v6886
  %v6921 = vpack.c.b16 %v6891, %v6889
  %v6922 = vpack.c.b16 %v6892, %v6890
  %v6923 = vpack.c.b16 %v6895, %v6893
  %v6924 = vpack.c.b16 %v6896, %v6894
  %v6925 = vpack.c.b16 %v6899, %v6897
  %v6926 = vpack.c.b16 %v6900, %v6898
  %v6927 = vpack.c.b16 %v6903, %v6901
  %v6928 = vpack.c.b16 %v6904, %v6902
  %v6929 = vpack.c.b16 %v6907, %v6905
  %v6930 = vpack.c.b16 %v6908, %v6906
  %v6931 = vpack.c.b16 %v6909, %v6909
  %v6932 = vpack.c.b16 %v6910, %v6910
  %vm6953 = vcmask 277504
  %v6955 = vsel %vm6953, %v6834, 0
  %v6958 = vsel %vm6953, %v6836, 0
  %v6961 = vsel %vm6953, %v6838, 0
  %v6964 = vsel %vm6953, %v6840, 0
  %v6967 = vsel %vm6953, %v6842, 0
  %vm6969 = vcmask 1040384
  %v6971 = vsel %vm6969, %v6931, 0
  %v6974 = vsel %vm6969, %v6932, 0
  %6976 = vmatpush.bf16.msra.mxu0 %v6925
  %6977 = vmatpush.bf16.msra.mxu0 %v6923
  %6978 = vmatpush.bf16.msra.mxu0 %v6921
  %6979 = vmatpush.bf16.msra.mxu0 %v6919
  %6980 = vmatpush.bf16.msra.mxu0 %v6917
  %6981 = vmatpush.bf16.msra.mxu0 %v6915
  %6982 = vmatpush.bf16.msra.mxu0 %v6913
  %6983 = vmatpush.bf16.msra.mxu0 %v6911
  %6984 = vmatmul.bf16.gmra.mxu0 %v6833
  %v6985 = vpop.f32.mrf.mxu0
  %v6986 = vadd.f32 0.0, %v6985
  %v6987 = vpop.f32.mrf.mxu0
  %v6988 = vadd.f32 0.0, %v6987
  %6989 = vmatmul.bf16.gmra.mxu0 %v6835
  %v6990 = vpop.f32.mrf.mxu0
  %v6991 = vadd.f32 0.0, %v6990
  %v6992 = vpop.f32.mrf.mxu0
  %v6993 = vadd.f32 0.0, %v6992
  %6994 = vmatmul.bf16.gmra.mxu0 %v6837
  %v6995 = vpop.f32.mrf.mxu0
  %v6996 = vadd.f32 0.0, %v6995
  %v6997 = vpop.f32.mrf.mxu0
  %v6998 = vadd.f32 0.0, %v6997
  %6999 = vmatmul.bf16.gmra.mxu0 %v6839
  %v7000 = vpop.f32.mrf.mxu0
  %v7001 = vadd.f32 0.0, %v7000
  %v7002 = vpop.f32.mrf.mxu0
  %v7003 = vadd.f32 0.0, %v7002
  %7004 = vmatmul.bf16.gmra.mxu0 %v6841
  %v7005 = vpop.f32.mrf.mxu0
  %v7006 = vadd.f32 0.0, %v7005
  %v7007 = vpop.f32.mrf.mxu0
  %v7008 = vadd.f32 0.0, %v7007
  %7009 = vdwg.mxu0
  %7010 = vmatpush.bf16.msra.mxu0 0
  %7011 = vmatpush.bf16.msra.mxu0 0
  %7012 = vmatpush.bf16.msra.mxu0 0
  %7013 = vmatpush.bf16.msra.mxu0 0
  %7014 = vmatpush.bf16.msra.mxu0 0
  %7015 = vmatpush.bf16.msra.mxu0 %v6971
  %7016 = vmatpush.bf16.msra.mxu0 %v6929
  %7017 = vmatpush.bf16.msra.mxu0 %v6927
  %7018 = vmatmul.bf16.gmra.mxu0 %v6955
  %v7019 = vpop.f32.mrf.mxu0
  %v7020 = vadd.f32 %v6986, %v7019
  %v7021 = vpop.f32.mrf.mxu0
  %v7022 = vadd.f32 %v6988, %v7021
  %7023 = vmatmul.bf16.gmra.mxu0 %v6958
  %v7024 = vpop.f32.mrf.mxu0
  %v7025 = vadd.f32 %v6991, %v7024
  %v7026 = vpop.f32.mrf.mxu0
  %v7027 = vadd.f32 %v6993, %v7026
  %7028 = vmatmul.bf16.gmra.mxu0 %v6961
  %v7029 = vpop.f32.mrf.mxu0
  %v7030 = vadd.f32 %v6996, %v7029
  %v7031 = vpop.f32.mrf.mxu0
  %v7032 = vadd.f32 %v6998, %v7031
  %7033 = vmatmul.bf16.gmra.mxu0 %v6964
  %v7034 = vpop.f32.mrf.mxu0
  %v7035 = vadd.f32 %v7001, %v7034
  %v7036 = vpop.f32.mrf.mxu0
  %v7037 = vadd.f32 %v7003, %v7036
  %7038 = vmatmul.bf16.gmra.mxu0 %v6967
  %v7039 = vpop.f32.mrf.mxu0
  %v7040 = vadd.f32 %v7006, %v7039
  %v7041 = vpop.f32.mrf.mxu0
  %v7042 = vadd.f32 %v7008, %v7041
  %7043 = vdwg.mxu0
  %7044 = vmatpush.bf16.msra.mxu0 %v6926
  %7045 = vmatpush.bf16.msra.mxu0 %v6924
  %7046 = vmatpush.bf16.msra.mxu0 %v6922
  %7047 = vmatpush.bf16.msra.mxu0 %v6920
  %7048 = vmatpush.bf16.msra.mxu0 %v6918
  %7049 = vmatpush.bf16.msra.mxu0 %v6916
  %7050 = vmatpush.bf16.msra.mxu0 %v6914
  %7051 = vmatpush.bf16.msra.mxu0 %v6912
  %7052 = vmatmul.bf16.gmra.mxu0 %v6833
  %v7053 = vpop.f32.mrf.mxu0
  %v7054 = vadd.f32 0.0, %v7053
  %v7055 = vpop.f32.mrf.mxu0
  %v7056 = vadd.f32 0.0, %v7055
  %7057 = vmatmul.bf16.gmra.mxu0 %v6835
  %v7058 = vpop.f32.mrf.mxu0
  %v7059 = vadd.f32 0.0, %v7058
  %v7060 = vpop.f32.mrf.mxu0
  %v7061 = vadd.f32 0.0, %v7060
  %7062 = vmatmul.bf16.gmra.mxu0 %v6837
  %v7063 = vpop.f32.mrf.mxu0
  %v7064 = vadd.f32 0.0, %v7063
  %v7065 = vpop.f32.mrf.mxu0
  %v7066 = vadd.f32 0.0, %v7065
  %7067 = vmatmul.bf16.gmra.mxu0 %v6839
  %v7068 = vpop.f32.mrf.mxu0
  %v7069 = vadd.f32 0.0, %v7068
  %v7070 = vpop.f32.mrf.mxu0
  %v7071 = vadd.f32 0.0, %v7070
  %7072 = vmatmul.bf16.gmra.mxu0 %v6841
  %v7073 = vpop.f32.mrf.mxu0
  %v7074 = vadd.f32 0.0, %v7073
  %v7075 = vpop.f32.mrf.mxu0
  %v7076 = vadd.f32 0.0, %v7075
  %7077 = vdwg.mxu0
  %7078 = vmatpush.bf16.msra.mxu0 0
  %7079 = vmatpush.bf16.msra.mxu0 0
  %7080 = vmatpush.bf16.msra.mxu0 0
  %7081 = vmatpush.bf16.msra.mxu0 0
  %7082 = vmatpush.bf16.msra.mxu0 0
  %7083 = vmatpush.bf16.msra.mxu0 %v6974
  %7084 = vmatpush.bf16.msra.mxu0 %v6930
  %7085 = vmatpush.bf16.msra.mxu0 %v6928
  %7086 = vmatmul.bf16.gmra.mxu0 %v6955
  %v7087 = vpop.f32.mrf.mxu0
  %v7088 = vadd.f32 %v7054, %v7087
  %v7089 = vpop.f32.mrf.mxu0
  %v7090 = vadd.f32 %v7056, %v7089
  %7091 = vmatmul.bf16.gmra.mxu0 %v6958
  %v7092 = vpop.f32.mrf.mxu0
  %v7093 = vadd.f32 %v7059, %v7092
  %v7094 = vpop.f32.mrf.mxu0
  %v7095 = vadd.f32 %v7061, %v7094
  %7096 = vmatmul.bf16.gmra.mxu0 %v6961
  %v7097 = vpop.f32.mrf.mxu0
  %v7098 = vadd.f32 %v7064, %v7097
  %v7099 = vpop.f32.mrf.mxu0
  %v7100 = vadd.f32 %v7066, %v7099
  %7101 = vmatmul.bf16.gmra.mxu0 %v6964
  %v7102 = vpop.f32.mrf.mxu0
  %v7103 = vadd.f32 %v7069, %v7102
  %v7104 = vpop.f32.mrf.mxu0
  %v7105 = vadd.f32 %v7071, %v7104
  %7106 = vmatmul.bf16.gmra.mxu0 %v6967
  %v7107 = vpop.f32.mrf.mxu0
  %v7108 = vadd.f32 %v7074, %v7107
  %v7109 = vpop.f32.mrf.mxu0
  %v7110 = vadd.f32 %v7076, %v7109
  %7111 = vdwg.mxu0
  %v7120 = vunpack.c.l.b16 %v5831
  %v7121 = vunpack.c.h.b16 %v5831
  %v7122 = vunpack.c.l.b16 %v5845
  %v7123 = vunpack.c.h.b16 %v5845
  %v7124 = vunpack.c.l.b16 %v5859
  %v7125 = vunpack.c.h.b16 %v5859
  %v7126 = vunpack.c.l.b16 %v5873
  %v7127 = vunpack.c.h.b16 %v5873
  %v7128 = vunpack.c.l.b16 %v5887
  %v7129 = vunpack.c.h.b16 %v5887
  %v7130 = vunpack.c.l.b16 %v5901
  %v7131 = vunpack.c.h.b16 %v5901
  %v7132 = vunpack.c.l.b16 %v5915
  %v7133 = vunpack.c.h.b16 %v5915
  %v7134 = vunpack.c.l.b16 %v5929
  %v7135 = vunpack.c.h.b16 %v5929
  %v7136 = vpack.c.b16 %v7120, %v7120
  %v7137 = vpack.c.b16 %v7121, %v7121
  %v7138 = vpack.c.b16 %v7122, %v7122
  %v7139 = vpack.c.b16 %v7123, %v7123
  %v7140 = vpack.c.b16 %v7124, %v7124
  %v7141 = vpack.c.b16 %v7125, %v7125
  %v7142 = vpack.c.b16 %v7126, %v7126
  %v7143 = vpack.c.b16 %v7127, %v7127
  %v7144 = vpack.c.b16 %v7128, %v7128
  %v7145 = vpack.c.b16 %v7129, %v7129
  %v7146 = vpack.c.b16 %v7130, %v7130
  %v7147 = vpack.c.b16 %v7131, %v7131
  %v7148 = vpack.c.b16 %v7132, %v7132
  %v7149 = vpack.c.b16 %v7133, %v7133
  %v7150 = vpack.c.b16 %v7134, %v7134
  %v7151 = vpack.c.b16 %v7135, %v7135
  %v7152 = vunpack.c.l.b16 %v7136
  %v7153 = vunpack.c.l.b16 %v7137
  %v7154 = vunpack.c.l.b16 %v7138
  %v7155 = vunpack.c.l.b16 %v7139
  %v7156 = vunpack.c.l.b16 %v7140
  %v7157 = vunpack.c.l.b16 %v7141
  %v7158 = vunpack.c.l.b16 %v7142
  %v7159 = vunpack.c.l.b16 %v7143
  %v7160 = vunpack.c.l.b16 %v7144
  %v7161 = vunpack.c.l.b16 %v7145
  %v7162 = vunpack.c.l.b16 %v7146
  %v7163 = vunpack.c.l.b16 %v7147
  %v7164 = vunpack.c.l.b16 %v7148
  %v7165 = vunpack.c.l.b16 %v7149
  %v7166 = vunpack.c.l.b16 %v7150
  %v7167 = vunpack.c.l.b16 %v7151
  %v7168 = vrot.slane %v6386, 7
  %v7169 = vsel %vm6547, %v7168, %v7152
  %v7170 = vrot.slane %v6388, 6
  %v7171 = vsel %vm6550, %v7170, %v7169
  %v7172 = vrot.slane %v6390, 5
  %v7173 = vsel %vm6553, %v7172, %v7171
  %v7174 = vrot.slane %v6392, 4
  %v7175 = vsel %vm6556, %v7174, %v7173
  %v7176 = vrot.slane %v6394, 3
  %v7177 = vsel %vm6559, %v7176, %v7175
  %v7178 = vrot.slane %v6396, 2
  %v7179 = vsel %vm6562, %v7178, %v7177
  %v7180 = vrot.slane %v6398, 1
  %v7181 = vsel %vm6565, %v7180, %v7179
  %v7182 = vrot.slane %v6387, 7
  %v7183 = vsel %vm6547, %v7182, %v7153
  %v7184 = vrot.slane %v6389, 6
  %v7185 = vsel %vm6550, %v7184, %v7183
  %v7186 = vrot.slane %v6391, 5
  %v7187 = vsel %vm6553, %v7186, %v7185
  %v7188 = vrot.slane %v6393, 4
  %v7189 = vsel %vm6556, %v7188, %v7187
  %v7190 = vrot.slane %v6395, 3
  %v7191 = vsel %vm6559, %v7190, %v7189
  %v7192 = vrot.slane %v6397, 2
  %v7193 = vsel %vm6562, %v7192, %v7191
  %v7194 = vrot.slane %v6399, 1
  %v7195 = vsel %vm6565, %v7194, %v7193
  %v7196 = vrot.slane %v6402, 7
  %v7197 = vsel %vm6547, %v7196, %v6400
  %v7198 = vrot.slane %v7154, 6
  %v7199 = vsel %vm6550, %v7198, %v7197
  %v7200 = vrot.slane %v6406, 5
  %v7201 = vsel %vm6553, %v7200, %v7199
  %v7202 = vrot.slane %v6408, 4
  %v7203 = vsel %vm6556, %v7202, %v7201
  %v7204 = vrot.slane %v6410, 3
  %v7205 = vsel %vm6559, %v7204, %v7203
  %v7206 = vrot.slane %v6412, 2
  %v7207 = vsel %vm6562, %v7206, %v7205
  %v7208 = vrot.slane %v6414, 1
  %v7209 = vsel %vm6565, %v7208, %v7207
  %v7210 = vrot.slane %v6403, 7
  %v7211 = vsel %vm6547, %v7210, %v6401
  %v7212 = vrot.slane %v7155, 6
  %v7213 = vsel %vm6550, %v7212, %v7211
  %v7214 = vrot.slane %v6407, 5
  %v7215 = vsel %vm6553, %v7214, %v7213
  %v7216 = vrot.slane %v6409, 4
  %v7217 = vsel %vm6556, %v7216, %v7215
  %v7218 = vrot.slane %v6411, 3
  %v7219 = vsel %vm6559, %v7218, %v7217
  %v7220 = vrot.slane %v6413, 2
  %v7221 = vsel %vm6562, %v7220, %v7219
  %v7222 = vrot.slane %v6415, 1
  %v7223 = vsel %vm6565, %v7222, %v7221
  %v7224 = vrot.slane %v6418, 7
  %v7225 = vsel %vm6547, %v7224, %v6416
  %v7226 = vrot.slane %v6420, 6
  %v7227 = vsel %vm6550, %v7226, %v7225
  %v7228 = vrot.slane %v6422, 5
  %v7229 = vsel %vm6553, %v7228, %v7227
  %v7230 = vrot.slane %v7156, 4
  %v7231 = vsel %vm6556, %v7230, %v7229
  %v7232 = vrot.slane %v6426, 3
  %v7233 = vsel %vm6559, %v7232, %v7231
  %v7234 = vrot.slane %v6428, 2
  %v7235 = vsel %vm6562, %v7234, %v7233
  %v7236 = vrot.slane %v6430, 1
  %v7237 = vsel %vm6565, %v7236, %v7235
  %v7238 = vrot.slane %v6419, 7
  %v7239 = vsel %vm6547, %v7238, %v6417
  %v7240 = vrot.slane %v6421, 6
  %v7241 = vsel %vm6550, %v7240, %v7239
  %v7242 = vrot.slane %v6423, 5
  %v7243 = vsel %vm6553, %v7242, %v7241
  %v7244 = vrot.slane %v7157, 4
  %v7245 = vsel %vm6556, %v7244, %v7243
  %v7246 = vrot.slane %v6427, 3
  %v7247 = vsel %vm6559, %v7246, %v7245
  %v7248 = vrot.slane %v6429, 2
  %v7249 = vsel %vm6562, %v7248, %v7247
  %v7250 = vrot.slane %v6431, 1
  %v7251 = vsel %vm6565, %v7250, %v7249
  %v7252 = vrot.slane %v6434, 7
  %v7253 = vsel %vm6547, %v7252, %v6432
  %v7254 = vrot.slane %v6436, 6
  %v7255 = vsel %vm6550, %v7254, %v7253
  %v7256 = vrot.slane %v6438, 5
  %v7257 = vsel %vm6553, %v7256, %v7255
  %v7258 = vrot.slane %v6440, 4
  %v7259 = vsel %vm6556, %v7258, %v7257
  %v7260 = vrot.slane %v6442, 3
  %v7261 = vsel %vm6559, %v7260, %v7259
  %v7262 = vrot.slane %v7158, 2
  %v7263 = vsel %vm6562, %v7262, %v7261
  %v7264 = vrot.slane %v6446, 1
  %v7265 = vsel %vm6565, %v7264, %v7263
  %v7266 = vrot.slane %v6435, 7
  %v7267 = vsel %vm6547, %v7266, %v6433
  %v7268 = vrot.slane %v6437, 6
  %v7269 = vsel %vm6550, %v7268, %v7267
  %v7270 = vrot.slane %v6439, 5
  %v7271 = vsel %vm6553, %v7270, %v7269
  %v7272 = vrot.slane %v6441, 4
  %v7273 = vsel %vm6556, %v7272, %v7271
  %v7274 = vrot.slane %v6443, 3
  %v7275 = vsel %vm6559, %v7274, %v7273
  %v7276 = vrot.slane %v7159, 2
  %v7277 = vsel %vm6562, %v7276, %v7275
  %v7278 = vrot.slane %v6447, 1
  %v7279 = vsel %vm6565, %v7278, %v7277
  %v7280 = vrot.slane %v6450, 7
  %v7281 = vsel %vm6547, %v7280, %v6448
  %v7282 = vrot.slane %v6452, 6
  %v7283 = vsel %vm6550, %v7282, %v7281
  %v7284 = vrot.slane %v6454, 5
  %v7285 = vsel %vm6553, %v7284, %v7283
  %v7286 = vrot.slane %v6456, 4
  %v7287 = vsel %vm6556, %v7286, %v7285
  %v7288 = vrot.slane %v6458, 3
  %v7289 = vsel %vm6559, %v7288, %v7287
  %v7290 = vrot.slane %v6460, 2
  %v7291 = vsel %vm6562, %v7290, %v7289
  %v7292 = vrot.slane %v6462, 1
  %v7293 = vsel %vm6565, %v7292, %v7291
  %v7294 = vrot.slane %v6451, 7
  %v7295 = vsel %vm6547, %v7294, %v6449
  %v7296 = vrot.slane %v6453, 6
  %v7297 = vsel %vm6550, %v7296, %v7295
  %v7298 = vrot.slane %v6455, 5
  %v7299 = vsel %vm6553, %v7298, %v7297
  %v7300 = vrot.slane %v6457, 4
  %v7301 = vsel %vm6556, %v7300, %v7299
  %v7302 = vrot.slane %v6459, 3
  %v7303 = vsel %vm6559, %v7302, %v7301
  %v7304 = vrot.slane %v6461, 2
  %v7305 = vsel %vm6562, %v7304, %v7303
  %v7306 = vrot.slane %v6463, 1
  %v7307 = vsel %vm6565, %v7306, %v7305
  %v7308 = vrot.slane %v6466, 7
  %v7309 = vsel %vm6547, %v7308, %v7160
  %v7310 = vrot.slane %v6468, 6
  %v7311 = vsel %vm6550, %v7310, %v7309
  %v7312 = vrot.slane %v6470, 5
  %v7313 = vsel %vm6553, %v7312, %v7311
  %v7314 = vrot.slane %v6472, 4
  %v7315 = vsel %vm6556, %v7314, %v7313
  %v7316 = vrot.slane %v6474, 3
  %v7317 = vsel %vm6559, %v7316, %v7315
  %v7318 = vrot.slane %v6476, 2
  %v7319 = vsel %vm6562, %v7318, %v7317
  %v7320 = vrot.slane %v6478, 1
  %v7321 = vsel %vm6565, %v7320, %v7319
  %v7322 = vrot.slane %v6467, 7
  %v7323 = vsel %vm6547, %v7322, %v7161
  %v7324 = vrot.slane %v6469, 6
  %v7325 = vsel %vm6550, %v7324, %v7323
  %v7326 = vrot.slane %v6471, 5
  %v7327 = vsel %vm6553, %v7326, %v7325
  %v7328 = vrot.slane %v6473, 4
  %v7329 = vsel %vm6556, %v7328, %v7327
  %v7330 = vrot.slane %v6475, 3
  %v7331 = vsel %vm6559, %v7330, %v7329
  %v7332 = vrot.slane %v6477, 2
  %v7333 = vsel %vm6562, %v7332, %v7331
  %v7334 = vrot.slane %v6479, 1
  %v7335 = vsel %vm6565, %v7334, %v7333
  %v7336 = vrot.slane %v6482, 7
  %v7337 = vsel %vm6547, %v7336, %v6480
  %v7338 = vrot.slane %v7162, 6
  %v7339 = vsel %vm6550, %v7338, %v7337
  %v7340 = vrot.slane %v6486, 5
  %v7341 = vsel %vm6553, %v7340, %v7339
  %v7342 = vrot.slane %v6488, 4
  %v7343 = vsel %vm6556, %v7342, %v7341
  %v7344 = vrot.slane %v6490, 3
  %v7345 = vsel %vm6559, %v7344, %v7343
  %v7346 = vrot.slane %v6492, 2
  %v7347 = vsel %vm6562, %v7346, %v7345
  %v7348 = vrot.slane %v6494, 1
  %v7349 = vsel %vm6565, %v7348, %v7347
  %v7350 = vrot.slane %v6483, 7
  %v7351 = vsel %vm6547, %v7350, %v6481
  %v7352 = vrot.slane %v7163, 6
  %v7353 = vsel %vm6550, %v7352, %v7351
  %v7354 = vrot.slane %v6487, 5
  %v7355 = vsel %vm6553, %v7354, %v7353
  %v7356 = vrot.slane %v6489, 4
  %v7357 = vsel %vm6556, %v7356, %v7355
  %v7358 = vrot.slane %v6491, 3
  %v7359 = vsel %vm6559, %v7358, %v7357
  %v7360 = vrot.slane %v6493, 2
  %v7361 = vsel %vm6562, %v7360, %v7359
  %v7362 = vrot.slane %v6495, 1
  %v7363 = vsel %vm6565, %v7362, %v7361
  %v7364 = vrot.slane %v6498, 7
  %v7365 = vsel %vm6547, %v7364, %v6496
  %v7366 = vrot.slane %v6500, 6
  %v7367 = vsel %vm6550, %v7366, %v7365
  %v7368 = vrot.slane %v6502, 5
  %v7369 = vsel %vm6553, %v7368, %v7367
  %v7370 = vrot.slane %v7164, 4
  %v7371 = vsel %vm6556, %v7370, %v7369
  %v7372 = vrot.slane %v6506, 3
  %v7373 = vsel %vm6559, %v7372, %v7371
  %v7374 = vrot.slane %v6508, 2
  %v7375 = vsel %vm6562, %v7374, %v7373
  %v7376 = vrot.slane %v6510, 1
  %v7377 = vsel %vm6565, %v7376, %v7375
  %v7378 = vrot.slane %v6499, 7
  %v7379 = vsel %vm6547, %v7378, %v6497
  %v7380 = vrot.slane %v6501, 6
  %v7381 = vsel %vm6550, %v7380, %v7379
  %v7382 = vrot.slane %v6503, 5
  %v7383 = vsel %vm6553, %v7382, %v7381
  %v7384 = vrot.slane %v7165, 4
  %v7385 = vsel %vm6556, %v7384, %v7383
  %v7386 = vrot.slane %v6507, 3
  %v7387 = vsel %vm6559, %v7386, %v7385
  %v7388 = vrot.slane %v6509, 2
  %v7389 = vsel %vm6562, %v7388, %v7387
  %v7390 = vrot.slane %v6511, 1
  %v7391 = vsel %vm6565, %v7390, %v7389
  %v7392 = vrot.slane %v6514, 7
  %v7393 = vsel %vm6547, %v7392, %v6512
  %v7394 = vrot.slane %v6516, 6
  %v7395 = vsel %vm6550, %v7394, %v7393
  %v7396 = vrot.slane %v6518, 5
  %v7397 = vsel %vm6553, %v7396, %v7395
  %v7398 = vrot.slane %v6520, 4
  %v7399 = vsel %vm6556, %v7398, %v7397
  %v7400 = vrot.slane %v6522, 3
  %v7401 = vsel %vm6559, %v7400, %v7399
  %v7402 = vrot.slane %v7166, 2
  %v7403 = vsel %vm6562, %v7402, %v7401
  %v7404 = vrot.slane %v6526, 1
  %v7405 = vsel %vm6565, %v7404, %v7403
  %v7406 = vrot.slane %v6515, 7
  %v7407 = vsel %vm6547, %v7406, %v6513
  %v7408 = vrot.slane %v6517, 6
  %v7409 = vsel %vm6550, %v7408, %v7407
  %v7410 = vrot.slane %v6519, 5
  %v7411 = vsel %vm6553, %v7410, %v7409
  %v7412 = vrot.slane %v6521, 4
  %v7413 = vsel %vm6556, %v7412, %v7411
  %v7414 = vrot.slane %v6523, 3
  %v7415 = vsel %vm6559, %v7414, %v7413
  %v7416 = vrot.slane %v7167, 2
  %v7417 = vsel %vm6562, %v7416, %v7415
  %v7418 = vrot.slane %v6527, 1
  %v7419 = vsel %vm6565, %v7418, %v7417
  %v7420 = vrot.slane %v6530, 7
  %v7421 = vsel %vm6547, %v7420, %v6528
  %v7422 = vrot.slane %v6532, 6
  %v7423 = vsel %vm6550, %v7422, %v7421
  %v7424 = vrot.slane %v6534, 5
  %v7425 = vsel %vm6553, %v7424, %v7423
  %v7426 = vrot.slane %v6536, 4
  %v7427 = vsel %vm6556, %v7426, %v7425
  %v7428 = vrot.slane %v6538, 3
  %v7429 = vsel %vm6559, %v7428, %v7427
  %v7430 = vrot.slane %v6540, 2
  %v7431 = vsel %vm6562, %v7430, %v7429
  %v7432 = vrot.slane %v6542, 1
  %v7433 = vsel %vm6565, %v7432, %v7431
  %v7434 = vrot.slane %v6531, 7
  %v7435 = vsel %vm6547, %v7434, %v6529
  %v7436 = vrot.slane %v6533, 6
  %v7437 = vsel %vm6550, %v7436, %v7435
  %v7438 = vrot.slane %v6535, 5
  %v7439 = vsel %vm6553, %v7438, %v7437
  %v7440 = vrot.slane %v6537, 4
  %v7441 = vsel %vm6556, %v7440, %v7439
  %v7442 = vrot.slane %v6539, 3
  %v7443 = vsel %vm6559, %v7442, %v7441
  %v7444 = vrot.slane %v6541, 2
  %v7445 = vsel %vm6562, %v7444, %v7443
  %v7446 = vrot.slane %v6543, 1
  %v7447 = vsel %vm6565, %v7446, %v7445
  %v7448 = vpack.c.b16 %v7209, %v7181
  %v7449 = vpack.c.b16 %v7223, %v7195
  %v7450 = vpack.c.b16 %v7265, %v7237
  %v7451 = vpack.c.b16 %v7279, %v7251
  %v7452 = vpack.c.b16 %v7321, %v7293
  %v7453 = vpack.c.b16 %v7335, %v7307
  %v7454 = vpack.c.b16 %v7377, %v7349
  %v7455 = vpack.c.b16 %v7391, %v7363
  %v7456 = vpack.c.b16 %v7433, %v7405
  %v7457 = vpack.c.b16 %v7447, %v7419
  %v7484 = vunpack.c.l.b16 %v5943
  %v7485 = vunpack.c.h.b16 %v5943
  %v7486 = vunpack.c.l.b16 %v5944
  %v7487 = vunpack.c.h.b16 %v5944
  %v7488 = vunpack.c.l.b16 %v5945
  %v7489 = vunpack.c.h.b16 %v5945
  %v7490 = vunpack.c.l.b16 %v5946
  %v7491 = vunpack.c.h.b16 %v5946
  %v7492 = vunpack.c.l.b16 %v5947
  %v7493 = vunpack.c.h.b16 %v5947
  %v7494 = vunpack.c.l.b16 %v5948
  %v7495 = vunpack.c.h.b16 %v5948
  %v7496 = vunpack.c.l.b16 %v5949
  %v7497 = vunpack.c.h.b16 %v5949
  %v7498 = vunpack.c.l.b16 %v5950
  %v7499 = vunpack.c.h.b16 %v5950
  %v7500 = vunpack.c.l.b16 %v5951
  %v7501 = vunpack.c.h.b16 %v5951
  %v7502 = vunpack.c.l.b16 %v5952
  %v7503 = vunpack.c.h.b16 %v5952
  %v7504 = vunpack.c.l.b16 %v5953
  %v7505 = vunpack.c.h.b16 %v5953
  %v7506 = vunpack.c.l.b16 %v5954
  %v7507 = vunpack.c.h.b16 %v5954
  %v7508 = vunpack.c.l.b16 %v5955
  %v7509 = vunpack.c.h.b16 %v5955
  %v7510 = vunpack.c.l.b16 %v5956
  %v7511 = vunpack.c.h.b16 %v5956
  %v7512 = vunpack.c.l.b16 %v5957
  %v7513 = vunpack.c.h.b16 %v5957
  %v7514 = vunpack.c.l.b16 %v5958
  %v7515 = vunpack.c.h.b16 %v5958
  %v7516 = vunpack.c.l.b16 %v5959
  %v7517 = vunpack.c.h.b16 %v5959
  %v7518 = vunpack.c.l.b16 %v5960
  %v7519 = vunpack.c.h.b16 %v5960
  %v7520 = vunpack.c.l.b16 %v5961
  %v7521 = vunpack.c.h.b16 %v5961
  %v7522 = vunpack.c.l.b16 %v5962
  %v7523 = vunpack.c.h.b16 %v5962
  %v7524 = vunpack.c.l.b16 %v5963
  %v7525 = vunpack.c.h.b16 %v5963
  %v7526 = vpack.c.b16 %v7486, %v7484
  %v7527 = vpack.c.b16 %v7487, %v7485
  %v7528 = vpack.c.b16 %v7490, %v7488
  %v7529 = vpack.c.b16 %v7491, %v7489
  %v7530 = vpack.c.b16 %v7494, %v7492
  %v7531 = vpack.c.b16 %v7495, %v7493
  %v7532 = vpack.c.b16 %v7498, %v7496
  %v7533 = vpack.c.b16 %v7499, %v7497
  %v7534 = vpack.c.b16 %v7502, %v7500
  %v7535 = vpack.c.b16 %v7503, %v7501
  %v7536 = vpack.c.b16 %v7506, %v7504
  %v7537 = vpack.c.b16 %v7507, %v7505
  %v7538 = vpack.c.b16 %v7510, %v7508
  %v7539 = vpack.c.b16 %v7511, %v7509
  %v7540 = vpack.c.b16 %v7514, %v7512
  %v7541 = vpack.c.b16 %v7515, %v7513
  %v7542 = vpack.c.b16 %v7518, %v7516
  %v7543 = vpack.c.b16 %v7519, %v7517
  %v7544 = vpack.c.b16 %v7522, %v7520
  %v7545 = vpack.c.b16 %v7523, %v7521
  %v7546 = vpack.c.b16 %v7524, %v7524
  %v7547 = vpack.c.b16 %v7525, %v7525
  %v7569 = vsel %vm6953, %v7449, 0
  %v7572 = vsel %vm6953, %v7451, 0
  %v7575 = vsel %vm6953, %v7453, 0
  %v7578 = vsel %vm6953, %v7455, 0
  %v7581 = vsel %vm6953, %v7457, 0
  %v7584 = vsel %vm6969, %v7546, 0
  %v7587 = vsel %vm6969, %v7547, 0
  %7589 = vmatpush.bf16.msra.mxu0 %v7540
  %7590 = vmatpush.bf16.msra.mxu0 %v7538
  %7591 = vmatpush.bf16.msra.mxu0 %v7536
  %7592 = vmatpush.bf16.msra.mxu0 %v7534
  %7593 = vmatpush.bf16.msra.mxu0 %v7532
  %7594 = vmatpush.bf16.msra.mxu0 %v7530
  %7595 = vmatpush.bf16.msra.mxu0 %v7528
  %7596 = vmatpush.bf16.msra.mxu0 %v7526
  %7597 = vmatmul.bf16.gmra.mxu0 %v7448
  %v7598 = vpop.f32.mrf.mxu0
  %v7599 = vadd.f32 %v7020, %v7598
  %v7600 = vpop.f32.mrf.mxu0
  %v7601 = vadd.f32 %v7022, %v7600
  %7602 = vmatmul.bf16.gmra.mxu0 %v7450
  %v7603 = vpop.f32.mrf.mxu0
  %v7604 = vadd.f32 %v7025, %v7603
  %v7605 = vpop.f32.mrf.mxu0
  %v7606 = vadd.f32 %v7027, %v7605
  %7607 = vmatmul.bf16.gmra.mxu0 %v7452
  %v7608 = vpop.f32.mrf.mxu0
  %v7609 = vadd.f32 %v7030, %v7608
  %v7610 = vpop.f32.mrf.mxu0
  %v7611 = vadd.f32 %v7032, %v7610
  %7612 = vmatmul.bf16.gmra.mxu0 %v7454
  %v7613 = vpop.f32.mrf.mxu0
  %v7614 = vadd.f32 %v7035, %v7613
  %v7615 = vpop.f32.mrf.mxu0
  %v7616 = vadd.f32 %v7037, %v7615
  %7617 = vmatmul.bf16.gmra.mxu0 %v7456
  %v7618 = vpop.f32.mrf.mxu0
  %v7619 = vadd.f32 %v7040, %v7618
  %v7620 = vpop.f32.mrf.mxu0
  %v7621 = vadd.f32 %v7042, %v7620
  %7622 = vdwg.mxu0
  %7623 = vmatpush.bf16.msra.mxu0 0
  %7624 = vmatpush.bf16.msra.mxu0 0
  %7625 = vmatpush.bf16.msra.mxu0 0
  %7626 = vmatpush.bf16.msra.mxu0 0
  %7627 = vmatpush.bf16.msra.mxu0 0
  %7628 = vmatpush.bf16.msra.mxu0 %v7584
  %7629 = vmatpush.bf16.msra.mxu0 %v7544
  %7630 = vmatpush.bf16.msra.mxu0 %v7542
  %7631 = vmatmul.bf16.gmra.mxu0 %v7569
  %v7632 = vpop.f32.mrf.mxu0
  %v7633 = vadd.f32 %v7599, %v7632
  %v7634 = vpop.f32.mrf.mxu0
  %v7635 = vadd.f32 %v7601, %v7634
  %7636 = vmatmul.bf16.gmra.mxu0 %v7572
  %v7637 = vpop.f32.mrf.mxu0
  %v7638 = vadd.f32 %v7604, %v7637
  %v7639 = vpop.f32.mrf.mxu0
  %v7640 = vadd.f32 %v7606, %v7639
  %7641 = vmatmul.bf16.gmra.mxu0 %v7575
  %v7642 = vpop.f32.mrf.mxu0
  %v7643 = vadd.f32 %v7609, %v7642
  %v7644 = vpop.f32.mrf.mxu0
  %v7645 = vadd.f32 %v7611, %v7644
  %7646 = vmatmul.bf16.gmra.mxu0 %v7578
  %v7647 = vpop.f32.mrf.mxu0
  %v7648 = vadd.f32 %v7614, %v7647
  %v7649 = vpop.f32.mrf.mxu0
  %v7650 = vadd.f32 %v7616, %v7649
  %7651 = vmatmul.bf16.gmra.mxu0 %v7581
  %v7652 = vpop.f32.mrf.mxu0
  %v7653 = vadd.f32 %v7619, %v7652
  %v7654 = vpop.f32.mrf.mxu0
  %v7655 = vadd.f32 %v7621, %v7654
  %7656 = vdwg.mxu0
  %7657 = vmatpush.bf16.msra.mxu0 %v7541
  %7658 = vmatpush.bf16.msra.mxu0 %v7539
  %7659 = vmatpush.bf16.msra.mxu0 %v7537
  %7660 = vmatpush.bf16.msra.mxu0 %v7535
  %7661 = vmatpush.bf16.msra.mxu0 %v7533
  %7662 = vmatpush.bf16.msra.mxu0 %v7531
  %7663 = vmatpush.bf16.msra.mxu0 %v7529
  %7664 = vmatpush.bf16.msra.mxu0 %v7527
  %7665 = vmatmul.bf16.gmra.mxu0 %v7448
  %v7666 = vpop.f32.mrf.mxu0
  %v7667 = vadd.f32 %v7088, %v7666
  %v7668 = vpop.f32.mrf.mxu0
  %v7669 = vadd.f32 %v7090, %v7668
  %7670 = vmatmul.bf16.gmra.mxu0 %v7450
  %v7671 = vpop.f32.mrf.mxu0
  %v7672 = vadd.f32 %v7093, %v7671
  %v7673 = vpop.f32.mrf.mxu0
  %v7674 = vadd.f32 %v7095, %v7673
  %7675 = vmatmul.bf16.gmra.mxu0 %v7452
  %v7676 = vpop.f32.mrf.mxu0
  %v7677 = vadd.f32 %v7098, %v7676
  %v7678 = vpop.f32.mrf.mxu0
  %v7679 = vadd.f32 %v7100, %v7678
  %7680 = vmatmul.bf16.gmra.mxu0 %v7454
  %v7681 = vpop.f32.mrf.mxu0
  %v7682 = vadd.f32 %v7103, %v7681
  %v7683 = vpop.f32.mrf.mxu0
  %v7684 = vadd.f32 %v7105, %v7683
  %7685 = vmatmul.bf16.gmra.mxu0 %v7456
  %v7686 = vpop.f32.mrf.mxu0
  %v7687 = vadd.f32 %v7108, %v7686
  %v7688 = vpop.f32.mrf.mxu0
  %v7689 = vadd.f32 %v7110, %v7688
  %7690 = vdwg.mxu0
  %7691 = vmatpush.bf16.msra.mxu0 0
  %7692 = vmatpush.bf16.msra.mxu0 0
  %7693 = vmatpush.bf16.msra.mxu0 0
  %7694 = vmatpush.bf16.msra.mxu0 0
  %7695 = vmatpush.bf16.msra.mxu0 0
  %7696 = vmatpush.bf16.msra.mxu0 %v7587
  %7697 = vmatpush.bf16.msra.mxu0 %v7545
  %7698 = vmatpush.bf16.msra.mxu0 %v7543
  %7699 = vmatmul.bf16.gmra.mxu0 %v7569
  %v7700 = vpop.f32.mrf.mxu0
  %v7701 = vadd.f32 %v7667, %v7700
  %v7702 = vpop.f32.mrf.mxu0
  %v7703 = vadd.f32 %v7669, %v7702
  %7704 = vmatmul.bf16.gmra.mxu0 %v7572
  %v7705 = vpop.f32.mrf.mxu0
  %v7706 = vadd.f32 %v7672, %v7705
  %v7707 = vpop.f32.mrf.mxu0
  %v7708 = vadd.f32 %v7674, %v7707
  %7709 = vmatmul.bf16.gmra.mxu0 %v7575
  %v7710 = vpop.f32.mrf.mxu0
  %v7711 = vadd.f32 %v7677, %v7710
  %v7712 = vpop.f32.mrf.mxu0
  %v7713 = vadd.f32 %v7679, %v7712
  %7714 = vmatmul.bf16.gmra.mxu0 %v7578
  %v7715 = vpop.f32.mrf.mxu0
  %v7716 = vadd.f32 %v7682, %v7715
  %v7717 = vpop.f32.mrf.mxu0
  %v7718 = vadd.f32 %v7684, %v7717
  %7719 = vmatmul.bf16.gmra.mxu0 %v7581
  %v7720 = vpop.f32.mrf.mxu0
  %v7721 = vadd.f32 %v7687, %v7720
  %v7722 = vpop.f32.mrf.mxu0
  %v7723 = vadd.f32 %v7689, %v7722
  %7724 = vdwg.mxu0
  %s7725 = scalar_lea.vmem %s3, 336
  %v7726 = vld [vmem:[%s7725] sm:$0xff]
  %v7727 = vld [vmem:[%s7725 + $0x8] sm:$0xff]
  %v7728 = vld [vmem:[%s7725 + $0x10] sm:$0xff]
  %v7729 = vld [vmem:[%s7725 + $0x18] sm:$0xff]
  %v7730 = vld [vmem:[%s7725 + $0x20] sm:$0xff]
  %v7731 = vld [vmem:[%s7725 + $0x28] sm:$0xff]
  %v7732 = vld [vmem:[%s7725 + $0x30] sm:$0xff]
  %v7733 = vld [vmem:[%s7725 + $0x38] sm:$0xff]
  %v7734 = vld [vmem:[%s7725 + $0x40] sm:$0xff]
  %v7735 = vld [vmem:[%s7725 + $0x48] sm:$0xff]
  %v7736 = vld [vmem:[%s7725 + $0x50] sm:$0xff]
  %v7737 = vld [vmem:[%s7725 + $0x58] sm:$0xff]
  %v7738 = vld [vmem:[%s7725 + $0x60] sm:$0xff]
  %v7739 = vld [vmem:[%s7725 + $0x68] sm:$0xff]
  %v7740 = vld [vmem:[%s7725 + $0x70] sm:$0xff]
  %v7741 = vld [vmem:[%s7725 + $0x78] sm:$0xff]
  %v7742 = vld [vmem:[%s7725 + $0x80] sm:$0xff]
  %v7743 = vld [vmem:[%s7725 + $0x88] sm:$0xff]
  %v7744 = vld [vmem:[%s7725 + $0x90] sm:$0xff]
  %v7745 = vld [vmem:[%s7725 + $0x98] sm:$0xff]
  %v7746 = vld [vmem:[%s7725 + $0xa0] sm:$0x11]
  %v7755 = vunpack.c.l.b16 %v5842
  %v7756 = vunpack.c.h.b16 %v5842
  %v7757 = vunpack.c.l.b16 %v5856
  %v7758 = vunpack.c.h.b16 %v5856
  %v7759 = vunpack.c.l.b16 %v5870
  %v7760 = vunpack.c.h.b16 %v5870
  %v7761 = vunpack.c.l.b16 %v5884
  %v7762 = vunpack.c.h.b16 %v5884
  %v7763 = vunpack.c.l.b16 %v5898
  %v7764 = vunpack.c.h.b16 %v5898
  %v7765 = vunpack.c.l.b16 %v5912
  %v7766 = vunpack.c.h.b16 %v5912
  %v7767 = vunpack.c.l.b16 %v5926
  %v7768 = vunpack.c.h.b16 %v5926
  %v7769 = vunpack.c.l.b16 %v5940
  %v7770 = vunpack.c.h.b16 %v5940
  %v7771 = vpack.c.b16 %v7755, %v7755
  %v7772 = vpack.c.b16 %v7756, %v7756
  %v7773 = vpack.c.b16 %v7757, %v7757
  %v7774 = vpack.c.b16 %v7758, %v7758
  %v7775 = vpack.c.b16 %v7759, %v7759
  %v7776 = vpack.c.b16 %v7760, %v7760
  %v7777 = vpack.c.b16 %v7761, %v7761
  %v7778 = vpack.c.b16 %v7762, %v7762
  %v7779 = vpack.c.b16 %v7763, %v7763
  %v7780 = vpack.c.b16 %v7764, %v7764
  %v7781 = vpack.c.b16 %v7765, %v7765
  %v7782 = vpack.c.b16 %v7766, %v7766
  %v7783 = vpack.c.b16 %v7767, %v7767
  %v7784 = vpack.c.b16 %v7768, %v7768
  %v7785 = vpack.c.b16 %v7769, %v7769
  %v7786 = vpack.c.b16 %v7770, %v7770
  %v7787 = vunpack.c.l.b16 %v7771
  %v7788 = vunpack.c.l.b16 %v7772
  %v7789 = vunpack.c.l.b16 %v7773
  %v7790 = vunpack.c.l.b16 %v7774
  %v7791 = vunpack.c.l.b16 %v7775
  %v7792 = vunpack.c.l.b16 %v7776
  %v7793 = vunpack.c.l.b16 %v7777
  %v7794 = vunpack.c.l.b16 %v7778
  %v7795 = vunpack.c.l.b16 %v7779
  %v7796 = vunpack.c.l.b16 %v7780
  %v7797 = vunpack.c.l.b16 %v7781
  %v7798 = vunpack.c.l.b16 %v7782
  %v7799 = vunpack.c.l.b16 %v7783
  %v7800 = vunpack.c.l.b16 %v7784
  %v7801 = vunpack.c.l.b16 %v7785
  %v7802 = vunpack.c.l.b16 %v7786
  %v7803 = vrot.slane %v6390, 7
  %v7804 = vsel %vm6547, %v7803, %v6388
  %v7805 = vrot.slane %v6392, 6
  %v7806 = vsel %vm6550, %v7805, %v7804
  %v7807 = vrot.slane %v6394, 5
  %v7808 = vsel %vm6553, %v7807, %v7806
  %v7809 = vrot.slane %v6396, 4
  %v7810 = vsel %vm6556, %v7809, %v7808
  %v7811 = vrot.slane %v6398, 3
  %v7812 = vsel %vm6559, %v7811, %v7810
  %v7813 = vrot.slane %v6400, 2
  %v7814 = vsel %vm6562, %v7813, %v7812
  %v7815 = vrot.slane %v6402, 1
  %v7816 = vsel %vm6565, %v7815, %v7814
  %v7817 = vrot.slane %v6391, 7
  %v7818 = vsel %vm6547, %v7817, %v6389
  %v7819 = vrot.slane %v6393, 6
  %v7820 = vsel %vm6550, %v7819, %v7818
  %v7821 = vrot.slane %v6395, 5
  %v7822 = vsel %vm6553, %v7821, %v7820
  %v7823 = vrot.slane %v6397, 4
  %v7824 = vsel %vm6556, %v7823, %v7822
  %v7825 = vrot.slane %v6399, 3
  %v7826 = vsel %vm6559, %v7825, %v7824
  %v7827 = vrot.slane %v6401, 2
  %v7828 = vsel %vm6562, %v7827, %v7826
  %v7829 = vrot.slane %v6403, 1
  %v7830 = vsel %vm6565, %v7829, %v7828
  %v7831 = vrot.slane %v7787, 7
  %v7832 = vsel %vm6547, %v7831, %v6404
  %v7833 = vrot.slane %v6408, 6
  %v7834 = vsel %vm6550, %v7833, %v7832
  %v7835 = vrot.slane %v6410, 5
  %v7836 = vsel %vm6553, %v7835, %v7834
  %v7837 = vrot.slane %v6412, 4
  %v7838 = vsel %vm6556, %v7837, %v7836
  %v7839 = vrot.slane %v6414, 3
  %v7840 = vsel %vm6559, %v7839, %v7838
  %v7841 = vrot.slane %v6416, 2
  %v7842 = vsel %vm6562, %v7841, %v7840
  %v7843 = vrot.slane %v6418, 1
  %v7844 = vsel %vm6565, %v7843, %v7842
  %v7845 = vrot.slane %v7788, 7
  %v7846 = vsel %vm6547, %v7845, %v6405
  %v7847 = vrot.slane %v6409, 6
  %v7848 = vsel %vm6550, %v7847, %v7846
  %v7849 = vrot.slane %v6411, 5
  %v7850 = vsel %vm6553, %v7849, %v7848
  %v7851 = vrot.slane %v6413, 4
  %v7852 = vsel %vm6556, %v7851, %v7850
  %v7853 = vrot.slane %v6415, 3
  %v7854 = vsel %vm6559, %v7853, %v7852
  %v7855 = vrot.slane %v6417, 2
  %v7856 = vsel %vm6562, %v7855, %v7854
  %v7857 = vrot.slane %v6419, 1
  %v7858 = vsel %vm6565, %v7857, %v7856
  %v7859 = vrot.slane %v6422, 7
  %v7860 = vsel %vm6547, %v7859, %v6420
  %v7861 = vrot.slane %v6424, 6
  %v7862 = vsel %vm6550, %v7861, %v7860
  %v7863 = vrot.slane %v7789, 5
  %v7864 = vsel %vm6553, %v7863, %v7862
  %v7865 = vrot.slane %v6428, 4
  %v7866 = vsel %vm6556, %v7865, %v7864
  %v7867 = vrot.slane %v6430, 3
  %v7868 = vsel %vm6559, %v7867, %v7866
  %v7869 = vrot.slane %v6432, 2
  %v7870 = vsel %vm6562, %v7869, %v7868
  %v7871 = vrot.slane %v6434, 1
  %v7872 = vsel %vm6565, %v7871, %v7870
  %v7873 = vrot.slane %v6423, 7
  %v7874 = vsel %vm6547, %v7873, %v6421
  %v7875 = vrot.slane %v6425, 6
  %v7876 = vsel %vm6550, %v7875, %v7874
  %v7877 = vrot.slane %v7790, 5
  %v7878 = vsel %vm6553, %v7877, %v7876
  %v7879 = vrot.slane %v6429, 4
  %v7880 = vsel %vm6556, %v7879, %v7878
  %v7881 = vrot.slane %v6431, 3
  %v7882 = vsel %vm6559, %v7881, %v7880
  %v7883 = vrot.slane %v6433, 2
  %v7884 = vsel %vm6562, %v7883, %v7882
  %v7885 = vrot.slane %v6435, 1
  %v7886 = vsel %vm6565, %v7885, %v7884
  %v7887 = vrot.slane %v6438, 7
  %v7888 = vsel %vm6547, %v7887, %v6436
  %v7889 = vrot.slane %v6440, 6
  %v7890 = vsel %vm6550, %v7889, %v7888
  %v7891 = vrot.slane %v6442, 5
  %v7892 = vsel %vm6553, %v7891, %v7890
  %v7893 = vrot.slane %v6444, 4
  %v7894 = vsel %vm6556, %v7893, %v7892
  %v7895 = vrot.slane %v7791, 3
  %v7896 = vsel %vm6559, %v7895, %v7894
  %v7897 = vrot.slane %v6448, 2
  %v7898 = vsel %vm6562, %v7897, %v7896
  %v7899 = vrot.slane %v6450, 1
  %v7900 = vsel %vm6565, %v7899, %v7898
  %v7901 = vrot.slane %v6439, 7
  %v7902 = vsel %vm6547, %v7901, %v6437
  %v7903 = vrot.slane %v6441, 6
  %v7904 = vsel %vm6550, %v7903, %v7902
  %v7905 = vrot.slane %v6443, 5
  %v7906 = vsel %vm6553, %v7905, %v7904
  %v7907 = vrot.slane %v6445, 4
  %v7908 = vsel %vm6556, %v7907, %v7906
  %v7909 = vrot.slane %v7792, 3
  %v7910 = vsel %vm6559, %v7909, %v7908
  %v7911 = vrot.slane %v6449, 2
  %v7912 = vsel %vm6562, %v7911, %v7910
  %v7913 = vrot.slane %v6451, 1
  %v7914 = vsel %vm6565, %v7913, %v7912
  %v7915 = vrot.slane %v6454, 7
  %v7916 = vsel %vm6547, %v7915, %v6452
  %v7917 = vrot.slane %v6456, 6
  %v7918 = vsel %vm6550, %v7917, %v7916
  %v7919 = vrot.slane %v6458, 5
  %v7920 = vsel %vm6553, %v7919, %v7918
  %v7921 = vrot.slane %v6460, 4
  %v7922 = vsel %vm6556, %v7921, %v7920
  %v7923 = vrot.slane %v6462, 3
  %v7924 = vsel %vm6559, %v7923, %v7922
  %v7925 = vrot.slane %v6464, 2
  %v7926 = vsel %vm6562, %v7925, %v7924
  %v7927 = vrot.slane %v7793, 1
  %v7928 = vsel %vm6565, %v7927, %v7926
  %v7929 = vrot.slane %v6455, 7
  %v7930 = vsel %vm6547, %v7929, %v6453
  %v7931 = vrot.slane %v6457, 6
  %v7932 = vsel %vm6550, %v7931, %v7930
  %v7933 = vrot.slane %v6459, 5
  %v7934 = vsel %vm6553, %v7933, %v7932
  %v7935 = vrot.slane %v6461, 4
  %v7936 = vsel %vm6556, %v7935, %v7934
  %v7937 = vrot.slane %v6463, 3
  %v7938 = vsel %vm6559, %v7937, %v7936
  %v7939 = vrot.slane %v6465, 2
  %v7940 = vsel %vm6562, %v7939, %v7938
  %v7941 = vrot.slane %v7794, 1
  %v7942 = vsel %vm6565, %v7941, %v7940
  %v7943 = vrot.slane %v6470, 7
  %v7944 = vsel %vm6547, %v7943, %v6468
  %v7945 = vrot.slane %v6472, 6
  %v7946 = vsel %vm6550, %v7945, %v7944
  %v7947 = vrot.slane %v6474, 5
  %v7948 = vsel %vm6553, %v7947, %v7946
  %v7949 = vrot.slane %v6476, 4
  %v7950 = vsel %vm6556, %v7949, %v7948
  %v7951 = vrot.slane %v6478, 3
  %v7952 = vsel %vm6559, %v7951, %v7950
  %v7953 = vrot.slane %v6480, 2
  %v7954 = vsel %vm6562, %v7953, %v7952
  %v7955 = vrot.slane %v6482, 1
  %v7956 = vsel %vm6565, %v7955, %v7954
  %v7957 = vrot.slane %v6471, 7
  %v7958 = vsel %vm6547, %v7957, %v6469
  %v7959 = vrot.slane %v6473, 6
  %v7960 = vsel %vm6550, %v7959, %v7958
  %v7961 = vrot.slane %v6475, 5
  %v7962 = vsel %vm6553, %v7961, %v7960
  %v7963 = vrot.slane %v6477, 4
  %v7964 = vsel %vm6556, %v7963, %v7962
  %v7965 = vrot.slane %v6479, 3
  %v7966 = vsel %vm6559, %v7965, %v7964
  %v7967 = vrot.slane %v6481, 2
  %v7968 = vsel %vm6562, %v7967, %v7966
  %v7969 = vrot.slane %v6483, 1
  %v7970 = vsel %vm6565, %v7969, %v7968
  %v7971 = vrot.slane %v7795, 7
  %v7972 = vsel %vm6547, %v7971, %v6484
  %v7973 = vrot.slane %v6488, 6
  %v7974 = vsel %vm6550, %v7973, %v7972
  %v7975 = vrot.slane %v6490, 5
  %v7976 = vsel %vm6553, %v7975, %v7974
  %v7977 = vrot.slane %v6492, 4
  %v7978 = vsel %vm6556, %v7977, %v7976
  %v7979 = vrot.slane %v6494, 3
  %v7980 = vsel %vm6559, %v7979, %v7978
  %v7981 = vrot.slane %v6496, 2
  %v7982 = vsel %vm6562, %v7981, %v7980
  %v7983 = vrot.slane %v6498, 1
  %v7984 = vsel %vm6565, %v7983, %v7982
  %v7985 = vrot.slane %v7796, 7
  %v7986 = vsel %vm6547, %v7985, %v6485
  %v7987 = vrot.slane %v6489, 6
  %v7988 = vsel %vm6550, %v7987, %v7986
  %v7989 = vrot.slane %v6491, 5
  %v7990 = vsel %vm6553, %v7989, %v7988
  %v7991 = vrot.slane %v6493, 4
  %v7992 = vsel %vm6556, %v7991, %v7990
  %v7993 = vrot.slane %v6495, 3
  %v7994 = vsel %vm6559, %v7993, %v7992
  %v7995 = vrot.slane %v6497, 2
  %v7996 = vsel %vm6562, %v7995, %v7994
  %v7997 = vrot.slane %v6499, 1
  %v7998 = vsel %vm6565, %v7997, %v7996
  %v7999 = vrot.slane %v6502, 7
  %v8000 = vsel %vm6547, %v7999, %v6500
  %v8001 = vrot.slane %v6504, 6
  %v8002 = vsel %vm6550, %v8001, %v8000
  %v8003 = vrot.slane %v7797, 5
  %v8004 = vsel %vm6553, %v8003, %v8002
  %v8005 = vrot.slane %v6508, 4
  %v8006 = vsel %vm6556, %v8005, %v8004
  %v8007 = vrot.slane %v6510, 3
  %v8008 = vsel %vm6559, %v8007, %v8006
  %v8009 = vrot.slane %v6512, 2
  %v8010 = vsel %vm6562, %v8009, %v8008
  %v8011 = vrot.slane %v6514, 1
  %v8012 = vsel %vm6565, %v8011, %v8010
  %v8013 = vrot.slane %v6503, 7
  %v8014 = vsel %vm6547, %v8013, %v6501
  %v8015 = vrot.slane %v6505, 6
  %v8016 = vsel %vm6550, %v8015, %v8014
  %v8017 = vrot.slane %v7798, 5
  %v8018 = vsel %vm6553, %v8017, %v8016
  %v8019 = vrot.slane %v6509, 4
  %v8020 = vsel %vm6556, %v8019, %v8018
  %v8021 = vrot.slane %v6511, 3
  %v8022 = vsel %vm6559, %v8021, %v8020
  %v8023 = vrot.slane %v6513, 2
  %v8024 = vsel %vm6562, %v8023, %v8022
  %v8025 = vrot.slane %v6515, 1
  %v8026 = vsel %vm6565, %v8025, %v8024
  %v8027 = vrot.slane %v6518, 7
  %v8028 = vsel %vm6547, %v8027, %v6516
  %v8029 = vrot.slane %v6520, 6
  %v8030 = vsel %vm6550, %v8029, %v8028
  %v8031 = vrot.slane %v6522, 5
  %v8032 = vsel %vm6553, %v8031, %v8030
  %v8033 = vrot.slane %v6524, 4
  %v8034 = vsel %vm6556, %v8033, %v8032
  %v8035 = vrot.slane %v7799, 3
  %v8036 = vsel %vm6559, %v8035, %v8034
  %v8037 = vrot.slane %v6528, 2
  %v8038 = vsel %vm6562, %v8037, %v8036
  %v8039 = vrot.slane %v6530, 1
  %v8040 = vsel %vm6565, %v8039, %v8038
  %v8041 = vrot.slane %v6519, 7
  %v8042 = vsel %vm6547, %v8041, %v6517
  %v8043 = vrot.slane %v6521, 6
  %v8044 = vsel %vm6550, %v8043, %v8042
  %v8045 = vrot.slane %v6523, 5
  %v8046 = vsel %vm6553, %v8045, %v8044
  %v8047 = vrot.slane %v6525, 4
  %v8048 = vsel %vm6556, %v8047, %v8046
  %v8049 = vrot.slane %v7800, 3
  %v8050 = vsel %vm6559, %v8049, %v8048
  %v8051 = vrot.slane %v6529, 2
  %v8052 = vsel %vm6562, %v8051, %v8050
  %v8053 = vrot.slane %v6531, 1
  %v8054 = vsel %vm6565, %v8053, %v8052
  %v8055 = vrot.slane %v6534, 7
  %v8056 = vsel %vm6547, %v8055, %v6532
  %v8057 = vrot.slane %v6536, 6
  %v8058 = vsel %vm6550, %v8057, %v8056
  %v8059 = vrot.slane %v6538, 5
  %v8060 = vsel %vm6553, %v8059, %v8058
  %v8061 = vrot.slane %v6540, 4
  %v8062 = vsel %vm6556, %v8061, %v8060
  %v8063 = vrot.slane %v6542, 3
  %v8064 = vsel %vm6559, %v8063, %v8062
  %v8065 = vrot.slane %v6544, 2
  %v8066 = vsel %vm6562, %v8065, %v8064
  %v8067 = vrot.slane %v7801, 1
  %v8068 = vsel %vm6565, %v8067, %v8066
  %v8069 = vrot.slane %v6535, 7
  %v8070 = vsel %vm6547, %v8069, %v6533
  %v8071 = vrot.slane %v6537, 6
  %v8072 = vsel %vm6550, %v8071, %v8070
  %v8073 = vrot.slane %v6539, 5
  %v8074 = vsel %vm6553, %v8073, %v8072
  %v8075 = vrot.slane %v6541, 4
  %v8076 = vsel %vm6556, %v8075, %v8074
  %v8077 = vrot.slane %v6543, 3
  %v8078 = vsel %vm6559, %v8077, %v8076
  %v8079 = vrot.slane %v6545, 2
  %v8080 = vsel %vm6562, %v8079, %v8078
  %v8081 = vrot.slane %v7802, 1
  %v8082 = vsel %vm6565, %v8081, %v8080
  %v8083 = vpack.c.b16 %v7844, %v7816
  %v8084 = vpack.c.b16 %v7858, %v7830
  %v8085 = vpack.c.b16 %v7900, %v7872
  %v8086 = vpack.c.b16 %v7914, %v7886
  %v8087 = vpack.c.b16 %v7956, %v7928
  %v8088 = vpack.c.b16 %v7970, %v7942
  %v8089 = vpack.c.b16 %v8012, %v7984
  %v8090 = vpack.c.b16 %v8026, %v7998
  %v8091 = vpack.c.b16 %v8068, %v8040
  %v8092 = vpack.c.b16 %v8082, %v8054
  %v8119 = vunpack.c.l.b16 %v7726
  %v8120 = vunpack.c.h.b16 %v7726
  %v8121 = vunpack.c.l.b16 %v7727
  %v8122 = vunpack.c.h.b16 %v7727
  %v8123 = vunpack.c.l.b16 %v7728
  %v8124 = vunpack.c.h.b16 %v7728
  %v8125 = vunpack.c.l.b16 %v7729
  %v8126 = vunpack.c.h.b16 %v7729
  %v8127 = vunpack.c.l.b16 %v7730
  %v8128 = vunpack.c.h.b16 %v7730
  %v8129 = vunpack.c.l.b16 %v7731
  %v8130 = vunpack.c.h.b16 %v7731
  %v8131 = vunpack.c.l.b16 %v7732
  %v8132 = vunpack.c.h.b16 %v7732
  %v8133 = vunpack.c.l.b16 %v7733
  %v8134 = vunpack.c.h.b16 %v7733
  %v8135 = vunpack.c.l.b16 %v7734
  %v8136 = vunpack.c.h.b16 %v7734
  %v8137 = vunpack.c.l.b16 %v7735
  %v8138 = vunpack.c.h.b16 %v7735
  %v8139 = vunpack.c.l.b16 %v7736
  %v8140 = vunpack.c.h.b16 %v7736
  %v8141 = vunpack.c.l.b16 %v7737
  %v8142 = vunpack.c.h.b16 %v7737
  %v8143 = vunpack.c.l.b16 %v7738
  %v8144 = vunpack.c.h.b16 %v7738
  %v8145 = vunpack.c.l.b16 %v7739
  %v8146 = vunpack.c.h.b16 %v7739
  %v8147 = vunpack.c.l.b16 %v7740
  %v8148 = vunpack.c.h.b16 %v7740
  %v8149 = vunpack.c.l.b16 %v7741
  %v8150 = vunpack.c.h.b16 %v7741
  %v8151 = vunpack.c.l.b16 %v7742
  %v8152 = vunpack.c.h.b16 %v7742
  %v8153 = vunpack.c.l.b16 %v7743
  %v8154 = vunpack.c.h.b16 %v7743
  %v8155 = vunpack.c.l.b16 %v7744
  %v8156 = vunpack.c.h.b16 %v7744
  %v8157 = vunpack.c.l.b16 %v7745
  %v8158 = vunpack.c.h.b16 %v7745
  %v8159 = vunpack.c.l.b16 %v7746
  %v8160 = vunpack.c.h.b16 %v7746
  %v8161 = vpack.c.b16 %v8121, %v8119
  %v8162 = vpack.c.b16 %v8122, %v8120
  %v8163 = vpack.c.b16 %v8125, %v8123
  %v8164 = vpack.c.b16 %v8126, %v8124
  %v8165 = vpack.c.b16 %v8129, %v8127
  %v8166 = vpack.c.b16 %v8130, %v8128
  %v8167 = vpack.c.b16 %v8133, %v8131
  %v8168 = vpack.c.b16 %v8134, %v8132
  %v8169 = vpack.c.b16 %v8137, %v8135
  %v8170 = vpack.c.b16 %v8138, %v8136
  %v8171 = vpack.c.b16 %v8141, %v8139
  %v8172 = vpack.c.b16 %v8142, %v8140
  %v8173 = vpack.c.b16 %v8145, %v8143
  %v8174 = vpack.c.b16 %v8146, %v8144
  %v8175 = vpack.c.b16 %v8149, %v8147
  %v8176 = vpack.c.b16 %v8150, %v8148
  %v8177 = vpack.c.b16 %v8153, %v8151
  %v8178 = vpack.c.b16 %v8154, %v8152
  %v8179 = vpack.c.b16 %v8157, %v8155
  %v8180 = vpack.c.b16 %v8158, %v8156
  %v8181 = vpack.c.b16 %v8159, %v8159
  %v8182 = vpack.c.b16 %v8160, %v8160
  %v8204 = vsel %vm6953, %v8084, 0
  %v8207 = vsel %vm6953, %v8086, 0
  %v8210 = vsel %vm6953, %v8088, 0
  %v8213 = vsel %vm6953, %v8090, 0
  %v8216 = vsel %vm6953, %v8092, 0
  %v8219 = vsel %vm6969, %v8181, 0
  %v8222 = vsel %vm6969, %v8182, 0
  %8224 = vmatpush.bf16.msra.mxu0 %v8175
  %8225 = vmatpush.bf16.msra.mxu0 %v8173
  %8226 = vmatpush.bf16.msra.mxu0 %v8171
  %8227 = vmatpush.bf16.msra.mxu0 %v8169
  %8228 = vmatpush.bf16.msra.mxu0 %v8167
  %8229 = vmatpush.bf16.msra.mxu0 %v8165
  %8230 = vmatpush.bf16.msra.mxu0 %v8163
  %8231 = vmatpush.bf16.msra.mxu0 %v8161
  %8232 = vmatmul.bf16.gmra.mxu0 %v8083
  %v8233 = vpop.f32.mrf.mxu0
  %v8234 = vadd.f32 0.0, %v8233
  %v8235 = vpop.f32.mrf.mxu0
  %v8236 = vadd.f32 0.0, %v8235
  %8237 = vmatmul.bf16.gmra.mxu0 %v8085
  %v8238 = vpop.f32.mrf.mxu0
  %v8239 = vadd.f32 0.0, %v8238
  %v8240 = vpop.f32.mrf.mxu0
  %v8241 = vadd.f32 0.0, %v8240
  %8242 = vmatmul.bf16.gmra.mxu0 %v8087
  %v8243 = vpop.f32.mrf.mxu0
  %v8244 = vadd.f32 0.0, %v8243
  %v8245 = vpop.f32.mrf.mxu0
  %v8246 = vadd.f32 0.0, %v8245
  %8247 = vmatmul.bf16.gmra.mxu0 %v8089
  %v8248 = vpop.f32.mrf.mxu0
  %v8249 = vadd.f32 0.0, %v8248
  %v8250 = vpop.f32.mrf.mxu0
  %v8251 = vadd.f32 0.0, %v8250
  %8252 = vmatmul.bf16.gmra.mxu0 %v8091
  %v8253 = vpop.f32.mrf.mxu0
  %v8254 = vadd.f32 0.0, %v8253
  %v8255 = vpop.f32.mrf.mxu0
  %v8256 = vadd.f32 0.0, %v8255
  %8257 = vdwg.mxu0
  %8258 = vmatpush.bf16.msra.mxu0 0
  %8259 = vmatpush.bf16.msra.mxu0 0
  %8260 = vmatpush.bf16.msra.mxu0 0
  %8261 = vmatpush.bf16.msra.mxu0 0
  %8262 = vmatpush.bf16.msra.mxu0 0
  %8263 = vmatpush.bf16.msra.mxu0 %v8219
  %8264 = vmatpush.bf16.msra.mxu0 %v8179
  %8265 = vmatpush.bf16.msra.mxu0 %v8177
  %8266 = vmatmul.bf16.gmra.mxu0 %v8204
  %v8267 = vpop.f32.mrf.mxu0
  %v8268 = vadd.f32 %v8234, %v8267
  %v8269 = vpop.f32.mrf.mxu0
  %v8270 = vadd.f32 %v8236, %v8269
  %8271 = vmatmul.bf16.gmra.mxu0 %v8207
  %v8272 = vpop.f32.mrf.mxu0
  %v8273 = vadd.f32 %v8239, %v8272
  %v8274 = vpop.f32.mrf.mxu0
  %v8275 = vadd.f32 %v8241, %v8274
  %8276 = vmatmul.bf16.gmra.mxu0 %v8210
  %v8277 = vpop.f32.mrf.mxu0
  %v8278 = vadd.f32 %v8244, %v8277
  %v8279 = vpop.f32.mrf.mxu0
  %v8280 = vadd.f32 %v8246, %v8279
  %8281 = vmatmul.bf16.gmra.mxu0 %v8213
  %v8282 = vpop.f32.mrf.mxu0
  %v8283 = vadd.f32 %v8249, %v8282
  %v8284 = vpop.f32.mrf.mxu0
  %v8285 = vadd.f32 %v8251, %v8284
  %8286 = vmatmul.bf16.gmra.mxu0 %v8216
  %v8287 = vpop.f32.mrf.mxu0
  %v8288 = vadd.f32 %v8254, %v8287
  %v8289 = vpop.f32.mrf.mxu0
  %v8290 = vadd.f32 %v8256, %v8289
  %8291 = vdwg.mxu0
  %8292 = vmatpush.bf16.msra.mxu0 %v8176
  %8293 = vmatpush.bf16.msra.mxu0 %v8174
  %8294 = vmatpush.bf16.msra.mxu0 %v8172
  %8295 = vmatpush.bf16.msra.mxu0 %v8170
  %8296 = vmatpush.bf16.msra.mxu0 %v8168
  %8297 = vmatpush.bf16.msra.mxu0 %v8166
  %8298 = vmatpush.bf16.msra.mxu0 %v8164
  %8299 = vmatpush.bf16.msra.mxu0 %v8162
  %8300 = vmatmul.bf16.gmra.mxu0 %v8083
  %v8301 = vpop.f32.mrf.mxu0
  %v8302 = vadd.f32 0.0, %v8301
  %v8303 = vpop.f32.mrf.mxu0
  %v8304 = vadd.f32 0.0, %v8303
  %8305 = vmatmul.bf16.gmra.mxu0 %v8085
  %v8306 = vpop.f32.mrf.mxu0
  %v8307 = vadd.f32 0.0, %v8306
  %v8308 = vpop.f32.mrf.mxu0
  %v8309 = vadd.f32 0.0, %v8308
  %8310 = vmatmul.bf16.gmra.mxu0 %v8087
  %v8311 = vpop.f32.mrf.mxu0
  %v8312 = vadd.f32 0.0, %v8311
  %v8313 = vpop.f32.mrf.mxu0
  %v8314 = vadd.f32 0.0, %v8313
  %8315 = vmatmul.bf16.gmra.mxu0 %v8089
  %v8316 = vpop.f32.mrf.mxu0
  %v8317 = vadd.f32 0.0, %v8316
  %v8318 = vpop.f32.mrf.mxu0
  %v8319 = vadd.f32 0.0, %v8318
  %8320 = vmatmul.bf16.gmra.mxu0 %v8091
  %v8321 = vpop.f32.mrf.mxu0
  %v8322 = vadd.f32 0.0, %v8321
  %v8323 = vpop.f32.mrf.mxu0
  %v8324 = vadd.f32 0.0, %v8323
  %8325 = vdwg.mxu0
  %8326 = vmatpush.bf16.msra.mxu0 0
  %8327 = vmatpush.bf16.msra.mxu0 0
  %8328 = vmatpush.bf16.msra.mxu0 0
  %8329 = vmatpush.bf16.msra.mxu0 0
  %8330 = vmatpush.bf16.msra.mxu0 0
  %8331 = vmatpush.bf16.msra.mxu0 %v8222
  %8332 = vmatpush.bf16.msra.mxu0 %v8180
  %8333 = vmatpush.bf16.msra.mxu0 %v8178
  %8334 = vmatmul.bf16.gmra.mxu0 %v8204
  %v8335 = vpop.f32.mrf.mxu0
  %v8336 = vadd.f32 %v8302, %v8335
  %v8337 = vpop.f32.mrf.mxu0
  %v8338 = vadd.f32 %v8304, %v8337
  %8339 = vmatmul.bf16.gmra.mxu0 %v8207
  %v8340 = vpop.f32.mrf.mxu0
  %v8341 = vadd.f32 %v8307, %v8340
  %v8342 = vpop.f32.mrf.mxu0
  %v8343 = vadd.f32 %v8309, %v8342
  %8344 = vmatmul.bf16.gmra.mxu0 %v8210
  %v8345 = vpop.f32.mrf.mxu0
  %v8346 = vadd.f32 %v8312, %v8345
  %v8347 = vpop.f32.mrf.mxu0
  %v8348 = vadd.f32 %v8314, %v8347
  %8349 = vmatmul.bf16.gmra.mxu0 %v8213
  %v8350 = vpop.f32.mrf.mxu0
  %v8351 = vadd.f32 %v8317, %v8350
  %v8352 = vpop.f32.mrf.mxu0
  %v8353 = vadd.f32 %v8319, %v8352
  %8354 = vmatmul.bf16.gmra.mxu0 %v8216
  %v8355 = vpop.f32.mrf.mxu0
  %v8356 = vadd.f32 %v8322, %v8355
  %v8357 = vpop.f32.mrf.mxu0
  %v8358 = vadd.f32 %v8324, %v8357
  %8359 = vdwg.mxu0
  %v8360 = vadd.f32 %v7633, %v8268
  %v8361 = vadd.f32 %v7701, %v8336
  %v8362 = vadd.f32 %v7635, %v8270
  %v8363 = vadd.f32 %v7703, %v8338
  %v8364 = vadd.f32 %v7638, %v8273
  %v8365 = vadd.f32 %v7706, %v8341
  %v8366 = vadd.f32 %v7640, %v8275
  %v8367 = vadd.f32 %v7708, %v8343
  %v8368 = vadd.f32 %v7643, %v8278
  %v8369 = vadd.f32 %v7711, %v8346
  %v8370 = vadd.f32 %v7645, %v8280
  %v8371 = vadd.f32 %v7713, %v8348
  %v8372 = vadd.f32 %v7648, %v8283
  %v8373 = vadd.f32 %v7716, %v8351
  %v8374 = vadd.f32 %v7650, %v8285
  %v8375 = vadd.f32 %v7718, %v8353
  %v8376 = vadd.f32 %v7653, %v8288
  %v8377 = vadd.f32 %v7721, %v8356
  %v8378 = vadd.f32 %v7655, %v8290
  %v8379 = vadd.f32 %v7723, %v8358
  %s8380 = scalar_lea.vmem %s3, 504
  %v8381 = vld [vmem:[%s8380] sm:$0xff]
  %v8382 = vld [vmem:[%s8380 + $0x8] sm:$0xff]
  %v8383 = vld [vmem:[%s8380 + $0x10] sm:$0xff]
  %v8384 = vld [vmem:[%s8380 + $0x18] sm:$0xff]
  %v8385 = vld [vmem:[%s8380 + $0x20] sm:$0xff]
  %v8386 = vld [vmem:[%s8380 + $0x28] sm:$0xff]
  %v8387 = vld [vmem:[%s8380 + $0x30] sm:$0xff]
  %v8388 = vld [vmem:[%s8380 + $0x38] sm:$0xff]
  %v8389 = vld [vmem:[%s8380 + $0x40] sm:$0xff]
  %v8390 = vld [vmem:[%s8380 + $0x48] sm:$0xff]
  %v8391 = vld [vmem:[%s8380 + $0x50] sm:$0xff]
  %v8392 = vld [vmem:[%s8380 + $0x58] sm:$0xff]
  %v8393 = vld [vmem:[%s8380 + $0x60] sm:$0xff]
  %v8394 = vld [vmem:[%s8380 + $0x68] sm:$0xff]
  %v8395 = vld [vmem:[%s8380 + $0x70] sm:$0xff]
  %v8396 = vld [vmem:[%s8380 + $0x78] sm:$0xff]
  %v8397 = vld [vmem:[%s8380 + $0x80] sm:$0xff]
  %v8398 = vld [vmem:[%s8380 + $0x88] sm:$0xff]
  %v8399 = vld [vmem:[%s8380 + $0x90] sm:$0xff]
  %v8400 = vld [vmem:[%s8380 + $0x98] sm:$0xff]
  %v8401 = vld [vmem:[%s8380 + $0xa0] sm:$0x11]
  %v8410 = vunpack.c.l.b16 %v5843
  %v8411 = vunpack.c.h.b16 %v5843
  %v8412 = vunpack.c.l.b16 %v5857
  %v8413 = vunpack.c.h.b16 %v5857
  %v8414 = vunpack.c.l.b16 %v5871
  %v8415 = vunpack.c.h.b16 %v5871
  %v8416 = vunpack.c.l.b16 %v5885
  %v8417 = vunpack.c.h.b16 %v5885
  %v8418 = vunpack.c.l.b16 %v5899
  %v8419 = vunpack.c.h.b16 %v5899
  %v8420 = vunpack.c.l.b16 %v5913
  %v8421 = vunpack.c.h.b16 %v5913
  %v8422 = vunpack.c.l.b16 %v5927
  %v8423 = vunpack.c.h.b16 %v5927
  %v8424 = vunpack.c.l.b16 %v5941
  %v8425 = vunpack.c.h.b16 %v5941
  %v8426 = vpack.c.b16 %v8410, %v8410
  %v8427 = vpack.c.b16 %v8411, %v8411
  %v8428 = vpack.c.b16 %v8412, %v8412
  %v8429 = vpack.c.b16 %v8413, %v8413
  %v8430 = vpack.c.b16 %v8414, %v8414
  %v8431 = vpack.c.b16 %v8415, %v8415
  %v8432 = vpack.c.b16 %v8416, %v8416
  %v8433 = vpack.c.b16 %v8417, %v8417
  %v8434 = vpack.c.b16 %v8418, %v8418
  %v8435 = vpack.c.b16 %v8419, %v8419
  %v8436 = vpack.c.b16 %v8420, %v8420
  %v8437 = vpack.c.b16 %v8421, %v8421
  %v8438 = vpack.c.b16 %v8422, %v8422
  %v8439 = vpack.c.b16 %v8423, %v8423
  %v8440 = vpack.c.b16 %v8424, %v8424
  %v8441 = vpack.c.b16 %v8425, %v8425
  %v8442 = vunpack.c.l.b16 %v8426
  %v8443 = vunpack.c.l.b16 %v8427
  %v8444 = vunpack.c.l.b16 %v8428
  %v8445 = vunpack.c.l.b16 %v8429
  %v8446 = vunpack.c.l.b16 %v8430
  %v8447 = vunpack.c.l.b16 %v8431
  %v8448 = vunpack.c.l.b16 %v8432
  %v8449 = vunpack.c.l.b16 %v8433
  %v8450 = vunpack.c.l.b16 %v8434
  %v8451 = vunpack.c.l.b16 %v8435
  %v8452 = vunpack.c.l.b16 %v8436
  %v8453 = vunpack.c.l.b16 %v8437
  %v8454 = vunpack.c.l.b16 %v8438
  %v8455 = vunpack.c.l.b16 %v8439
  %v8456 = vunpack.c.l.b16 %v8440
  %v8457 = vunpack.c.l.b16 %v8441
  %v8458 = vrot.slane %v6392, 7
  %v8459 = vsel %vm6547, %v8458, %v6390
  %v8460 = vrot.slane %v6394, 6
  %v8461 = vsel %vm6550, %v8460, %v8459
  %v8462 = vrot.slane %v6396, 5
  %v8463 = vsel %vm6553, %v8462, %v8461
  %v8464 = vrot.slane %v6398, 4
  %v8465 = vsel %vm6556, %v8464, %v8463
  %v8466 = vrot.slane %v6400, 3
  %v8467 = vsel %vm6559, %v8466, %v8465
  %v8468 = vrot.slane %v6402, 2
  %v8469 = vsel %vm6562, %v8468, %v8467
  %v8470 = vrot.slane %v6404, 1
  %v8471 = vsel %vm6565, %v8470, %v8469
  %v8472 = vrot.slane %v6393, 7
  %v8473 = vsel %vm6547, %v8472, %v6391
  %v8474 = vrot.slane %v6395, 6
  %v8475 = vsel %vm6550, %v8474, %v8473
  %v8476 = vrot.slane %v6397, 5
  %v8477 = vsel %vm6553, %v8476, %v8475
  %v8478 = vrot.slane %v6399, 4
  %v8479 = vsel %vm6556, %v8478, %v8477
  %v8480 = vrot.slane %v6401, 3
  %v8481 = vsel %vm6559, %v8480, %v8479
  %v8482 = vrot.slane %v6403, 2
  %v8483 = vsel %vm6562, %v8482, %v8481
  %v8484 = vrot.slane %v6405, 1
  %v8485 = vsel %vm6565, %v8484, %v8483
  %v8486 = vrot.slane %v8442, 7
  %v8487 = vsel %vm6547, %v8486, %v7787
  %v8488 = vrot.slane %v6410, 6
  %v8489 = vsel %vm6550, %v8488, %v8487
  %v8490 = vrot.slane %v6412, 5
  %v8491 = vsel %vm6553, %v8490, %v8489
  %v8492 = vrot.slane %v6414, 4
  %v8493 = vsel %vm6556, %v8492, %v8491
  %v8494 = vrot.slane %v6416, 3
  %v8495 = vsel %vm6559, %v8494, %v8493
  %v8496 = vrot.slane %v6418, 2
  %v8497 = vsel %vm6562, %v8496, %v8495
  %v8498 = vrot.slane %v6420, 1
  %v8499 = vsel %vm6565, %v8498, %v8497
  %v8500 = vrot.slane %v8443, 7
  %v8501 = vsel %vm6547, %v8500, %v7788
  %v8502 = vrot.slane %v6411, 6
  %v8503 = vsel %vm6550, %v8502, %v8501
  %v8504 = vrot.slane %v6413, 5
  %v8505 = vsel %vm6553, %v8504, %v8503
  %v8506 = vrot.slane %v6415, 4
  %v8507 = vsel %vm6556, %v8506, %v8505
  %v8508 = vrot.slane %v6417, 3
  %v8509 = vsel %vm6559, %v8508, %v8507
  %v8510 = vrot.slane %v6419, 2
  %v8511 = vsel %vm6562, %v8510, %v8509
  %v8512 = vrot.slane %v6421, 1
  %v8513 = vsel %vm6565, %v8512, %v8511
  %v8514 = vrot.slane %v6424, 7
  %v8515 = vsel %vm6547, %v8514, %v6422
  %v8516 = vrot.slane %v7789, 6
  %v8517 = vsel %vm6550, %v8516, %v8515
  %v8518 = vrot.slane %v8444, 5
  %v8519 = vsel %vm6553, %v8518, %v8517
  %v8520 = vrot.slane %v6430, 4
  %v8521 = vsel %vm6556, %v8520, %v8519
  %v8522 = vrot.slane %v6432, 3
  %v8523 = vsel %vm6559, %v8522, %v8521
  %v8524 = vrot.slane %v6434, 2
  %v8525 = vsel %vm6562, %v8524, %v8523
  %v8526 = vrot.slane %v6436, 1
  %v8527 = vsel %vm6565, %v8526, %v8525
  %v8528 = vrot.slane %v6425, 7
  %v8529 = vsel %vm6547, %v8528, %v6423
  %v8530 = vrot.slane %v7790, 6
  %v8531 = vsel %vm6550, %v8530, %v8529
  %v8532 = vrot.slane %v8445, 5
  %v8533 = vsel %vm6553, %v8532, %v8531
  %v8534 = vrot.slane %v6431, 4
  %v8535 = vsel %vm6556, %v8534, %v8533
  %v8536 = vrot.slane %v6433, 3
  %v8537 = vsel %vm6559, %v8536, %v8535
  %v8538 = vrot.slane %v6435, 2
  %v8539 = vsel %vm6562, %v8538, %v8537
  %v8540 = vrot.slane %v6437, 1
  %v8541 = vsel %vm6565, %v8540, %v8539
  %v8542 = vrot.slane %v6440, 7
  %v8543 = vsel %vm6547, %v8542, %v6438
  %v8544 = vrot.slane %v6442, 6
  %v8545 = vsel %vm6550, %v8544, %v8543
  %v8546 = vrot.slane %v6444, 5
  %v8547 = vsel %vm6553, %v8546, %v8545
  %v8548 = vrot.slane %v7791, 4
  %v8549 = vsel %vm6556, %v8548, %v8547
  %v8550 = vrot.slane %v8446, 3
  %v8551 = vsel %vm6559, %v8550, %v8549
  %v8552 = vrot.slane %v6450, 2
  %v8553 = vsel %vm6562, %v8552, %v8551
  %v8554 = vrot.slane %v6452, 1
  %v8555 = vsel %vm6565, %v8554, %v8553
  %v8556 = vrot.slane %v6441, 7
  %v8557 = vsel %vm6547, %v8556, %v6439
  %v8558 = vrot.slane %v6443, 6
  %v8559 = vsel %vm6550, %v8558, %v8557
  %v8560 = vrot.slane %v6445, 5
  %v8561 = vsel %vm6553, %v8560, %v8559
  %v8562 = vrot.slane %v7792, 4
  %v8563 = vsel %vm6556, %v8562, %v8561
  %v8564 = vrot.slane %v8447, 3
  %v8565 = vsel %vm6559, %v8564, %v8563
  %v8566 = vrot.slane %v6451, 2
  %v8567 = vsel %vm6562, %v8566, %v8565
  %v8568 = vrot.slane %v6453, 1
  %v8569 = vsel %vm6565, %v8568, %v8567
  %v8570 = vrot.slane %v6456, 7
  %v8571 = vsel %vm6547, %v8570, %v6454
  %v8572 = vrot.slane %v6458, 6
  %v8573 = vsel %vm6550, %v8572, %v8571
  %v8574 = vrot.slane %v6460, 5
  %v8575 = vsel %vm6553, %v8574, %v8573
  %v8576 = vrot.slane %v6462, 4
  %v8577 = vsel %vm6556, %v8576, %v8575
  %v8578 = vrot.slane %v6464, 3
  %v8579 = vsel %vm6559, %v8578, %v8577
  %v8580 = vrot.slane %v7793, 2
  %v8581 = vsel %vm6562, %v8580, %v8579
  %v8582 = vrot.slane %v8448, 1
  %v8583 = vsel %vm6565, %v8582, %v8581
  %v8584 = vrot.slane %v6457, 7
  %v8585 = vsel %vm6547, %v8584, %v6455
  %v8586 = vrot.slane %v6459, 6
  %v8587 = vsel %vm6550, %v8586, %v8585
  %v8588 = vrot.slane %v6461, 5
  %v8589 = vsel %vm6553, %v8588, %v8587
  %v8590 = vrot.slane %v6463, 4
  %v8591 = vsel %vm6556, %v8590, %v8589
  %v8592 = vrot.slane %v6465, 3
  %v8593 = vsel %vm6559, %v8592, %v8591
  %v8594 = vrot.slane %v7794, 2
  %v8595 = vsel %vm6562, %v8594, %v8593
  %v8596 = vrot.slane %v8449, 1
  %v8597 = vsel %vm6565, %v8596, %v8595
  %v8598 = vrot.slane %v6472, 7
  %v8599 = vsel %vm6547, %v8598, %v6470
  %v8600 = vrot.slane %v6474, 6
  %v8601 = vsel %vm6550, %v8600, %v8599
  %v8602 = vrot.slane %v6476, 5
  %v8603 = vsel %vm6553, %v8602, %v8601
  %v8604 = vrot.slane %v6478, 4
  %v8605 = vsel %vm6556, %v8604, %v8603
  %v8606 = vrot.slane %v6480, 3
  %v8607 = vsel %vm6559, %v8606, %v8605
  %v8608 = vrot.slane %v6482, 2
  %v8609 = vsel %vm6562, %v8608, %v8607
  %v8610 = vrot.slane %v6484, 1
  %v8611 = vsel %vm6565, %v8610, %v8609
  %v8612 = vrot.slane %v6473, 7
  %v8613 = vsel %vm6547, %v8612, %v6471
  %v8614 = vrot.slane %v6475, 6
  %v8615 = vsel %vm6550, %v8614, %v8613
  %v8616 = vrot.slane %v6477, 5
  %v8617 = vsel %vm6553, %v8616, %v8615
  %v8618 = vrot.slane %v6479, 4
  %v8619 = vsel %vm6556, %v8618, %v8617
  %v8620 = vrot.slane %v6481, 3
  %v8621 = vsel %vm6559, %v8620, %v8619
  %v8622 = vrot.slane %v6483, 2
  %v8623 = vsel %vm6562, %v8622, %v8621
  %v8624 = vrot.slane %v6485, 1
  %v8625 = vsel %vm6565, %v8624, %v8623
  %v8626 = vrot.slane %v8450, 7
  %v8627 = vsel %vm6547, %v8626, %v7795
  %v8628 = vrot.slane %v6490, 6
  %v8629 = vsel %vm6550, %v8628, %v8627
  %v8630 = vrot.slane %v6492, 5
  %v8631 = vsel %vm6553, %v8630, %v8629
  %v8632 = vrot.slane %v6494, 4
  %v8633 = vsel %vm6556, %v8632, %v8631
  %v8634 = vrot.slane %v6496, 3
  %v8635 = vsel %vm6559, %v8634, %v8633
  %v8636 = vrot.slane %v6498, 2
  %v8637 = vsel %vm6562, %v8636, %v8635
  %v8638 = vrot.slane %v6500, 1
  %v8639 = vsel %vm6565, %v8638, %v8637
  %v8640 = vrot.slane %v8451, 7
  %v8641 = vsel %vm6547, %v8640, %v7796
  %v8642 = vrot.slane %v6491, 6
  %v8643 = vsel %vm6550, %v8642, %v8641
  %v8644 = vrot.slane %v6493, 5
  %v8645 = vsel %vm6553, %v8644, %v8643
  %v8646 = vrot.slane %v6495, 4
  %v8647 = vsel %vm6556, %v8646, %v8645
  %v8648 = vrot.slane %v6497, 3
  %v8649 = vsel %vm6559, %v8648, %v8647
  %v8650 = vrot.slane %v6499, 2
  %v8651 = vsel %vm6562, %v8650, %v8649
  %v8652 = vrot.slane %v6501, 1
  %v8653 = vsel %vm6565, %v8652, %v8651
  %v8654 = vrot.slane %v6504, 7
  %v8655 = vsel %vm6547, %v8654, %v6502
  %v8656 = vrot.slane %v7797, 6
  %v8657 = vsel %vm6550, %v8656, %v8655
  %v8658 = vrot.slane %v8452, 5
  %v8659 = vsel %vm6553, %v8658, %v8657
  %v8660 = vrot.slane %v6510, 4
  %v8661 = vsel %vm6556, %v8660, %v8659
  %v8662 = vrot.slane %v6512, 3
  %v8663 = vsel %vm6559, %v8662, %v8661
  %v8664 = vrot.slane %v6514, 2
  %v8665 = vsel %vm6562, %v8664, %v8663
  %v8666 = vrot.slane %v6516, 1
  %v8667 = vsel %vm6565, %v8666, %v8665
  %v8668 = vrot.slane %v6505, 7
  %v8669 = vsel %vm6547, %v8668, %v6503
  %v8670 = vrot.slane %v7798, 6
  %v8671 = vsel %vm6550, %v8670, %v8669
  %v8672 = vrot.slane %v8453, 5
  %v8673 = vsel %vm6553, %v8672, %v8671
  %v8674 = vrot.slane %v6511, 4
  %v8675 = vsel %vm6556, %v8674, %v8673
  %v8676 = vrot.slane %v6513, 3
  %v8677 = vsel %vm6559, %v8676, %v8675
  %v8678 = vrot.slane %v6515, 2
  %v8679 = vsel %vm6562, %v8678, %v8677
  %v8680 = vrot.slane %v6517, 1
  %v8681 = vsel %vm6565, %v8680, %v8679
  %v8682 = vrot.slane %v6520, 7
  %v8683 = vsel %vm6547, %v8682, %v6518
  %v8684 = vrot.slane %v6522, 6
  %v8685 = vsel %vm6550, %v8684, %v8683
  %v8686 = vrot.slane %v6524, 5
  %v8687 = vsel %vm6553, %v8686, %v8685
  %v8688 = vrot.slane %v7799, 4
  %v8689 = vsel %vm6556, %v8688, %v8687
  %v8690 = vrot.slane %v8454, 3
  %v8691 = vsel %vm6559, %v8690, %v8689
  %v8692 = vrot.slane %v6530, 2
  %v8693 = vsel %vm6562, %v8692, %v8691
  %v8694 = vrot.slane %v6532, 1
  %v8695 = vsel %vm6565, %v8694, %v8693
  %v8696 = vrot.slane %v6521, 7
  %v8697 = vsel %vm6547, %v8696, %v6519
  %v8698 = vrot.slane %v6523, 6
  %v8699 = vsel %vm6550, %v8698, %v8697
  %v8700 = vrot.slane %v6525, 5
  %v8701 = vsel %vm6553, %v8700, %v8699
  %v8702 = vrot.slane %v7800, 4
  %v8703 = vsel %vm6556, %v8702, %v8701
  %v8704 = vrot.slane %v8455, 3
  %v8705 = vsel %vm6559, %v8704, %v8703
  %v8706 = vrot.slane %v6531, 2
  %v8707 = vsel %vm6562, %v8706, %v8705
  %v8708 = vrot.slane %v6533, 1
  %v8709 = vsel %vm6565, %v8708, %v8707
  %v8710 = vrot.slane %v6536, 7
  %v8711 = vsel %vm6547, %v8710, %v6534
  %v8712 = vrot.slane %v6538, 6
  %v8713 = vsel %vm6550, %v8712, %v8711
  %v8714 = vrot.slane %v6540, 5
  %v8715 = vsel %vm6553, %v8714, %v8713
  %v8716 = vrot.slane %v6542, 4
  %v8717 = vsel %vm6556, %v8716, %v8715
  %v8718 = vrot.slane %v6544, 3
  %v8719 = vsel %vm6559, %v8718, %v8717
  %v8720 = vrot.slane %v7801, 2
  %v8721 = vsel %vm6562, %v8720, %v8719
  %v8722 = vrot.slane %v8456, 1
  %v8723 = vsel %vm6565, %v8722, %v8721
  %v8724 = vrot.slane %v6537, 7
  %v8725 = vsel %vm6547, %v8724, %v6535
  %v8726 = vrot.slane %v6539, 6
  %v8727 = vsel %vm6550, %v8726, %v8725
  %v8728 = vrot.slane %v6541, 5
  %v8729 = vsel %vm6553, %v8728, %v8727
  %v8730 = vrot.slane %v6543, 4
  %v8731 = vsel %vm6556, %v8730, %v8729
  %v8732 = vrot.slane %v6545, 3
  %v8733 = vsel %vm6559, %v8732, %v8731
  %v8734 = vrot.slane %v7802, 2
  %v8735 = vsel %vm6562, %v8734, %v8733
  %v8736 = vrot.slane %v8457, 1
  %v8737 = vsel %vm6565, %v8736, %v8735
  %v8738 = vpack.c.b16 %v8499, %v8471
  %v8739 = vpack.c.b16 %v8513, %v8485
  %v8740 = vpack.c.b16 %v8555, %v8527
  %v8741 = vpack.c.b16 %v8569, %v8541
  %v8742 = vpack.c.b16 %v8611, %v8583
  %v8743 = vpack.c.b16 %v8625, %v8597
  %v8744 = vpack.c.b16 %v8667, %v8639
  %v8745 = vpack.c.b16 %v8681, %v8653
  %v8746 = vpack.c.b16 %v8723, %v8695
  %v8747 = vpack.c.b16 %v8737, %v8709
  %v8774 = vunpack.c.l.b16 %v8381
  %v8775 = vunpack.c.h.b16 %v8381
  %v8776 = vunpack.c.l.b16 %v8382
  %v8777 = vunpack.c.h.b16 %v8382
  %v8778 = vunpack.c.l.b16 %v8383
  %v8779 = vunpack.c.h.b16 %v8383
  %v8780 = vunpack.c.l.b16 %v8384
  %v8781 = vunpack.c.h.b16 %v8384
  %v8782 = vunpack.c.l.b16 %v8385
  %v8783 = vunpack.c.h.b16 %v8385
  %v8784 = vunpack.c.l.b16 %v8386
  %v8785 = vunpack.c.h.b16 %v8386
  %v8786 = vunpack.c.l.b16 %v8387
  %v8787 = vunpack.c.h.b16 %v8387
  %v8788 = vunpack.c.l.b16 %v8388
  %v8789 = vunpack.c.h.b16 %v8388
  %v8790 = vunpack.c.l.b16 %v8389
  %v8791 = vunpack.c.h.b16 %v8389
  %v8792 = vunpack.c.l.b16 %v8390
  %v8793 = vunpack.c.h.b16 %v8390
  %v8794 = vunpack.c.l.b16 %v8391
  %v8795 = vunpack.c.h.b16 %v8391
  %v8796 = vunpack.c.l.b16 %v8392
  %v8797 = vunpack.c.h.b16 %v8392
  %v8798 = vunpack.c.l.b16 %v8393
  %v8799 = vunpack.c.h.b16 %v8393
  %v8800 = vunpack.c.l.b16 %v8394
  %v8801 = vunpack.c.h.b16 %v8394
  %v8802 = vunpack.c.l.b16 %v8395
  %v8803 = vunpack.c.h.b16 %v8395
  %v8804 = vunpack.c.l.b16 %v8396
  %v8805 = vunpack.c.h.b16 %v8396
  %v8806 = vunpack.c.l.b16 %v8397
  %v8807 = vunpack.c.h.b16 %v8397
  %v8808 = vunpack.c.l.b16 %v8398
  %v8809 = vunpack.c.h.b16 %v8398
  %v8810 = vunpack.c.l.b16 %v8399
  %v8811 = vunpack.c.h.b16 %v8399
  %v8812 = vunpack.c.l.b16 %v8400
  %v8813 = vunpack.c.h.b16 %v8400
  %v8814 = vunpack.c.l.b16 %v8401
  %v8815 = vunpack.c.h.b16 %v8401
  %v8816 = vpack.c.b16 %v8776, %v8774
  %v8817 = vpack.c.b16 %v8777, %v8775
  %v8818 = vpack.c.b16 %v8780, %v8778
  %v8819 = vpack.c.b16 %v8781, %v8779
  %v8820 = vpack.c.b16 %v8784, %v8782
  %v8821 = vpack.c.b16 %v8785, %v8783
  %v8822 = vpack.c.b16 %v8788, %v8786
  %v8823 = vpack.c.b16 %v8789, %v8787
  %v8824 = vpack.c.b16 %v8792, %v8790
  %v8825 = vpack.c.b16 %v8793, %v8791
  %v8826 = vpack.c.b16 %v8796, %v8794
  %v8827 = vpack.c.b16 %v8797, %v8795
  %v8828 = vpack.c.b16 %v8800, %v8798
  %v8829 = vpack.c.b16 %v8801, %v8799
  %v8830 = vpack.c.b16 %v8804, %v8802
  %v8831 = vpack.c.b16 %v8805, %v8803
  %v8832 = vpack.c.b16 %v8808, %v8806
  %v8833 = vpack.c.b16 %v8809, %v8807
  %v8834 = vpack.c.b16 %v8812, %v8810
  %v8835 = vpack.c.b16 %v8813, %v8811
  %v8836 = vpack.c.b16 %v8814, %v8814
  %v8837 = vpack.c.b16 %v8815, %v8815
  %v8859 = vsel %vm6953, %v8739, 0
  %v8862 = vsel %vm6953, %v8741, 0
  %v8865 = vsel %vm6953, %v8743, 0
  %v8868 = vsel %vm6953, %v8745, 0
  %v8871 = vsel %vm6953, %v8747, 0
  %v8874 = vsel %vm6969, %v8836, 0
  %v8877 = vsel %vm6969, %v8837, 0
  %8879 = vmatpush.bf16.msra.mxu0 %v8830
  %8880 = vmatpush.bf16.msra.mxu0 %v8828
  %8881 = vmatpush.bf16.msra.mxu0 %v8826
  %8882 = vmatpush.bf16.msra.mxu0 %v8824
  %8883 = vmatpush.bf16.msra.mxu0 %v8822
  %8884 = vmatpush.bf16.msra.mxu0 %v8820
  %8885 = vmatpush.bf16.msra.mxu0 %v8818
  %8886 = vmatpush.bf16.msra.mxu0 %v8816
  %8887 = vmatmul.bf16.gmra.mxu0 %v8738
  %v8888 = vpop.f32.mrf.mxu0
  %v8889 = vadd.f32 0.0, %v8888
  %v8890 = vpop.f32.mrf.mxu0
  %v8891 = vadd.f32 0.0, %v8890
  %8892 = vmatmul.bf16.gmra.mxu0 %v8740
  %v8893 = vpop.f32.mrf.mxu0
  %v8894 = vadd.f32 0.0, %v8893
  %v8895 = vpop.f32.mrf.mxu0
  %v8896 = vadd.f32 0.0, %v8895
  %8897 = vmatmul.bf16.gmra.mxu0 %v8742
  %v8898 = vpop.f32.mrf.mxu0
  %v8899 = vadd.f32 0.0, %v8898
  %v8900 = vpop.f32.mrf.mxu0
  %v8901 = vadd.f32 0.0, %v8900
  %8902 = vmatmul.bf16.gmra.mxu0 %v8744
  %v8903 = vpop.f32.mrf.mxu0
  %v8904 = vadd.f32 0.0, %v8903
  %v8905 = vpop.f32.mrf.mxu0
  %v8906 = vadd.f32 0.0, %v8905
  %8907 = vmatmul.bf16.gmra.mxu0 %v8746
  %v8908 = vpop.f32.mrf.mxu0
  %v8909 = vadd.f32 0.0, %v8908
  %v8910 = vpop.f32.mrf.mxu0
  %v8911 = vadd.f32 0.0, %v8910
  %8912 = vdwg.mxu0
  %8913 = vmatpush.bf16.msra.mxu0 0
  %8914 = vmatpush.bf16.msra.mxu0 0
  %8915 = vmatpush.bf16.msra.mxu0 0
  %8916 = vmatpush.bf16.msra.mxu0 0
  %8917 = vmatpush.bf16.msra.mxu0 0
  %8918 = vmatpush.bf16.msra.mxu0 %v8874
  %8919 = vmatpush.bf16.msra.mxu0 %v8834
  %8920 = vmatpush.bf16.msra.mxu0 %v8832
  %8921 = vmatmul.bf16.gmra.mxu0 %v8859
  %v8922 = vpop.f32.mrf.mxu0
  %v8923 = vadd.f32 %v8889, %v8922
  %v8924 = vpop.f32.mrf.mxu0
  %v8925 = vadd.f32 %v8891, %v8924
  %8926 = vmatmul.bf16.gmra.mxu0 %v8862
  %v8927 = vpop.f32.mrf.mxu0
  %v8928 = vadd.f32 %v8894, %v8927
  %v8929 = vpop.f32.mrf.mxu0
  %v8930 = vadd.f32 %v8896, %v8929
  %8931 = vmatmul.bf16.gmra.mxu0 %v8865
  %v8932 = vpop.f32.mrf.mxu0
  %v8933 = vadd.f32 %v8899, %v8932
  %v8934 = vpop.f32.mrf.mxu0
  %v8935 = vadd.f32 %v8901, %v8934
  %8936 = vmatmul.bf16.gmra.mxu0 %v8868
  %v8937 = vpop.f32.mrf.mxu0
  %v8938 = vadd.f32 %v8904, %v8937
  %v8939 = vpop.f32.mrf.mxu0
  %v8940 = vadd.f32 %v8906, %v8939
  %8941 = vmatmul.bf16.gmra.mxu0 %v8871
  %v8942 = vpop.f32.mrf.mxu0
  %v8943 = vadd.f32 %v8909, %v8942
  %v8944 = vpop.f32.mrf.mxu0
  %v8945 = vadd.f32 %v8911, %v8944
  %8946 = vdwg.mxu0
  %8947 = vmatpush.bf16.msra.mxu0 %v8831
  %8948 = vmatpush.bf16.msra.mxu0 %v8829
  %8949 = vmatpush.bf16.msra.mxu0 %v8827
  %8950 = vmatpush.bf16.msra.mxu0 %v8825
  %8951 = vmatpush.bf16.msra.mxu0 %v8823
  %8952 = vmatpush.bf16.msra.mxu0 %v8821
  %8953 = vmatpush.bf16.msra.mxu0 %v8819
  %8954 = vmatpush.bf16.msra.mxu0 %v8817
  %8955 = vmatmul.bf16.gmra.mxu0 %v8738
  %v8956 = vpop.f32.mrf.mxu0
  %v8957 = vadd.f32 0.0, %v8956
  %v8958 = vpop.f32.mrf.mxu0
  %v8959 = vadd.f32 0.0, %v8958
  %8960 = vmatmul.bf16.gmra.mxu0 %v8740
  %v8961 = vpop.f32.mrf.mxu0
  %v8962 = vadd.f32 0.0, %v8961
  %v8963 = vpop.f32.mrf.mxu0
  %v8964 = vadd.f32 0.0, %v8963
  %8965 = vmatmul.bf16.gmra.mxu0 %v8742
  %v8966 = vpop.f32.mrf.mxu0
  %v8967 = vadd.f32 0.0, %v8966
  %v8968 = vpop.f32.mrf.mxu0
  %v8969 = vadd.f32 0.0, %v8968
  %8970 = vmatmul.bf16.gmra.mxu0 %v8744
  %v8971 = vpop.f32.mrf.mxu0
  %v8972 = vadd.f32 0.0, %v8971
  %v8973 = vpop.f32.mrf.mxu0
  %v8974 = vadd.f32 0.0, %v8973
  %8975 = vmatmul.bf16.gmra.mxu0 %v8746
  %v8976 = vpop.f32.mrf.mxu0
  %v8977 = vadd.f32 0.0, %v8976
  %v8978 = vpop.f32.mrf.mxu0
  %v8979 = vadd.f32 0.0, %v8978
  %8980 = vdwg.mxu0
  %8981 = vmatpush.bf16.msra.mxu0 0
  %8982 = vmatpush.bf16.msra.mxu0 0
  %8983 = vmatpush.bf16.msra.mxu0 0
  %8984 = vmatpush.bf16.msra.mxu0 0
  %8985 = vmatpush.bf16.msra.mxu0 0
  %8986 = vmatpush.bf16.msra.mxu0 %v8877
  %8987 = vmatpush.bf16.msra.mxu0 %v8835
  %8988 = vmatpush.bf16.msra.mxu0 %v8833
  %8989 = vmatmul.bf16.gmra.mxu0 %v8859
  %v8990 = vpop.f32.mrf.mxu0
  %v8991 = vadd.f32 %v8957, %v8990
  %v8992 = vpop.f32.mrf.mxu0
  %v8993 = vadd.f32 %v8959, %v8992
  %8994 = vmatmul.bf16.gmra.mxu0 %v8862
  %v8995 = vpop.f32.mrf.mxu0
  %v8996 = vadd.f32 %v8962, %v8995
  %v8997 = vpop.f32.mrf.mxu0
  %v8998 = vadd.f32 %v8964, %v8997
  %8999 = vmatmul.bf16.gmra.mxu0 %v8865
  %v9000 = vpop.f32.mrf.mxu0
  %v9001 = vadd.f32 %v8967, %v9000
  %v9002 = vpop.f32.mrf.mxu0
  %v9003 = vadd.f32 %v8969, %v9002
  %9004 = vmatmul.bf16.gmra.mxu0 %v8868
  %v9005 = vpop.f32.mrf.mxu0
  %v9006 = vadd.f32 %v8972, %v9005
  %v9007 = vpop.f32.mrf.mxu0
  %v9008 = vadd.f32 %v8974, %v9007
  %9009 = vmatmul.bf16.gmra.mxu0 %v8871
  %v9010 = vpop.f32.mrf.mxu0
  %v9011 = vadd.f32 %v8977, %v9010
  %v9012 = vpop.f32.mrf.mxu0
  %v9013 = vadd.f32 %v8979, %v9012
  %9014 = vdwg.mxu0
  %v9015 = vadd.f32 %v8360, %v8923
  %v9016 = vadd.f32 %v8361, %v8991
  %v9017 = vadd.f32 %v8362, %v8925
  %v9018 = vadd.f32 %v8363, %v8993
  %v9019 = vadd.f32 %v8364, %v8928
  %v9020 = vadd.f32 %v8365, %v8996
  %v9021 = vadd.f32 %v8366, %v8930
  %v9022 = vadd.f32 %v8367, %v8998
  %v9023 = vadd.f32 %v8368, %v8933
  %v9024 = vadd.f32 %v8369, %v9001
  %v9025 = vadd.f32 %v8370, %v8935
  %v9026 = vadd.f32 %v8371, %v9003
  %v9027 = vadd.f32 %v8372, %v8938
  %v9028 = vadd.f32 %v8373, %v9006
  %v9029 = vadd.f32 %v8374, %v8940
  %v9030 = vadd.f32 %v8375, %v9008
  %v9031 = vadd.f32 %v8376, %v8943
  %v9032 = vadd.f32 %v8377, %v9011
  %v9033 = vadd.f32 %v8378, %v8945
  %v9034 = vadd.f32 %v8379, %v9013
  %s9035 = scalar_lea.vmem %s3, 672
  %v9036 = vld [vmem:[%s9035] sm:$0xff]
  %v9037 = vld [vmem:[%s9035 + $0x8] sm:$0xff]
  %v9038 = vld [vmem:[%s9035 + $0x10] sm:$0xff]
  %v9039 = vld [vmem:[%s9035 + $0x18] sm:$0xff]
  %v9040 = vld [vmem:[%s9035 + $0x20] sm:$0xff]
  %v9041 = vld [vmem:[%s9035 + $0x28] sm:$0xff]
  %v9042 = vld [vmem:[%s9035 + $0x30] sm:$0xff]
  %v9043 = vld [vmem:[%s9035 + $0x38] sm:$0xff]
  %v9044 = vld [vmem:[%s9035 + $0x40] sm:$0xff]
  %v9045 = vld [vmem:[%s9035 + $0x48] sm:$0xff]
  %v9046 = vld [vmem:[%s9035 + $0x50] sm:$0xff]
  %v9047 = vld [vmem:[%s9035 + $0x58] sm:$0xff]
  %v9048 = vld [vmem:[%s9035 + $0x60] sm:$0xff]
  %v9049 = vld [vmem:[%s9035 + $0x68] sm:$0xff]
  %v9050 = vld [vmem:[%s9035 + $0x70] sm:$0xff]
  %v9051 = vld [vmem:[%s9035 + $0x78] sm:$0xff]
  %v9052 = vld [vmem:[%s9035 + $0x80] sm:$0xff]
  %v9053 = vld [vmem:[%s9035 + $0x88] sm:$0xff]
  %v9054 = vld [vmem:[%s9035 + $0x90] sm:$0xff]
  %v9055 = vld [vmem:[%s9035 + $0x98] sm:$0xff]
  %v9056 = vld [vmem:[%s9035 + $0xa0] sm:$0x11]
  %v9065 = vunpack.c.l.b16 %v5844
  %v9066 = vunpack.c.h.b16 %v5844
  %v9067 = vunpack.c.l.b16 %v5858
  %v9068 = vunpack.c.h.b16 %v5858
  %v9069 = vunpack.c.l.b16 %v5872
  %v9070 = vunpack.c.h.b16 %v5872
  %v9071 = vunpack.c.l.b16 %v5886
  %v9072 = vunpack.c.h.b16 %v5886
  %v9073 = vunpack.c.l.b16 %v5900
  %v9074 = vunpack.c.h.b16 %v5900
  %v9075 = vunpack.c.l.b16 %v5914
  %v9076 = vunpack.c.h.b16 %v5914
  %v9077 = vunpack.c.l.b16 %v5928
  %v9078 = vunpack.c.h.b16 %v5928
  %v9079 = vunpack.c.l.b16 %v5942
  %v9080 = vunpack.c.h.b16 %v5942
  %v9081 = vpack.c.b16 %v9065, %v9065
  %v9082 = vpack.c.b16 %v9066, %v9066
  %v9083 = vpack.c.b16 %v9067, %v9067
  %v9084 = vpack.c.b16 %v9068, %v9068
  %v9085 = vpack.c.b16 %v9069, %v9069
  %v9086 = vpack.c.b16 %v9070, %v9070
  %v9087 = vpack.c.b16 %v9071, %v9071
  %v9088 = vpack.c.b16 %v9072, %v9072
  %v9089 = vpack.c.b16 %v9073, %v9073
  %v9090 = vpack.c.b16 %v9074, %v9074
  %v9091 = vpack.c.b16 %v9075, %v9075
  %v9092 = vpack.c.b16 %v9076, %v9076
  %v9093 = vpack.c.b16 %v9077, %v9077
  %v9094 = vpack.c.b16 %v9078, %v9078
  %v9095 = vpack.c.b16 %v9079, %v9079
  %v9096 = vpack.c.b16 %v9080, %v9080
  %v9097 = vunpack.c.l.b16 %v9081
  %v9098 = vunpack.c.l.b16 %v9082
  %v9099 = vunpack.c.l.b16 %v9083
  %v9100 = vunpack.c.l.b16 %v9084
  %v9101 = vunpack.c.l.b16 %v9085
  %v9102 = vunpack.c.l.b16 %v9086
  %v9103 = vunpack.c.l.b16 %v9087
  %v9104 = vunpack.c.l.b16 %v9088
  %v9105 = vunpack.c.l.b16 %v9089
  %v9106 = vunpack.c.l.b16 %v9090
  %v9107 = vunpack.c.l.b16 %v9091
  %v9108 = vunpack.c.l.b16 %v9092
  %v9109 = vunpack.c.l.b16 %v9093
  %v9110 = vunpack.c.l.b16 %v9094
  %v9111 = vunpack.c.l.b16 %v9095
  %v9112 = vunpack.c.l.b16 %v9096
  %v9113 = vrot.slane %v6394, 7
  %v9114 = vsel %vm6547, %v9113, %v6392
  %v9115 = vrot.slane %v6396, 6
  %v9116 = vsel %vm6550, %v9115, %v9114
  %v9117 = vrot.slane %v6398, 5
  %v9118 = vsel %vm6553, %v9117, %v9116
  %v9119 = vrot.slane %v6400, 4
  %v9120 = vsel %vm6556, %v9119, %v9118
  %v9121 = vrot.slane %v6402, 3
  %v9122 = vsel %vm6559, %v9121, %v9120
  %v9123 = vrot.slane %v6404, 2
  %v9124 = vsel %vm6562, %v9123, %v9122
  %v9125 = vrot.slane %v7787, 1
  %v9126 = vsel %vm6565, %v9125, %v9124
  %v9127 = vrot.slane %v6395, 7
  %v9128 = vsel %vm6547, %v9127, %v6393
  %v9129 = vrot.slane %v6397, 6
  %v9130 = vsel %vm6550, %v9129, %v9128
  %v9131 = vrot.slane %v6399, 5
  %v9132 = vsel %vm6553, %v9131, %v9130
  %v9133 = vrot.slane %v6401, 4
  %v9134 = vsel %vm6556, %v9133, %v9132
  %v9135 = vrot.slane %v6403, 3
  %v9136 = vsel %vm6559, %v9135, %v9134
  %v9137 = vrot.slane %v6405, 2
  %v9138 = vsel %vm6562, %v9137, %v9136
  %v9139 = vrot.slane %v7788, 1
  %v9140 = vsel %vm6565, %v9139, %v9138
  %v9141 = vrot.slane %v9097, 7
  %v9142 = vsel %vm6547, %v9141, %v8442
  %v9143 = vrot.slane %v6412, 6
  %v9144 = vsel %vm6550, %v9143, %v9142
  %v9145 = vrot.slane %v6414, 5
  %v9146 = vsel %vm6553, %v9145, %v9144
  %v9147 = vrot.slane %v6416, 4
  %v9148 = vsel %vm6556, %v9147, %v9146
  %v9149 = vrot.slane %v6418, 3
  %v9150 = vsel %vm6559, %v9149, %v9148
  %v9151 = vrot.slane %v6420, 2
  %v9152 = vsel %vm6562, %v9151, %v9150
  %v9153 = vrot.slane %v6422, 1
  %v9154 = vsel %vm6565, %v9153, %v9152
  %v9155 = vrot.slane %v9098, 7
  %v9156 = vsel %vm6547, %v9155, %v8443
  %v9157 = vrot.slane %v6413, 6
  %v9158 = vsel %vm6550, %v9157, %v9156
  %v9159 = vrot.slane %v6415, 5
  %v9160 = vsel %vm6553, %v9159, %v9158
  %v9161 = vrot.slane %v6417, 4
  %v9162 = vsel %vm6556, %v9161, %v9160
  %v9163 = vrot.slane %v6419, 3
  %v9164 = vsel %vm6559, %v9163, %v9162
  %v9165 = vrot.slane %v6421, 2
  %v9166 = vsel %vm6562, %v9165, %v9164
  %v9167 = vrot.slane %v6423, 1
  %v9168 = vsel %vm6565, %v9167, %v9166
  %v9169 = vrot.slane %v7789, 7
  %v9170 = vsel %vm6547, %v9169, %v6424
  %v9171 = vrot.slane %v8444, 6
  %v9172 = vsel %vm6550, %v9171, %v9170
  %v9173 = vrot.slane %v9099, 5
  %v9174 = vsel %vm6553, %v9173, %v9172
  %v9175 = vrot.slane %v6432, 4
  %v9176 = vsel %vm6556, %v9175, %v9174
  %v9177 = vrot.slane %v6434, 3
  %v9178 = vsel %vm6559, %v9177, %v9176
  %v9179 = vrot.slane %v6436, 2
  %v9180 = vsel %vm6562, %v9179, %v9178
  %v9181 = vrot.slane %v6438, 1
  %v9182 = vsel %vm6565, %v9181, %v9180
  %v9183 = vrot.slane %v7790, 7
  %v9184 = vsel %vm6547, %v9183, %v6425
  %v9185 = vrot.slane %v8445, 6
  %v9186 = vsel %vm6550, %v9185, %v9184
  %v9187 = vrot.slane %v9100, 5
  %v9188 = vsel %vm6553, %v9187, %v9186
  %v9189 = vrot.slane %v6433, 4
  %v9190 = vsel %vm6556, %v9189, %v9188
  %v9191 = vrot.slane %v6435, 3
  %v9192 = vsel %vm6559, %v9191, %v9190
  %v9193 = vrot.slane %v6437, 2
  %v9194 = vsel %vm6562, %v9193, %v9192
  %v9195 = vrot.slane %v6439, 1
  %v9196 = vsel %vm6565, %v9195, %v9194
  %v9197 = vrot.slane %v6442, 7
  %v9198 = vsel %vm6547, %v9197, %v6440
  %v9199 = vrot.slane %v6444, 6
  %v9200 = vsel %vm6550, %v9199, %v9198
  %v9201 = vrot.slane %v7791, 5
  %v9202 = vsel %vm6553, %v9201, %v9200
  %v9203 = vrot.slane %v8446, 4
  %v9204 = vsel %vm6556, %v9203, %v9202
  %v9205 = vrot.slane %v9101, 3
  %v9206 = vsel %vm6559, %v9205, %v9204
  %v9207 = vrot.slane %v6452, 2
  %v9208 = vsel %vm6562, %v9207, %v9206
  %v9209 = vrot.slane %v6454, 1
  %v9210 = vsel %vm6565, %v9209, %v9208
  %v9211 = vrot.slane %v6443, 7
  %v9212 = vsel %vm6547, %v9211, %v6441
  %v9213 = vrot.slane %v6445, 6
  %v9214 = vsel %vm6550, %v9213, %v9212
  %v9215 = vrot.slane %v7792, 5
  %v9216 = vsel %vm6553, %v9215, %v9214
  %v9217 = vrot.slane %v8447, 4
  %v9218 = vsel %vm6556, %v9217, %v9216
  %v9219 = vrot.slane %v9102, 3
  %v9220 = vsel %vm6559, %v9219, %v9218
  %v9221 = vrot.slane %v6453, 2
  %v9222 = vsel %vm6562, %v9221, %v9220
  %v9223 = vrot.slane %v6455, 1
  %v9224 = vsel %vm6565, %v9223, %v9222
  %v9225 = vrot.slane %v6458, 7
  %v9226 = vsel %vm6547, %v9225, %v6456
  %v9227 = vrot.slane %v6460, 6
  %v9228 = vsel %vm6550, %v9227, %v9226
  %v9229 = vrot.slane %v6462, 5
  %v9230 = vsel %vm6553, %v9229, %v9228
  %v9231 = vrot.slane %v6464, 4
  %v9232 = vsel %vm6556, %v9231, %v9230
  %v9233 = vrot.slane %v7793, 3
  %v9234 = vsel %vm6559, %v9233, %v9232
  %v9235 = vrot.slane %v8448, 2
  %v9236 = vsel %vm6562, %v9235, %v9234
  %v9237 = vrot.slane %v9103, 1
  %v9238 = vsel %vm6565, %v9237, %v9236
  %v9239 = vrot.slane %v6459, 7
  %v9240 = vsel %vm6547, %v9239, %v6457
  %v9241 = vrot.slane %v6461, 6
  %v9242 = vsel %vm6550, %v9241, %v9240
  %v9243 = vrot.slane %v6463, 5
  %v9244 = vsel %vm6553, %v9243, %v9242
  %v9245 = vrot.slane %v6465, 4
  %v9246 = vsel %vm6556, %v9245, %v9244
  %v9247 = vrot.slane %v7794, 3
  %v9248 = vsel %vm6559, %v9247, %v9246
  %v9249 = vrot.slane %v8449, 2
  %v9250 = vsel %vm6562, %v9249, %v9248
  %v9251 = vrot.slane %v9104, 1
  %v9252 = vsel %vm6565, %v9251, %v9250
  %v9253 = vrot.slane %v6474, 7
  %v9254 = vsel %vm6547, %v9253, %v6472
  %v9255 = vrot.slane %v6476, 6
  %v9256 = vsel %vm6550, %v9255, %v9254
  %v9257 = vrot.slane %v6478, 5
  %v9258 = vsel %vm6553, %v9257, %v9256
  %v9259 = vrot.slane %v6480, 4
  %v9260 = vsel %vm6556, %v9259, %v9258
  %v9261 = vrot.slane %v6482, 3
  %v9262 = vsel %vm6559, %v9261, %v9260
  %v9263 = vrot.slane %v6484, 2
  %v9264 = vsel %vm6562, %v9263, %v9262
  %v9265 = vrot.slane %v7795, 1
  %v9266 = vsel %vm6565, %v9265, %v9264
  %v9267 = vrot.slane %v6475, 7
  %v9268 = vsel %vm6547, %v9267, %v6473
  %v9269 = vrot.slane %v6477, 6
  %v9270 = vsel %vm6550, %v9269, %v9268
  %v9271 = vrot.slane %v6479, 5
  %v9272 = vsel %vm6553, %v9271, %v9270
  %v9273 = vrot.slane %v6481, 4
  %v9274 = vsel %vm6556, %v9273, %v9272
  %v9275 = vrot.slane %v6483, 3
  %v9276 = vsel %vm6559, %v9275, %v9274
  %v9277 = vrot.slane %v6485, 2
  %v9278 = vsel %vm6562, %v9277, %v9276
  %v9279 = vrot.slane %v7796, 1
  %v9280 = vsel %vm6565, %v9279, %v9278
  %v9281 = vrot.slane %v9105, 7
  %v9282 = vsel %vm6547, %v9281, %v8450
  %v9283 = vrot.slane %v6492, 6
  %v9284 = vsel %vm6550, %v9283, %v9282
  %v9285 = vrot.slane %v6494, 5
  %v9286 = vsel %vm6553, %v9285, %v9284
  %v9287 = vrot.slane %v6496, 4
  %v9288 = vsel %vm6556, %v9287, %v9286
  %v9289 = vrot.slane %v6498, 3
  %v9290 = vsel %vm6559, %v9289, %v9288
  %v9291 = vrot.slane %v6500, 2
  %v9292 = vsel %vm6562, %v9291, %v9290
  %v9293 = vrot.slane %v6502, 1
  %v9294 = vsel %vm6565, %v9293, %v9292
  %v9295 = vrot.slane %v9106, 7
  %v9296 = vsel %vm6547, %v9295, %v8451
  %v9297 = vrot.slane %v6493, 6
  %v9298 = vsel %vm6550, %v9297, %v9296
  %v9299 = vrot.slane %v6495, 5
  %v9300 = vsel %vm6553, %v9299, %v9298
  %v9301 = vrot.slane %v6497, 4
  %v9302 = vsel %vm6556, %v9301, %v9300
  %v9303 = vrot.slane %v6499, 3
  %v9304 = vsel %vm6559, %v9303, %v9302
  %v9305 = vrot.slane %v6501, 2
  %v9306 = vsel %vm6562, %v9305, %v9304
  %v9307 = vrot.slane %v6503, 1
  %v9308 = vsel %vm6565, %v9307, %v9306
  %v9309 = vrot.slane %v7797, 7
  %v9310 = vsel %vm6547, %v9309, %v6504
  %v9311 = vrot.slane %v8452, 6
  %v9312 = vsel %vm6550, %v9311, %v9310
  %v9313 = vrot.slane %v9107, 5
  %v9314 = vsel %vm6553, %v9313, %v9312
  %v9315 = vrot.slane %v6512, 4
  %v9316 = vsel %vm6556, %v9315, %v9314
  %v9317 = vrot.slane %v6514, 3
  %v9318 = vsel %vm6559, %v9317, %v9316
  %v9319 = vrot.slane %v6516, 2
  %v9320 = vsel %vm6562, %v9319, %v9318
  %v9321 = vrot.slane %v6518, 1
  %v9322 = vsel %vm6565, %v9321, %v9320
  %v9323 = vrot.slane %v7798, 7
  %v9324 = vsel %vm6547, %v9323, %v6505
  %v9325 = vrot.slane %v8453, 6
  %v9326 = vsel %vm6550, %v9325, %v9324
  %v9327 = vrot.slane %v9108, 5
  %v9328 = vsel %vm6553, %v9327, %v9326
  %v9329 = vrot.slane %v6513, 4
  %v9330 = vsel %vm6556, %v9329, %v9328
  %v9331 = vrot.slane %v6515, 3
  %v9332 = vsel %vm6559, %v9331, %v9330
  %v9333 = vrot.slane %v6517, 2
  %v9334 = vsel %vm6562, %v9333, %v9332
  %v9335 = vrot.slane %v6519, 1
  %v9336 = vsel %vm6565, %v9335, %v9334
  %v9337 = vrot.slane %v6522, 7
  %v9338 = vsel %vm6547, %v9337, %v6520
  %v9339 = vrot.slane %v6524, 6
  %v9340 = vsel %vm6550, %v9339, %v9338
  %v9341 = vrot.slane %v7799, 5
  %v9342 = vsel %vm6553, %v9341, %v9340
  %v9343 = vrot.slane %v8454, 4
  %v9344 = vsel %vm6556, %v9343, %v9342
  %v9345 = vrot.slane %v9109, 3
  %v9346 = vsel %vm6559, %v9345, %v9344
  %v9347 = vrot.slane %v6532, 2
  %v9348 = vsel %vm6562, %v9347, %v9346
  %v9349 = vrot.slane %v6534, 1
  %v9350 = vsel %vm6565, %v9349, %v9348
  %v9351 = vrot.slane %v6523, 7
  %v9352 = vsel %vm6547, %v9351, %v6521
  %v9353 = vrot.slane %v6525, 6
  %v9354 = vsel %vm6550, %v9353, %v9352
  %v9355 = vrot.slane %v7800, 5
  %v9356 = vsel %vm6553, %v9355, %v9354
  %v9357 = vrot.slane %v8455, 4
  %v9358 = vsel %vm6556, %v9357, %v9356
  %v9359 = vrot.slane %v9110, 3
  %v9360 = vsel %vm6559, %v9359, %v9358
  %v9361 = vrot.slane %v6533, 2
  %v9362 = vsel %vm6562, %v9361, %v9360
  %v9363 = vrot.slane %v6535, 1
  %v9364 = vsel %vm6565, %v9363, %v9362
  %v9365 = vrot.slane %v6538, 7
  %v9366 = vsel %vm6547, %v9365, %v6536
  %v9367 = vrot.slane %v6540, 6
  %v9368 = vsel %vm6550, %v9367, %v9366
  %v9369 = vrot.slane %v6542, 5
  %v9370 = vsel %vm6553, %v9369, %v9368
  %v9371 = vrot.slane %v6544, 4
  %v9372 = vsel %vm6556, %v9371, %v9370
  %v9373 = vrot.slane %v7801, 3
  %v9374 = vsel %vm6559, %v9373, %v9372
  %v9375 = vrot.slane %v8456, 2
  %v9376 = vsel %vm6562, %v9375, %v9374
  %v9377 = vrot.slane %v9111, 1
  %v9378 = vsel %vm6565, %v9377, %v9376
  %v9379 = vrot.slane %v6539, 7
  %v9380 = vsel %vm6547, %v9379, %v6537
  %v9381 = vrot.slane %v6541, 6
  %v9382 = vsel %vm6550, %v9381, %v9380
  %v9383 = vrot.slane %v6543, 5
  %v9384 = vsel %vm6553, %v9383, %v9382
  %v9385 = vrot.slane %v6545, 4
  %v9386 = vsel %vm6556, %v9385, %v9384
  %v9387 = vrot.slane %v7802, 3
  %v9388 = vsel %vm6559, %v9387, %v9386
  %v9389 = vrot.slane %v8457, 2
  %v9390 = vsel %vm6562, %v9389, %v9388
  %v9391 = vrot.slane %v9112, 1
  %v9392 = vsel %vm6565, %v9391, %v9390
  %v9393 = vpack.c.b16 %v9154, %v9126
  %v9394 = vpack.c.b16 %v9168, %v9140
  %v9395 = vpack.c.b16 %v9210, %v9182
  %v9396 = vpack.c.b16 %v9224, %v9196
  %v9397 = vpack.c.b16 %v9266, %v9238
  %v9398 = vpack.c.b16 %v9280, %v9252
  %v9399 = vpack.c.b16 %v9322, %v9294
  %v9400 = vpack.c.b16 %v9336, %v9308
  %v9401 = vpack.c.b16 %v9378, %v9350
  %v9402 = vpack.c.b16 %v9392, %v9364
  %v9429 = vunpack.c.l.b16 %v9036
  %v9430 = vunpack.c.h.b16 %v9036
  %v9431 = vunpack.c.l.b16 %v9037
  %v9432 = vunpack.c.h.b16 %v9037
  %v9433 = vunpack.c.l.b16 %v9038
  %v9434 = vunpack.c.h.b16 %v9038
  %v9435 = vunpack.c.l.b16 %v9039
  %v9436 = vunpack.c.h.b16 %v9039
  %v9437 = vunpack.c.l.b16 %v9040
  %v9438 = vunpack.c.h.b16 %v9040
  %v9439 = vunpack.c.l.b16 %v9041
  %v9440 = vunpack.c.h.b16 %v9041
  %v9441 = vunpack.c.l.b16 %v9042
  %v9442 = vunpack.c.h.b16 %v9042
  %v9443 = vunpack.c.l.b16 %v9043
  %v9444 = vunpack.c.h.b16 %v9043
  %v9445 = vunpack.c.l.b16 %v9044
  %v9446 = vunpack.c.h.b16 %v9044
  %v9447 = vunpack.c.l.b16 %v9045
  %v9448 = vunpack.c.h.b16 %v9045
  %v9449 = vunpack.c.l.b16 %v9046
  %v9450 = vunpack.c.h.b16 %v9046
  %v9451 = vunpack.c.l.b16 %v9047
  %v9452 = vunpack.c.h.b16 %v9047
  %v9453 = vunpack.c.l.b16 %v9048
  %v9454 = vunpack.c.h.b16 %v9048
  %v9455 = vunpack.c.l.b16 %v9049
  %v9456 = vunpack.c.h.b16 %v9049
  %v9457 = vunpack.c.l.b16 %v9050
  %v9458 = vunpack.c.h.b16 %v9050
  %v9459 = vunpack.c.l.b16 %v9051
  %v9460 = vunpack.c.h.b16 %v9051
  %v9461 = vunpack.c.l.b16 %v9052
  %v9462 = vunpack.c.h.b16 %v9052
  %v9463 = vunpack.c.l.b16 %v9053
  %v9464 = vunpack.c.h.b16 %v9053
  %v9465 = vunpack.c.l.b16 %v9054
  %v9466 = vunpack.c.h.b16 %v9054
  %v9467 = vunpack.c.l.b16 %v9055
  %v9468 = vunpack.c.h.b16 %v9055
  %v9469 = vunpack.c.l.b16 %v9056
  %v9470 = vunpack.c.h.b16 %v9056
  %v9471 = vpack.c.b16 %v9431, %v9429
  %v9472 = vpack.c.b16 %v9432, %v9430
  %v9473 = vpack.c.b16 %v9435, %v9433
  %v9474 = vpack.c.b16 %v9436, %v9434
  %v9475 = vpack.c.b16 %v9439, %v9437
  %v9476 = vpack.c.b16 %v9440, %v9438
  %v9477 = vpack.c.b16 %v9443, %v9441
  %v9478 = vpack.c.b16 %v9444, %v9442
  %v9479 = vpack.c.b16 %v9447, %v9445
  %v9480 = vpack.c.b16 %v9448, %v9446
  %v9481 = vpack.c.b16 %v9451, %v9449
  %v9482 = vpack.c.b16 %v9452, %v9450
  %v9483 = vpack.c.b16 %v9455, %v9453
  %v9484 = vpack.c.b16 %v9456, %v9454
  %v9485 = vpack.c.b16 %v9459, %v9457
  %v9486 = vpack.c.b16 %v9460, %v9458
  %v9487 = vpack.c.b16 %v9463, %v9461
  %v9488 = vpack.c.b16 %v9464, %v9462
  %v9489 = vpack.c.b16 %v9467, %v9465
  %v9490 = vpack.c.b16 %v9468, %v9466
  %v9491 = vpack.c.b16 %v9469, %v9469
  %v9492 = vpack.c.b16 %v9470, %v9470
  %v9514 = vsel %vm6953, %v9394, 0
  %v9517 = vsel %vm6953, %v9396, 0
  %v9520 = vsel %vm6953, %v9398, 0
  %v9523 = vsel %vm6953, %v9400, 0
  %v9526 = vsel %vm6953, %v9402, 0
  %v9529 = vsel %vm6969, %v9491, 0
  %v9532 = vsel %vm6969, %v9492, 0
  %9534 = vmatpush.bf16.msra.mxu0 %v9485
  %9535 = vmatpush.bf16.msra.mxu0 %v9483
  %9536 = vmatpush.bf16.msra.mxu0 %v9481
  %9537 = vmatpush.bf16.msra.mxu0 %v9479
  %9538 = vmatpush.bf16.msra.mxu0 %v9477
  %9539 = vmatpush.bf16.msra.mxu0 %v9475
  %9540 = vmatpush.bf16.msra.mxu0 %v9473
  %9541 = vmatpush.bf16.msra.mxu0 %v9471
  %9542 = vmatmul.bf16.gmra.mxu0 %v9393
  %v9543 = vpop.f32.mrf.mxu0
  %v9544 = vadd.f32 0.0, %v9543
  %v9545 = vpop.f32.mrf.mxu0
  %v9546 = vadd.f32 0.0, %v9545
  %9547 = vmatmul.bf16.gmra.mxu0 %v9395
  %v9548 = vpop.f32.mrf.mxu0
  %v9549 = vadd.f32 0.0, %v9548
  %v9550 = vpop.f32.mrf.mxu0
  %v9551 = vadd.f32 0.0, %v9550
  %9552 = vmatmul.bf16.gmra.mxu0 %v9397
  %v9553 = vpop.f32.mrf.mxu0
  %v9554 = vadd.f32 0.0, %v9553
  %v9555 = vpop.f32.mrf.mxu0
  %v9556 = vadd.f32 0.0, %v9555
  %9557 = vmatmul.bf16.gmra.mxu0 %v9399
  %v9558 = vpop.f32.mrf.mxu0
  %v9559 = vadd.f32 0.0, %v9558
  %v9560 = vpop.f32.mrf.mxu0
  %v9561 = vadd.f32 0.0, %v9560
  %9562 = vmatmul.bf16.gmra.mxu0 %v9401
  %v9563 = vpop.f32.mrf.mxu0
  %v9564 = vadd.f32 0.0, %v9563
  %v9565 = vpop.f32.mrf.mxu0
  %v9566 = vadd.f32 0.0, %v9565
  %9567 = vdwg.mxu0
  %9568 = vmatpush.bf16.msra.mxu0 0
  %9569 = vmatpush.bf16.msra.mxu0 0
  %9570 = vmatpush.bf16.msra.mxu0 0
  %9571 = vmatpush.bf16.msra.mxu0 0
  %9572 = vmatpush.bf16.msra.mxu0 0
  %9573 = vmatpush.bf16.msra.mxu0 %v9529
  %9574 = vmatpush.bf16.msra.mxu0 %v9489
  %9575 = vmatpush.bf16.msra.mxu0 %v9487
  %9576 = vmatmul.bf16.gmra.mxu0 %v9514
  %v9577 = vpop.f32.mrf.mxu0
  %v9578 = vadd.f32 %v9544, %v9577
  %v9579 = vpop.f32.mrf.mxu0
  %v9580 = vadd.f32 %v9546, %v9579
  %9581 = vmatmul.bf16.gmra.mxu0 %v9517
  %v9582 = vpop.f32.mrf.mxu0
  %v9583 = vadd.f32 %v9549, %v9582
  %v9584 = vpop.f32.mrf.mxu0
  %v9585 = vadd.f32 %v9551, %v9584
  %9586 = vmatmul.bf16.gmra.mxu0 %v9520
  %v9587 = vpop.f32.mrf.mxu0
  %v9588 = vadd.f32 %v9554, %v9587
  %v9589 = vpop.f32.mrf.mxu0
  %v9590 = vadd.f32 %v9556, %v9589
  %9591 = vmatmul.bf16.gmra.mxu0 %v9523
  %v9592 = vpop.f32.mrf.mxu0
  %v9593 = vadd.f32 %v9559, %v9592
  %v9594 = vpop.f32.mrf.mxu0
  %v9595 = vadd.f32 %v9561, %v9594
  %9596 = vmatmul.bf16.gmra.mxu0 %v9526
  %v9597 = vpop.f32.mrf.mxu0
  %v9598 = vadd.f32 %v9564, %v9597
  %v9599 = vpop.f32.mrf.mxu0
  %v9600 = vadd.f32 %v9566, %v9599
  %9601 = vdwg.mxu0
  %9602 = vmatpush.bf16.msra.mxu0 %v9486
  %9603 = vmatpush.bf16.msra.mxu0 %v9484
  %9604 = vmatpush.bf16.msra.mxu0 %v9482
  %9605 = vmatpush.bf16.msra.mxu0 %v9480
  %9606 = vmatpush.bf16.msra.mxu0 %v9478
  %9607 = vmatpush.bf16.msra.mxu0 %v9476
  %9608 = vmatpush.bf16.msra.mxu0 %v9474
  %9609 = vmatpush.bf16.msra.mxu0 %v9472
  %9610 = vmatmul.bf16.gmra.mxu0 %v9393
  %v9611 = vpop.f32.mrf.mxu0
  %v9612 = vadd.f32 0.0, %v9611
  %v9613 = vpop.f32.mrf.mxu0
  %v9614 = vadd.f32 0.0, %v9613
  %9615 = vmatmul.bf16.gmra.mxu0 %v9395
  %v9616 = vpop.f32.mrf.mxu0
  %v9617 = vadd.f32 0.0, %v9616
  %v9618 = vpop.f32.mrf.mxu0
  %v9619 = vadd.f32 0.0, %v9618
  %9620 = vmatmul.bf16.gmra.mxu0 %v9397
  %v9621 = vpop.f32.mrf.mxu0
  %v9622 = vadd.f32 0.0, %v9621
  %v9623 = vpop.f32.mrf.mxu0
  %v9624 = vadd.f32 0.0, %v9623
  %9625 = vmatmul.bf16.gmra.mxu0 %v9399
  %v9626 = vpop.f32.mrf.mxu0
  %v9627 = vadd.f32 0.0, %v9626
  %v9628 = vpop.f32.mrf.mxu0
  %v9629 = vadd.f32 0.0, %v9628
  %9630 = vmatmul.bf16.gmra.mxu0 %v9401
  %v9631 = vpop.f32.mrf.mxu0
  %v9632 = vadd.f32 0.0, %v9631
  %v9633 = vpop.f32.mrf.mxu0
  %v9634 = vadd.f32 0.0, %v9633
  %9635 = vdwg.mxu0
  %9636 = vmatpush.bf16.msra.mxu0 0
  %9637 = vmatpush.bf16.msra.mxu0 0
  %9638 = vmatpush.bf16.msra.mxu0 0
  %9639 = vmatpush.bf16.msra.mxu0 0
  %9640 = vmatpush.bf16.msra.mxu0 0
  %9641 = vmatpush.bf16.msra.mxu0 %v9532
  %9642 = vmatpush.bf16.msra.mxu0 %v9490
  %9643 = vmatpush.bf16.msra.mxu0 %v9488
  %9644 = vmatmul.bf16.gmra.mxu0 %v9514
  %v9645 = vpop.f32.mrf.mxu0
  %v9646 = vadd.f32 %v9612, %v9645
  %v9647 = vpop.f32.mrf.mxu0
  %v9648 = vadd.f32 %v9614, %v9647
  %9649 = vmatmul.bf16.gmra.mxu0 %v9517
  %v9650 = vpop.f32.mrf.mxu0
  %v9651 = vadd.f32 %v9617, %v9650
  %v9652 = vpop.f32.mrf.mxu0
  %v9653 = vadd.f32 %v9619, %v9652
  %9654 = vmatmul.bf16.gmra.mxu0 %v9520
  %v9655 = vpop.f32.mrf.mxu0
  %v9656 = vadd.f32 %v9622, %v9655
  %v9657 = vpop.f32.mrf.mxu0
  %v9658 = vadd.f32 %v9624, %v9657
  %9659 = vmatmul.bf16.gmra.mxu0 %v9523
  %v9660 = vpop.f32.mrf.mxu0
  %v9661 = vadd.f32 %v9627, %v9660
  %v9662 = vpop.f32.mrf.mxu0
  %v9663 = vadd.f32 %v9629, %v9662
  %9664 = vmatmul.bf16.gmra.mxu0 %v9526
  %v9665 = vpop.f32.mrf.mxu0
  %v9666 = vadd.f32 %v9632, %v9665
  %v9667 = vpop.f32.mrf.mxu0
  %v9668 = vadd.f32 %v9634, %v9667
  %9669 = vdwg.mxu0
  %v9670 = vadd.f32 %v9015, %v9578
  %v9671 = vadd.f32 %v9016, %v9646
  %v9672 = vadd.f32 %v9017, %v9580
  %v9673 = vadd.f32 %v9018, %v9648
  %v9674 = vadd.f32 %v9019, %v9583
  %v9675 = vadd.f32 %v9020, %v9651
  %v9676 = vadd.f32 %v9021, %v9585
  %v9677 = vadd.f32 %v9022, %v9653
  %v9678 = vadd.f32 %v9023, %v9588
  %v9679 = vadd.f32 %v9024, %v9656
  %v9680 = vadd.f32 %v9025, %v9590
  %v9681 = vadd.f32 %v9026, %v9658
  %v9682 = vadd.f32 %v9027, %v9593
  %v9683 = vadd.f32 %v9028, %v9661
  %v9684 = vadd.f32 %v9029, %v9595
  %v9685 = vadd.f32 %v9030, %v9663
  %v9686 = vadd.f32 %v9031, %v9598
  %v9687 = vadd.f32 %v9032, %v9666
  %v9688 = vadd.f32 %v9033, %v9600
  %v9689 = vadd.f32 %v9034, %v9668
  %v9690 = vld [vmem:[%s4] sm:$0x3]
  %v9692 = vperm.slane %v9690, 0
  %v9693 = vperm.slane %v9690, 1
  %v9696 = vadd.f32 %v9670, %v9692
  %v9697 = vadd.f32 %v9671, %v9693
  %v9698 = vadd.f32 %v9672, %v9692
  %v9699 = vadd.f32 %v9673, %v9693
  %v9700 = vadd.f32 %v9674, %v9692
  %v9701 = vadd.f32 %v9675, %v9693
  %v9702 = vadd.f32 %v9676, %v9692
  %v9703 = vadd.f32 %v9677, %v9693
  %v9704 = vadd.f32 %v9678, %v9692
  %v9705 = vadd.f32 %v9679, %v9693
  %v9706 = vadd.f32 %v9680, %v9692
  %v9707 = vadd.f32 %v9681, %v9693
  %v9708 = vadd.f32 %v9682, %v9692
  %v9709 = vadd.f32 %v9683, %v9693
  %v9710 = vadd.f32 %v9684, %v9692
  %v9711 = vadd.f32 %v9685, %v9693
  %v9712 = vadd.f32 %v9686, %v9692
  %v9713 = vadd.f32 %v9687, %v9693
  %v9714 = vadd.f32 %v9688, %v9692
  %v9715 = vadd.f32 %v9689, %v9693
  %v9716 = vmax.f32 %v9696, 0.0
  %v9717 = vmax.f32 %v9697, 0.0
  %v9718 = vmax.f32 %v9698, 0.0
  %v9719 = vmax.f32 %v9699, 0.0
  %v9720 = vmax.f32 %v9700, 0.0
  %v9721 = vmax.f32 %v9701, 0.0
  %v9722 = vmax.f32 %v9702, 0.0
  %v9723 = vmax.f32 %v9703, 0.0
  %v9724 = vmax.f32 %v9704, 0.0
  %v9725 = vmax.f32 %v9705, 0.0
  %v9726 = vmax.f32 %v9706, 0.0
  %v9727 = vmax.f32 %v9707, 0.0
  %v9728 = vmax.f32 %v9708, 0.0
  %v9729 = vmax.f32 %v9709, 0.0
  %v9730 = vmax.f32 %v9710, 0.0
  %v9731 = vmax.f32 %v9711, 0.0
  %v9732 = vmax.f32 %v9712, 0.0
  %v9733 = vmax.f32 %v9713, 0.0
  %v9734 = vmax.f32 %v9714, 0.0
  %v9735 = vmax.f32 %v9715, 0.0
  %v9756 = vrot.slane %v9717, 6
  %v9757 = vrot.slane %v9719, 6
  %v9758 = vrot.slane %v9721, 6
  %v9759 = vrot.slane %v9723, 6
  %v9760 = vrot.slane %v9725, 6
  %v9761 = vrot.slane %v9727, 6
  %v9762 = vrot.slane %v9729, 6
  %v9763 = vrot.slane %v9731, 6
  %v9764 = vrot.slane %v9733, 6
  %v9765 = vrot.slane %v9735, 6
  %v9766 = vsel %vm135, %v9716, %v9756
  %v9767 = vsel %vm139, %v9716, %v9756
  %v9768 = vrot.slane %v9767, 2
  %v9769 = vsel %vm3731, %v9716, %v9756
  %v9770 = vrot.slane %v9769, 4
  %v9771 = vsel %vm3734, %v9756, %v9716
  %v9772 = vrot.slane %v9771, 6
  %v9773 = vsel %vm135, %v9718, %v9757
  %v9774 = vsel %vm139, %v9718, %v9757
  %v9775 = vrot.slane %v9774, 2
  %v9776 = vsel %vm3731, %v9718, %v9757
  %v9777 = vrot.slane %v9776, 4
  %v9778 = vsel %vm3734, %v9757, %v9718
  %v9779 = vrot.slane %v9778, 6
  %v9780 = vsel %vm135, %v9720, %v9758
  %v9781 = vsel %vm139, %v9720, %v9758
  %v9782 = vrot.slane %v9781, 2
  %v9783 = vsel %vm3731, %v9720, %v9758
  %v9784 = vrot.slane %v9783, 4
  %v9785 = vsel %vm3734, %v9758, %v9720
  %v9786 = vrot.slane %v9785, 6
  %v9787 = vsel %vm135, %v9722, %v9759
  %v9788 = vsel %vm139, %v9722, %v9759
  %v9789 = vrot.slane %v9788, 2
  %v9790 = vsel %vm3731, %v9722, %v9759
  %v9791 = vrot.slane %v9790, 4
  %v9792 = vsel %vm3734, %v9759, %v9722
  %v9793 = vrot.slane %v9792, 6
  %v9794 = vsel %vm135, %v9724, %v9760
  %v9795 = vsel %vm139, %v9724, %v9760
  %v9796 = vrot.slane %v9795, 2
  %v9797 = vsel %vm3731, %v9724, %v9760
  %v9798 = vrot.slane %v9797, 4
  %v9799 = vsel %vm3734, %v9760, %v9724
  %v9800 = vrot.slane %v9799, 6
  %v9801 = vsel %vm135, %v9726, %v9761
  %v9802 = vsel %vm139, %v9726, %v9761
  %v9803 = vrot.slane %v9802, 2
  %v9804 = vsel %vm3731, %v9726, %v9761
  %v9805 = vrot.slane %v9804, 4
  %v9806 = vsel %vm3734, %v9761, %v9726
  %v9807 = vrot.slane %v9806, 6
  %v9808 = vsel %vm135, %v9728, %v9762
  %v9809 = vsel %vm139, %v9728, %v9762
  %v9810 = vrot.slane %v9809, 2
  %v9811 = vsel %vm3731, %v9728, %v9762
  %v9812 = vrot.slane %v9811, 4
  %v9813 = vsel %vm3734, %v9762, %v9728
  %v9814 = vrot.slane %v9813, 6
  %v9815 = vsel %vm135, %v9730, %v9763
  %v9816 = vsel %vm139, %v9730, %v9763
  %v9817 = vrot.slane %v9816, 2
  %v9818 = vsel %vm3731, %v9730, %v9763
  %v9819 = vrot.slane %v9818, 4
  %v9820 = vsel %vm3734, %v9763, %v9730
  %v9821 = vrot.slane %v9820, 6
  %v9822 = vsel %vm135, %v9732, %v9764
  %v9823 = vsel %vm139, %v9732, %v9764
  %v9824 = vrot.slane %v9823, 2
  %v9825 = vsel %vm3731, %v9732, %v9764
  %v9826 = vrot.slane %v9825, 4
  %v9827 = vsel %vm3734, %v9764, %v9732
  %v9828 = vrot.slane %v9827, 6
  %v9829 = vsel %vm135, %v9734, %v9765
  %v9830 = vsel %vm139, %v9734, %v9765
  %v9831 = vrot.slane %v9830, 2
  %v9832 = vsel %vm3731, %v9734, %v9765
  %v9833 = vrot.slane %v9832, 4
  %v9834 = vsel %vm3734, %v9765, %v9734
  %v9835 = vrot.slane %v9834, 6
  %v9876 = vrot.slane %v9766, 7
  %v9877 = vrot.slane %v9876, 2
  %v9878 = vrot.slane %v9768, 7
  %v9879 = vrot.slane %v9878, 2
  %v9880 = vrot.slane %v9770, 7
  %v9881 = vrot.slane %v9880, 2
  %v9882 = vrot.slane %v9772, 7
  %v9883 = vrot.slane %v9882, 2
  %v9884 = vrot.slane %v9773, 7
  %v9885 = vrot.slane %v9884, 2
  %v9886 = vrot.slane %v9775, 7
  %v9887 = vrot.slane %v9886, 2
  %v9888 = vrot.slane %v9777, 7
  %v9889 = vrot.slane %v9888, 2
  %v9890 = vrot.slane %v9779, 7
  %v9891 = vrot.slane %v9890, 2
  %v9892 = vrot.slane %v9780, 7
  %v9893 = vrot.slane %v9892, 2
  %v9894 = vrot.slane %v9782, 7
  %v9895 = vrot.slane %v9894, 2
  %v9896 = vrot.slane %v9784, 7
  %v9897 = vrot.slane %v9896, 2
  %v9898 = vrot.slane %v9786, 7
  %v9899 = vrot.slane %v9898, 2
  %v9900 = vrot.slane %v9787, 7
  %v9901 = vrot.slane %v9900, 2
  %v9902 = vrot.slane %v9789, 7
  %v9903 = vrot.slane %v9902, 2
  %v9904 = vrot.slane %v9791, 7
  %v9905 = vrot.slane %v9904, 2
  %v9906 = vrot.slane %v9793, 7
  %v9907 = vrot.slane %v9906, 2
  %v9908 = vrot.slane %v9794, 7
  %v9909 = vrot.slane %v9908, 2
  %v9910 = vrot.slane %v9796, 7
  %v9911 = vrot.slane %v9910, 2
  %v9912 = vrot.slane %v9798, 7
  %v9913 = vrot.slane %v9912, 2
  %v9914 = vrot.slane %v9800, 7
  %v9915 = vrot.slane %v9914, 2
  %v9916 = vrot.slane %v9801, 7
  %v9917 = vrot.slane %v9916, 2
  %v9918 = vrot.slane %v9803, 7
  %v9919 = vrot.slane %v9918, 2
  %v9920 = vrot.slane %v9805, 7
  %v9921 = vrot.slane %v9920, 2
  %v9922 = vrot.slane %v9807, 7
  %v9923 = vrot.slane %v9922, 2
  %v9924 = vrot.slane %v9808, 7
  %v9925 = vrot.slane %v9924, 2
  %v9926 = vrot.slane %v9810, 7
  %v9927 = vrot.slane %v9926, 2
  %v9928 = vrot.slane %v9812, 7
  %v9929 = vrot.slane %v9928, 2
  %v9930 = vrot.slane %v9814, 7
  %v9931 = vrot.slane %v9930, 2
  %v9932 = vrot.slane %v9815, 7
  %v9933 = vrot.slane %v9932, 2
  %v9934 = vrot.slane %v9817, 7
  %v9935 = vrot.slane %v9934, 2
  %v9936 = vrot.slane %v9819, 7
  %v9937 = vrot.slane %v9936, 2
  %v9938 = vrot.slane %v9821, 7
  %v9939 = vrot.slane %v9938, 2
  %v9940 = vrot.slane %v9822, 7
  %v9941 = vrot.slane %v9940, 2
  %v9942 = vrot.slane %v9824, 7
  %v9943 = vrot.slane %v9942, 2
  %v9944 = vrot.slane %v9826, 7
  %v9945 = vrot.slane %v9944, 2
  %v9946 = vrot.slane %v9828, 7
  %v9947 = vrot.slane %v9946, 2
  %v9948 = vrot.slane %v9829, 7
  %v9949 = vrot.slane %v9948, 2
  %v9950 = vrot.slane %v9831, 7
  %v9951 = vrot.slane %v9950, 2
  %v9952 = vrot.slane %v9833, 7
  %v9953 = vrot.slane %v9952, 2
  %v9954 = vrot.slane %v9835, 7
  %v9955 = vrot.slane %v9954, 2
  %v9996 = vmax.f32 %v9766, %v9877
  %v9997 = vmax.f32 %v9768, %v9879
  %v9998 = vmax.f32 %v9770, %v9881
  %v9999 = vmax.f32 %v9772, %v9883
  %v10000 = vmax.f32 %v9773, %v9885
  %v10001 = vmax.f32 %v9775, %v9887
  %v10002 = vmax.f32 %v9777, %v9889
  %v10003 = vmax.f32 %v9779, %v9891
  %v10004 = vmax.f32 %v9780, %v9893
  %v10005 = vmax.f32 %v9782, %v9895
  %v10006 = vmax.f32 %v9784, %v9897
  %v10007 = vmax.f32 %v9786, %v9899
  %v10008 = vmax.f32 %v9787, %v9901
  %v10009 = vmax.f32 %v9789, %v9903
  %v10010 = vmax.f32 %v9791, %v9905
  %v10011 = vmax.f32 %v9793, %v9907
  %v10012 = vmax.f32 %v9794, %v9909
  %v10013 = vmax.f32 %v9796, %v9911
  %v10014 = vmax.f32 %v9798, %v9913
  %v10015 = vmax.f32 %v9800, %v9915
  %v10016 = vmax.f32 %v9801, %v9917
  %v10017 = vmax.f32 %v9803, %v9919
  %v10018 = vmax.f32 %v9805, %v9921
  %v10019 = vmax.f32 %v9807, %v9923
  %v10020 = vmax.f32 %v9808, %v9925
  %v10021 = vmax.f32 %v9810, %v9927
  %v10022 = vmax.f32 %v9812, %v9929
  %v10023 = vmax.f32 %v9814, %v9931
  %v10024 = vmax.f32 %v9815, %v9933
  %v10025 = vmax.f32 %v9817, %v9935
  %v10026 = vmax.f32 %v9819, %v9937
  %v10027 = vmax.f32 %v9821, %v9939
  %v10028 = vmax.f32 %v9822, %v9941
  %v10029 = vmax.f32 %v9824, %v9943
  %v10030 = vmax.f32 %v9826, %v9945
  %v10031 = vmax.f32 %v9828, %v9947
  %v10032 = vmax.f32 %v9829, %v9949
  %v10033 = vmax.f32 %v9831, %v9951
  %v10034 = vmax.f32 %v9833, %v9953
  %v10035 = vmax.f32 %v9835, %v9955
  %10076 = vrot.lane.b32.xlu0 %v9996, 112
  %v10077 = vpop.permute.xlu0 %10076
  %10078 = vrot.lane.b32.xlu0 %v9997, 112
  %v10079 = vpop.permute.xlu0 %10078
  %10080 = vrot.lane.b32.xlu0 %v9998, 112
  %v10081 = vpop.permute.xlu0 %10080
  %10082 = vrot.lane.b32.xlu0 %v9999, 112
  %v10083 = vpop.permute.xlu0 %10082
  %10084 = vrot.lane.b32.xlu0 %v10000, 112
  %v10085 = vpop.permute.xlu0 %10084
  %10086 = vrot.lane.b32.xlu0 %v10001, 112
  %v10087 = vpop.permute.xlu0 %10086
  %10088 = vrot.lane.b32.xlu0 %v10002, 112
  %v10089 = vpop.permute.xlu0 %10088
  %10090 = vrot.lane.b32.xlu0 %v10003, 112
  %v10091 = vpop.permute.xlu0 %10090
  %10092 = vrot.lane.b32.xlu0 %v10004, 112
  %v10093 = vpop.permute.xlu0 %10092
  %10094 = vrot.lane.b32.xlu0 %v10005, 112
  %v10095 = vpop.permute.xlu0 %10094
  %10096 = vrot.lane.b32.xlu0 %v10006, 112
  %v10097 = vpop.permute.xlu0 %10096
  %10098 = vrot.lane.b32.xlu0 %v10007, 112
  %v10099 = vpop.permute.xlu0 %10098
  %10100 = vrot.lane.b32.xlu0 %v10008, 112
  %v10101 = vpop.permute.xlu0 %10100
  %10102 = vrot.lane.b32.xlu0 %v10009, 112
  %v10103 = vpop.permute.xlu0 %10102
  %10104 = vrot.lane.b32.xlu0 %v10010, 112
  %v10105 = vpop.permute.xlu0 %10104
  %10106 = vrot.lane.b32.xlu0 %v10011, 112
  %v10107 = vpop.permute.xlu0 %10106
  %10108 = vrot.lane.b32.xlu0 %v10012, 112
  %v10109 = vpop.permute.xlu0 %10108
  %10110 = vrot.lane.b32.xlu0 %v10013, 112
  %v10111 = vpop.permute.xlu0 %10110
  %10112 = vrot.lane.b32.xlu0 %v10014, 112
  %v10113 = vpop.permute.xlu0 %10112
  %10114 = vrot.lane.b32.xlu0 %v10015, 112
  %v10115 = vpop.permute.xlu0 %10114
  %10116 = vrot.lane.b32.xlu0 %v10016, 112
  %v10117 = vpop.permute.xlu0 %10116
  %10118 = vrot.lane.b32.xlu0 %v10017, 112
  %v10119 = vpop.permute.xlu0 %10118
  %10120 = vrot.lane.b32.xlu0 %v10018, 112
  %v10121 = vpop.permute.xlu0 %10120
  %10122 = vrot.lane.b32.xlu0 %v10019, 112
  %v10123 = vpop.permute.xlu0 %10122
  %10124 = vrot.lane.b32.xlu0 %v10020, 112
  %v10125 = vpop.permute.xlu0 %10124
  %10126 = vrot.lane.b32.xlu0 %v10021, 112
  %v10127 = vpop.permute.xlu0 %10126
  %10128 = vrot.lane.b32.xlu0 %v10022, 112
  %v10129 = vpop.permute.xlu0 %10128
  %10130 = vrot.lane.b32.xlu0 %v10023, 112
  %v10131 = vpop.permute.xlu0 %10130
  %10132 = vrot.lane.b32.xlu0 %v10024, 112
  %v10133 = vpop.permute.xlu0 %10132
  %10134 = vrot.lane.b32.xlu0 %v10025, 112
  %v10135 = vpop.permute.xlu0 %10134
  %10136 = vrot.lane.b32.xlu0 %v10026, 112
  %v10137 = vpop.permute.xlu0 %10136
  %10138 = vrot.lane.b32.xlu0 %v10027, 112
  %v10139 = vpop.permute.xlu0 %10138
  %10140 = vrot.lane.b32.xlu0 %v10028, 112
  %v10141 = vpop.permute.xlu0 %10140
  %10142 = vrot.lane.b32.xlu0 %v10029, 112
  %v10143 = vpop.permute.xlu0 %10142
  %10144 = vrot.lane.b32.xlu0 %v10030, 112
  %v10145 = vpop.permute.xlu0 %10144
  %10146 = vrot.lane.b32.xlu0 %v10031, 112
  %v10147 = vpop.permute.xlu0 %10146
  %10148 = vrot.lane.b32.xlu0 %v10032, 112
  %v10149 = vpop.permute.xlu0 %10148
  %10150 = vrot.lane.b32.xlu0 %v10033, 112
  %v10151 = vpop.permute.xlu0 %10150
  %10152 = vrot.lane.b32.xlu0 %v10034, 112
  %v10153 = vpop.permute.xlu0 %10152
  %10154 = vrot.lane.b32.xlu0 %v10035, 112
  %v10155 = vpop.permute.xlu0 %10154
  %v10156 = vrot.slane %v10077, 2
  %v10157 = vrot.slane %v10079, 2
  %v10158 = vrot.slane %v10081, 2
  %v10159 = vrot.slane %v10083, 2
  %v10160 = vrot.slane %v10085, 2
  %v10161 = vrot.slane %v10087, 2
  %v10162 = vrot.slane %v10089, 2
  %v10163 = vrot.slane %v10091, 2
  %v10164 = vrot.slane %v10093, 2
  %v10165 = vrot.slane %v10095, 2
  %v10166 = vrot.slane %v10097, 2
  %v10167 = vrot.slane %v10099, 2
  %v10168 = vrot.slane %v10101, 2
  %v10169 = vrot.slane %v10103, 2
  %v10170 = vrot.slane %v10105, 2
  %v10171 = vrot.slane %v10107, 2
  %v10172 = vrot.slane %v10109, 2
  %v10173 = vrot.slane %v10111, 2
  %v10174 = vrot.slane %v10113, 2
  %v10175 = vrot.slane %v10115, 2
  %v10176 = vrot.slane %v10117, 2
  %v10177 = vrot.slane %v10119, 2
  %v10178 = vrot.slane %v10121, 2
  %v10179 = vrot.slane %v10123, 2
  %v10180 = vrot.slane %v10125, 2
  %v10181 = vrot.slane %v10127, 2
  %v10182 = vrot.slane %v10129, 2
  %v10183 = vrot.slane %v10131, 2
  %v10184 = vrot.slane %v10133, 2
  %v10185 = vrot.slane %v10135, 2
  %v10186 = vrot.slane %v10137, 2
  %v10187 = vrot.slane %v10139, 2
  %v10188 = vrot.slane %v10141, 2
  %v10189 = vrot.slane %v10143, 2
  %v10190 = vrot.slane %v10145, 2
  %v10191 = vrot.slane %v10147, 2
  %v10192 = vrot.slane %v10149, 2
  %v10193 = vrot.slane %v10151, 2
  %v10194 = vrot.slane %v10153, 2
  %v10195 = vrot.slane %v10155, 2
  %vm10196 = vcmask 916480
  %v10197 = vsel %vm10196, %v10077, %v10156
  %v10198 = vsel %vm10196, %v10079, %v10157
  %v10199 = vsel %vm10196, %v10081, %v10158
  %v10200 = vsel %vm10196, %v10083, %v10159
  %v10201 = vsel %vm10196, %v10085, %v10160
  %v10202 = vsel %vm10196, %v10087, %v10161
  %v10203 = vsel %vm10196, %v10089, %v10162
  %v10204 = vsel %vm10196, %v10091, %v10163
  %v10205 = vsel %vm10196, %v10093, %v10164
  %v10206 = vsel %vm10196, %v10095, %v10165
  %v10207 = vsel %vm10196, %v10097, %v10166
  %v10208 = vsel %vm10196, %v10099, %v10167
  %v10209 = vsel %vm10196, %v10101, %v10168
  %v10210 = vsel %vm10196, %v10103, %v10169
  %v10211 = vsel %vm10196, %v10105, %v10170
  %v10212 = vsel %vm10196, %v10107, %v10171
  %v10213 = vsel %vm10196, %v10109, %v10172
  %v10214 = vsel %vm10196, %v10111, %v10173
  %v10215 = vsel %vm10196, %v10113, %v10174
  %v10216 = vsel %vm10196, %v10115, %v10175
  %v10217 = vsel %vm10196, %v10117, %v10176
  %v10218 = vsel %vm10196, %v10119, %v10177
  %v10219 = vsel %vm10196, %v10121, %v10178
  %v10220 = vsel %vm10196, %v10123, %v10179
  %v10221 = vsel %vm10196, %v10125, %v10180
  %v10222 = vsel %vm10196, %v10127, %v10181
  %v10223 = vsel %vm10196, %v10129, %v10182
  %v10224 = vsel %vm10196, %v10131, %v10183
  %v10225 = vsel %vm10196, %v10133, %v10184
  %v10226 = vsel %vm10196, %v10135, %v10185
  %v10227 = vsel %vm10196, %v10137, %v10186
  %v10228 = vsel %vm10196, %v10139, %v10187
  %v10229 = vsel %vm10196, %v10141, %v10188
  %v10230 = vsel %vm10196, %v10143, %v10189
  %v10231 = vsel %vm10196, %v10145, %v10190
  %v10232 = vsel %vm10196, %v10147, %v10191
  %v10233 = vsel %vm10196, %v10149, %v10192
  %v10234 = vsel %vm10196, %v10151, %v10193
  %v10235 = vsel %vm10196, %v10153, %v10194
  %v10236 = vsel %vm10196, %v10155, %v10195
  %v10277 = vmax.f32 %v9996, %v10197
  %v10278 = vmax.f32 %v9997, %v10198
  %v10279 = vmax.f32 %v9998, %v10199
  %v10280 = vmax.f32 %v9999, %v10200
  %v10281 = vmax.f32 %v10000, %v10201
  %v10282 = vmax.f32 %v10001, %v10202
  %v10283 = vmax.f32 %v10002, %v10203
  %v10284 = vmax.f32 %v10003, %v10204
  %v10285 = vmax.f32 %v10004, %v10205
  %v10286 = vmax.f32 %v10005, %v10206
  %v10287 = vmax.f32 %v10006, %v10207
  %v10288 = vmax.f32 %v10007, %v10208
  %v10289 = vmax.f32 %v10008, %v10209
  %v10290 = vmax.f32 %v10009, %v10210
  %v10291 = vmax.f32 %v10010, %v10211
  %v10292 = vmax.f32 %v10011, %v10212
  %v10293 = vmax.f32 %v10012, %v10213
  %v10294 = vmax.f32 %v10013, %v10214
  %v10295 = vmax.f32 %v10014, %v10215
  %v10296 = vmax.f32 %v10015, %v10216
  %v10297 = vmax.f32 %v10016, %v10217
  %v10298 = vmax.f32 %v10017, %v10218
  %v10299 = vmax.f32 %v10018, %v10219
  %v10300 = vmax.f32 %v10019, %v10220
  %v10301 = vmax.f32 %v10020, %v10221
  %v10302 = vmax.f32 %v10021, %v10222
  %v10303 = vmax.f32 %v10022, %v10223
  %v10304 = vmax.f32 %v10023, %v10224
  %v10305 = vmax.f32 %v10024, %v10225
  %v10306 = vmax.f32 %v10025, %v10226
  %v10307 = vmax.f32 %v10026, %v10227
  %v10308 = vmax.f32 %v10027, %v10228
  %v10309 = vmax.f32 %v10028, %v10229
  %v10310 = vmax.f32 %v10029, %v10230
  %v10311 = vmax.f32 %v10030, %v10231
  %v10312 = vmax.f32 %v10031, %v10232
  %v10313 = vmax.f32 %v10032, %v10233
  %v10314 = vmax.f32 %v10033, %v10234
  %v10315 = vmax.f32 %v10034, %v10235
  %v10316 = vmax.f32 %v10035, %v10236
  %v10357 = vperm.slane %v10277, 0
  %v10358 = vperm.slane %v10277, 2
  %v10359 = vperm.slane %v10278, 0
  %v10360 = vperm.slane %v10278, 2
  %v10361 = vperm.slane %v10279, 0
  %v10362 = vperm.slane %v10279, 2
  %v10363 = vperm.slane %v10280, 0
  %v10364 = vperm.slane %v10280, 2
  %v10365 = vperm.slane %v10281, 0
  %v10366 = vperm.slane %v10281, 2
  %v10367 = vperm.slane %v10282, 0
  %v10368 = vperm.slane %v10282, 2
  %v10369 = vperm.slane %v10283, 0
  %v10370 = vperm.slane %v10283, 2
  %v10371 = vperm.slane %v10284, 0
  %v10372 = vperm.slane %v10284, 2
  %v10373 = vperm.slane %v10285, 0
  %v10374 = vperm.slane %v10285, 2
  %v10375 = vperm.slane %v10286, 0
  %v10376 = vperm.slane %v10286, 2
  %v10377 = vperm.slane %v10287, 0
  %v10378 = vperm.slane %v10287, 2
  %v10379 = vperm.slane %v10288, 0
  %v10380 = vperm.slane %v10288, 2
  %v10381 = vperm.slane %v10289, 0
  %v10382 = vperm.slane %v10289, 2
  %v10383 = vperm.slane %v10290, 0
  %v10384 = vperm.slane %v10290, 2
  %v10385 = vperm.slane %v10291, 0
  %v10386 = vperm.slane %v10291, 2
  %v10387 = vperm.slane %v10292, 0
  %v10388 = vperm.slane %v10292, 2
  %v10389 = vperm.slane %v10293, 0
  %v10390 = vperm.slane %v10293, 2
  %v10391 = vperm.slane %v10294, 0
  %v10392 = vperm.slane %v10294, 2
  %v10393 = vperm.slane %v10295, 0
  %v10394 = vperm.slane %v10295, 2
  %v10395 = vperm.slane %v10296, 0
  %v10396 = vperm.slane %v10296, 2
  %v10397 = vperm.slane %v10297, 0
  %v10398 = vperm.slane %v10297, 2
  %v10399 = vperm.slane %v10298, 0
  %v10400 = vperm.slane %v10298, 2
  %v10401 = vperm.slane %v10299, 0
  %v10402 = vperm.slane %v10299, 2
  %v10403 = vperm.slane %v10300, 0
  %v10404 = vperm.slane %v10300, 2
  %v10405 = vperm.slane %v10301, 0
  %v10406 = vperm.slane %v10301, 2
  %v10407 = vperm.slane %v10302, 0
  %v10408 = vperm.slane %v10302, 2
  %v10409 = vperm.slane %v10303, 0
  %v10410 = vperm.slane %v10303, 2
  %v10411 = vperm.slane %v10304, 0
  %v10412 = vperm.slane %v10304, 2
  %v10413 = vperm.slane %v10305, 0
  %v10414 = vperm.slane %v10305, 2
  %v10415 = vperm.slane %v10306, 0
  %v10416 = vperm.slane %v10306, 2
  %v10417 = vperm.slane %v10307, 0
  %v10418 = vperm.slane %v10307, 2
  %v10419 = vperm.slane %v10308, 0
  %v10420 = vperm.slane %v10308, 2
  %v10421 = vperm.slane %v10309, 0
  %v10422 = vperm.slane %v10309, 2
  %v10423 = vperm.slane %v10310, 0
  %v10424 = vperm.slane %v10310, 2
  %v10425 = vperm.slane %v10311, 0
  %v10426 = vperm.slane %v10311, 2
  %v10427 = vperm.slane %v10312, 0
  %v10428 = vperm.slane %v10312, 2
  %v10429 = vperm.slane %v10313, 0
  %v10430 = vperm.slane %v10313, 2
  %v10431 = vperm.slane %v10314, 0
  %v10432 = vperm.slane %v10314, 2
  %v10433 = vperm.slane %v10315, 0
  %v10434 = vperm.slane %v10315, 2
  %v10435 = vperm.slane %v10316, 0
  %v10436 = vperm.slane %v10316, 2
  %v10517 = vpack.c.bf16 %v10358, %v10357
  %v10518 = vpack.c.bf16 %v10360, %v10359
  %v10519 = vpack.c.bf16 %v10362, %v10361
  %v10520 = vpack.c.bf16 %v10364, %v10363
  %v10521 = vpack.c.bf16 %v10366, %v10365
  %v10522 = vpack.c.bf16 %v10368, %v10367
  %v10523 = vpack.c.bf16 %v10370, %v10369
  %v10524 = vpack.c.bf16 %v10372, %v10371
  %v10525 = vpack.c.bf16 %v10374, %v10373
  %v10526 = vpack.c.bf16 %v10376, %v10375
  %v10527 = vpack.c.bf16 %v10378, %v10377
  %v10528 = vpack.c.bf16 %v10380, %v10379
  %v10529 = vpack.c.bf16 %v10382, %v10381
  %v10530 = vpack.c.bf16 %v10384, %v10383
  %v10531 = vpack.c.bf16 %v10386, %v10385
  %v10532 = vpack.c.bf16 %v10388, %v10387
  %v10533 = vpack.c.bf16 %v10390, %v10389
  %v10534 = vpack.c.bf16 %v10392, %v10391
  %v10535 = vpack.c.bf16 %v10394, %v10393
  %v10536 = vpack.c.bf16 %v10396, %v10395
  %v10537 = vpack.c.bf16 %v10398, %v10397
  %v10538 = vpack.c.bf16 %v10400, %v10399
  %v10539 = vpack.c.bf16 %v10402, %v10401
  %v10540 = vpack.c.bf16 %v10404, %v10403
  %v10541 = vpack.c.bf16 %v10406, %v10405
  %v10542 = vpack.c.bf16 %v10408, %v10407
  %v10543 = vpack.c.bf16 %v10410, %v10409
  %v10544 = vpack.c.bf16 %v10412, %v10411
  %v10545 = vpack.c.bf16 %v10414, %v10413
  %v10546 = vpack.c.bf16 %v10416, %v10415
  %v10547 = vpack.c.bf16 %v10418, %v10417
  %v10548 = vpack.c.bf16 %v10420, %v10419
  %v10549 = vpack.c.bf16 %v10422, %v10421
  %v10550 = vpack.c.bf16 %v10424, %v10423
  %v10551 = vpack.c.bf16 %v10426, %v10425
  %v10552 = vpack.c.bf16 %v10428, %v10427
  %v10553 = vpack.c.bf16 %v10430, %v10429
  %v10554 = vpack.c.bf16 %v10432, %v10431
  %v10555 = vpack.c.bf16 %v10434, %v10433
  %v10556 = vpack.c.bf16 %v10436, %v10435
  %v10557 = vld [vmem:[%s5] sm:$0xf]
  %v10558 = vld [vmem:[%s5 + $0x4] sm:$0xf]
  %v10559 = vld [vmem:[%s5 + $0x8] sm:$0xf]
  %v10560 = vld [vmem:[%s5 + $0xc] sm:$0xf]
  %v10561 = vld [vmem:[%s5 + $0x10] sm:$0xf]
  %v10562 = vld [vmem:[%s5 + $0x14] sm:$0xf]
  %v10563 = vld [vmem:[%s5 + $0x18] sm:$0xf]
  %v10564 = vld [vmem:[%s5 + $0x1c] sm:$0xf]
  %v10565 = vld [vmem:[%s5 + $0x20] sm:$0xf]
  %v10566 = vld [vmem:[%s5 + $0x24] sm:$0xf]
  %v10567 = vld [vmem:[%s5 + $0x28] sm:$0xf]
  %v10568 = vld [vmem:[%s5 + $0x2c] sm:$0xf]
  %v10569 = vld [vmem:[%s5 + $0x30] sm:$0xf]
  %v10570 = vld [vmem:[%s5 + $0x34] sm:$0xf]
  %v10571 = vld [vmem:[%s5 + $0x38] sm:$0xf]
  %v10572 = vld [vmem:[%s5 + $0x3c] sm:$0xf]
  %v10573 = vld [vmem:[%s5 + $0x40] sm:$0xf]
  %v10574 = vld [vmem:[%s5 + $0x44] sm:$0xf]
  %s10575 = scalar_lea.vmem %s5, 72
  %v10576 = vld [vmem:[%s10575] sm:$0xf]
  %v10577 = vld [vmem:[%s10575 + $0x4] sm:$0xf]
  %v10578 = vld [vmem:[%s10575 + $0x8] sm:$0xf]
  %v10579 = vld [vmem:[%s10575 + $0xc] sm:$0xf]
  %v10580 = vld [vmem:[%s10575 + $0x10] sm:$0xf]
  %v10581 = vld [vmem:[%s10575 + $0x14] sm:$0xf]
  %v10582 = vld [vmem:[%s10575 + $0x18] sm:$0xf]
  %v10583 = vld [vmem:[%s10575 + $0x1c] sm:$0xf]
  %v10584 = vld [vmem:[%s10575 + $0x20] sm:$0xf]
  %v10585 = vld [vmem:[%s10575 + $0x24] sm:$0xf]
  %v10586 = vld [vmem:[%s10575 + $0x28] sm:$0xf]
  %v10587 = vld [vmem:[%s10575 + $0x2c] sm:$0xf]
  %v10588 = vld [vmem:[%s10575 + $0x30] sm:$0xf]
  %v10589 = vld [vmem:[%s10575 + $0x34] sm:$0xf]
  %v10590 = vld [vmem:[%s10575 + $0x38] sm:$0xf]
  %v10591 = vld [vmem:[%s10575 + $0x3c] sm:$0xf]
  %v10592 = vld [vmem:[%s10575 + $0x40] sm:$0xf]
  %v10593 = vld [vmem:[%s10575 + $0x44] sm:$0xf]
  %v10602 = vunpack.c.l.b16 %v10518
  %v10603 = vunpack.c.h.b16 %v10518
  %v10604 = vunpack.c.l.b16 %v10523
  %v10605 = vunpack.c.h.b16 %v10523
  %v10606 = vunpack.c.l.b16 %v10528
  %v10607 = vunpack.c.h.b16 %v10528
  %v10608 = vunpack.c.l.b16 %v10533
  %v10609 = vunpack.c.h.b16 %v10533
  %v10610 = vunpack.c.l.b16 %v10538
  %v10611 = vunpack.c.h.b16 %v10538
  %v10612 = vunpack.c.l.b16 %v10543
  %v10613 = vunpack.c.h.b16 %v10543
  %v10614 = vunpack.c.l.b16 %v10548
  %v10615 = vunpack.c.h.b16 %v10548
  %v10616 = vunpack.c.l.b16 %v10553
  %v10617 = vunpack.c.h.b16 %v10553
  %v10618 = vpack.c.b16 %v10602, %v10602
  %v10619 = vpack.c.b16 %v10603, %v10603
  %v10620 = vpack.c.b16 %v10604, %v10604
  %v10621 = vpack.c.b16 %v10605, %v10605
  %v10622 = vpack.c.b16 %v10606, %v10606
  %v10623 = vpack.c.b16 %v10607, %v10607
  %v10624 = vpack.c.b16 %v10608, %v10608
  %v10625 = vpack.c.b16 %v10609, %v10609
  %v10626 = vpack.c.b16 %v10610, %v10610
  %v10627 = vpack.c.b16 %v10611, %v10611
  %v10628 = vpack.c.b16 %v10612, %v10612
  %v10629 = vpack.c.b16 %v10613, %v10613
  %v10630 = vpack.c.b16 %v10614, %v10614
  %v10631 = vpack.c.b16 %v10615, %v10615
  %v10632 = vpack.c.b16 %v10616, %v10616
  %v10633 = vpack.c.b16 %v10617, %v10617
  %v10634 = vunpack.c.l.b16 %v10618
  %v10635 = vunpack.c.l.b16 %v10619
  %v10636 = vunpack.c.l.b16 %v10620
  %v10637 = vunpack.c.l.b16 %v10621
  %v10638 = vunpack.c.l.b16 %v10622
  %v10639 = vunpack.c.l.b16 %v10623
  %v10640 = vunpack.c.l.b16 %v10624
  %v10641 = vunpack.c.l.b16 %v10625
  %v10642 = vunpack.c.l.b16 %v10626
  %v10643 = vunpack.c.l.b16 %v10627
  %v10644 = vunpack.c.l.b16 %v10628
  %v10645 = vunpack.c.l.b16 %v10629
  %v10646 = vunpack.c.l.b16 %v10630
  %v10647 = vunpack.c.l.b16 %v10631
  %v10648 = vunpack.c.l.b16 %v10632
  %v10649 = vunpack.c.l.b16 %v10633
  %v10650 = vrot.slane %v10636, 7
  %v10651 = vsel %vm6547, %v10650, %v10634
  %v10652 = vrot.slane %v10638, 6
  %v10653 = vsel %vm6550, %v10652, %v10651
  %v10654 = vrot.slane %v10640, 5
  %v10655 = vsel %vm6553, %v10654, %v10653
  %v10656 = vrot.slane %v10642, 4
  %v10657 = vsel %vm6556, %v10656, %v10655
  %v10658 = vrot.slane %v10644, 3
  %v10659 = vsel %vm6559, %v10658, %v10657
  %v10660 = vrot.slane %v10646, 2
  %v10661 = vsel %vm6562, %v10660, %v10659
  %v10662 = vrot.slane %v10648, 1
  %v10663 = vsel %vm6565, %v10662, %v10661
  %v10664 = vrot.slane %v10637, 7
  %v10665 = vsel %vm6547, %v10664, %v10635
  %v10666 = vrot.slane %v10639, 6
  %v10667 = vsel %vm6550, %v10666, %v10665
  %v10668 = vrot.slane %v10641, 5
  %v10669 = vsel %vm6553, %v10668, %v10667
  %v10670 = vrot.slane %v10643, 4
  %v10671 = vsel %vm6556, %v10670, %v10669
  %v10672 = vrot.slane %v10645, 3
  %v10673 = vsel %vm6559, %v10672, %v10671
  %v10674 = vrot.slane %v10647, 2
  %v10675 = vsel %vm6562, %v10674, %v10673
  %v10676 = vrot.slane %v10649, 1
  %v10677 = vsel %vm6565, %v10676, %v10675
  %v10678 = vpack.c.b16 %v10663, %v10663
  %v10679 = vpack.c.b16 %v10677, %v10677
  %v10699 = vunpack.c.l.b16 %v10576
  %v10700 = vunpack.c.l.b16 %v10577
  %v10701 = vunpack.c.l.b16 %v10578
  %v10702 = vunpack.c.l.b16 %v10579
  %v10703 = vunpack.c.l.b16 %v10580
  %v10704 = vunpack.c.l.b16 %v10581
  %v10705 = vunpack.c.l.b16 %v10582
  %v10706 = vunpack.c.l.b16 %v10583
  %v10707 = vunpack.c.l.b16 %v10584
  %v10708 = vunpack.c.l.b16 %v10585
  %v10709 = vunpack.c.l.b16 %v10586
  %v10710 = vunpack.c.l.b16 %v10587
  %v10711 = vunpack.c.l.b16 %v10588
  %v10712 = vunpack.c.l.b16 %v10589
  %v10713 = vunpack.c.l.b16 %v10590
  %v10714 = vunpack.c.l.b16 %v10591
  %v10715 = vunpack.c.l.b16 %v10592
  %v10716 = vunpack.c.l.b16 %v10593
  %v10717 = vpack.c.b16 %v10700, %v10699
  %v10718 = vpack.c.b16 %v10702, %v10701
  %v10719 = vpack.c.b16 %v10704, %v10703
  %v10720 = vpack.c.b16 %v10706, %v10705
  %v10721 = vpack.c.b16 %v10708, %v10707
  %v10722 = vpack.c.b16 %v10710, %v10709
  %v10723 = vpack.c.b16 %v10712, %v10711
  %v10724 = vpack.c.b16 %v10714, %v10713
  %v10725 = vpack.c.b16 %v10716, %v10715
  %vm10735 = vcmask 130048
  %v10737 = vsel %vm10735, %v10679, 0
  %10739 = vmatpush.bf16.msra.mxu0 %v10724
  %10740 = vmatpush.bf16.msra.mxu0 %v10723
  %10741 = vmatpush.bf16.msra.mxu0 %v10722
  %10742 = vmatpush.bf16.msra.mxu0 %v10721
  %10743 = vmatpush.bf16.msra.mxu0 %v10720
  %10744 = vmatpush.bf16.msra.mxu0 %v10719
  %10745 = vmatpush.bf16.msra.mxu0 %v10718
  %10746 = vmatpush.bf16.msra.mxu0 %v10717
  %10747 = vmatmul.bf16.gmra.mxu0 %v10678
  %v10748 = vpop.f32.mrf.mxu0
  %v10749 = vadd.f32 0.0, %v10748
  %v10750 = vpop.f32.mrf.mxu0
  %10751 = vdwg.mxu0
  %10752 = vmatpush.bf16.msra.mxu0 0
  %10753 = vmatpush.bf16.msra.mxu0 0
  %10754 = vmatpush.bf16.msra.mxu0 0
  %10755 = vmatpush.bf16.msra.mxu0 0
  %10756 = vmatpush.bf16.msra.mxu0 0
  %10757 = vmatpush.bf16.msra.mxu0 0
  %10758 = vmatpush.bf16.msra.mxu0 0
  %10759 = vmatpush.bf16.msra.mxu0 %v10725
  %10760 = vmatmul.bf16.gmra.mxu0 %v10737
  %v10761 = vpop.f32.mrf.mxu0
  %v10762 = vadd.f32 %v10749, %v10761
  %v10763 = vpop.f32.mrf.mxu0
  %10764 = vdwg.mxu0
  %v10773 = vunpack.c.l.b16 %v10517
  %v10774 = vunpack.c.h.b16 %v10517
  %v10775 = vunpack.c.l.b16 %v10522
  %v10776 = vunpack.c.h.b16 %v10522
  %v10777 = vunpack.c.l.b16 %v10527
  %v10778 = vunpack.c.h.b16 %v10527
  %v10779 = vunpack.c.l.b16 %v10532
  %v10780 = vunpack.c.h.b16 %v10532
  %v10781 = vunpack.c.l.b16 %v10537
  %v10782 = vunpack.c.h.b16 %v10537
  %v10783 = vunpack.c.l.b16 %v10542
  %v10784 = vunpack.c.h.b16 %v10542
  %v10785 = vunpack.c.l.b16 %v10547
  %v10786 = vunpack.c.h.b16 %v10547
  %v10787 = vunpack.c.l.b16 %v10552
  %v10788 = vunpack.c.h.b16 %v10552
  %v10789 = vpack.c.b16 %v10773, %v10773
  %v10790 = vpack.c.b16 %v10774, %v10774
  %v10791 = vpack.c.b16 %v10775, %v10775
  %v10792 = vpack.c.b16 %v10776, %v10776
  %v10793 = vpack.c.b16 %v10777, %v10777
  %v10794 = vpack.c.b16 %v10778, %v10778
  %v10795 = vpack.c.b16 %v10779, %v10779
  %v10796 = vpack.c.b16 %v10780, %v10780
  %v10797 = vpack.c.b16 %v10781, %v10781
  %v10798 = vpack.c.b16 %v10782, %v10782
  %v10799 = vpack.c.b16 %v10783, %v10783
  %v10800 = vpack.c.b16 %v10784, %v10784
  %v10801 = vpack.c.b16 %v10785, %v10785
  %v10802 = vpack.c.b16 %v10786, %v10786
  %v10803 = vpack.c.b16 %v10787, %v10787
  %v10804 = vpack.c.b16 %v10788, %v10788
  %v10805 = vunpack.c.l.b16 %v10789
  %v10806 = vunpack.c.l.b16 %v10790
  %v10807 = vunpack.c.l.b16 %v10791
  %v10808 = vunpack.c.l.b16 %v10792
  %v10809 = vunpack.c.l.b16 %v10793
  %v10810 = vunpack.c.l.b16 %v10794
  %v10811 = vunpack.c.l.b16 %v10795
  %v10812 = vunpack.c.l.b16 %v10796
  %v10813 = vunpack.c.l.b16 %v10797
  %v10814 = vunpack.c.l.b16 %v10798
  %v10815 = vunpack.c.l.b16 %v10799
  %v10816 = vunpack.c.l.b16 %v10800
  %v10817 = vunpack.c.l.b16 %v10801
  %v10818 = vunpack.c.l.b16 %v10802
  %v10819 = vunpack.c.l.b16 %v10803
  %v10820 = vunpack.c.l.b16 %v10804
  %v10821 = vrot.slane %v10807, 7
  %v10822 = vsel %vm6547, %v10821, %v10805
  %v10823 = vrot.slane %v10809, 6
  %v10824 = vsel %vm6550, %v10823, %v10822
  %v10825 = vrot.slane %v10811, 5
  %v10826 = vsel %vm6553, %v10825, %v10824
  %v10827 = vrot.slane %v10813, 4
  %v10828 = vsel %vm6556, %v10827, %v10826
  %v10829 = vrot.slane %v10815, 3
  %v10830 = vsel %vm6559, %v10829, %v10828
  %v10831 = vrot.slane %v10817, 2
  %v10832 = vsel %vm6562, %v10831, %v10830
  %v10833 = vrot.slane %v10819, 1
  %v10834 = vsel %vm6565, %v10833, %v10832
  %v10835 = vrot.slane %v10808, 7
  %v10836 = vsel %vm6547, %v10835, %v10806
  %v10837 = vrot.slane %v10810, 6
  %v10838 = vsel %vm6550, %v10837, %v10836
  %v10839 = vrot.slane %v10812, 5
  %v10840 = vsel %vm6553, %v10839, %v10838
  %v10841 = vrot.slane %v10814, 4
  %v10842 = vsel %vm6556, %v10841, %v10840
  %v10843 = vrot.slane %v10816, 3
  %v10844 = vsel %vm6559, %v10843, %v10842
  %v10845 = vrot.slane %v10818, 2
  %v10846 = vsel %vm6562, %v10845, %v10844
  %v10847 = vrot.slane %v10820, 1
  %v10848 = vsel %vm6565, %v10847, %v10846
  %v10849 = vpack.c.b16 %v10834, %v10834
  %v10850 = vpack.c.b16 %v10848, %v10848
  %v10870 = vunpack.c.l.b16 %v10557
  %v10871 = vunpack.c.l.b16 %v10558
  %v10872 = vunpack.c.l.b16 %v10559
  %v10873 = vunpack.c.l.b16 %v10560
  %v10874 = vunpack.c.l.b16 %v10561
  %v10875 = vunpack.c.l.b16 %v10562
  %v10876 = vunpack.c.l.b16 %v10563
  %v10877 = vunpack.c.l.b16 %v10564
  %v10878 = vunpack.c.l.b16 %v10565
  %v10879 = vunpack.c.l.b16 %v10566
  %v10880 = vunpack.c.l.b16 %v10567
  %v10881 = vunpack.c.l.b16 %v10568
  %v10882 = vunpack.c.l.b16 %v10569
  %v10883 = vunpack.c.l.b16 %v10570
  %v10884 = vunpack.c.l.b16 %v10571
  %v10885 = vunpack.c.l.b16 %v10572
  %v10886 = vunpack.c.l.b16 %v10573
  %v10887 = vunpack.c.l.b16 %v10574
  %v10888 = vpack.c.b16 %v10871, %v10870
  %v10889 = vpack.c.b16 %v10873, %v10872
  %v10890 = vpack.c.b16 %v10875, %v10874
  %v10891 = vpack.c.b16 %v10877, %v10876
  %v10892 = vpack.c.b16 %v10879, %v10878
  %v10893 = vpack.c.b16 %v10881, %v10880
  %v10894 = vpack.c.b16 %v10883, %v10882
  %v10895 = vpack.c.b16 %v10885, %v10884
  %v10896 = vpack.c.b16 %v10887, %v10886
  %v10907 = vsel %vm10735, %v10850, 0
  %10909 = vmatpush.bf16.msra.mxu0 %v10895
  %10910 = vmatpush.bf16.msra.mxu0 %v10894
  %10911 = vmatpush.bf16.msra.mxu0 %v10893
  %10912 = vmatpush.bf16.msra.mxu0 %v10892
  %10913 = vmatpush.bf16.msra.mxu0 %v10891
  %10914 = vmatpush.bf16.msra.mxu0 %v10890
  %10915 = vmatpush.bf16.msra.mxu0 %v10889
  %10916 = vmatpush.bf16.msra.mxu0 %v10888
  %10917 = vmatmul.bf16.gmra.mxu0 %v10849
  %v10918 = vpop.f32.mrf.mxu0
  %v10919 = vadd.f32 %v10762, %v10918
  %v10920 = vpop.f32.mrf.mxu0
  %10921 = vdwg.mxu0
  %10922 = vmatpush.bf16.msra.mxu0 0
  %10923 = vmatpush.bf16.msra.mxu0 0
  %10924 = vmatpush.bf16.msra.mxu0 0
  %10925 = vmatpush.bf16.msra.mxu0 0
  %10926 = vmatpush.bf16.msra.mxu0 0
  %10927 = vmatpush.bf16.msra.mxu0 0
  %10928 = vmatpush.bf16.msra.mxu0 0
  %10929 = vmatpush.bf16.msra.mxu0 %v10896
  %10930 = vmatmul.bf16.gmra.mxu0 %v10907
  %v10931 = vpop.f32.mrf.mxu0
  %v10932 = vadd.f32 %v10919, %v10931
  %v10933 = vpop.f32.mrf.mxu0
  %10934 = vdwg.mxu0
  %s10935 = scalar_lea.vmem %s5, 144
  %v10936 = vld [vmem:[%s10935] sm:$0xf]
  %v10937 = vld [vmem:[%s10935 + $0x4] sm:$0xf]
  %v10938 = vld [vmem:[%s10935 + $0x8] sm:$0xf]
  %v10939 = vld [vmem:[%s10935 + $0xc] sm:$0xf]
  %v10940 = vld [vmem:[%s10935 + $0x10] sm:$0xf]
  %v10941 = vld [vmem:[%s10935 + $0x14] sm:$0xf]
  %v10942 = vld [vmem:[%s10935 + $0x18] sm:$0xf]
  %v10943 = vld [vmem:[%s10935 + $0x1c] sm:$0xf]
  %v10944 = vld [vmem:[%s10935 + $0x20] sm:$0xf]
  %v10945 = vld [vmem:[%s10935 + $0x24] sm:$0xf]
  %v10946 = vld [vmem:[%s10935 + $0x28] sm:$0xf]
  %v10947 = vld [vmem:[%s10935 + $0x2c] sm:$0xf]
  %v10948 = vld [vmem:[%s10935 + $0x30] sm:$0xf]
  %v10949 = vld [vmem:[%s10935 + $0x34] sm:$0xf]
  %v10950 = vld [vmem:[%s10935 + $0x38] sm:$0xf]
  %v10951 = vld [vmem:[%s10935 + $0x3c] sm:$0xf]
  %v10952 = vld [vmem:[%s10935 + $0x40] sm:$0xf]
  %v10953 = vld [vmem:[%s10935 + $0x44] sm:$0xf]
  %v10962 = vunpack.c.l.b16 %v10519
  %v10963 = vunpack.c.h.b16 %v10519
  %v10964 = vunpack.c.l.b16 %v10524
  %v10965 = vunpack.c.h.b16 %v10524
  %v10966 = vunpack.c.l.b16 %v10529
  %v10967 = vunpack.c.h.b16 %v10529
  %v10968 = vunpack.c.l.b16 %v10534
  %v10969 = vunpack.c.h.b16 %v10534
  %v10970 = vunpack.c.l.b16 %v10539
  %v10971 = vunpack.c.h.b16 %v10539
  %v10972 = vunpack.c.l.b16 %v10544
  %v10973 = vunpack.c.h.b16 %v10544
  %v10974 = vunpack.c.l.b16 %v10549
  %v10975 = vunpack.c.h.b16 %v10549
  %v10976 = vunpack.c.l.b16 %v10554
  %v10977 = vunpack.c.h.b16 %v10554
  %v10978 = vpack.c.b16 %v10962, %v10962
  %v10979 = vpack.c.b16 %v10963, %v10963
  %v10980 = vpack.c.b16 %v10964, %v10964
  %v10981 = vpack.c.b16 %v10965, %v10965
  %v10982 = vpack.c.b16 %v10966, %v10966
  %v10983 = vpack.c.b16 %v10967, %v10967
  %v10984 = vpack.c.b16 %v10968, %v10968
  %v10985 = vpack.c.b16 %v10969, %v10969
  %v10986 = vpack.c.b16 %v10970, %v10970
  %v10987 = vpack.c.b16 %v10971, %v10971
  %v10988 = vpack.c.b16 %v10972, %v10972
  %v10989 = vpack.c.b16 %v10973, %v10973
  %v10990 = vpack.c.b16 %v10974, %v10974
  %v10991 = vpack.c.b16 %v10975, %v10975
  %v10992 = vpack.c.b16 %v10976, %v10976
  %v10993 = vpack.c.b16 %v10977, %v10977
  %v10994 = vunpack.c.l.b16 %v10978
  %v10995 = vunpack.c.l.b16 %v10979
  %v10996 = vunpack.c.l.b16 %v10980
  %v10997 = vunpack.c.l.b16 %v10981
  %v10998 = vunpack.c.l.b16 %v10982
  %v10999 = vunpack.c.l.b16 %v10983
  %v11000 = vunpack.c.l.b16 %v10984
  %v11001 = vunpack.c.l.b16 %v10985
  %v11002 = vunpack.c.l.b16 %v10986
  %v11003 = vunpack.c.l.b16 %v10987
  %v11004 = vunpack.c.l.b16 %v10988
  %v11005 = vunpack.c.l.b16 %v10989
  %v11006 = vunpack.c.l.b16 %v10990
  %v11007 = vunpack.c.l.b16 %v10991
  %v11008 = vunpack.c.l.b16 %v10992
  %v11009 = vunpack.c.l.b16 %v10993
  %v11010 = vrot.slane %v10996, 7
  %v11011 = vsel %vm6547, %v11010, %v10994
  %v11012 = vrot.slane %v10998, 6
  %v11013 = vsel %vm6550, %v11012, %v11011
  %v11014 = vrot.slane %v11000, 5
  %v11015 = vsel %vm6553, %v11014, %v11013
  %v11016 = vrot.slane %v11002, 4
  %v11017 = vsel %vm6556, %v11016, %v11015
  %v11018 = vrot.slane %v11004, 3
  %v11019 = vsel %vm6559, %v11018, %v11017
  %v11020 = vrot.slane %v11006, 2
  %v11021 = vsel %vm6562, %v11020, %v11019
  %v11022 = vrot.slane %v11008, 1
  %v11023 = vsel %vm6565, %v11022, %v11021
  %v11024 = vrot.slane %v10997, 7
  %v11025 = vsel %vm6547, %v11024, %v10995
  %v11026 = vrot.slane %v10999, 6
  %v11027 = vsel %vm6550, %v11026, %v11025
  %v11028 = vrot.slane %v11001, 5
  %v11029 = vsel %vm6553, %v11028, %v11027
  %v11030 = vrot.slane %v11003, 4
  %v11031 = vsel %vm6556, %v11030, %v11029
  %v11032 = vrot.slane %v11005, 3
  %v11033 = vsel %vm6559, %v11032, %v11031
  %v11034 = vrot.slane %v11007, 2
  %v11035 = vsel %vm6562, %v11034, %v11033
  %v11036 = vrot.slane %v11009, 1
  %v11037 = vsel %vm6565, %v11036, %v11035
  %v11038 = vpack.c.b16 %v11023, %v11023
  %v11039 = vpack.c.b16 %v11037, %v11037
  %v11059 = vunpack.c.l.b16 %v10936
  %v11060 = vunpack.c.l.b16 %v10937
  %v11061 = vunpack.c.l.b16 %v10938
  %v11062 = vunpack.c.l.b16 %v10939
  %v11063 = vunpack.c.l.b16 %v10940
  %v11064 = vunpack.c.l.b16 %v10941
  %v11065 = vunpack.c.l.b16 %v10942
  %v11066 = vunpack.c.l.b16 %v10943
  %v11067 = vunpack.c.l.b16 %v10944
  %v11068 = vunpack.c.l.b16 %v10945
  %v11069 = vunpack.c.l.b16 %v10946
  %v11070 = vunpack.c.l.b16 %v10947
  %v11071 = vunpack.c.l.b16 %v10948
  %v11072 = vunpack.c.l.b16 %v10949
  %v11073 = vunpack.c.l.b16 %v10950
  %v11074 = vunpack.c.l.b16 %v10951
  %v11075 = vunpack.c.l.b16 %v10952
  %v11076 = vunpack.c.l.b16 %v10953
  %v11077 = vpack.c.b16 %v11060, %v11059
  %v11078 = vpack.c.b16 %v11062, %v11061
  %v11079 = vpack.c.b16 %v11064, %v11063
  %v11080 = vpack.c.b16 %v11066, %v11065
  %v11081 = vpack.c.b16 %v11068, %v11067
  %v11082 = vpack.c.b16 %v11070, %v11069
  %v11083 = vpack.c.b16 %v11072, %v11071
  %v11084 = vpack.c.b16 %v11074, %v11073
  %v11085 = vpack.c.b16 %v11076, %v11075
  %v11096 = vsel %vm10735, %v11039, 0
  %11098 = vmatpush.bf16.msra.mxu0 %v11084
  %11099 = vmatpush.bf16.msra.mxu0 %v11083
  %11100 = vmatpush.bf16.msra.mxu0 %v11082
  %11101 = vmatpush.bf16.msra.mxu0 %v11081
  %11102 = vmatpush.bf16.msra.mxu0 %v11080
  %11103 = vmatpush.bf16.msra.mxu0 %v11079
  %11104 = vmatpush.bf16.msra.mxu0 %v11078
  %11105 = vmatpush.bf16.msra.mxu0 %v11077
  %11106 = vmatmul.bf16.gmra.mxu0 %v11038
  %v11107 = vpop.f32.mrf.mxu0
  %v11108 = vadd.f32 0.0, %v11107
  %v11109 = vpop.f32.mrf.mxu0
  %11110 = vdwg.mxu0
  %11111 = vmatpush.bf16.msra.mxu0 0
  %11112 = vmatpush.bf16.msra.mxu0 0
  %11113 = vmatpush.bf16.msra.mxu0 0
  %11114 = vmatpush.bf16.msra.mxu0 0
  %11115 = vmatpush.bf16.msra.mxu0 0
  %11116 = vmatpush.bf16.msra.mxu0 0
  %11117 = vmatpush.bf16.msra.mxu0 0
  %11118 = vmatpush.bf16.msra.mxu0 %v11085
  %11119 = vmatmul.bf16.gmra.mxu0 %v11096
  %v11120 = vpop.f32.mrf.mxu0
  %v11121 = vadd.f32 %v11108, %v11120
  %v11122 = vpop.f32.mrf.mxu0
  %11123 = vdwg.mxu0
  %v11124 = vadd.f32 %v10932, %v11121
  %s11125 = scalar_lea.vmem %s5, 216
  %v11126 = vld [vmem:[%s11125] sm:$0xf]
  %v11127 = vld [vmem:[%s11125 + $0x4] sm:$0xf]
  %v11128 = vld [vmem:[%s11125 + $0x8] sm:$0xf]
  %v11129 = vld [vmem:[%s11125 + $0xc] sm:$0xf]
  %v11130 = vld [vmem:[%s11125 + $0x10] sm:$0xf]
  %v11131 = vld [vmem:[%s11125 + $0x14] sm:$0xf]
  %v11132 = vld [vmem:[%s11125 + $0x18] sm:$0xf]
  %v11133 = vld [vmem:[%s11125 + $0x1c] sm:$0xf]
  %v11134 = vld [vmem:[%s11125 + $0x20] sm:$0xf]
  %v11135 = vld [vmem:[%s11125 + $0x24] sm:$0xf]
  %v11136 = vld [vmem:[%s11125 + $0x28] sm:$0xf]
  %v11137 = vld [vmem:[%s11125 + $0x2c] sm:$0xf]
  %v11138 = vld [vmem:[%s11125 + $0x30] sm:$0xf]
  %v11139 = vld [vmem:[%s11125 + $0x34] sm:$0xf]
  %v11140 = vld [vmem:[%s11125 + $0x38] sm:$0xf]
  %v11141 = vld [vmem:[%s11125 + $0x3c] sm:$0xf]
  %v11142 = vld [vmem:[%s11125 + $0x40] sm:$0xf]
  %v11143 = vld [vmem:[%s11125 + $0x44] sm:$0xf]
  %v11152 = vunpack.c.l.b16 %v10520
  %v11153 = vunpack.c.h.b16 %v10520
  %v11154 = vunpack.c.l.b16 %v10525
  %v11155 = vunpack.c.h.b16 %v10525
  %v11156 = vunpack.c.l.b16 %v10530
  %v11157 = vunpack.c.h.b16 %v10530
  %v11158 = vunpack.c.l.b16 %v10535
  %v11159 = vunpack.c.h.b16 %v10535
  %v11160 = vunpack.c.l.b16 %v10540
  %v11161 = vunpack.c.h.b16 %v10540
  %v11162 = vunpack.c.l.b16 %v10545
  %v11163 = vunpack.c.h.b16 %v10545
  %v11164 = vunpack.c.l.b16 %v10550
  %v11165 = vunpack.c.h.b16 %v10550
  %v11166 = vunpack.c.l.b16 %v10555
  %v11167 = vunpack.c.h.b16 %v10555
  %v11168 = vpack.c.b16 %v11152, %v11152
  %v11169 = vpack.c.b16 %v11153, %v11153
  %v11170 = vpack.c.b16 %v11154, %v11154
  %v11171 = vpack.c.b16 %v11155, %v11155
  %v11172 = vpack.c.b16 %v11156, %v11156
  %v11173 = vpack.c.b16 %v11157, %v11157
  %v11174 = vpack.c.b16 %v11158, %v11158
  %v11175 = vpack.c.b16 %v11159, %v11159
  %v11176 = vpack.c.b16 %v11160, %v11160
  %v11177 = vpack.c.b16 %v11161, %v11161
  %v11178 = vpack.c.b16 %v11162, %v11162
  %v11179 = vpack.c.b16 %v11163, %v11163
  %v11180 = vpack.c.b16 %v11164, %v11164
  %v11181 = vpack.c.b16 %v11165, %v11165
  %v11182 = vpack.c.b16 %v11166, %v11166
  %v11183 = vpack.c.b16 %v11167, %v11167
  %v11184 = vunpack.c.l.b16 %v11168
  %v11185 = vunpack.c.l.b16 %v11169
  %v11186 = vunpack.c.l.b16 %v11170
  %v11187 = vunpack.c.l.b16 %v11171
  %v11188 = vunpack.c.l.b16 %v11172
  %v11189 = vunpack.c.l.b16 %v11173
  %v11190 = vunpack.c.l.b16 %v11174
  %v11191 = vunpack.c.l.b16 %v11175
  %v11192 = vunpack.c.l.b16 %v11176
  %v11193 = vunpack.c.l.b16 %v11177
  %v11194 = vunpack.c.l.b16 %v11178
  %v11195 = vunpack.c.l.b16 %v11179
  %v11196 = vunpack.c.l.b16 %v11180
  %v11197 = vunpack.c.l.b16 %v11181
  %v11198 = vunpack.c.l.b16 %v11182
  %v11199 = vunpack.c.l.b16 %v11183
  %v11200 = vrot.slane %v11186, 7
  %v11201 = vsel %vm6547, %v11200, %v11184
  %v11202 = vrot.slane %v11188, 6
  %v11203 = vsel %vm6550, %v11202, %v11201
  %v11204 = vrot.slane %v11190, 5
  %v11205 = vsel %vm6553, %v11204, %v11203
  %v11206 = vrot.slane %v11192, 4
  %v11207 = vsel %vm6556, %v11206, %v11205
  %v11208 = vrot.slane %v11194, 3
  %v11209 = vsel %vm6559, %v11208, %v11207
  %v11210 = vrot.slane %v11196, 2
  %v11211 = vsel %vm6562, %v11210, %v11209
  %v11212 = vrot.slane %v11198, 1
  %v11213 = vsel %vm6565, %v11212, %v11211
  %v11214 = vrot.slane %v11187, 7
  %v11215 = vsel %vm6547, %v11214, %v11185
  %v11216 = vrot.slane %v11189, 6
  %v11217 = vsel %vm6550, %v11216, %v11215
  %v11218 = vrot.slane %v11191, 5
  %v11219 = vsel %vm6553, %v11218, %v11217
  %v11220 = vrot.slane %v11193, 4
  %v11221 = vsel %vm6556, %v11220, %v11219
  %v11222 = vrot.slane %v11195, 3
  %v11223 = vsel %vm6559, %v11222, %v11221
  %v11224 = vrot.slane %v11197, 2
  %v11225 = vsel %vm6562, %v11224, %v11223
  %v11226 = vrot.slane %v11199, 1
  %v11227 = vsel %vm6565, %v11226, %v11225
  %v11228 = vpack.c.b16 %v11213, %v11213
  %v11229 = vpack.c.b16 %v11227, %v11227
  %v11249 = vunpack.c.l.b16 %v11126
  %v11250 = vunpack.c.l.b16 %v11127
  %v11251 = vunpack.c.l.b16 %v11128
  %v11252 = vunpack.c.l.b16 %v11129
  %v11253 = vunpack.c.l.b16 %v11130
  %v11254 = vunpack.c.l.b16 %v11131
  %v11255 = vunpack.c.l.b16 %v11132
  %v11256 = vunpack.c.l.b16 %v11133
  %v11257 = vunpack.c.l.b16 %v11134
  %v11258 = vunpack.c.l.b16 %v11135
  %v11259 = vunpack.c.l.b16 %v11136
  %v11260 = vunpack.c.l.b16 %v11137
  %v11261 = vunpack.c.l.b16 %v11138
  %v11262 = vunpack.c.l.b16 %v11139
  %v11263 = vunpack.c.l.b16 %v11140
  %v11264 = vunpack.c.l.b16 %v11141
  %v11265 = vunpack.c.l.b16 %v11142
  %v11266 = vunpack.c.l.b16 %v11143
  %v11267 = vpack.c.b16 %v11250, %v11249
  %v11268 = vpack.c.b16 %v11252, %v11251
  %v11269 = vpack.c.b16 %v11254, %v11253
  %v11270 = vpack.c.b16 %v11256, %v11255
  %v11271 = vpack.c.b16 %v11258, %v11257
  %v11272 = vpack.c.b16 %v11260, %v11259
  %v11273 = vpack.c.b16 %v11262, %v11261
  %v11274 = vpack.c.b16 %v11264, %v11263
  %v11275 = vpack.c.b16 %v11266, %v11265
  %v11286 = vsel %vm10735, %v11229, 0
  %11288 = vmatpush.bf16.msra.mxu0 %v11274
  %11289 = vmatpush.bf16.msra.mxu0 %v11273
  %11290 = vmatpush.bf16.msra.mxu0 %v11272
  %11291 = vmatpush.bf16.msra.mxu0 %v11271
  %11292 = vmatpush.bf16.msra.mxu0 %v11270
  %11293 = vmatpush.bf16.msra.mxu0 %v11269
  %11294 = vmatpush.bf16.msra.mxu0 %v11268
  %11295 = vmatpush.bf16.msra.mxu0 %v11267
  %11296 = vmatmul.bf16.gmra.mxu0 %v11228
  %v11297 = vpop.f32.mrf.mxu0
  %v11298 = vadd.f32 0.0, %v11297
  %v11299 = vpop.f32.mrf.mxu0
  %11300 = vdwg.mxu0
  %11301 = vmatpush.bf16.msra.mxu0 0
  %11302 = vmatpush.bf16.msra.mxu0 0
  %11303 = vmatpush.bf16.msra.mxu0 0
  %11304 = vmatpush.bf16.msra.mxu0 0
  %11305 = vmatpush.bf16.msra.mxu0 0
  %11306 = vmatpush.bf16.msra.mxu0 0
  %11307 = vmatpush.bf16.msra.mxu0 0
  %11308 = vmatpush.bf16.msra.mxu0 %v11275
  %11309 = vmatmul.bf16.gmra.mxu0 %v11286
  %v11310 = vpop.f32.mrf.mxu0
  %v11311 = vadd.f32 %v11298, %v11310
  %v11312 = vpop.f32.mrf.mxu0
  %11313 = vdwg.mxu0
  %v11314 = vadd.f32 %v11124, %v11311
  %s11315 = scalar_lea.vmem %s5, 288
  %v11316 = vld [vmem:[%s11315] sm:$0xf]
  %v11317 = vld [vmem:[%s11315 + $0x4] sm:$0xf]
  %v11318 = vld [vmem:[%s11315 + $0x8] sm:$0xf]
  %v11319 = vld [vmem:[%s11315 + $0xc] sm:$0xf]
  %v11320 = vld [vmem:[%s11315 + $0x10] sm:$0xf]
  %v11321 = vld [vmem:[%s11315 + $0x14] sm:$0xf]
  %v11322 = vld [vmem:[%s11315 + $0x18] sm:$0xf]
  %v11323 = vld [vmem:[%s11315 + $0x1c] sm:$0xf]
  %v11324 = vld [vmem:[%s11315 + $0x20] sm:$0xf]
  %v11325 = vld [vmem:[%s11315 + $0x24] sm:$0xf]
  %v11326 = vld [vmem:[%s11315 + $0x28] sm:$0xf]
  %v11327 = vld [vmem:[%s11315 + $0x2c] sm:$0xf]
  %v11328 = vld [vmem:[%s11315 + $0x30] sm:$0xf]
  %v11329 = vld [vmem:[%s11315 + $0x34] sm:$0xf]
  %v11330 = vld [vmem:[%s11315 + $0x38] sm:$0xf]
  %v11331 = vld [vmem:[%s11315 + $0x3c] sm:$0xf]
  %v11332 = vld [vmem:[%s11315 + $0x40] sm:$0xf]
  %v11333 = vld [vmem:[%s11315 + $0x44] sm:$0xf]
  %v11342 = vunpack.c.l.b16 %v10521
  %v11343 = vunpack.c.h.b16 %v10521
  %v11344 = vunpack.c.l.b16 %v10526
  %v11345 = vunpack.c.h.b16 %v10526
  %v11346 = vunpack.c.l.b16 %v10531
  %v11347 = vunpack.c.h.b16 %v10531
  %v11348 = vunpack.c.l.b16 %v10536
  %v11349 = vunpack.c.h.b16 %v10536
  %v11350 = vunpack.c.l.b16 %v10541
  %v11351 = vunpack.c.h.b16 %v10541
  %v11352 = vunpack.c.l.b16 %v10546
  %v11353 = vunpack.c.h.b16 %v10546
  %v11354 = vunpack.c.l.b16 %v10551
  %v11355 = vunpack.c.h.b16 %v10551
  %v11356 = vunpack.c.l.b16 %v10556
  %v11357 = vunpack.c.h.b16 %v10556
  %v11358 = vpack.c.b16 %v11342, %v11342
  %v11359 = vpack.c.b16 %v11343, %v11343
  %v11360 = vpack.c.b16 %v11344, %v11344
  %v11361 = vpack.c.b16 %v11345, %v11345
  %v11362 = vpack.c.b16 %v11346, %v11346
  %v11363 = vpack.c.b16 %v11347, %v11347
  %v11364 = vpack.c.b16 %v11348, %v11348
  %v11365 = vpack.c.b16 %v11349, %v11349
  %v11366 = vpack.c.b16 %v11350, %v11350
  %v11367 = vpack.c.b16 %v11351, %v11351
  %v11368 = vpack.c.b16 %v11352, %v11352
  %v11369 = vpack.c.b16 %v11353, %v11353
  %v11370 = vpack.c.b16 %v11354, %v11354
  %v11371 = vpack.c.b16 %v11355, %v11355
  %v11372 = vpack.c.b16 %v11356, %v11356
  %v11373 = vpack.c.b16 %v11357, %v11357
  %v11374 = vunpack.c.l.b16 %v11358
  %v11375 = vunpack.c.l.b16 %v11359
  %v11376 = vunpack.c.l.b16 %v11360
  %v11377 = vunpack.c.l.b16 %v11361
  %v11378 = vunpack.c.l.b16 %v11362
  %v11379 = vunpack.c.l.b16 %v11363
  %v11380 = vunpack.c.l.b16 %v11364
  %v11381 = vunpack.c.l.b16 %v11365
  %v11382 = vunpack.c.l.b16 %v11366
  %v11383 = vunpack.c.l.b16 %v11367
  %v11384 = vunpack.c.l.b16 %v11368
  %v11385 = vunpack.c.l.b16 %v11369
  %v11386 = vunpack.c.l.b16 %v11370
  %v11387 = vunpack.c.l.b16 %v11371
  %v11388 = vunpack.c.l.b16 %v11372
  %v11389 = vunpack.c.l.b16 %v11373
  %v11390 = vrot.slane %v11376, 7
  %v11391 = vsel %vm6547, %v11390, %v11374
  %v11392 = vrot.slane %v11378, 6
  %v11393 = vsel %vm6550, %v11392, %v11391
  %v11394 = vrot.slane %v11380, 5
  %v11395 = vsel %vm6553, %v11394, %v11393
  %v11396 = vrot.slane %v11382, 4
  %v11397 = vsel %vm6556, %v11396, %v11395
  %v11398 = vrot.slane %v11384, 3
  %v11399 = vsel %vm6559, %v11398, %v11397
  %v11400 = vrot.slane %v11386, 2
  %v11401 = vsel %vm6562, %v11400, %v11399
  %v11402 = vrot.slane %v11388, 1
  %v11403 = vsel %vm6565, %v11402, %v11401
  %v11404 = vrot.slane %v11377, 7
  %v11405 = vsel %vm6547, %v11404, %v11375
  %v11406 = vrot.slane %v11379, 6
  %v11407 = vsel %vm6550, %v11406, %v11405
  %v11408 = vrot.slane %v11381, 5
  %v11409 = vsel %vm6553, %v11408, %v11407
  %v11410 = vrot.slane %v11383, 4
  %v11411 = vsel %vm6556, %v11410, %v11409
  %v11412 = vrot.slane %v11385, 3
  %v11413 = vsel %vm6559, %v11412, %v11411
  %v11414 = vrot.slane %v11387, 2
  %v11415 = vsel %vm6562, %v11414, %v11413
  %v11416 = vrot.slane %v11389, 1
  %v11417 = vsel %vm6565, %v11416, %v11415
  %v11418 = vpack.c.b16 %v11403, %v11403
  %v11419 = vpack.c.b16 %v11417, %v11417
  %v11439 = vunpack.c.l.b16 %v11316
  %v11440 = vunpack.c.l.b16 %v11317
  %v11441 = vunpack.c.l.b16 %v11318
  %v11442 = vunpack.c.l.b16 %v11319
  %v11443 = vunpack.c.l.b16 %v11320
  %v11444 = vunpack.c.l.b16 %v11321
  %v11445 = vunpack.c.l.b16 %v11322
  %v11446 = vunpack.c.l.b16 %v11323
  %v11447 = vunpack.c.l.b16 %v11324
  %v11448 = vunpack.c.l.b16 %v11325
  %v11449 = vunpack.c.l.b16 %v11326
  %v11450 = vunpack.c.l.b16 %v11327
  %v11451 = vunpack.c.l.b16 %v11328
  %v11452 = vunpack.c.l.b16 %v11329
  %v11453 = vunpack.c.l.b16 %v11330
  %v11454 = vunpack.c.l.b16 %v11331
  %v11455 = vunpack.c.l.b16 %v11332
  %v11456 = vunpack.c.l.b16 %v11333
  %v11457 = vpack.c.b16 %v11440, %v11439
  %v11458 = vpack.c.b16 %v11442, %v11441
  %v11459 = vpack.c.b16 %v11444, %v11443
  %v11460 = vpack.c.b16 %v11446, %v11445
  %v11461 = vpack.c.b16 %v11448, %v11447
  %v11462 = vpack.c.b16 %v11450, %v11449
  %v11463 = vpack.c.b16 %v11452, %v11451
  %v11464 = vpack.c.b16 %v11454, %v11453
  %v11465 = vpack.c.b16 %v11456, %v11455
  %v11476 = vsel %vm10735, %v11419, 0
  %11478 = vmatpush.bf16.msra.mxu0 %v11464
  %11479 = vmatpush.bf16.msra.mxu0 %v11463
  %11480 = vmatpush.bf16.msra.mxu0 %v11462
  %11481 = vmatpush.bf16.msra.mxu0 %v11461
  %11482 = vmatpush.bf16.msra.mxu0 %v11460
  %11483 = vmatpush.bf16.msra.mxu0 %v11459
  %11484 = vmatpush.bf16.msra.mxu0 %v11458
  %11485 = vmatpush.bf16.msra.mxu0 %v11457
  %11486 = vmatmul.bf16.gmra.mxu0 %v11418
  %v11487 = vpop.f32.mrf.mxu0
  %v11488 = vadd.f32 0.0, %v11487
  %v11489 = vpop.f32.mrf.mxu0
  %11490 = vdwg.mxu0
  %11491 = vmatpush.bf16.msra.mxu0 0
  %11492 = vmatpush.bf16.msra.mxu0 0
  %11493 = vmatpush.bf16.msra.mxu0 0
  %11494 = vmatpush.bf16.msra.mxu0 0
  %11495 = vmatpush.bf16.msra.mxu0 0
  %11496 = vmatpush.bf16.msra.mxu0 0
  %11497 = vmatpush.bf16.msra.mxu0 0
  %11498 = vmatpush.bf16.msra.mxu0 %v11465
  %11499 = vmatmul.bf16.gmra.mxu0 %v11476
  %v11500 = vpop.f32.mrf.mxu0
  %v11501 = vadd.f32 %v11488, %v11500
  %v11502 = vpop.f32.mrf.mxu0
  %11503 = vdwg.mxu0
  %v11504 = vadd.f32 %v11314, %v11501
  %v11505 = vld [vmem:[%s6] sm:$0x1]
  %v11507 = vperm.slane %v11505, 0
  %v11509 = vadd.f32 %v11504, %v11507
  %v11510 = vmax.f32 %v11509, 0.0
  %v11511 = vpack.c.bf16 %v11510, %v11510
  %v11512 = vld [vmem:[%s7] sm:$0xf]
  %v11513 = vld [vmem:[%s7 + $0x4] sm:$0xf]
  %v11514 = vld [vmem:[%s7 + $0x8] sm:$0xf]
  %v11515 = vld [vmem:[%s7 + $0xc] sm:$0xf]
  %v11516 = vld [vmem:[%s7 + $0x10] sm:$0xf]
  %v11517 = vld [vmem:[%s7 + $0x14] sm:$0xf]
  %v11518 = vld [vmem:[%s7 + $0x18] sm:$0xf]
  %v11519 = vld [vmem:[%s7 + $0x1c] sm:$0xf]
  %v11520 = vld [vmem:[%s7 + $0x20] sm:$0xf]
  %v11521 = vld [vmem:[%s7 + $0x24] sm:$0xf]
  %v11522 = vld [vmem:[%s7 + $0x28] sm:$0xf]
  %v11523 = vld [vmem:[%s7 + $0x2c] sm:$0xf]
  %v11524 = vld [vmem:[%s7 + $0x30] sm:$0xf]
  %v11525 = vld [vmem:[%s7 + $0x34] sm:$0xf]
  %v11526 = vld [vmem:[%s7 + $0x38] sm:$0xf]
  %v11527 = vld [vmem:[%s7 + $0x3c] sm:$0xf]
  %v11528 = vld [vmem:[%s8] sm:$0x1]
  %v11530 = vperm.slane %v11528, 0
  %v11548 = vunpack.c.l.b16 %v11512
  %v11549 = vunpack.c.l.b16 %v11513
  %v11550 = vunpack.c.l.b16 %v11514
  %v11551 = vunpack.c.l.b16 %v11515
  %v11552 = vunpack.c.l.b16 %v11516
  %v11553 = vunpack.c.l.b16 %v11517
  %v11554 = vunpack.c.l.b16 %v11518
  %v11555 = vunpack.c.l.b16 %v11519
  %v11556 = vunpack.c.l.b16 %v11520
  %v11557 = vunpack.c.l.b16 %v11521
  %v11558 = vunpack.c.l.b16 %v11522
  %v11559 = vunpack.c.l.b16 %v11523
  %v11560 = vunpack.c.l.b16 %v11524
  %v11561 = vunpack.c.l.b16 %v11525
  %v11562 = vunpack.c.l.b16 %v11526
  %v11563 = vunpack.c.l.b16 %v11527
  %v11564 = vpack.c.b16 %v11549, %v11548
  %v11565 = vpack.c.b16 %v11551, %v11550
  %v11566 = vpack.c.b16 %v11553, %v11552
  %v11567 = vpack.c.b16 %v11555, %v11554
  %v11568 = vpack.c.b16 %v11557, %v11556
  %v11569 = vpack.c.b16 %v11559, %v11558
  %v11570 = vpack.c.b16 %v11561, %v11560
  %v11571 = vpack.c.b16 %v11563, %v11562
  %11580 = vmatpush.bf16.msra.mxu0 %v11571
  %11581 = vmatpush.bf16.msra.mxu0 %v11570
  %11582 = vmatpush.bf16.msra.mxu0 %v11569
  %11583 = vmatpush.bf16.msra.mxu0 %v11568
  %11584 = vmatpush.bf16.msra.mxu0 %v11567
  %11585 = vmatpush.bf16.msra.mxu0 %v11566
  %11586 = vmatpush.bf16.msra.mxu0 %v11565
  %11587 = vmatpush.bf16.msra.mxu0 %v11564
  %11588 = vmatmul.bf16.gmra.mxu0 %v11511
  %v11589 = vpop.f32.mrf.mxu0
  %v11590 = vadd.f32 %v11530, %v11589
  %v11591 = vpop.f32.mrf.mxu0
  %11592 = vdwg.mxu0
  %v11593 = vmax.f32 %v11590, 0.0
  %v11594 = vpack.c.bf16 %v11593, %v11593
  %v11595 = vld [vmem:[%s9] sm:$0xf]
  %v11596 = vld [vmem:[%s9 + $0x4] sm:$0xf]
  %v11597 = vld [vmem:[%s9 + $0x8] sm:$0xf]
  %v11598 = vld [vmem:[%s9 + $0xc] sm:$0xf]
  %v11599 = vld [vmem:[%s9 + $0x10] sm:$0xf]
  %v11600 = vld [vmem:[%s9 + $0x14] sm:$0xf]
  %v11601 = vld [vmem:[%s9 + $0x18] sm:$0xf]
  %v11602 = vld [vmem:[%s9 + $0x1c] sm:$0xf]
  %v11603 = vld [vmem:[%s9 + $0x20] sm:$0xf]
  %v11604 = vld [vmem:[%s9 + $0x24] sm:$0xf]
  %v11605 = vld [vmem:[%s9 + $0x28] sm:$0xf]
  %v11606 = vld [vmem:[%s9 + $0x2c] sm:$0xf]
  %v11607 = vld [vmem:[%s9 + $0x30] sm:$0xf]
  %v11608 = vld [vmem:[%s9 + $0x34] sm:$0xf]
  %v11609 = vld [vmem:[%s9 + $0x38] sm:$0xf]
  %v11610 = vld [vmem:[%s9 + $0x3c] sm:$0xf]
  %v11611 = vld [vmem:[%s10] sm:$0x1]
  %v11613 = vperm.slane %v11611, 0
  %v11631 = vunpack.c.l.b16 %v11595
  %v11632 = vunpack.c.l.b16 %v11596
  %v11633 = vunpack.c.l.b16 %v11597
  %v11634 = vunpack.c.l.b16 %v11598
  %v11635 = vunpack.c.l.b16 %v11599
  %v11636 = vunpack.c.l.b16 %v11600
  %v11637 = vunpack.c.l.b16 %v11601
  %v11638 = vunpack.c.l.b16 %v11602
  %v11639 = vunpack.c.l.b16 %v11603
  %v11640 = vunpack.c.l.b16 %v11604
  %v11641 = vunpack.c.l.b16 %v11605
  %v11642 = vunpack.c.l.b16 %v11606
  %v11643 = vunpack.c.l.b16 %v11607
  %v11644 = vunpack.c.l.b16 %v11608
  %v11645 = vunpack.c.l.b16 %v11609
  %v11646 = vunpack.c.l.b16 %v11610
  %v11647 = vpack.c.b16 %v11632, %v11631
  %v11648 = vpack.c.b16 %v11634, %v11633
  %v11649 = vpack.c.b16 %v11636, %v11635
  %v11650 = vpack.c.b16 %v11638, %v11637
  %v11651 = vpack.c.b16 %v11640, %v11639
  %v11652 = vpack.c.b16 %v11642, %v11641
  %v11653 = vpack.c.b16 %v11644, %v11643
  %v11654 = vpack.c.b16 %v11646, %v11645
  %11663 = vmatpush.bf16.msra.mxu0 %v11654
  %11664 = vmatpush.bf16.msra.mxu0 %v11653
  %11665 = vmatpush.bf16.msra.mxu0 %v11652
  %11666 = vmatpush.bf16.msra.mxu0 %v11651
  %11667 = vmatpush.bf16.msra.mxu0 %v11650
  %11668 = vmatpush.bf16.msra.mxu0 %v11649
  %11669 = vmatpush.bf16.msra.mxu0 %v11648
  %11670 = vmatpush.bf16.msra.mxu0 %v11647
  %11671 = vmatmul.bf16.gmra.mxu0 %v11594
  %v11672 = vpop.f32.mrf.mxu0
  %v11673 = vadd.f32 %v11613, %v11672
  %v11674 = vpop.f32.mrf.mxu0
  %11675 = vdwg.mxu0
  %11676 = vst [vmem:[%s11] sm:$0xff] %v11673
  // Predicated region
  $region46: #{net_forward.1} parent=0 // pred_check
    _
  $region47: #{net_forward.1} parent=0 // pred_check_branch
    %11678 = sbr.rel (0) target = $region49
  $region48: #{net_forward.1} parent=0 // pred_region
    _
  $region49: #{net_forward.1} parent=0 // pred_fallthru
    _
  // Predicated region
  $region50: #{net_forward.1} parent=0 // pred_check
    _
  $region51: #{net_forward.1} parent=0 // pred_check_branch
    %11680 = sbr.rel (0) target = $region53
  $region52: #{net_forward.1} parent=0 // pred_region
    _
  $region53: #{net_forward.1} parent=0 // pred_fallthru
    _

</llo_original>
